<compile_context>
chip_gen: v6e
topology: v6e:2x2x1
jax: 0.10.0
libtpu: 0.0.40
codegen_flags: <defaults>
</compile_context>

<pallas_src>
import numpy as np
import jax
import jax.numpy as jnp
from jax.experimental import pallas as pl
from jax.experimental.pallas import tpu as pltpu


def _make_kernel(ndim, TR, TN, alpha):
    """Per-(batch, col-tile, row-tile) kernel.

    col_ref: (1, ndim+3, TN)  [coord_0..coord_{ndim-1}, mask_p, mask_t, err]  (lane-dense)
    row_ref: (1, TR, ndim+2)  [coord_0..coord_{ndim-1}, mask_p(+2 pad), mask_t(+2 pad)]
    """
    alpha = float(alpha)

    def kernel(col_ref, row_ref, out_ref, minp_ref, mint_ref):
        i = pl.program_id(2)

        @pl.when(i == 0)
        def _():
            minp_ref[...] = jnp.full_like(minp_ref, jnp.inf)
            mint_ref[...] = jnp.full_like(mint_ref, jnp.inf)

        cp = col_ref[0]                                  # (Kc, TN)
        rp = row_ref[0]                                  # (TR, Kr)

        # Pairwise squared distances for this tile, built once and reused for both
        # the pred and target distance fields.
        d2 = jnp.zeros((TR, TN), jnp.float32)
        for a in range(ndim):
            diff = rp[:, a:a + 1] - cp[a:a + 1, :]       # (TR,1) - (1,TN) -> (TR,TN)
            d2 = d2 + diff * diff

        mpj = cp[ndim:ndim + 1, :]                       # (1, TN) column-voxel masks (0/1)
        mtj = cp[ndim + 1:ndim + 2, :]
        mpi = rp[:, ndim:ndim + 1]                       # (TR, 1) row masks: 0/1 (2 = pad)
        mti = rp[:, ndim + 1:ndim + 2]

        inf = jnp.float32(jnp.inf)
        # opposite class  <=>  mask_i + mask_j == 1  (padded rows carry 2 -> never match)
        cand_p = jnp.where(mpi + mpj == 1.0, d2, inf)
        cand_t = jnp.where(mti + mtj == 1.0, d2, inf)
        minp_ref[...] = jnp.minimum(minp_ref[...],
                                    jnp.min(cand_p, axis=0, keepdims=True))
        mint_ref[...] = jnp.minimum(mint_ref[...],
                                    jnp.min(cand_t, axis=0, keepdims=True))

        @pl.when(i == pl.num_programs(2) - 1)
        def _():
            # TODO(synk): volumes that are entirely one class keep the zero-field
            # convention here (min stays +inf); scipy's edt of an all-ones mask differs.
            dp2 = jnp.where(minp_ref[...] < inf, minp_ref[...], 0.0)
            dt2 = jnp.where(mint_ref[...] < inf, mint_ref[...], 0.0)
            if alpha == 2.0:
                pow_p, pow_t = dp2, dt2                  # sqrt(d2)**2 == d2 exactly
            else:
                pow_p = jnp.power(dp2, alpha * 0.5)
                pow_t = jnp.power(dt2, alpha * 0.5)
            err = cp[ndim + 2:ndim + 3, :]               # (pred - target)^2 precomputed
            out_ref[0] = err * (pow_p + pow_t)           # lane-dense (1, TN) write

    return kernel


def hausdorff_dt_loss(pred, target, alpha=2.0):
    assert pred.ndim in (4, 5), "Only 2D and 3D supported"
    assert pred.shape == target.shape, "Prediction and target need to be of same dimension"
    B = int(pred.shape[0])
    dims = tuple(int(d) for d in pred.shape[1:])
    ndim = len(dims)
    N = int(np.prod(dims))
    Kc = ndim + 3
    Kr = ndim + 2

    # ---- tile sizes: lane-dense column tiles, sublane row (min-reduction) tiles ----
    N128 = ((N + 127) // 128) * 128
    if N128 <= 512:
        TN = TR = N128                 # tiny volume: single tile
    else:
        TN, TR = 1024, 512             # (512 x 1024) pairwise tile, a few MiB of VMEM
    N_pad = ((N + TN - 1) // TN) * TN  # TN is a multiple of TR in both branches
    n_ct = N_pad // TN
    n_rt = N_pad // TR

    pred_f = pred.astype(jnp.float32).reshape(B, N)
    tgt_f = target.astype(jnp.float32).reshape(B, N)
    if N_pad > N:
        pad = ((0, 0), (0, N_pad - N))
        pred_p = jnp.pad(pred_f, pad)
        tgt_p = jnp.pad(tgt_f, pad)
    else:
        pred_p, tgt_p = pred_f, tgt_f

    # ---- precomputed voxel coordinates (no iota // % inside the kernel) ------------
    strides = []
    s = 1
    for d in reversed(dims):
        strides.append(s)
        s *= d
    strides = strides[::-1]
    v = np.arange(N, dtype=np.int64)
    coords_np = np.zeros((ndim, N_pad), np.float32)
    for a in range(ndim):
        coords_np[a, :N] = ((v // strides[a]) % dims[a]).astype(np.float32)
    coords = jnp.asarray(coords_np)
    coords_b = jnp.broadcast_to(coords[None], (B, ndim, N_pad))

    # 0/1 class masks and squared error, precomputed once in XLA (padded voxels -> 0).
    mp = jnp.where(pred_p > 0.5, 1.0, 0.0).astype(jnp.float32)
    mt = jnp.where(tgt_p > 0.5, 1.0, 0.0).astype(jnp.float32)
    err = ((pred_p - tgt_p) ** 2).astype(jnp.float32)

    # column-side pack: [coords..., mask_p, mask_t, err], lane-dense (B, Kc, N_pad)
    col_pack = jnp.concatenate(
        [coords_b, mp[:, None, :], mt[:, None, :], err[:, None, :]], axis=1)

    # row-side pack: [coords..., mask_p, mask_t] per voxel, (B, N_pad, Kr).
    # Padded voxels get mask 2.0 so they are never "opposite class" candidates.
    if N_pad > N:
        pad_flag = jnp.concatenate(
            [jnp.zeros((N,), jnp.float32), jnp.full((N_pad - N,), 2.0, jnp.float32)])
        mpr = mp + pad_flag[None, :]
        mtr = mt + pad_flag[None, :]
    else:
        mpr, mtr = mp, mt
    row_pack = jnp.transpose(
        jnp.concatenate([coords_b, mpr[:, None, :], mtr[:, None, :]], axis=1),
        (0, 2, 1))

    kernel = _make_kernel(ndim, TR, TN, float(alpha))

    col_spec = pl.BlockSpec((1, Kc, TN), lambda b, j, i: (b, 0, j))
    row_spec = pl.BlockSpec((1, TR, Kr), lambda b, j, i: (b, i, 0))
    out_spec = pl.BlockSpec((1, 1, TN), lambda b, j, i: (b, 0, j))

    field = pl.pallas_call(
        kernel,
        out_shape=jax.ShapeDtypeStruct((B, 1, N_pad), jnp.float32),
        grid_spec=pltpu.PrefetchScalarGridSpec(
            num_scalar_prefetch=0,
            grid=(B, n_ct, n_rt),
            in_specs=[col_spec, row_spec],
            out_specs=out_spec,
            scratch_shapes=[pltpu.VMEM((1, TN), jnp.float32),
                            pltpu.VMEM((1, TN), jnp.float32)],
        ),
        compiler_params=pltpu.CompilerParams(
            dimension_semantics=("parallel", "parallel", "arbitrary"),
            vmem_limit_bytes=32 << 20,
        ),
    )(col_pack, row_pack)

    # Padded voxels contribute exactly 0 (err == 0); mean over real voxels only.
    return jnp.sum(field) / (B * N)


def _reference_loss(pred, target, alpha=2.0):
    """Pure-JAX brute-force reference (same math as the scipy-edt based original)."""
    B = pred.shape[0]
    dims = pred.shape[1:]
    N = int(np.prod(dims))
    grids = jnp.meshgrid(*[jnp.arange(d, dtype=jnp.float32) for d in dims], indexing="ij")
    coords = jnp.stack([g.reshape(N) for g in grids], axis=-1)              # (N, ndim)
    d2 = jnp.sum((coords[:, None, :] - coords[None, :, :]) ** 2, axis=-1)   # (N, N)

    def field_pow(x_flat):
        m = (x_flat > 0.5).astype(jnp.float32)
        opp = (m[:, None] + m[None, :]) == 1.0
        mn = jnp.min(jnp.where(opp, d2, jnp.inf), axis=0)
        d2f = jnp.where(mn < jnp.inf, mn, 0.0)
        return jnp.power(d2f, alpha * 0.5)

    total = jnp.float32(0.0)
    for b in range(B):
        p = pred[b].reshape(N).astype(jnp.float32)
        t = target[b].reshape(N).astype(jnp.float32)
        total = total + jnp.sum((p - t) ** 2 * (field_pow(p) + field_pow(t)))
    return total / (B * N)


if __name__ == "__main__":
    key = jax.random.PRNGKey(0)
    k1, k2 = jax.random.split(key)
    # Small shapes consistent with the module: (B, C, H, W) = (2, 4, 16, 16)
    pred = jax.random.uniform(k1, (2, 4, 16, 16), dtype=jnp.float32)
    target = (jax.random.uniform(k2, (2, 4, 16, 16), dtype=jnp.float32) > 0.5).astype(jnp.float32)

    loss = jax.block_until_ready(hausdorff_dt_loss(pred, target, alpha=2.0))
    ref = jax.block_until_ready(_reference_loss(pred, target, alpha=2.0))
    assert np.allclose(np.asarray(loss), np.asarray(ref), rtol=1e-4, atol=1e-5), (loss, ref)

    print("KERNEL_OK")
</pallas_src>

<mosaic_0001>
module attributes {stable_mosaic.version = 11 : i64} {
  func.func @kernel(%arg0: i32, %arg1: i32, %arg2: i32, %arg3: memref<1x6x1024xf32, #tpu.memory_space<vmem>>, %arg4: memref<1x512x5xf32, #tpu.memory_space<vmem>>, %arg5: memref<1x1x1024xf32, #tpu.memory_space<vmem>>, %arg6: memref<1x1024xf32, #tpu.memory_space<vmem>>, %arg7: memref<1x1024xf32, #tpu.memory_space<vmem>>) attributes {dimension_semantics = [#tpu.dimension_semantics<parallel>, #tpu.dimension_semantics<parallel>, #tpu.dimension_semantics<arbitrary>], iteration_bounds = array<i64: 2, 1, 2>, scalar_prefetch = 0 : i64, scratch_operands = 2 : i64, tpu.core_type = #tpu.core_type<tc>, window_params = [{transform_indices = @transform_0, window_bounds = array<i64: 1, 6, 1024>}, {transform_indices = @transform_1, window_bounds = array<i64: 1, 512, 5>}, {transform_indices = @transform_2, window_bounds = array<i64: 1, 1, 1024>}]} {
    %c0_i32 = arith.constant 0 : i32
    %0 = arith.cmpi eq, %arg2, %c0_i32 : i32
    %1 = arith.extui %0 : i1 to i32
    %c0_i32_0 = arith.constant 0 : i32
    %2 = arith.cmpi ne, %1, %c0_i32_0 : i32
    scf.if %2 {
      %cst_22 = arith.constant 0x7F800000 : f32
      %60 = vector.broadcast %cst_22 : f32 to vector<1x1024xf32>
      %c0_23 = arith.constant 0 : index
      %c0_24 = arith.constant 0 : index
      %61 = vector.load %arg6[%c0_23, %c0_24] : memref<1x1024xf32, #tpu.memory_space<vmem>>, vector<1x1024xf32>
      tpu.vector_store %arg6[%c0_23, %c0_24], %60 {strides = array<i32>} : memref<1x1024xf32, #tpu.memory_space<vmem>>, vector<1x1024xf32>,
      %cst_25 = arith.constant 0x7F800000 : f32
      %62 = vector.broadcast %cst_25 : f32 to vector<1x1024xf32>
      %c0_26 = arith.constant 0 : index
      %c0_27 = arith.constant 0 : index
      %63 = vector.load %arg7[%c0_26, %c0_27] : memref<1x1024xf32, #tpu.memory_space<vmem>>, vector<1x1024xf32>
      tpu.vector_store %arg7[%c0_26, %c0_27], %62 {strides = array<i32>} : memref<1x1024xf32, #tpu.memory_space<vmem>>, vector<1x1024xf32>,
    } else {
    }
    %c0 = arith.constant 0 : index
    %c0_1 = arith.constant 0 : index
    %c0_2 = arith.constant 0 : index
    %3 = vector.load %arg3[%c0, %c0_1, %c0_2] : memref<1x6x1024xf32, #tpu.memory_space<vmem>>, vector<1x6x1024xf32>
    %4 = vector.shape_cast %3 : vector<1x6x1024xf32> to vector<6x1024xf32>
    %c0_3 = arith.constant 0 : index
    %c0_4 = arith.constant 0 : index
    %c0_5 = arith.constant 0 : index
    %5 = vector.load %arg4[%c0_3, %c0_4, %c0_5] : memref<1x512x5xf32, #tpu.memory_space<vmem>>, vector<1x512x5xf32>
    %6 = vector.shape_cast %5 : vector<1x512x5xf32> to vector<512x5xf32>
    %cst = arith.constant 0.000000e+00 : f32
    %7 = vector.broadcast %cst : f32 to vector<512x1024xf32>
    %8 = vector.extract_strided_slice %6 {offsets = [0, 0], sizes = [512, 1], strides = [1, 1]} : vector<512x5xf32> to vector<512x1xf32>
    %9 = vector.extract_strided_slice %4 {offsets = [0, 0], sizes = [1, 1024], strides = [1, 1]} : vector<6x1024xf32> to vector<1x1024xf32>
    %10 = vector.broadcast %8 : vector<512x1xf32> to vector<512x1024xf32>
    %11 = vector.broadcast %9 : vector<1x1024xf32> to vector<512x1024xf32>
    %12 = arith.subf %10, %11 : vector<512x1024xf32>
    %13 = arith.mulf %12, %12 : vector<512x1024xf32>
    %14 = arith.addf %7, %13 : vector<512x1024xf32>
    %15 = vector.extract_strided_slice %6 {offsets = [0, 1], sizes = [512, 1], strides = [1, 1]} : vector<512x5xf32> to vector<512x1xf32>
    %16 = vector.extract_strided_slice %4 {offsets = [1, 0], sizes = [1, 1024], strides = [1, 1]} : vector<6x1024xf32> to vector<1x1024xf32>
    %17 = vector.broadcast %15 : vector<512x1xf32> to vector<512x1024xf32>
    %18 = vector.broadcast %16 : vector<1x1024xf32> to vector<512x1024xf32>
    %19 = arith.subf %17, %18 : vector<512x1024xf32>
    %20 = arith.mulf %19, %19 : vector<512x1024xf32>
    %21 = arith.addf %14, %20 : vector<512x1024xf32>
    %22 = vector.extract_strided_slice %6 {offsets = [0, 2], sizes = [512, 1], strides = [1, 1]} : vector<512x5xf32> to vector<512x1xf32>
    %23 = vector.extract_strided_slice %4 {offsets = [2, 0], sizes = [1, 1024], strides = [1, 1]} : vector<6x1024xf32> to vector<1x1024xf32>
    %24 = vector.broadcast %22 : vector<512x1xf32> to vector<512x1024xf32>
    %25 = vector.broadcast %23 : vector<1x1024xf32> to vector<512x1024xf32>
    %26 = arith.subf %24, %25 : vector<512x1024xf32>
    %27 = arith.mulf %26, %26 : vector<512x1024xf32>
    %28 = arith.addf %21, %27 : vector<512x1024xf32>
    %29 = vector.extract_strided_slice %4 {offsets = [3, 0], sizes = [1, 1024], strides = [1, 1]} : vector<6x1024xf32> to vector<1x1024xf32>
    %30 = vector.extract_strided_slice %4 {offsets = [4, 0], sizes = [1, 1024], strides = [1, 1]} : vector<6x1024xf32> to vector<1x1024xf32>
    %31 = vector.extract_strided_slice %6 {offsets = [0, 3], sizes = [512, 1], strides = [1, 1]} : vector<512x5xf32> to vector<512x1xf32>
    %32 = vector.extract_strided_slice %6 {offsets = [0, 4], sizes = [512, 1], strides = [1, 1]} : vector<512x5xf32> to vector<512x1xf32>
    %33 = vector.broadcast %31 : vector<512x1xf32> to vector<512x1024xf32>
    %34 = vector.broadcast %29 : vector<1x1024xf32> to vector<512x1024xf32>
    %35 = arith.addf %33, %34 : vector<512x1024xf32>
    %cst_6 = arith.constant 1.000000e+00 : f32
    %36 = vector.broadcast %cst_6 : f32 to vector<512x1024xf32>
    %37 = arith.cmpf oeq, %35, %36 : vector<512x1024xf32>
    %cst_7 = arith.constant 0x7F800000 : f32
    %38 = vector.broadcast %cst_7 : f32 to vector<512x1024xf32>
    %39 = arith.select %37, %28, %38 : vector<512x1024xi1>, vector<512x1024xf32>
    %40 = vector.broadcast %32 : vector<512x1xf32> to vector<512x1024xf32>
    %41 = vector.broadcast %30 : vector<1x1024xf32> to vector<512x1024xf32>
    %42 = arith.addf %40, %41 : vector<512x1024xf32>
    %cst_8 = arith.constant 1.000000e+00 : f32
    %43 = vector.broadcast %cst_8 : f32 to vector<512x1024xf32>
    %44 = arith.cmpf oeq, %42, %43 : vector<512x1024xf32>
    %cst_9 = arith.constant 0x7F800000 : f32
    %45 = vector.broadcast %cst_9 : f32 to vector<512x1024xf32>
    %46 = arith.select %44, %28, %45 : vector<512x1024xi1>, vector<512x1024xf32>
    %c0_10 = arith.constant 0 : index
    %c0_11 = arith.constant 0 : index
    %47 = vector.load %arg6[%c0_10, %c0_11] : memref<1x1024xf32, #tpu.memory_space<vmem>>, vector<1x1024xf32>
    %cst_12 = arith.constant dense<0x7F800000> : vector<1024xf32>
    %48 = vector.multi_reduction <minimumf>, %39, %cst_12 [0] : vector<512x1024xf32> to vector<1024xf32>
    %49 = vector.shape_cast %48 : vector<1024xf32> to vector<1x1024xf32>
    %50 = arith.minimumf %47, %49 : vector<1x1024xf32>
    %c0_13 = arith.constant 0 : index
    %c0_14 = arith.constant 0 : index
    %51 = vector.load %arg6[%c0_13, %c0_14] : memref<1x1024xf32, #tpu.memory_space<vmem>>, vector<1x1024xf32>
    tpu.vector_store %arg6[%c0_13, %c0_14], %50 {strides = array<i32>} : memref<1x1024xf32, #tpu.memory_space<vmem>>, vector<1x1024xf32>,
    %c0_15 = arith.constant 0 : index
    %c0_16 = arith.constant 0 : index
    %52 = vector.load %arg7[%c0_15, %c0_16] : memref<1x1024xf32, #tpu.memory_space<vmem>>, vector<1x1024xf32>
    %cst_17 = arith.constant dense<0x7F800000> : vector<1024xf32>
    %53 = vector.multi_reduction <minimumf>, %46, %cst_17 [0] : vector<512x1024xf32> to vector<1024xf32>
    %54 = vector.shape_cast %53 : vector<1024xf32> to vector<1x1024xf32>
    %55 = arith.minimumf %52, %54 : vector<1x1024xf32>
    %c0_18 = arith.constant 0 : index
    %c0_19 = arith.constant 0 : index
    %56 = vector.load %arg7[%c0_18, %c0_19] : memref<1x1024xf32, #tpu.memory_space<vmem>>, vector<1x1024xf32>
    tpu.vector_store %arg7[%c0_18, %c0_19], %55 {strides = array<i32>} : memref<1x1024xf32, #tpu.memory_space<vmem>>, vector<1x1024xf32>,
    %c1_i32 = arith.constant 1 : i32
    %57 = arith.cmpi eq, %arg2, %c1_i32 : i32
    %58 = arith.extui %57 : i1 to i32
    %cst_20 = arith.constant 0x7F800000 : f32
    %c0_i32_21 = arith.constant 0 : i32
    %59 = arith.cmpi ne, %58, %c0_i32_21 : i32
    scf.if %59 {
      %c0_22 = arith.constant 0 : index
      %c0_23 = arith.constant 0 : index
      %60 = vector.load %arg6[%c0_22, %c0_23] : memref<1x1024xf32, #tpu.memory_space<vmem>>, vector<1x1024xf32>
      %61 = vector.broadcast %cst_20 : f32 to vector<1x1024xf32>
      %62 = arith.cmpf olt, %60, %61 : vector<1x1024xf32>
      %c0_24 = arith.constant 0 : index
      %c0_25 = arith.constant 0 : index
      %63 = vector.load %arg6[%c0_24, %c0_25] : memref<1x1024xf32, #tpu.memory_space<vmem>>, vector<1x1024xf32>
      %cst_26 = arith.constant 0.000000e+00 : f32
      %64 = vector.broadcast %cst_26 : f32 to vector<1x1024xf32>
      %65 = arith.select %62, %63, %64 : vector<1x1024xi1>, vector<1x1024xf32>
      %c0_27 = arith.constant 0 : index
      %c0_28 = arith.constant 0 : index
      %66 = vector.load %arg7[%c0_27, %c0_28] : memref<1x1024xf32, #tpu.memory_space<vmem>>, vector<1x1024xf32>
      %67 = vector.broadcast %cst_20 : f32 to vector<1x1024xf32>
      %68 = arith.cmpf olt, %66, %67 : vector<1x1024xf32>
      %c0_29 = arith.constant 0 : index
      %c0_30 = arith.constant 0 : index
      %69 = vector.load %arg7[%c0_29, %c0_30] : memref<1x1024xf32, #tpu.memory_space<vmem>>, vector<1x1024xf32>
      %cst_31 = arith.constant 0.000000e+00 : f32
      %70 = vector.broadcast %cst_31 : f32 to vector<1x1024xf32>
      %71 = arith.select %68, %69, %70 : vector<1x1024xi1>, vector<1x1024xf32>
      %72 = vector.extract_strided_slice %4 {offsets = [5, 0], sizes = [1, 1024], strides = [1, 1]} : vector<6x1024xf32> to vector<1x1024xf32>
      %73 = arith.addf %65, %71 : vector<1x1024xf32>
      %74 = arith.mulf %72, %73 : vector<1x1024xf32>
      %c0_32 = arith.constant 0 : index
      %c0_33 = arith.constant 0 : index
      %c0_34 = arith.constant 0 : index
      %75 = vector.load %arg5[%c0_32, %c0_33, %c0_34] : memref<1x1x1024xf32, #tpu.memory_space<vmem>>, vector<1x1x1024xf32>
      %76 = vector.shape_cast %75 : vector<1x1x1024xf32> to vector<1x1024xf32>
      %77 = vector.shape_cast %74 : vector<1x1024xf32> to vector<1x1x1024xf32>
      tpu.vector_store %arg5[%c0_32, %c0_33, %c0_34], %77 {strides = array<i32>} : memref<1x1x1024xf32, #tpu.memory_space<vmem>>, vector<1x1x1024xf32>,
    } else {
    }
    return
  }
  func.func @transform_0(%arg0: i32, %arg1: i32, %arg2: i32) -> (i32, i32, i32) {
    %c0_i32 = arith.constant 0 : i32
    %c0_i32_0 = arith.constant 0 : i32
    return %arg0, %c0_i32, %arg1 : i32, i32, i32
  }
  func.func @transform_1(%arg0: i32, %arg1: i32, %arg2: i32) -> (i32, i32, i32) {
    %c0_i32 = arith.constant 0 : i32
    %c0_i32_0 = arith.constant 0 : i32
    return %arg0, %arg2, %c0_i32 : i32, i32, i32
  }
  func.func @transform_2(%arg0: i32, %arg1: i32, %arg2: i32) -> (i32, i32, i32) {
    %c0_i32 = arith.constant 0 : i32
    %c0_i32_0 = arith.constant 0 : i32
    return %arg0, %c0_i32, %arg1 : i32, i32, i32
  }
}

</mosaic_0001>

<llo_original>
// kernel: tpu_custom_call.1
$region0: #{tpu_custom_call.1}
  #allocation0 [shape = 'u32[]', space=smem, size = 0x4, offset = 0x4, fixed_abs, tag = 'smem constant byte address 0x4 - core index']
  #allocation1 [shape = 'u32[144,128]{1,0:T(1,128)}', space=vmem, size = 0x12000, scoped, tag = 'internal scratch']
  #allocation2 [shape = 'f32[1,1024]{1,0:T(1,128)}', space=vmem, size = 0x1000, scoped, tag = 'scratch operand']
  #allocation3 [shape = 'f32[1,1024]{1,0:T(1,128)}', space=vmem, size = 0x1000, scoped, tag = 'scratch operand']
  %s0 = inlined_call_operand.vmem [shape: f32[2,6,1024], index: 0, kind: input, shape index: {}]
  %s1 = inlined_call_operand.vmem [shape: f32[2,1024,5], index: 1, kind: input, shape index: {}]
  %s2 = inlined_call_operand.hbm [shape: f32[2,1,1024], index: 2, kind: output, shape index: {}]
  %s3 = sld [smem:[#allocation0]]
  $region49: #{tpu_custom_call.1} parent=0
    _
  %s5 = ssub.s32 1, %s3
  %s6 = scalar_select 0, %s5, %s3
  $region1: #{tpu_custom_call.1} parent=0
    #allocation4 [shape = 'u8[8192]{0}', space=vmem, size = 0x2000, scoped, tag = 'output window, operand 0']
    #allocation5 [shape = 's32[2]{0}', space=sflag, size = 0x8, scoped, tag = 'scoped memory for tpu_custom_call.1']
    %7 = vsyncpa [#allocation5], 0
    %s8 = scalar_lea.sflag [#allocation5], 1
    %9 = vsyncpa %s8, 0
    loop: start=0, step=1, limit=6
    $region2: #{tpu_custom_call.1} parent=1 // loop_pre_header
      _
    $region3: #{tpu_custom_call.1} parent=1 // loop_header
      %s11 = sphi 0, %s15
      %p12 = scmp.ge.s32.totalorder %s11, 6
      %s18 = sphi 0, %s37
      %s19 = sphi 0, %s33
      %s20 = sphi 0, %s29
      %s21 = sphi 0, %s18
      %s22 = sphi 0, %s19
      %s23 = sphi 0, %s20
      %s24 = sphi 0, %s21
      %s25 = sphi 0, %s22
      %s26 = sphi 0, %s23
      %s42 = sphi 0, %s44
      %s45 = sphi 0, %s42
      %s46 = sphi 0, %s45
      %s62 = sphi 0, %s46
      %s70 = sphi 0, %s72
      %s73 = sphi 0, %s70
      %s74 = sphi 0, %s73
      %s90 = sphi 0, %s74
      %s98 = sphi 0, %s100
      %s101 = sphi 0, %s98
      %s102 = sphi 0, %s101
      %s118 = sphi 0, %s102
    $region4: #{tpu_custom_call.1} parent=1 // loop_header_branch
      %14 = sbr.rel (%p12) target = $region8
    $region5: #{tpu_custom_call.1} parent=1 // loop_body
      %s16 = ssub.s32 %s11, 1
      %s17 = ssub.s32 %s11, 2
      %s27 = sadd.s32 1, %s20
      %p28 = scmp.ge.s32.totalorder %s27, 2
      %s29 = scalar_select %p28, 0, %s27
      %s30 = sadd.s32 1, %s19
      %s31 = scalar_select %p28, %s30, %s19
      %p32 = scmp.ge.s32.totalorder %s31, 1
      %s33 = scalar_select %p32, 0, %s31
      %s34 = sadd.s32 1, %s18
      %s35 = scalar_select %p32, %s34, %s18
      %p36 = scmp.ge.s32.totalorder %s35, 2
      %s37 = scalar_select %p36, 0, %s35
      %s38 = ssub.s32 %s18, %s37
      %s39 = ssub.s32 %s19, %s33
      %s40 = sor.u32 %s38, %s39
      %p41 = scmp.eq.s32.totalorder %s40, 0
      %s43 = sadd.s32 %s42, 1
      %s44 = scalar_select %p41, %s42, %s43
      %p47 = pneg %p41
      %p48 = scmp.eq.s32.totalorder %s11, 3
      %p49 = por %p47, %p48
      %p50 = scmp.ne.s32.totalorder %s42, %s45
      %p51 = scmp.eq.s32.totalorder %s11, 0
      %p52 = por %p50, %p51
      %p53 = scmp.ne.s32.totalorder %s42, %s45
      %p54 = scmp.eq.s32.totalorder %s16, 3
      %p55 = por %p53, %p54
      %p56 = scmp.ne.s32.totalorder %s45, %s46
      %p57 = scmp.eq.s32.totalorder %s16, 0
      %p58 = por %p56, %p57
      %p59 = scmp.ne.s32.totalorder %s45, %s46
      %p60 = scmp.eq.s32.totalorder %s17, 3
      %p61 = por %p59, %p60
      %p63 = scmp.ne.s32.totalorder %s46, %s62
      %p64 = scmp.eq.s32.totalorder %s17, 0
      %p65 = por %p63, %p64
      %s66 = ssub.s32 %s18, %s37
      %s67 = ssub.s32 %s20, %s29
      %s68 = sor.u32 %s66, %s67
      %p69 = scmp.eq.s32.totalorder %s68, 0
      %s71 = sadd.s32 %s70, 1
      %s72 = scalar_select %p69, %s70, %s71
      %p75 = pneg %p69
      %p76 = scmp.eq.s32.totalorder %s11, 3
      %p77 = por %p75, %p76
      %p78 = scmp.ne.s32.totalorder %s70, %s73
      %p79 = scmp.eq.s32.totalorder %s11, 0
      %p80 = por %p78, %p79
      %p81 = scmp.ne.s32.totalorder %s70, %s73
      %p82 = scmp.eq.s32.totalorder %s16, 3
      %p83 = por %p81, %p82
      %p84 = scmp.ne.s32.totalorder %s73, %s74
      %p85 = scmp.eq.s32.totalorder %s16, 0
      %p86 = por %p84, %p85
      %p87 = scmp.ne.s32.totalorder %s73, %s74
      %p88 = scmp.eq.s32.totalorder %s17, 3
      %p89 = por %p87, %p88
      %p91 = scmp.ne.s32.totalorder %s74, %s90
      %p92 = scmp.eq.s32.totalorder %s17, 0
      %p93 = por %p91, %p92
      %s94 = ssub.s32 %s18, %s37
      %s95 = ssub.s32 %s19, %s33
      %s96 = sor.u32 %s94, %s95
      %p97 = scmp.eq.s32.totalorder %s96, 0
      %s99 = sadd.s32 %s98, 1
      %s100 = scalar_select %p97, %s98, %s99
      %p103 = pneg %p97
      %p104 = scmp.eq.s32.totalorder %s11, 3
      %p105 = por %p103, %p104
      %p106 = scmp.ne.s32.totalorder %s98, %s101
      %p107 = scmp.eq.s32.totalorder %s11, 0
      %p108 = por %p106, %p107
      %p109 = scmp.ne.s32.totalorder %s98, %s101
      %p110 = scmp.eq.s32.totalorder %s16, 3
      %p111 = por %p109, %p110
      %p112 = scmp.ne.s32.totalorder %s101, %s102
      %p113 = scmp.eq.s32.totalorder %s16, 0
      %p114 = por %p112, %p113
      %p115 = scmp.ne.s32.totalorder %s101, %s102
      %p116 = scmp.eq.s32.totalorder %s17, 3
      %p117 = por %p115, %p116
      %p119 = scmp.ne.s32.totalorder %s102, %s118
      %p120 = scmp.eq.s32.totalorder %s17, 0
      %p121 = por %p119, %p120
      %p122 = scmp.le.s32.totalorder 1, %s11
      %p123 = scmp.lt.s32.totalorder %s11, 5
      %p124 = pnand %p122, %p123
      %p125 = pneg %p124
      // Predicated region
      $region9: #{tpu_custom_call.1} parent=5 // pred_check
        _
      $region10: #{tpu_custom_call.1} parent=5 // pred_check_branch
        %127 = sbr.rel (%p124) target = $region12
      $region11: #{tpu_custom_call.1} parent=5 // pred_region
        %s128 = ssub.s32 %s11, 1
      $region12: #{tpu_custom_call.1} parent=5 // pred_fallthru
        _
      %p129 = scmp.lt.s32.totalorder %s11, 4
      // Predicated region
      $region13: #{tpu_custom_call.1} parent=5 // pred_check
        %p130 = pneg %p129
      $region14: #{tpu_custom_call.1} parent=5 // pred_check_branch
        %132 = sbr.rel (%p130) target = $region16
      $region15: #{tpu_custom_call.1} parent=5 // pred_region
        // Predicated region
        $region17: #{tpu_custom_call.1} parent=15 // pred_check
          %p133 = pneg %p52
        $region18: #{tpu_custom_call.1} parent=15 // pred_check_branch
          %135 = sbr.rel (%p133) target = $region20
        $region19: #{tpu_custom_call.1} parent=15 // pred_region
          %s136 = smul.u32 8, %s19
          %p137 = scmp.lt.s32.totalorder %s18, 1
          %s138 = scalar_select %p137, %s18, 1
          %p139 = scmp.lt.s32.totalorder %s136, 7
          %s140 = scalar_select %p139, %s136, 7
          %s141 = smul.addr %s138, 8
          %s142 = sadd.s32 %s140, %s141
          %s143 = smul.addr %s142, 8
          %s144 = scalar_lea.vmem %s0, %s143
          %s145 = smul.u32 8, %s19
        $region20: #{tpu_custom_call.1} parent=15 // pred_fallthru
          _
        // Predicated region
        $region21: #{tpu_custom_call.1} parent=15 // pred_check
          %p146 = pneg %p80
        $region22: #{tpu_custom_call.1} parent=15 // pred_check_branch
          %148 = sbr.rel (%p146) target = $region24
        $region23: #{tpu_custom_call.1} parent=15 // pred_region
          %s149 = smul.u32 64, %s20
          %p150 = scmp.lt.s32.totalorder %s18, 1
          %s151 = scalar_select %p150, %s18, 1
          %p152 = scmp.lt.s32.totalorder %s149, 127
          %s153 = scalar_select %p152, %s149, 127
          %s154 = smul.addr %s151, 128
          %s155 = sadd.s32 %s153, %s154
          %s156 = smul.addr %s155, 8
          %s157 = scalar_lea.vmem %s1, %s156
          %s158 = smul.u32 64, %s20
        $region24: #{tpu_custom_call.1} parent=15 // pred_fallthru
          _
      $region16: #{tpu_custom_call.1} parent=5 // pred_fallthru
        _
      %p159 = scmp.le.s32.totalorder 1, %s11
      %p160 = scmp.lt.s32.totalorder %s11, 5
      %p161 = pnand %p159, %p160
      %p162 = pneg %p161
      // Predicated region
      $region25: #{tpu_custom_call.1} parent=5 // pred_check
        _
      $region26: #{tpu_custom_call.1} parent=5 // pred_check_branch
        %164 = sbr.rel (%p161) target = $region28
      $region27: #{tpu_custom_call.1} parent=5 // pred_region
        %s165 = ssub.s32 %s11, 1
        %s166 = smul.u32 8, %s22
        %p167 = scmp.lt.s32.totalorder %s21, 1
        %s168 = scalar_select %p167, %s21, 1
        %p169 = scmp.lt.s32.totalorder %s166, 7
        %s170 = scalar_select %p169, %s166, 7
        %s171 = smul.addr %s168, 8
        %s172 = sadd.s32 %s170, %s171
        %s173 = smul.addr %s172, 8
        %s174 = scalar_lea.vmem %s0, %s173
        %p175 = pneg %p58
        %p176 = pneg %p55
        %s177 = smul.u32 64, %s23
        %p178 = scmp.lt.s32.totalorder %s21, 1
        %s179 = scalar_select %p178, %s21, 1
        %p180 = scmp.lt.s32.totalorder %s177, 127
        %s181 = scalar_select %p180, %s177, 127
        %s182 = smul.addr %s179, 128
        %s183 = sadd.s32 %s181, %s182
        %s184 = smul.addr %s183, 8
        %s185 = scalar_lea.vmem %s1, %s184
        %p186 = pneg %p86
        %p187 = pneg %p83
        %p188 = pneg %p114
        %p189 = pneg %p111
        %s190 = sand.u32 %s101, 1
        %s191 = scalar_lea.sflag [#allocation5], %s190
        %s192 = sand.u32 %s101, 1
        %s193 = smul.addr %s192, 8
        %s194 = scalar_lea.vmem [#allocation4], %s193
        %s195 = smul.u32 8, %s22
        %p196 = scmp.lt.s32.totalorder %s21, 1
        %s197 = scalar_select %p196, %s21, 1
        %p198 = scmp.lt.s32.totalorder %s195, 7
        %s199 = scalar_select %p198, %s195, 7
        %s200 = smul.addr %s197, 8
        %s201 = sadd.s32 %s199, %s200
        %s202 = smul.addr %s201, 8
        %s203 = scalar_lea.vmem %s0, %s202
        %s204 = smul.u32 8, %s22
        %s205 = smul.u32 64, %s23
        %p206 = scmp.lt.s32.totalorder %s21, 1
        %s207 = scalar_select %p206, %s21, 1
        %p208 = scmp.lt.s32.totalorder %s205, 127
        %s209 = scalar_select %p208, %s205, 127
        %s210 = smul.addr %s207, 128
        %s211 = sadd.s32 %s209, %s210
        %s212 = smul.addr %s211, 8
        %s213 = scalar_lea.vmem %s1, %s212
        %s214 = smul.u32 64, %s23
        %s215 = smul.u32 8, %s22
        %p216 = scmp.eq.s32.totalorder %s23, 0
        // Predicated region
        $region29: #{tpu_custom_call.1} parent=27 // pred_check
          %p217 = pneg %p216
        $region30: #{tpu_custom_call.1} parent=27 // pred_check_branch
          %219 = sbr.rel (%p217) target = $region32
        $region31: #{tpu_custom_call.1} parent=27 // pred_region
          %220 = vst [vmem:[#allocation2] sm:$0xff] inf
          %221 = vst [vmem:[#allocation3] sm:$0xff] inf
        $region32: #{tpu_custom_call.1} parent=27 // pred_fallthru
          _
        %v222 = vld [vmem:[%s203] sm:$0x3f]
        %v223 = vld [vmem:[%s203 + $0x8] sm:$0x3f]
        %v224 = vld [vmem:[%s203 + $0x10] sm:$0x3f]
        %v225 = vld [vmem:[%s203 + $0x18] sm:$0x3f]
        %v226 = vld [vmem:[%s203 + $0x20] sm:$0x3f]
        %v227 = vld [vmem:[%s203 + $0x28] sm:$0x3f]
        %v228 = vld [vmem:[%s203 + $0x30] sm:$0x3f]
        %v229 = vld [vmem:[%s203 + $0x38] sm:$0x3f]
        %v230 = vld [vmem:[%s213] sm:$0xff]
        %v231 = vld [vmem:[%s213 + $0x8] sm:$0xff]
        %v232 = vld [vmem:[%s213 + $0x10] sm:$0xff]
        %v233 = vld [vmem:[%s213 + $0x18] sm:$0xff]
        %v234 = vld [vmem:[%s213 + $0x20] sm:$0xff]
        %v235 = vld [vmem:[%s213 + $0x28] sm:$0xff]
        %v236 = vld [vmem:[%s213 + $0x30] sm:$0xff]
        %v237 = vld [vmem:[%s213 + $0x38] sm:$0xff]
        %v238 = vld [vmem:[%s213 + $0x40] sm:$0xff]
        %v239 = vld [vmem:[%s213 + $0x48] sm:$0xff]
        %v240 = vld [vmem:[%s213 + $0x50] sm:$0xff]
        %v241 = vld [vmem:[%s213 + $0x58] sm:$0xff]
        %v242 = vld [vmem:[%s213 + $0x60] sm:$0xff]
        %v243 = vld [vmem:[%s213 + $0x68] sm:$0xff]
        %v244 = vld [vmem:[%s213 + $0x70] sm:$0xff]
        %v245 = vld [vmem:[%s213 + $0x78] sm:$0xff]
        %v246 = vld [vmem:[%s213 + $0x80] sm:$0xff]
        %v247 = vld [vmem:[%s213 + $0x88] sm:$0xff]
        %v248 = vld [vmem:[%s213 + $0x90] sm:$0xff]
        %v249 = vld [vmem:[%s213 + $0x98] sm:$0xff]
        %v250 = vld [vmem:[%s213 + $0xa0] sm:$0xff]
        %v251 = vld [vmem:[%s213 + $0xa8] sm:$0xff]
        %v252 = vld [vmem:[%s213 + $0xb0] sm:$0xff]
        %v253 = vld [vmem:[%s213 + $0xb8] sm:$0xff]
        %v254 = vld [vmem:[%s213 + $0xc0] sm:$0xff]
        %v255 = vld [vmem:[%s213 + $0xc8] sm:$0xff]
        %v256 = vld [vmem:[%s213 + $0xd0] sm:$0xff]
        %v257 = vld [vmem:[%s213 + $0xd8] sm:$0xff]
        %v258 = vld [vmem:[%s213 + $0xe0] sm:$0xff]
        %v259 = vld [vmem:[%s213 + $0xe8] sm:$0xff]
        %v260 = vld [vmem:[%s213 + $0xf0] sm:$0xff]
        %v261 = vld [vmem:[%s213 + $0xf8] sm:$0xff]
        %v262 = vld [vmem:[%s213 + $0x100] sm:$0xff]
        %v263 = vld [vmem:[%s213 + $0x108] sm:$0xff]
        %v264 = vld [vmem:[%s213 + $0x110] sm:$0xff]
        %v265 = vld [vmem:[%s213 + $0x118] sm:$0xff]
        %v266 = vld [vmem:[%s213 + $0x120] sm:$0xff]
        %v267 = vld [vmem:[%s213 + $0x128] sm:$0xff]
        %v268 = vld [vmem:[%s213 + $0x130] sm:$0xff]
        %v269 = vld [vmem:[%s213 + $0x138] sm:$0xff]
        %v270 = vld [vmem:[%s213 + $0x140] sm:$0xff]
        %v271 = vld [vmem:[%s213 + $0x148] sm:$0xff]
        %v272 = vld [vmem:[%s213 + $0x150] sm:$0xff]
        %v273 = vld [vmem:[%s213 + $0x158] sm:$0xff]
        %v274 = vld [vmem:[%s213 + $0x160] sm:$0xff]
        %v275 = vld [vmem:[%s213 + $0x168] sm:$0xff]
        %v276 = vld [vmem:[%s213 + $0x170] sm:$0xff]
        %v277 = vld [vmem:[%s213 + $0x178] sm:$0xff]
        %v278 = vld [vmem:[%s213 + $0x180] sm:$0xff]
        %v279 = vld [vmem:[%s213 + $0x188] sm:$0xff]
        %v280 = vld [vmem:[%s213 + $0x190] sm:$0xff]
        %v281 = vld [vmem:[%s213 + $0x198] sm:$0xff]
        %v282 = vld [vmem:[%s213 + $0x1a0] sm:$0xff]
        %v283 = vld [vmem:[%s213 + $0x1a8] sm:$0xff]
        %v284 = vld [vmem:[%s213 + $0x1b0] sm:$0xff]
        %v285 = vld [vmem:[%s213 + $0x1b8] sm:$0xff]
        %v286 = vld [vmem:[%s213 + $0x1c0] sm:$0xff]
        %v287 = vld [vmem:[%s213 + $0x1c8] sm:$0xff]
        %v288 = vld [vmem:[%s213 + $0x1d0] sm:$0xff]
        %v289 = vld [vmem:[%s213 + $0x1d8] sm:$0xff]
        %v290 = vld [vmem:[%s213 + $0x1e0] sm:$0xff]
        %v291 = vld [vmem:[%s213 + $0x1e8] sm:$0xff]
        %v292 = vld [vmem:[%s213 + $0x1f0] sm:$0xff]
        %v293 = vld [vmem:[%s213 + $0x1f8] sm:$0xff]
        %295 = vset.pattern.permute.xlu0 0
        %296 = vperm.xlu0 %295, %v230
        %v297 = vpop.permute.xlu0 %296
        %300 = vset.pattern.permute.xlu0 0
        %301 = vperm.xlu0 %300, %v231
        %v302 = vpop.permute.xlu0 %301
        %305 = vset.pattern.permute.xlu0 0
        %306 = vperm.xlu0 %305, %v232
        %v307 = vpop.permute.xlu0 %306
        %310 = vset.pattern.permute.xlu0 0
        %311 = vperm.xlu0 %310, %v233
        %v312 = vpop.permute.xlu0 %311
        %315 = vset.pattern.permute.xlu0 0
        %316 = vperm.xlu0 %315, %v234
        %v317 = vpop.permute.xlu0 %316
        %320 = vset.pattern.permute.xlu0 0
        %321 = vperm.xlu0 %320, %v235
        %v322 = vpop.permute.xlu0 %321
        %325 = vset.pattern.permute.xlu0 0
        %326 = vperm.xlu0 %325, %v236
        %v327 = vpop.permute.xlu0 %326
        %330 = vset.pattern.permute.xlu0 0
        %331 = vperm.xlu0 %330, %v237
        %v332 = vpop.permute.xlu0 %331
        %335 = vset.pattern.permute.xlu0 0
        %336 = vperm.xlu0 %335, %v238
        %v337 = vpop.permute.xlu0 %336
        %340 = vset.pattern.permute.xlu0 0
        %341 = vperm.xlu0 %340, %v239
        %v342 = vpop.permute.xlu0 %341
        %345 = vset.pattern.permute.xlu0 0
        %346 = vperm.xlu0 %345, %v240
        %v347 = vpop.permute.xlu0 %346
        %350 = vset.pattern.permute.xlu0 0
        %351 = vperm.xlu0 %350, %v241
        %v352 = vpop.permute.xlu0 %351
        %355 = vset.pattern.permute.xlu0 0
        %356 = vperm.xlu0 %355, %v242
        %v357 = vpop.permute.xlu0 %356
        %360 = vset.pattern.permute.xlu0 0
        %361 = vperm.xlu0 %360, %v243
        %v362 = vpop.permute.xlu0 %361
        %365 = vset.pattern.permute.xlu0 0
        %366 = vperm.xlu0 %365, %v244
        %v367 = vpop.permute.xlu0 %366
        %370 = vset.pattern.permute.xlu0 0
        %371 = vperm.xlu0 %370, %v245
        %v372 = vpop.permute.xlu0 %371
        %375 = vset.pattern.permute.xlu0 0
        %376 = vperm.xlu0 %375, %v246
        %v377 = vpop.permute.xlu0 %376
        %380 = vset.pattern.permute.xlu0 0
        %381 = vperm.xlu0 %380, %v247
        %v382 = vpop.permute.xlu0 %381
        %385 = vset.pattern.permute.xlu0 0
        %386 = vperm.xlu0 %385, %v248
        %v387 = vpop.permute.xlu0 %386
        %390 = vset.pattern.permute.xlu0 0
        %391 = vperm.xlu0 %390, %v249
        %v392 = vpop.permute.xlu0 %391
        %395 = vset.pattern.permute.xlu0 0
        %396 = vperm.xlu0 %395, %v250
        %v397 = vpop.permute.xlu0 %396
        %400 = vset.pattern.permute.xlu0 0
        %401 = vperm.xlu0 %400, %v251
        %v402 = vpop.permute.xlu0 %401
        %405 = vset.pattern.permute.xlu0 0
        %406 = vperm.xlu0 %405, %v252
        %v407 = vpop.permute.xlu0 %406
        %410 = vset.pattern.permute.xlu0 0
        %411 = vperm.xlu0 %410, %v253
        %v412 = vpop.permute.xlu0 %411
        %415 = vset.pattern.permute.xlu0 0
        %416 = vperm.xlu0 %415, %v254
        %v417 = vpop.permute.xlu0 %416
        %420 = vset.pattern.permute.xlu0 0
        %421 = vperm.xlu0 %420, %v255
        %v422 = vpop.permute.xlu0 %421
        %425 = vset.pattern.permute.xlu0 0
        %426 = vperm.xlu0 %425, %v256
        %v427 = vpop.permute.xlu0 %426
        %430 = vset.pattern.permute.xlu0 0
        %431 = vperm.xlu0 %430, %v257
        %v432 = vpop.permute.xlu0 %431
        %435 = vset.pattern.permute.xlu0 0
        %436 = vperm.xlu0 %435, %v258
        %v437 = vpop.permute.xlu0 %436
        %440 = vset.pattern.permute.xlu0 0
        %441 = vperm.xlu0 %440, %v259
        %v442 = vpop.permute.xlu0 %441
        %445 = vset.pattern.permute.xlu0 0
        %446 = vperm.xlu0 %445, %v260
        %v447 = vpop.permute.xlu0 %446
        %450 = vset.pattern.permute.xlu0 0
        %451 = vperm.xlu0 %450, %v261
        %v452 = vpop.permute.xlu0 %451
        %455 = vset.pattern.permute.xlu0 0
        %456 = vperm.xlu0 %455, %v262
        %v457 = vpop.permute.xlu0 %456
        %460 = vset.pattern.permute.xlu0 0
        %461 = vperm.xlu0 %460, %v263
        %v462 = vpop.permute.xlu0 %461
        %465 = vset.pattern.permute.xlu0 0
        %466 = vperm.xlu0 %465, %v264
        %v467 = vpop.permute.xlu0 %466
        %470 = vset.pattern.permute.xlu0 0
        %471 = vperm.xlu0 %470, %v265
        %v472 = vpop.permute.xlu0 %471
        %475 = vset.pattern.permute.xlu0 0
        %476 = vperm.xlu0 %475, %v266
        %v477 = vpop.permute.xlu0 %476
        %480 = vset.pattern.permute.xlu0 0
        %481 = vperm.xlu0 %480, %v267
        %v482 = vpop.permute.xlu0 %481
        %485 = vset.pattern.permute.xlu0 0
        %486 = vperm.xlu0 %485, %v268
        %v487 = vpop.permute.xlu0 %486
        %490 = vset.pattern.permute.xlu0 0
        %491 = vperm.xlu0 %490, %v269
        %v492 = vpop.permute.xlu0 %491
        %495 = vset.pattern.permute.xlu0 0
        %496 = vperm.xlu0 %495, %v270
        %v497 = vpop.permute.xlu0 %496
        %500 = vset.pattern.permute.xlu0 0
        %501 = vperm.xlu0 %500, %v271
        %v502 = vpop.permute.xlu0 %501
        %505 = vset.pattern.permute.xlu0 0
        %506 = vperm.xlu0 %505, %v272
        %v507 = vpop.permute.xlu0 %506
        %510 = vset.pattern.permute.xlu0 0
        %511 = vperm.xlu0 %510, %v273
        %v512 = vpop.permute.xlu0 %511
        %515 = vset.pattern.permute.xlu0 0
        %516 = vperm.xlu0 %515, %v274
        %v517 = vpop.permute.xlu0 %516
        %520 = vset.pattern.permute.xlu0 0
        %521 = vperm.xlu0 %520, %v275
        %v522 = vpop.permute.xlu0 %521
        %525 = vset.pattern.permute.xlu0 0
        %526 = vperm.xlu0 %525, %v276
        %v527 = vpop.permute.xlu0 %526
        %530 = vset.pattern.permute.xlu0 0
        %531 = vperm.xlu0 %530, %v277
        %v532 = vpop.permute.xlu0 %531
        %535 = vset.pattern.permute.xlu0 0
        %536 = vperm.xlu0 %535, %v278
        %v537 = vpop.permute.xlu0 %536
        %540 = vset.pattern.permute.xlu0 0
        %541 = vperm.xlu0 %540, %v279
        %v542 = vpop.permute.xlu0 %541
        %545 = vset.pattern.permute.xlu0 0
        %546 = vperm.xlu0 %545, %v280
        %v547 = vpop.permute.xlu0 %546
        %550 = vset.pattern.permute.xlu0 0
        %551 = vperm.xlu0 %550, %v281
        %v552 = vpop.permute.xlu0 %551
        %555 = vset.pattern.permute.xlu0 0
        %556 = vperm.xlu0 %555, %v282
        %v557 = vpop.permute.xlu0 %556
        %560 = vset.pattern.permute.xlu0 0
        %561 = vperm.xlu0 %560, %v283
        %v562 = vpop.permute.xlu0 %561
        %565 = vset.pattern.permute.xlu0 0
        %566 = vperm.xlu0 %565, %v284
        %v567 = vpop.permute.xlu0 %566
        %570 = vset.pattern.permute.xlu0 0
        %571 = vperm.xlu0 %570, %v285
        %v572 = vpop.permute.xlu0 %571
        %575 = vset.pattern.permute.xlu0 0
        %576 = vperm.xlu0 %575, %v286
        %v577 = vpop.permute.xlu0 %576
        %580 = vset.pattern.permute.xlu0 0
        %581 = vperm.xlu0 %580, %v287
        %v582 = vpop.permute.xlu0 %581
        %585 = vset.pattern.permute.xlu0 0
        %586 = vperm.xlu0 %585, %v288
        %v587 = vpop.permute.xlu0 %586
        %590 = vset.pattern.permute.xlu0 0
        %591 = vperm.xlu0 %590, %v289
        %v592 = vpop.permute.xlu0 %591
        %595 = vset.pattern.permute.xlu0 0
        %596 = vperm.xlu0 %595, %v290
        %v597 = vpop.permute.xlu0 %596
        %600 = vset.pattern.permute.xlu0 0
        %601 = vperm.xlu0 %600, %v291
        %v602 = vpop.permute.xlu0 %601
        %605 = vset.pattern.permute.xlu0 0
        %606 = vperm.xlu0 %605, %v292
        %v607 = vpop.permute.xlu0 %606
        %610 = vset.pattern.permute.xlu0 0
        %611 = vperm.xlu0 %610, %v293
        %v612 = vpop.permute.xlu0 %611
        %v614 = vlaneseq
        %v615 = vshrl.u32 %v614, 7
        %v616 = vsub.s32 0, %v615
        %v617 = vrot.slane %v222, %v616
        %v618 = vlaneseq
        %v619 = vshrl.u32 %v618, 7
        %v620 = vsub.s32 0, %v619
        %v621 = vrot.slane %v223, %v620
        %v622 = vlaneseq
        %v623 = vshrl.u32 %v622, 7
        %v624 = vsub.s32 0, %v623
        %v625 = vrot.slane %v224, %v624
        %v626 = vlaneseq
        %v627 = vshrl.u32 %v626, 7
        %v628 = vsub.s32 0, %v627
        %v629 = vrot.slane %v225, %v628
        %v630 = vlaneseq
        %v631 = vshrl.u32 %v630, 7
        %v632 = vsub.s32 0, %v631
        %v633 = vrot.slane %v226, %v632
        %v634 = vlaneseq
        %v635 = vshrl.u32 %v634, 7
        %v636 = vsub.s32 0, %v635
        %v637 = vrot.slane %v227, %v636
        %v638 = vlaneseq
        %v639 = vshrl.u32 %v638, 7
        %v640 = vsub.s32 0, %v639
        %v641 = vrot.slane %v228, %v640
        %v642 = vlaneseq
        %v643 = vshrl.u32 %v642, 7
        %v644 = vsub.s32 0, %v643
        %v645 = vrot.slane %v229, %v644
        %v646 = vsub.f32 %v297, %v617
        %v647 = vsub.f32 %v297, %v621
        %v648 = vsub.f32 %v297, %v625
        %v649 = vsub.f32 %v297, %v629
        %v650 = vsub.f32 %v297, %v633
        %v651 = vsub.f32 %v297, %v637
        %v652 = vsub.f32 %v297, %v641
        %v653 = vsub.f32 %v297, %v645
        %v654 = vsub.f32 %v302, %v617
        %v655 = vsub.f32 %v302, %v621
        %v656 = vsub.f32 %v302, %v625
        %v657 = vsub.f32 %v302, %v629
        %v658 = vsub.f32 %v302, %v633
        %v659 = vsub.f32 %v302, %v637
        %v660 = vsub.f32 %v302, %v641
        %v661 = vsub.f32 %v302, %v645
        %v662 = vsub.f32 %v307, %v617
        %v663 = vsub.f32 %v307, %v621
        %v664 = vsub.f32 %v307, %v625
        %v665 = vsub.f32 %v307, %v629
        %v666 = vsub.f32 %v307, %v633
        %v667 = vsub.f32 %v307, %v637
        %v668 = vsub.f32 %v307, %v641
        %v669 = vsub.f32 %v307, %v645
        %v670 = vsub.f32 %v312, %v617
        %v671 = vsub.f32 %v312, %v621
        %v672 = vsub.f32 %v312, %v625
        %v673 = vsub.f32 %v312, %v629
        %v674 = vsub.f32 %v312, %v633
        %v675 = vsub.f32 %v312, %v637
        %v676 = vsub.f32 %v312, %v641
        %v677 = vsub.f32 %v312, %v645
        %v678 = vsub.f32 %v317, %v617
        %v679 = vsub.f32 %v317, %v621
        %v680 = vsub.f32 %v317, %v625
        %v681 = vsub.f32 %v317, %v629
        %v682 = vsub.f32 %v317, %v633
        %v683 = vsub.f32 %v317, %v637
        %v684 = vsub.f32 %v317, %v641
        %v685 = vsub.f32 %v317, %v645
        %v686 = vsub.f32 %v322, %v617
        %v687 = vsub.f32 %v322, %v621
        %v688 = vsub.f32 %v322, %v625
        %v689 = vsub.f32 %v322, %v629
        %v690 = vsub.f32 %v322, %v633
        %v691 = vsub.f32 %v322, %v637
        %v692 = vsub.f32 %v322, %v641
        %v693 = vsub.f32 %v322, %v645
        %v694 = vsub.f32 %v327, %v617
        %v695 = vsub.f32 %v327, %v621
        %v696 = vsub.f32 %v327, %v625
        %v697 = vsub.f32 %v327, %v629
        %v698 = vsub.f32 %v327, %v633
        %v699 = vsub.f32 %v327, %v637
        %v700 = vsub.f32 %v327, %v641
        %v701 = vsub.f32 %v327, %v645
        %v702 = vsub.f32 %v332, %v617
        %v703 = vsub.f32 %v332, %v621
        %v704 = vsub.f32 %v332, %v625
        %v705 = vsub.f32 %v332, %v629
        %v706 = vsub.f32 %v332, %v633
        %v707 = vsub.f32 %v332, %v637
        %v708 = vsub.f32 %v332, %v641
        %v709 = vsub.f32 %v332, %v645
        %v710 = vsub.f32 %v337, %v617
        %v711 = vsub.f32 %v337, %v621
        %v712 = vsub.f32 %v337, %v625
        %v713 = vsub.f32 %v337, %v629
        %v714 = vsub.f32 %v337, %v633
        %v715 = vsub.f32 %v337, %v637
        %v716 = vsub.f32 %v337, %v641
        %v717 = vsub.f32 %v337, %v645
        %v718 = vsub.f32 %v342, %v617
        %v719 = vsub.f32 %v342, %v621
        %v720 = vsub.f32 %v342, %v625
        %v721 = vsub.f32 %v342, %v629
        %v722 = vsub.f32 %v342, %v633
        %v723 = vsub.f32 %v342, %v637
        %v724 = vsub.f32 %v342, %v641
        %v725 = vsub.f32 %v342, %v645
        %v726 = vsub.f32 %v347, %v617
        %v727 = vsub.f32 %v347, %v621
        %v728 = vsub.f32 %v347, %v625
        %v729 = vsub.f32 %v347, %v629
        %v730 = vsub.f32 %v347, %v633
        %v731 = vsub.f32 %v347, %v637
        %v732 = vsub.f32 %v347, %v641
        %v733 = vsub.f32 %v347, %v645
        %v734 = vsub.f32 %v352, %v617
        %v735 = vsub.f32 %v352, %v621
        %v736 = vsub.f32 %v352, %v625
        %v737 = vsub.f32 %v352, %v629
        %v738 = vsub.f32 %v352, %v633
        %v739 = vsub.f32 %v352, %v637
        %v740 = vsub.f32 %v352, %v641
        %v741 = vsub.f32 %v352, %v645
        %v742 = vsub.f32 %v357, %v617
        %v743 = vsub.f32 %v357, %v621
        %v744 = vsub.f32 %v357, %v625
        %v745 = vsub.f32 %v357, %v629
        %v746 = vsub.f32 %v357, %v633
        %v747 = vsub.f32 %v357, %v637
        %v748 = vsub.f32 %v357, %v641
        %v749 = vsub.f32 %v357, %v645
        %v750 = vsub.f32 %v362, %v617
        %v751 = vsub.f32 %v362, %v621
        %v752 = vsub.f32 %v362, %v625
        %v753 = vsub.f32 %v362, %v629
        %v754 = vsub.f32 %v362, %v633
        %v755 = vsub.f32 %v362, %v637
        %v756 = vsub.f32 %v362, %v641
        %v757 = vsub.f32 %v362, %v645
        %v758 = vsub.f32 %v367, %v617
        %v759 = vsub.f32 %v367, %v621
        %v760 = vsub.f32 %v367, %v625
        %v761 = vsub.f32 %v367, %v629
        %v762 = vsub.f32 %v367, %v633
        %v763 = vsub.f32 %v367, %v637
        %v764 = vsub.f32 %v367, %v641
        %v765 = vsub.f32 %v367, %v645
        %v766 = vsub.f32 %v372, %v617
        %v767 = vsub.f32 %v372, %v621
        %v768 = vsub.f32 %v372, %v625
        %v769 = vsub.f32 %v372, %v629
        %v770 = vsub.f32 %v372, %v633
        %v771 = vsub.f32 %v372, %v637
        %v772 = vsub.f32 %v372, %v641
        %v773 = vsub.f32 %v372, %v645
        %v774 = vsub.f32 %v377, %v617
        %v775 = vsub.f32 %v377, %v621
        %v776 = vsub.f32 %v377, %v625
        %v777 = vsub.f32 %v377, %v629
        %v778 = vsub.f32 %v377, %v633
        %v779 = vsub.f32 %v377, %v637
        %v780 = vsub.f32 %v377, %v641
        %v781 = vsub.f32 %v377, %v645
        %v782 = vsub.f32 %v382, %v617
        %v783 = vsub.f32 %v382, %v621
        %v784 = vsub.f32 %v382, %v625
        %v785 = vsub.f32 %v382, %v629
        %v786 = vsub.f32 %v382, %v633
        %v787 = vsub.f32 %v382, %v637
        %v788 = vsub.f32 %v382, %v641
        %v789 = vsub.f32 %v382, %v645
        %v790 = vsub.f32 %v387, %v617
        %v791 = vsub.f32 %v387, %v621
        %v792 = vsub.f32 %v387, %v625
        %v793 = vsub.f32 %v387, %v629
        %v794 = vsub.f32 %v387, %v633
        %v795 = vsub.f32 %v387, %v637
        %v796 = vsub.f32 %v387, %v641
        %v797 = vsub.f32 %v387, %v645
        %v798 = vsub.f32 %v392, %v617
        %v799 = vsub.f32 %v392, %v621
        %v800 = vsub.f32 %v392, %v625
        %v801 = vsub.f32 %v392, %v629
        %v802 = vsub.f32 %v392, %v633
        %v803 = vsub.f32 %v392, %v637
        %v804 = vsub.f32 %v392, %v641
        %v805 = vsub.f32 %v392, %v645
        %v806 = vsub.f32 %v397, %v617
        %v807 = vsub.f32 %v397, %v621
        %v808 = vsub.f32 %v397, %v625
        %v809 = vsub.f32 %v397, %v629
        %v810 = vsub.f32 %v397, %v633
        %v811 = vsub.f32 %v397, %v637
        %v812 = vsub.f32 %v397, %v641
        %v813 = vsub.f32 %v397, %v645
        %v814 = vsub.f32 %v402, %v617
        %v815 = vsub.f32 %v402, %v621
        %v816 = vsub.f32 %v402, %v625
        %v817 = vsub.f32 %v402, %v629
        %v818 = vsub.f32 %v402, %v633
        %v819 = vsub.f32 %v402, %v637
        %v820 = vsub.f32 %v402, %v641
        %v821 = vsub.f32 %v402, %v645
        %v822 = vsub.f32 %v407, %v617
        %v823 = vsub.f32 %v407, %v621
        %v824 = vsub.f32 %v407, %v625
        %v825 = vsub.f32 %v407, %v629
        %v826 = vsub.f32 %v407, %v633
        %v827 = vsub.f32 %v407, %v637
        %v828 = vsub.f32 %v407, %v641
        %v829 = vsub.f32 %v407, %v645
        %v830 = vsub.f32 %v412, %v617
        %v831 = vsub.f32 %v412, %v621
        %v832 = vsub.f32 %v412, %v625
        %v833 = vsub.f32 %v412, %v629
        %v834 = vsub.f32 %v412, %v633
        %v835 = vsub.f32 %v412, %v637
        %v836 = vsub.f32 %v412, %v641
        %v837 = vsub.f32 %v412, %v645
        %v838 = vsub.f32 %v417, %v617
        %v839 = vsub.f32 %v417, %v621
        %v840 = vsub.f32 %v417, %v625
        %v841 = vsub.f32 %v417, %v629
        %v842 = vsub.f32 %v417, %v633
        %v843 = vsub.f32 %v417, %v637
        %v844 = vsub.f32 %v417, %v641
        %v845 = vsub.f32 %v417, %v645
        %v846 = vsub.f32 %v422, %v617
        %v847 = vsub.f32 %v422, %v621
        %v848 = vsub.f32 %v422, %v625
        %v849 = vsub.f32 %v422, %v629
        %v850 = vsub.f32 %v422, %v633
        %v851 = vsub.f32 %v422, %v637
        %v852 = vsub.f32 %v422, %v641
        %v853 = vsub.f32 %v422, %v645
        %v854 = vsub.f32 %v427, %v617
        %v855 = vsub.f32 %v427, %v621
        %v856 = vsub.f32 %v427, %v625
        %v857 = vsub.f32 %v427, %v629
        %v858 = vsub.f32 %v427, %v633
        %v859 = vsub.f32 %v427, %v637
        %v860 = vsub.f32 %v427, %v641
        %v861 = vsub.f32 %v427, %v645
        %v862 = vsub.f32 %v432, %v617
        %v863 = vsub.f32 %v432, %v621
        %v864 = vsub.f32 %v432, %v625
        %v865 = vsub.f32 %v432, %v629
        %v866 = vsub.f32 %v432, %v633
        %v867 = vsub.f32 %v432, %v637
        %v868 = vsub.f32 %v432, %v641
        %v869 = vsub.f32 %v432, %v645
        %v870 = vsub.f32 %v437, %v617
        %v871 = vsub.f32 %v437, %v621
        %v872 = vsub.f32 %v437, %v625
        %v873 = vsub.f32 %v437, %v629
        %v874 = vsub.f32 %v437, %v633
        %v875 = vsub.f32 %v437, %v637
        %v876 = vsub.f32 %v437, %v641
        %v877 = vsub.f32 %v437, %v645
        %v878 = vsub.f32 %v442, %v617
        %v879 = vsub.f32 %v442, %v621
        %v880 = vsub.f32 %v442, %v625
        %v881 = vsub.f32 %v442, %v629
        %v882 = vsub.f32 %v442, %v633
        %v883 = vsub.f32 %v442, %v637
        %v884 = vsub.f32 %v442, %v641
        %v885 = vsub.f32 %v442, %v645
        %v886 = vsub.f32 %v447, %v617
        %v887 = vsub.f32 %v447, %v621
        %v888 = vsub.f32 %v447, %v625
        %v889 = vsub.f32 %v447, %v629
        %v890 = vsub.f32 %v447, %v633
        %v891 = vsub.f32 %v447, %v637
        %v892 = vsub.f32 %v447, %v641
        %v893 = vsub.f32 %v447, %v645
        %v894 = vsub.f32 %v452, %v617
        %v895 = vsub.f32 %v452, %v621
        %v896 = vsub.f32 %v452, %v625
        %v897 = vsub.f32 %v452, %v629
        %v898 = vsub.f32 %v452, %v633
        %v899 = vsub.f32 %v452, %v637
        %v900 = vsub.f32 %v452, %v641
        %v901 = vsub.f32 %v452, %v645
        %v902 = vsub.f32 %v457, %v617
        %v903 = vsub.f32 %v457, %v621
        %v904 = vsub.f32 %v457, %v625
        %v905 = vsub.f32 %v457, %v629
        %v906 = vsub.f32 %v457, %v633
        %v907 = vsub.f32 %v457, %v637
        %v908 = vsub.f32 %v457, %v641
        %v909 = vsub.f32 %v457, %v645
        %v910 = vsub.f32 %v462, %v617
        %v911 = vsub.f32 %v462, %v621
        %v912 = vsub.f32 %v462, %v625
        %v913 = vsub.f32 %v462, %v629
        %v914 = vsub.f32 %v462, %v633
        %v915 = vsub.f32 %v462, %v637
        %v916 = vsub.f32 %v462, %v641
        %v917 = vsub.f32 %v462, %v645
        %v918 = vsub.f32 %v467, %v617
        %v919 = vsub.f32 %v467, %v621
        %v920 = vsub.f32 %v467, %v625
        %v921 = vsub.f32 %v467, %v629
        %v922 = vsub.f32 %v467, %v633
        %v923 = vsub.f32 %v467, %v637
        %v924 = vsub.f32 %v467, %v641
        %v925 = vsub.f32 %v467, %v645
        %v926 = vsub.f32 %v472, %v617
        %v927 = vsub.f32 %v472, %v621
        %v928 = vsub.f32 %v472, %v625
        %v929 = vsub.f32 %v472, %v629
        %v930 = vsub.f32 %v472, %v633
        %v931 = vsub.f32 %v472, %v637
        %v932 = vsub.f32 %v472, %v641
        %v933 = vsub.f32 %v472, %v645
        %v934 = vsub.f32 %v477, %v617
        %v935 = vsub.f32 %v477, %v621
        %v936 = vsub.f32 %v477, %v625
        %v937 = vsub.f32 %v477, %v629
        %v938 = vsub.f32 %v477, %v633
        %v939 = vsub.f32 %v477, %v637
        %v940 = vsub.f32 %v477, %v641
        %v941 = vsub.f32 %v477, %v645
        %v942 = vsub.f32 %v482, %v617
        %v943 = vsub.f32 %v482, %v621
        %v944 = vsub.f32 %v482, %v625
        %v945 = vsub.f32 %v482, %v629
        %v946 = vsub.f32 %v482, %v633
        %v947 = vsub.f32 %v482, %v637
        %v948 = vsub.f32 %v482, %v641
        %v949 = vsub.f32 %v482, %v645
        %v950 = vsub.f32 %v487, %v617
        %v951 = vsub.f32 %v487, %v621
        %v952 = vsub.f32 %v487, %v625
        %v953 = vsub.f32 %v487, %v629
        %v954 = vsub.f32 %v487, %v633
        %v955 = vsub.f32 %v487, %v637
        %v956 = vsub.f32 %v487, %v641
        %v957 = vsub.f32 %v487, %v645
        %v958 = vsub.f32 %v492, %v617
        %v959 = vsub.f32 %v492, %v621
        %v960 = vsub.f32 %v492, %v625
        %v961 = vsub.f32 %v492, %v629
        %v962 = vsub.f32 %v492, %v633
        %v963 = vsub.f32 %v492, %v637
        %v964 = vsub.f32 %v492, %v641
        %v965 = vsub.f32 %v492, %v645
        %v966 = vsub.f32 %v497, %v617
        %v967 = vsub.f32 %v497, %v621
        %v968 = vsub.f32 %v497, %v625
        %v969 = vsub.f32 %v497, %v629
        %v970 = vsub.f32 %v497, %v633
        %v971 = vsub.f32 %v497, %v637
        %v972 = vsub.f32 %v497, %v641
        %v973 = vsub.f32 %v497, %v645
        %v974 = vsub.f32 %v502, %v617
        %v975 = vsub.f32 %v502, %v621
        %v976 = vsub.f32 %v502, %v625
        %v977 = vsub.f32 %v502, %v629
        %v978 = vsub.f32 %v502, %v633
        %v979 = vsub.f32 %v502, %v637
        %v980 = vsub.f32 %v502, %v641
        %v981 = vsub.f32 %v502, %v645
        %v982 = vsub.f32 %v507, %v617
        %v983 = vsub.f32 %v507, %v621
        %v984 = vsub.f32 %v507, %v625
        %v985 = vsub.f32 %v507, %v629
        %v986 = vsub.f32 %v507, %v633
        %v987 = vsub.f32 %v507, %v637
        %v988 = vsub.f32 %v507, %v641
        %v989 = vsub.f32 %v507, %v645
        %v990 = vsub.f32 %v512, %v617
        %v991 = vsub.f32 %v512, %v621
        %v992 = vsub.f32 %v512, %v625
        %v993 = vsub.f32 %v512, %v629
        %v994 = vsub.f32 %v512, %v633
        %v995 = vsub.f32 %v512, %v637
        %v996 = vsub.f32 %v512, %v641
        %v997 = vsub.f32 %v512, %v645
        %v998 = vsub.f32 %v517, %v617
        %v999 = vsub.f32 %v517, %v621
        %v1000 = vsub.f32 %v517, %v625
        %v1001 = vsub.f32 %v517, %v629
        %v1002 = vsub.f32 %v517, %v633
        %v1003 = vsub.f32 %v517, %v637
        %v1004 = vsub.f32 %v517, %v641
        %v1005 = vsub.f32 %v517, %v645
        %v1006 = vsub.f32 %v522, %v617
        %v1007 = vsub.f32 %v522, %v621
        %v1008 = vsub.f32 %v522, %v625
        %v1009 = vsub.f32 %v522, %v629
        %v1010 = vsub.f32 %v522, %v633
        %v1011 = vsub.f32 %v522, %v637
        %v1012 = vsub.f32 %v522, %v641
        %v1013 = vsub.f32 %v522, %v645
        %v1014 = vsub.f32 %v527, %v617
        %v1015 = vsub.f32 %v527, %v621
        %v1016 = vsub.f32 %v527, %v625
        %v1017 = vsub.f32 %v527, %v629
        %v1018 = vsub.f32 %v527, %v633
        %v1019 = vsub.f32 %v527, %v637
        %v1020 = vsub.f32 %v527, %v641
        %v1021 = vsub.f32 %v527, %v645
        %v1022 = vsub.f32 %v532, %v617
        %v1023 = vsub.f32 %v532, %v621
        %v1024 = vsub.f32 %v532, %v625
        %v1025 = vsub.f32 %v532, %v629
        %v1026 = vsub.f32 %v532, %v633
        %v1027 = vsub.f32 %v532, %v637
        %v1028 = vsub.f32 %v532, %v641
        %v1029 = vsub.f32 %v532, %v645
        %v1030 = vsub.f32 %v537, %v617
        %v1031 = vsub.f32 %v537, %v621
        %v1032 = vsub.f32 %v537, %v625
        %v1033 = vsub.f32 %v537, %v629
        %v1034 = vsub.f32 %v537, %v633
        %v1035 = vsub.f32 %v537, %v637
        %v1036 = vsub.f32 %v537, %v641
        %v1037 = vsub.f32 %v537, %v645
        %v1038 = vsub.f32 %v542, %v617
        %v1039 = vsub.f32 %v542, %v621
        %v1040 = vsub.f32 %v542, %v625
        %v1041 = vsub.f32 %v542, %v629
        %v1042 = vsub.f32 %v542, %v633
        %v1043 = vsub.f32 %v542, %v637
        %v1044 = vsub.f32 %v542, %v641
        %v1045 = vsub.f32 %v542, %v645
        %v1046 = vsub.f32 %v547, %v617
        %v1047 = vsub.f32 %v547, %v621
        %v1048 = vsub.f32 %v547, %v625
        %v1049 = vsub.f32 %v547, %v629
        %v1050 = vsub.f32 %v547, %v633
        %v1051 = vsub.f32 %v547, %v637
        %v1052 = vsub.f32 %v547, %v641
        %v1053 = vsub.f32 %v547, %v645
        %v1054 = vsub.f32 %v552, %v617
        %v1055 = vsub.f32 %v552, %v621
        %v1056 = vsub.f32 %v552, %v625
        %v1057 = vsub.f32 %v552, %v629
        %v1058 = vsub.f32 %v552, %v633
        %v1059 = vsub.f32 %v552, %v637
        %v1060 = vsub.f32 %v552, %v641
        %v1061 = vsub.f32 %v552, %v645
        %v1062 = vsub.f32 %v557, %v617
        %v1063 = vsub.f32 %v557, %v621
        %v1064 = vsub.f32 %v557, %v625
        %v1065 = vsub.f32 %v557, %v629
        %v1066 = vsub.f32 %v557, %v633
        %v1067 = vsub.f32 %v557, %v637
        %v1068 = vsub.f32 %v557, %v641
        %v1069 = vsub.f32 %v557, %v645
        %v1070 = vsub.f32 %v562, %v617
        %v1071 = vsub.f32 %v562, %v621
        %v1072 = vsub.f32 %v562, %v625
        %v1073 = vsub.f32 %v562, %v629
        %v1074 = vsub.f32 %v562, %v633
        %v1075 = vsub.f32 %v562, %v637
        %v1076 = vsub.f32 %v562, %v641
        %v1077 = vsub.f32 %v562, %v645
        %v1078 = vsub.f32 %v567, %v617
        %v1079 = vsub.f32 %v567, %v621
        %v1080 = vsub.f32 %v567, %v625
        %v1081 = vsub.f32 %v567, %v629
        %v1082 = vsub.f32 %v567, %v633
        %v1083 = vsub.f32 %v567, %v637
        %v1084 = vsub.f32 %v567, %v641
        %v1085 = vsub.f32 %v567, %v645
        %v1086 = vsub.f32 %v572, %v617
        %v1087 = vsub.f32 %v572, %v621
        %v1088 = vsub.f32 %v572, %v625
        %v1089 = vsub.f32 %v572, %v629
        %v1090 = vsub.f32 %v572, %v633
        %v1091 = vsub.f32 %v572, %v637
        %v1092 = vsub.f32 %v572, %v641
        %v1093 = vsub.f32 %v572, %v645
        %v1094 = vsub.f32 %v577, %v617
        %v1095 = vsub.f32 %v577, %v621
        %v1096 = vsub.f32 %v577, %v625
        %v1097 = vsub.f32 %v577, %v629
        %v1098 = vsub.f32 %v577, %v633
        %v1099 = vsub.f32 %v577, %v637
        %v1100 = vsub.f32 %v577, %v641
        %v1101 = vsub.f32 %v577, %v645
        %v1102 = vsub.f32 %v582, %v617
        %v1103 = vsub.f32 %v582, %v621
        %v1104 = vsub.f32 %v582, %v625
        %v1105 = vsub.f32 %v582, %v629
        %v1106 = vsub.f32 %v582, %v633
        %v1107 = vsub.f32 %v582, %v637
        %v1108 = vsub.f32 %v582, %v641
        %v1109 = vsub.f32 %v582, %v645
        %v1110 = vsub.f32 %v587, %v617
        %v1111 = vsub.f32 %v587, %v621
        %v1112 = vsub.f32 %v587, %v625
        %v1113 = vsub.f32 %v587, %v629
        %v1114 = vsub.f32 %v587, %v633
        %v1115 = vsub.f32 %v587, %v637
        %v1116 = vsub.f32 %v587, %v641
        %v1117 = vsub.f32 %v587, %v645
        %v1118 = vsub.f32 %v592, %v617
        %v1119 = vsub.f32 %v592, %v621
        %v1120 = vsub.f32 %v592, %v625
        %v1121 = vsub.f32 %v592, %v629
        %v1122 = vsub.f32 %v592, %v633
        %v1123 = vsub.f32 %v592, %v637
        %v1124 = vsub.f32 %v592, %v641
        %v1125 = vsub.f32 %v592, %v645
        %v1126 = vsub.f32 %v597, %v617
        %v1127 = vsub.f32 %v597, %v621
        %v1128 = vsub.f32 %v597, %v625
        %v1129 = vsub.f32 %v597, %v629
        %v1130 = vsub.f32 %v597, %v633
        %v1131 = vsub.f32 %v597, %v637
        %v1132 = vsub.f32 %v597, %v641
        %v1133 = vsub.f32 %v597, %v645
        %v1134 = vsub.f32 %v602, %v617
        %v1135 = vsub.f32 %v602, %v621
        %v1136 = vsub.f32 %v602, %v625
        %v1137 = vsub.f32 %v602, %v629
        %v1138 = vsub.f32 %v602, %v633
        %v1139 = vsub.f32 %v602, %v637
        %v1140 = vsub.f32 %v602, %v641
        %v1141 = vsub.f32 %v602, %v645
        %v1142 = vsub.f32 %v607, %v617
        %v1143 = vsub.f32 %v607, %v621
        %v1144 = vsub.f32 %v607, %v625
        %v1145 = vsub.f32 %v607, %v629
        %v1146 = vsub.f32 %v607, %v633
        %v1147 = vsub.f32 %v607, %v637
        %v1148 = vsub.f32 %v607, %v641
        %v1149 = vsub.f32 %v607, %v645
        %v1150 = vsub.f32 %v612, %v617
        %v1151 = vsub.f32 %v612, %v621
        %v1152 = vsub.f32 %v612, %v625
        %v1153 = vsub.f32 %v612, %v629
        %v1154 = vsub.f32 %v612, %v633
        %v1155 = vsub.f32 %v612, %v637
        %v1156 = vsub.f32 %v612, %v641
        %v1157 = vsub.f32 %v612, %v645
        %v1158 = vmul.f32 %v646, %v646
        %v1159 = vmul.f32 %v647, %v647
        %v1160 = vmul.f32 %v648, %v648
        %v1161 = vmul.f32 %v649, %v649
        %v1162 = vmul.f32 %v650, %v650
        %v1163 = vmul.f32 %v651, %v651
        %v1164 = vmul.f32 %v652, %v652
        %v1165 = vmul.f32 %v653, %v653
        %v1166 = vmul.f32 %v654, %v654
        %v1167 = vmul.f32 %v655, %v655
        %v1168 = vmul.f32 %v656, %v656
        %v1169 = vmul.f32 %v657, %v657
        %v1170 = vmul.f32 %v658, %v658
        %v1171 = vmul.f32 %v659, %v659
        %v1172 = vmul.f32 %v660, %v660
        %v1173 = vmul.f32 %v661, %v661
        %v1174 = vmul.f32 %v662, %v662
        %v1175 = vmul.f32 %v663, %v663
        %v1176 = vmul.f32 %v664, %v664
        %v1177 = vmul.f32 %v665, %v665
        %v1178 = vmul.f32 %v666, %v666
        %v1179 = vmul.f32 %v667, %v667
        %v1180 = vmul.f32 %v668, %v668
        %v1181 = vmul.f32 %v669, %v669
        %v1182 = vmul.f32 %v670, %v670
        %v1183 = vmul.f32 %v671, %v671
        %v1184 = vmul.f32 %v672, %v672
        %v1185 = vmul.f32 %v673, %v673
        %v1186 = vmul.f32 %v674, %v674
        %v1187 = vmul.f32 %v675, %v675
        %v1188 = vmul.f32 %v676, %v676
        %v1189 = vmul.f32 %v677, %v677
        %v1190 = vmul.f32 %v678, %v678
        %v1191 = vmul.f32 %v679, %v679
        %v1192 = vmul.f32 %v680, %v680
        %v1193 = vmul.f32 %v681, %v681
        %v1194 = vmul.f32 %v682, %v682
        %v1195 = vmul.f32 %v683, %v683
        %v1196 = vmul.f32 %v684, %v684
        %v1197 = vmul.f32 %v685, %v685
        %v1198 = vmul.f32 %v686, %v686
        %v1199 = vmul.f32 %v687, %v687
        %v1200 = vmul.f32 %v688, %v688
        %v1201 = vmul.f32 %v689, %v689
        %v1202 = vmul.f32 %v690, %v690
        %v1203 = vmul.f32 %v691, %v691
        %v1204 = vmul.f32 %v692, %v692
        %v1205 = vmul.f32 %v693, %v693
        %v1206 = vmul.f32 %v694, %v694
        %v1207 = vmul.f32 %v695, %v695
        %v1208 = vmul.f32 %v696, %v696
        %v1209 = vmul.f32 %v697, %v697
        %v1210 = vmul.f32 %v698, %v698
        %v1211 = vmul.f32 %v699, %v699
        %v1212 = vmul.f32 %v700, %v700
        %v1213 = vmul.f32 %v701, %v701
        %v1214 = vmul.f32 %v702, %v702
        %v1215 = vmul.f32 %v703, %v703
        %v1216 = vmul.f32 %v704, %v704
        %v1217 = vmul.f32 %v705, %v705
        %v1218 = vmul.f32 %v706, %v706
        %v1219 = vmul.f32 %v707, %v707
        %v1220 = vmul.f32 %v708, %v708
        %v1221 = vmul.f32 %v709, %v709
        %v1222 = vmul.f32 %v710, %v710
        %v1223 = vmul.f32 %v711, %v711
        %v1224 = vmul.f32 %v712, %v712
        %v1225 = vmul.f32 %v713, %v713
        %v1226 = vmul.f32 %v714, %v714
        %v1227 = vmul.f32 %v715, %v715
        %v1228 = vmul.f32 %v716, %v716
        %v1229 = vmul.f32 %v717, %v717
        %v1230 = vmul.f32 %v718, %v718
        %v1231 = vmul.f32 %v719, %v719
        %v1232 = vmul.f32 %v720, %v720
        %v1233 = vmul.f32 %v721, %v721
        %v1234 = vmul.f32 %v722, %v722
        %v1235 = vmul.f32 %v723, %v723
        %v1236 = vmul.f32 %v724, %v724
        %v1237 = vmul.f32 %v725, %v725
        %v1238 = vmul.f32 %v726, %v726
        %v1239 = vmul.f32 %v727, %v727
        %v1240 = vmul.f32 %v728, %v728
        %v1241 = vmul.f32 %v729, %v729
        %v1242 = vmul.f32 %v730, %v730
        %v1243 = vmul.f32 %v731, %v731
        %v1244 = vmul.f32 %v732, %v732
        %v1245 = vmul.f32 %v733, %v733
        %v1246 = vmul.f32 %v734, %v734
        %v1247 = vmul.f32 %v735, %v735
        %v1248 = vmul.f32 %v736, %v736
        %v1249 = vmul.f32 %v737, %v737
        %v1250 = vmul.f32 %v738, %v738
        %v1251 = vmul.f32 %v739, %v739
        %v1252 = vmul.f32 %v740, %v740
        %v1253 = vmul.f32 %v741, %v741
        %v1254 = vmul.f32 %v742, %v742
        %v1255 = vmul.f32 %v743, %v743
        %v1256 = vmul.f32 %v744, %v744
        %v1257 = vmul.f32 %v745, %v745
        %v1258 = vmul.f32 %v746, %v746
        %v1259 = vmul.f32 %v747, %v747
        %v1260 = vmul.f32 %v748, %v748
        %v1261 = vmul.f32 %v749, %v749
        %v1262 = vmul.f32 %v750, %v750
        %v1263 = vmul.f32 %v751, %v751
        %v1264 = vmul.f32 %v752, %v752
        %v1265 = vmul.f32 %v753, %v753
        %v1266 = vmul.f32 %v754, %v754
        %v1267 = vmul.f32 %v755, %v755
        %v1268 = vmul.f32 %v756, %v756
        %v1269 = vmul.f32 %v757, %v757
        %v1270 = vmul.f32 %v758, %v758
        %v1271 = vmul.f32 %v759, %v759
        %v1272 = vmul.f32 %v760, %v760
        %v1273 = vmul.f32 %v761, %v761
        %v1274 = vmul.f32 %v762, %v762
        %v1275 = vmul.f32 %v763, %v763
        %v1276 = vmul.f32 %v764, %v764
        %v1277 = vmul.f32 %v765, %v765
        %v1278 = vmul.f32 %v766, %v766
        %v1279 = vmul.f32 %v767, %v767
        %v1280 = vmul.f32 %v768, %v768
        %v1281 = vmul.f32 %v769, %v769
        %v1282 = vmul.f32 %v770, %v770
        %v1283 = vmul.f32 %v771, %v771
        %v1284 = vmul.f32 %v772, %v772
        %v1285 = vmul.f32 %v773, %v773
        %v1286 = vmul.f32 %v774, %v774
        %v1287 = vmul.f32 %v775, %v775
        %v1288 = vmul.f32 %v776, %v776
        %v1289 = vmul.f32 %v777, %v777
        %v1290 = vmul.f32 %v778, %v778
        %v1291 = vmul.f32 %v779, %v779
        %v1292 = vmul.f32 %v780, %v780
        %v1293 = vmul.f32 %v781, %v781
        %v1294 = vmul.f32 %v782, %v782
        %v1295 = vmul.f32 %v783, %v783
        %v1296 = vmul.f32 %v784, %v784
        %v1297 = vmul.f32 %v785, %v785
        %v1298 = vmul.f32 %v786, %v786
        %v1299 = vmul.f32 %v787, %v787
        %v1300 = vmul.f32 %v788, %v788
        %v1301 = vmul.f32 %v789, %v789
        %v1302 = vmul.f32 %v790, %v790
        %v1303 = vmul.f32 %v791, %v791
        %v1304 = vmul.f32 %v792, %v792
        %v1305 = vmul.f32 %v793, %v793
        %v1306 = vmul.f32 %v794, %v794
        %v1307 = vmul.f32 %v795, %v795
        %v1308 = vmul.f32 %v796, %v796
        %v1309 = vmul.f32 %v797, %v797
        %v1310 = vmul.f32 %v798, %v798
        %v1311 = vmul.f32 %v799, %v799
        %v1312 = vmul.f32 %v800, %v800
        %v1313 = vmul.f32 %v801, %v801
        %v1314 = vmul.f32 %v802, %v802
        %v1315 = vmul.f32 %v803, %v803
        %v1316 = vmul.f32 %v804, %v804
        %v1317 = vmul.f32 %v805, %v805
        %v1318 = vmul.f32 %v806, %v806
        %v1319 = vmul.f32 %v807, %v807
        %v1320 = vmul.f32 %v808, %v808
        %v1321 = vmul.f32 %v809, %v809
        %v1322 = vmul.f32 %v810, %v810
        %v1323 = vmul.f32 %v811, %v811
        %v1324 = vmul.f32 %v812, %v812
        %v1325 = vmul.f32 %v813, %v813
        %v1326 = vmul.f32 %v814, %v814
        %v1327 = vmul.f32 %v815, %v815
        %v1328 = vmul.f32 %v816, %v816
        %v1329 = vmul.f32 %v817, %v817
        %v1330 = vmul.f32 %v818, %v818
        %v1331 = vmul.f32 %v819, %v819
        %v1332 = vmul.f32 %v820, %v820
        %v1333 = vmul.f32 %v821, %v821
        %v1334 = vmul.f32 %v822, %v822
        %v1335 = vmul.f32 %v823, %v823
        %v1336 = vmul.f32 %v824, %v824
        %v1337 = vmul.f32 %v825, %v825
        %v1338 = vmul.f32 %v826, %v826
        %v1339 = vmul.f32 %v827, %v827
        %v1340 = vmul.f32 %v828, %v828
        %v1341 = vmul.f32 %v829, %v829
        %v1342 = vmul.f32 %v830, %v830
        %v1343 = vmul.f32 %v831, %v831
        %v1344 = vmul.f32 %v832, %v832
        %v1345 = vmul.f32 %v833, %v833
        %v1346 = vmul.f32 %v834, %v834
        %v1347 = vmul.f32 %v835, %v835
        %v1348 = vmul.f32 %v836, %v836
        %v1349 = vmul.f32 %v837, %v837
        %v1350 = vmul.f32 %v838, %v838
        %v1351 = vmul.f32 %v839, %v839
        %v1352 = vmul.f32 %v840, %v840
        %v1353 = vmul.f32 %v841, %v841
        %v1354 = vmul.f32 %v842, %v842
        %v1355 = vmul.f32 %v843, %v843
        %v1356 = vmul.f32 %v844, %v844
        %v1357 = vmul.f32 %v845, %v845
        %v1358 = vmul.f32 %v846, %v846
        %v1359 = vmul.f32 %v847, %v847
        %v1360 = vmul.f32 %v848, %v848
        %v1361 = vmul.f32 %v849, %v849
        %v1362 = vmul.f32 %v850, %v850
        %v1363 = vmul.f32 %v851, %v851
        %v1364 = vmul.f32 %v852, %v852
        %v1365 = vmul.f32 %v853, %v853
        %v1366 = vmul.f32 %v854, %v854
        %v1367 = vmul.f32 %v855, %v855
        %v1368 = vmul.f32 %v856, %v856
        %v1369 = vmul.f32 %v857, %v857
        %v1370 = vmul.f32 %v858, %v858
        %v1371 = vmul.f32 %v859, %v859
        %v1372 = vmul.f32 %v860, %v860
        %v1373 = vmul.f32 %v861, %v861
        %v1374 = vmul.f32 %v862, %v862
        %v1375 = vmul.f32 %v863, %v863
        %v1376 = vmul.f32 %v864, %v864
        %v1377 = vmul.f32 %v865, %v865
        %v1378 = vmul.f32 %v866, %v866
        %v1379 = vmul.f32 %v867, %v867
        %v1380 = vmul.f32 %v868, %v868
        %v1381 = vmul.f32 %v869, %v869
        %v1382 = vmul.f32 %v870, %v870
        %v1383 = vmul.f32 %v871, %v871
        %v1384 = vmul.f32 %v872, %v872
        %v1385 = vmul.f32 %v873, %v873
        %v1386 = vmul.f32 %v874, %v874
        %v1387 = vmul.f32 %v875, %v875
        %v1388 = vmul.f32 %v876, %v876
        %v1389 = vmul.f32 %v877, %v877
        %v1390 = vmul.f32 %v878, %v878
        %v1391 = vmul.f32 %v879, %v879
        %v1392 = vmul.f32 %v880, %v880
        %v1393 = vmul.f32 %v881, %v881
        %v1394 = vmul.f32 %v882, %v882
        %v1395 = vmul.f32 %v883, %v883
        %v1396 = vmul.f32 %v884, %v884
        %v1397 = vmul.f32 %v885, %v885
        %v1398 = vmul.f32 %v886, %v886
        %v1399 = vmul.f32 %v887, %v887
        %v1400 = vmul.f32 %v888, %v888
        %v1401 = vmul.f32 %v889, %v889
        %v1402 = vmul.f32 %v890, %v890
        %v1403 = vmul.f32 %v891, %v891
        %v1404 = vmul.f32 %v892, %v892
        %v1405 = vmul.f32 %v893, %v893
        %v1406 = vmul.f32 %v894, %v894
        %v1407 = vmul.f32 %v895, %v895
        %v1408 = vmul.f32 %v896, %v896
        %v1409 = vmul.f32 %v897, %v897
        %v1410 = vmul.f32 %v898, %v898
        %v1411 = vmul.f32 %v899, %v899
        %v1412 = vmul.f32 %v900, %v900
        %v1413 = vmul.f32 %v901, %v901
        %v1414 = vmul.f32 %v902, %v902
        %v1415 = vmul.f32 %v903, %v903
        %v1416 = vmul.f32 %v904, %v904
        %v1417 = vmul.f32 %v905, %v905
        %v1418 = vmul.f32 %v906, %v906
        %v1419 = vmul.f32 %v907, %v907
        %v1420 = vmul.f32 %v908, %v908
        %v1421 = vmul.f32 %v909, %v909
        %v1422 = vmul.f32 %v910, %v910
        %v1423 = vmul.f32 %v911, %v911
        %v1424 = vmul.f32 %v912, %v912
        %v1425 = vmul.f32 %v913, %v913
        %v1426 = vmul.f32 %v914, %v914
        %v1427 = vmul.f32 %v915, %v915
        %v1428 = vmul.f32 %v916, %v916
        %v1429 = vmul.f32 %v917, %v917
        %v1430 = vmul.f32 %v918, %v918
        %v1431 = vmul.f32 %v919, %v919
        %v1432 = vmul.f32 %v920, %v920
        %v1433 = vmul.f32 %v921, %v921
        %v1434 = vmul.f32 %v922, %v922
        %v1435 = vmul.f32 %v923, %v923
        %v1436 = vmul.f32 %v924, %v924
        %v1437 = vmul.f32 %v925, %v925
        %v1438 = vmul.f32 %v926, %v926
        %v1439 = vmul.f32 %v927, %v927
        %v1440 = vmul.f32 %v928, %v928
        %v1441 = vmul.f32 %v929, %v929
        %v1442 = vmul.f32 %v930, %v930
        %v1443 = vmul.f32 %v931, %v931
        %v1444 = vmul.f32 %v932, %v932
        %v1445 = vmul.f32 %v933, %v933
        %v1446 = vmul.f32 %v934, %v934
        %v1447 = vmul.f32 %v935, %v935
        %v1448 = vmul.f32 %v936, %v936
        %v1449 = vmul.f32 %v937, %v937
        %v1450 = vmul.f32 %v938, %v938
        %v1451 = vmul.f32 %v939, %v939
        %v1452 = vmul.f32 %v940, %v940
        %v1453 = vmul.f32 %v941, %v941
        %v1454 = vmul.f32 %v942, %v942
        %v1455 = vmul.f32 %v943, %v943
        %v1456 = vmul.f32 %v944, %v944
        %v1457 = vmul.f32 %v945, %v945
        %v1458 = vmul.f32 %v946, %v946
        %v1459 = vmul.f32 %v947, %v947
        %v1460 = vmul.f32 %v948, %v948
        %v1461 = vmul.f32 %v949, %v949
        %v1462 = vmul.f32 %v950, %v950
        %v1463 = vmul.f32 %v951, %v951
        %v1464 = vmul.f32 %v952, %v952
        %v1465 = vmul.f32 %v953, %v953
        %v1466 = vmul.f32 %v954, %v954
        %v1467 = vmul.f32 %v955, %v955
        %v1468 = vmul.f32 %v956, %v956
        %v1469 = vmul.f32 %v957, %v957
        %v1470 = vmul.f32 %v958, %v958
        %v1471 = vmul.f32 %v959, %v959
        %v1472 = vmul.f32 %v960, %v960
        %v1473 = vmul.f32 %v961, %v961
        %v1474 = vmul.f32 %v962, %v962
        %v1475 = vmul.f32 %v963, %v963
        %v1476 = vmul.f32 %v964, %v964
        %v1477 = vmul.f32 %v965, %v965
        %v1478 = vmul.f32 %v966, %v966
        %v1479 = vmul.f32 %v967, %v967
        %v1480 = vmul.f32 %v968, %v968
        %v1481 = vmul.f32 %v969, %v969
        %v1482 = vmul.f32 %v970, %v970
        %v1483 = vmul.f32 %v971, %v971
        %v1484 = vmul.f32 %v972, %v972
        %v1485 = vmul.f32 %v973, %v973
        %v1486 = vmul.f32 %v974, %v974
        %v1487 = vmul.f32 %v975, %v975
        %v1488 = vmul.f32 %v976, %v976
        %v1489 = vmul.f32 %v977, %v977
        %v1490 = vmul.f32 %v978, %v978
        %v1491 = vmul.f32 %v979, %v979
        %v1492 = vmul.f32 %v980, %v980
        %v1493 = vmul.f32 %v981, %v981
        %v1494 = vmul.f32 %v982, %v982
        %v1495 = vmul.f32 %v983, %v983
        %v1496 = vmul.f32 %v984, %v984
        %v1497 = vmul.f32 %v985, %v985
        %v1498 = vmul.f32 %v986, %v986
        %v1499 = vmul.f32 %v987, %v987
        %v1500 = vmul.f32 %v988, %v988
        %v1501 = vmul.f32 %v989, %v989
        %v1502 = vmul.f32 %v990, %v990
        %v1503 = vmul.f32 %v991, %v991
        %v1504 = vmul.f32 %v992, %v992
        %v1505 = vmul.f32 %v993, %v993
        %v1506 = vmul.f32 %v994, %v994
        %v1507 = vmul.f32 %v995, %v995
        %v1508 = vmul.f32 %v996, %v996
        %v1509 = vmul.f32 %v997, %v997
        %v1510 = vmul.f32 %v998, %v998
        %v1511 = vmul.f32 %v999, %v999
        %v1512 = vmul.f32 %v1000, %v1000
        %v1513 = vmul.f32 %v1001, %v1001
        %v1514 = vmul.f32 %v1002, %v1002
        %v1515 = vmul.f32 %v1003, %v1003
        %v1516 = vmul.f32 %v1004, %v1004
        %v1517 = vmul.f32 %v1005, %v1005
        %v1518 = vmul.f32 %v1006, %v1006
        %v1519 = vmul.f32 %v1007, %v1007
        %v1520 = vmul.f32 %v1008, %v1008
        %v1521 = vmul.f32 %v1009, %v1009
        %v1522 = vmul.f32 %v1010, %v1010
        %v1523 = vmul.f32 %v1011, %v1011
        %v1524 = vmul.f32 %v1012, %v1012
        %v1525 = vmul.f32 %v1013, %v1013
        %v1526 = vmul.f32 %v1014, %v1014
        %v1527 = vmul.f32 %v1015, %v1015
        %v1528 = vmul.f32 %v1016, %v1016
        %v1529 = vmul.f32 %v1017, %v1017
        %v1530 = vmul.f32 %v1018, %v1018
        %v1531 = vmul.f32 %v1019, %v1019
        %v1532 = vmul.f32 %v1020, %v1020
        %v1533 = vmul.f32 %v1021, %v1021
        %v1534 = vmul.f32 %v1022, %v1022
        %v1535 = vmul.f32 %v1023, %v1023
        %v1536 = vmul.f32 %v1024, %v1024
        %v1537 = vmul.f32 %v1025, %v1025
        %v1538 = vmul.f32 %v1026, %v1026
        %v1539 = vmul.f32 %v1027, %v1027
        %v1540 = vmul.f32 %v1028, %v1028
        %v1541 = vmul.f32 %v1029, %v1029
        %v1542 = vmul.f32 %v1030, %v1030
        %v1543 = vmul.f32 %v1031, %v1031
        %v1544 = vmul.f32 %v1032, %v1032
        %v1545 = vmul.f32 %v1033, %v1033
        %v1546 = vmul.f32 %v1034, %v1034
        %v1547 = vmul.f32 %v1035, %v1035
        %v1548 = vmul.f32 %v1036, %v1036
        %v1549 = vmul.f32 %v1037, %v1037
        %v1550 = vmul.f32 %v1038, %v1038
        %v1551 = vmul.f32 %v1039, %v1039
        %v1552 = vmul.f32 %v1040, %v1040
        %v1553 = vmul.f32 %v1041, %v1041
        %v1554 = vmul.f32 %v1042, %v1042
        %v1555 = vmul.f32 %v1043, %v1043
        %v1556 = vmul.f32 %v1044, %v1044
        %v1557 = vmul.f32 %v1045, %v1045
        %v1558 = vmul.f32 %v1046, %v1046
        %v1559 = vmul.f32 %v1047, %v1047
        %v1560 = vmul.f32 %v1048, %v1048
        %v1561 = vmul.f32 %v1049, %v1049
        %v1562 = vmul.f32 %v1050, %v1050
        %v1563 = vmul.f32 %v1051, %v1051
        %v1564 = vmul.f32 %v1052, %v1052
        %v1565 = vmul.f32 %v1053, %v1053
        %v1566 = vmul.f32 %v1054, %v1054
        %v1567 = vmul.f32 %v1055, %v1055
        %v1568 = vmul.f32 %v1056, %v1056
        %v1569 = vmul.f32 %v1057, %v1057
        %v1570 = vmul.f32 %v1058, %v1058
        %v1571 = vmul.f32 %v1059, %v1059
        %v1572 = vmul.f32 %v1060, %v1060
        %v1573 = vmul.f32 %v1061, %v1061
        %v1574 = vmul.f32 %v1062, %v1062
        %v1575 = vmul.f32 %v1063, %v1063
        %v1576 = vmul.f32 %v1064, %v1064
        %v1577 = vmul.f32 %v1065, %v1065
        %v1578 = vmul.f32 %v1066, %v1066
        %v1579 = vmul.f32 %v1067, %v1067
        %v1580 = vmul.f32 %v1068, %v1068
        %v1581 = vmul.f32 %v1069, %v1069
        %v1582 = vmul.f32 %v1070, %v1070
        %v1583 = vmul.f32 %v1071, %v1071
        %v1584 = vmul.f32 %v1072, %v1072
        %v1585 = vmul.f32 %v1073, %v1073
        %v1586 = vmul.f32 %v1074, %v1074
        %v1587 = vmul.f32 %v1075, %v1075
        %v1588 = vmul.f32 %v1076, %v1076
        %v1589 = vmul.f32 %v1077, %v1077
        %v1590 = vmul.f32 %v1078, %v1078
        %v1591 = vmul.f32 %v1079, %v1079
        %v1592 = vmul.f32 %v1080, %v1080
        %v1593 = vmul.f32 %v1081, %v1081
        %v1594 = vmul.f32 %v1082, %v1082
        %v1595 = vmul.f32 %v1083, %v1083
        %v1596 = vmul.f32 %v1084, %v1084
        %v1597 = vmul.f32 %v1085, %v1085
        %v1598 = vmul.f32 %v1086, %v1086
        %v1599 = vmul.f32 %v1087, %v1087
        %v1600 = vmul.f32 %v1088, %v1088
        %v1601 = vmul.f32 %v1089, %v1089
        %v1602 = vmul.f32 %v1090, %v1090
        %v1603 = vmul.f32 %v1091, %v1091
        %v1604 = vmul.f32 %v1092, %v1092
        %v1605 = vmul.f32 %v1093, %v1093
        %v1606 = vmul.f32 %v1094, %v1094
        %v1607 = vmul.f32 %v1095, %v1095
        %v1608 = vmul.f32 %v1096, %v1096
        %v1609 = vmul.f32 %v1097, %v1097
        %v1610 = vmul.f32 %v1098, %v1098
        %v1611 = vmul.f32 %v1099, %v1099
        %v1612 = vmul.f32 %v1100, %v1100
        %v1613 = vmul.f32 %v1101, %v1101
        %v1614 = vmul.f32 %v1102, %v1102
        %v1615 = vmul.f32 %v1103, %v1103
        %v1616 = vmul.f32 %v1104, %v1104
        %v1617 = vmul.f32 %v1105, %v1105
        %v1618 = vmul.f32 %v1106, %v1106
        %v1619 = vmul.f32 %v1107, %v1107
        %v1620 = vmul.f32 %v1108, %v1108
        %v1621 = vmul.f32 %v1109, %v1109
        %v1622 = vmul.f32 %v1110, %v1110
        %v1623 = vmul.f32 %v1111, %v1111
        %v1624 = vmul.f32 %v1112, %v1112
        %v1625 = vmul.f32 %v1113, %v1113
        %v1626 = vmul.f32 %v1114, %v1114
        %v1627 = vmul.f32 %v1115, %v1115
        %v1628 = vmul.f32 %v1116, %v1116
        %v1629 = vmul.f32 %v1117, %v1117
        %v1630 = vmul.f32 %v1118, %v1118
        %v1631 = vmul.f32 %v1119, %v1119
        %v1632 = vmul.f32 %v1120, %v1120
        %v1633 = vmul.f32 %v1121, %v1121
        %v1634 = vmul.f32 %v1122, %v1122
        %v1635 = vmul.f32 %v1123, %v1123
        %v1636 = vmul.f32 %v1124, %v1124
        %v1637 = vmul.f32 %v1125, %v1125
        %v1638 = vmul.f32 %v1126, %v1126
        %v1639 = vmul.f32 %v1127, %v1127
        %v1640 = vmul.f32 %v1128, %v1128
        %v1641 = vmul.f32 %v1129, %v1129
        %v1642 = vmul.f32 %v1130, %v1130
        %v1643 = vmul.f32 %v1131, %v1131
        %v1644 = vmul.f32 %v1132, %v1132
        %v1645 = vmul.f32 %v1133, %v1133
        %v1646 = vmul.f32 %v1134, %v1134
        %v1647 = vmul.f32 %v1135, %v1135
        %v1648 = vmul.f32 %v1136, %v1136
        %v1649 = vmul.f32 %v1137, %v1137
        %v1650 = vmul.f32 %v1138, %v1138
        %v1651 = vmul.f32 %v1139, %v1139
        %v1652 = vmul.f32 %v1140, %v1140
        %v1653 = vmul.f32 %v1141, %v1141
        %v1654 = vmul.f32 %v1142, %v1142
        %v1655 = vmul.f32 %v1143, %v1143
        %v1656 = vmul.f32 %v1144, %v1144
        %v1657 = vmul.f32 %v1145, %v1145
        %v1658 = vmul.f32 %v1146, %v1146
        %v1659 = vmul.f32 %v1147, %v1147
        %v1660 = vmul.f32 %v1148, %v1148
        %v1661 = vmul.f32 %v1149, %v1149
        %v1662 = vmul.f32 %v1150, %v1150
        %v1663 = vmul.f32 %v1151, %v1151
        %v1664 = vmul.f32 %v1152, %v1152
        %v1665 = vmul.f32 %v1153, %v1153
        %v1666 = vmul.f32 %v1154, %v1154
        %v1667 = vmul.f32 %v1155, %v1155
        %v1668 = vmul.f32 %v1156, %v1156
        %v1669 = vmul.f32 %v1157, %v1157
        %v1670 = vadd.f32 %v1158, 0.0
        %v1671 = vadd.f32 %v1159, 0.0
        %v1672 = vadd.f32 %v1160, 0.0
        %v1673 = vadd.f32 %v1161, 0.0
        %v1674 = vadd.f32 %v1162, 0.0
        %v1675 = vadd.f32 %v1163, 0.0
        %v1676 = vadd.f32 %v1164, 0.0
        %v1677 = vadd.f32 %v1165, 0.0
        %v1678 = vadd.f32 %v1166, 0.0
        %v1679 = vadd.f32 %v1167, 0.0
        %v1680 = vadd.f32 %v1168, 0.0
        %v1681 = vadd.f32 %v1169, 0.0
        %v1682 = vadd.f32 %v1170, 0.0
        %v1683 = vadd.f32 %v1171, 0.0
        %v1684 = vadd.f32 %v1172, 0.0
        %v1685 = vadd.f32 %v1173, 0.0
        %v1686 = vadd.f32 %v1174, 0.0
        %v1687 = vadd.f32 %v1175, 0.0
        %v1688 = vadd.f32 %v1176, 0.0
        %v1689 = vadd.f32 %v1177, 0.0
        %v1690 = vadd.f32 %v1178, 0.0
        %v1691 = vadd.f32 %v1179, 0.0
        %v1692 = vadd.f32 %v1180, 0.0
        %v1693 = vadd.f32 %v1181, 0.0
        %v1694 = vadd.f32 %v1182, 0.0
        %v1695 = vadd.f32 %v1183, 0.0
        %v1696 = vadd.f32 %v1184, 0.0
        %v1697 = vadd.f32 %v1185, 0.0
        %v1698 = vadd.f32 %v1186, 0.0
        %v1699 = vadd.f32 %v1187, 0.0
        %v1700 = vadd.f32 %v1188, 0.0
        %v1701 = vadd.f32 %v1189, 0.0
        %v1702 = vadd.f32 %v1190, 0.0
        %v1703 = vadd.f32 %v1191, 0.0
        %v1704 = vadd.f32 %v1192, 0.0
        %v1705 = vadd.f32 %v1193, 0.0
        %v1706 = vadd.f32 %v1194, 0.0
        %v1707 = vadd.f32 %v1195, 0.0
        %v1708 = vadd.f32 %v1196, 0.0
        %v1709 = vadd.f32 %v1197, 0.0
        %v1710 = vadd.f32 %v1198, 0.0
        %v1711 = vadd.f32 %v1199, 0.0
        %v1712 = vadd.f32 %v1200, 0.0
        %v1713 = vadd.f32 %v1201, 0.0
        %v1714 = vadd.f32 %v1202, 0.0
        %v1715 = vadd.f32 %v1203, 0.0
        %v1716 = vadd.f32 %v1204, 0.0
        %v1717 = vadd.f32 %v1205, 0.0
        %v1718 = vadd.f32 %v1206, 0.0
        %v1719 = vadd.f32 %v1207, 0.0
        %v1720 = vadd.f32 %v1208, 0.0
        %v1721 = vadd.f32 %v1209, 0.0
        %v1722 = vadd.f32 %v1210, 0.0
        %v1723 = vadd.f32 %v1211, 0.0
        %v1724 = vadd.f32 %v1212, 0.0
        %v1725 = vadd.f32 %v1213, 0.0
        %v1726 = vadd.f32 %v1214, 0.0
        %v1727 = vadd.f32 %v1215, 0.0
        %v1728 = vadd.f32 %v1216, 0.0
        %v1729 = vadd.f32 %v1217, 0.0
        %v1730 = vadd.f32 %v1218, 0.0
        %v1731 = vadd.f32 %v1219, 0.0
        %v1732 = vadd.f32 %v1220, 0.0
        %v1733 = vadd.f32 %v1221, 0.0
        %v1734 = vadd.f32 %v1222, 0.0
        %v1735 = vadd.f32 %v1223, 0.0
        %v1736 = vadd.f32 %v1224, 0.0
        %v1737 = vadd.f32 %v1225, 0.0
        %v1738 = vadd.f32 %v1226, 0.0
        %v1739 = vadd.f32 %v1227, 0.0
        %v1740 = vadd.f32 %v1228, 0.0
        %v1741 = vadd.f32 %v1229, 0.0
        %v1742 = vadd.f32 %v1230, 0.0
        %v1743 = vadd.f32 %v1231, 0.0
        %v1744 = vadd.f32 %v1232, 0.0
        %v1745 = vadd.f32 %v1233, 0.0
        %v1746 = vadd.f32 %v1234, 0.0
        %v1747 = vadd.f32 %v1235, 0.0
        %v1748 = vadd.f32 %v1236, 0.0
        %v1749 = vadd.f32 %v1237, 0.0
        %v1750 = vadd.f32 %v1238, 0.0
        %v1751 = vadd.f32 %v1239, 0.0
        %v1752 = vadd.f32 %v1240, 0.0
        %v1753 = vadd.f32 %v1241, 0.0
        %v1754 = vadd.f32 %v1242, 0.0
        %v1755 = vadd.f32 %v1243, 0.0
        %v1756 = vadd.f32 %v1244, 0.0
        %v1757 = vadd.f32 %v1245, 0.0
        %v1758 = vadd.f32 %v1246, 0.0
        %v1759 = vadd.f32 %v1247, 0.0
        %v1760 = vadd.f32 %v1248, 0.0
        %v1761 = vadd.f32 %v1249, 0.0
        %v1762 = vadd.f32 %v1250, 0.0
        %v1763 = vadd.f32 %v1251, 0.0
        %v1764 = vadd.f32 %v1252, 0.0
        %v1765 = vadd.f32 %v1253, 0.0
        %v1766 = vadd.f32 %v1254, 0.0
        %v1767 = vadd.f32 %v1255, 0.0
        %v1768 = vadd.f32 %v1256, 0.0
        %v1769 = vadd.f32 %v1257, 0.0
        %v1770 = vadd.f32 %v1258, 0.0
        %v1771 = vadd.f32 %v1259, 0.0
        %v1772 = vadd.f32 %v1260, 0.0
        %v1773 = vadd.f32 %v1261, 0.0
        %v1774 = vadd.f32 %v1262, 0.0
        %v1775 = vadd.f32 %v1263, 0.0
        %v1776 = vadd.f32 %v1264, 0.0
        %v1777 = vadd.f32 %v1265, 0.0
        %v1778 = vadd.f32 %v1266, 0.0
        %v1779 = vadd.f32 %v1267, 0.0
        %v1780 = vadd.f32 %v1268, 0.0
        %v1781 = vadd.f32 %v1269, 0.0
        %v1782 = vadd.f32 %v1270, 0.0
        %v1783 = vadd.f32 %v1271, 0.0
        %v1784 = vadd.f32 %v1272, 0.0
        %v1785 = vadd.f32 %v1273, 0.0
        %v1786 = vadd.f32 %v1274, 0.0
        %v1787 = vadd.f32 %v1275, 0.0
        %v1788 = vadd.f32 %v1276, 0.0
        %v1789 = vadd.f32 %v1277, 0.0
        %v1790 = vadd.f32 %v1278, 0.0
        %v1791 = vadd.f32 %v1279, 0.0
        %v1792 = vadd.f32 %v1280, 0.0
        %v1793 = vadd.f32 %v1281, 0.0
        %v1794 = vadd.f32 %v1282, 0.0
        %v1795 = vadd.f32 %v1283, 0.0
        %v1796 = vadd.f32 %v1284, 0.0
        %v1797 = vadd.f32 %v1285, 0.0
        %v1798 = vadd.f32 %v1286, 0.0
        %v1799 = vadd.f32 %v1287, 0.0
        %v1800 = vadd.f32 %v1288, 0.0
        %v1801 = vadd.f32 %v1289, 0.0
        %v1802 = vadd.f32 %v1290, 0.0
        %v1803 = vadd.f32 %v1291, 0.0
        %v1804 = vadd.f32 %v1292, 0.0
        %v1805 = vadd.f32 %v1293, 0.0
        %v1806 = vadd.f32 %v1294, 0.0
        %v1807 = vadd.f32 %v1295, 0.0
        %v1808 = vadd.f32 %v1296, 0.0
        %v1809 = vadd.f32 %v1297, 0.0
        %v1810 = vadd.f32 %v1298, 0.0
        %v1811 = vadd.f32 %v1299, 0.0
        %v1812 = vadd.f32 %v1300, 0.0
        %v1813 = vadd.f32 %v1301, 0.0
        %v1814 = vadd.f32 %v1302, 0.0
        %v1815 = vadd.f32 %v1303, 0.0
        %v1816 = vadd.f32 %v1304, 0.0
        %v1817 = vadd.f32 %v1305, 0.0
        %v1818 = vadd.f32 %v1306, 0.0
        %v1819 = vadd.f32 %v1307, 0.0
        %v1820 = vadd.f32 %v1308, 0.0
        %v1821 = vadd.f32 %v1309, 0.0
        %v1822 = vadd.f32 %v1310, 0.0
        %v1823 = vadd.f32 %v1311, 0.0
        %v1824 = vadd.f32 %v1312, 0.0
        %v1825 = vadd.f32 %v1313, 0.0
        %v1826 = vadd.f32 %v1314, 0.0
        %v1827 = vadd.f32 %v1315, 0.0
        %v1828 = vadd.f32 %v1316, 0.0
        %v1829 = vadd.f32 %v1317, 0.0
        %v1830 = vadd.f32 %v1318, 0.0
        %v1831 = vadd.f32 %v1319, 0.0
        %v1832 = vadd.f32 %v1320, 0.0
        %v1833 = vadd.f32 %v1321, 0.0
        %v1834 = vadd.f32 %v1322, 0.0
        %v1835 = vadd.f32 %v1323, 0.0
        %v1836 = vadd.f32 %v1324, 0.0
        %v1837 = vadd.f32 %v1325, 0.0
        %v1838 = vadd.f32 %v1326, 0.0
        %v1839 = vadd.f32 %v1327, 0.0
        %v1840 = vadd.f32 %v1328, 0.0
        %v1841 = vadd.f32 %v1329, 0.0
        %v1842 = vadd.f32 %v1330, 0.0
        %v1843 = vadd.f32 %v1331, 0.0
        %v1844 = vadd.f32 %v1332, 0.0
        %v1845 = vadd.f32 %v1333, 0.0
        %v1846 = vadd.f32 %v1334, 0.0
        %v1847 = vadd.f32 %v1335, 0.0
        %v1848 = vadd.f32 %v1336, 0.0
        %v1849 = vadd.f32 %v1337, 0.0
        %v1850 = vadd.f32 %v1338, 0.0
        %v1851 = vadd.f32 %v1339, 0.0
        %v1852 = vadd.f32 %v1340, 0.0
        %v1853 = vadd.f32 %v1341, 0.0
        %v1854 = vadd.f32 %v1342, 0.0
        %v1855 = vadd.f32 %v1343, 0.0
        %v1856 = vadd.f32 %v1344, 0.0
        %v1857 = vadd.f32 %v1345, 0.0
        %v1858 = vadd.f32 %v1346, 0.0
        %v1859 = vadd.f32 %v1347, 0.0
        %v1860 = vadd.f32 %v1348, 0.0
        %v1861 = vadd.f32 %v1349, 0.0
        %v1862 = vadd.f32 %v1350, 0.0
        %v1863 = vadd.f32 %v1351, 0.0
        %v1864 = vadd.f32 %v1352, 0.0
        %v1865 = vadd.f32 %v1353, 0.0
        %v1866 = vadd.f32 %v1354, 0.0
        %v1867 = vadd.f32 %v1355, 0.0
        %v1868 = vadd.f32 %v1356, 0.0
        %v1869 = vadd.f32 %v1357, 0.0
        %v1870 = vadd.f32 %v1358, 0.0
        %v1871 = vadd.f32 %v1359, 0.0
        %v1872 = vadd.f32 %v1360, 0.0
        %v1873 = vadd.f32 %v1361, 0.0
        %v1874 = vadd.f32 %v1362, 0.0
        %v1875 = vadd.f32 %v1363, 0.0
        %v1876 = vadd.f32 %v1364, 0.0
        %v1877 = vadd.f32 %v1365, 0.0
        %v1878 = vadd.f32 %v1366, 0.0
        %v1879 = vadd.f32 %v1367, 0.0
        %v1880 = vadd.f32 %v1368, 0.0
        %v1881 = vadd.f32 %v1369, 0.0
        %v1882 = vadd.f32 %v1370, 0.0
        %v1883 = vadd.f32 %v1371, 0.0
        %v1884 = vadd.f32 %v1372, 0.0
        %v1885 = vadd.f32 %v1373, 0.0
        %v1886 = vadd.f32 %v1374, 0.0
        %v1887 = vadd.f32 %v1375, 0.0
        %v1888 = vadd.f32 %v1376, 0.0
        %v1889 = vadd.f32 %v1377, 0.0
        %v1890 = vadd.f32 %v1378, 0.0
        %v1891 = vadd.f32 %v1379, 0.0
        %v1892 = vadd.f32 %v1380, 0.0
        %v1893 = vadd.f32 %v1381, 0.0
        %v1894 = vadd.f32 %v1382, 0.0
        %v1895 = vadd.f32 %v1383, 0.0
        %v1896 = vadd.f32 %v1384, 0.0
        %v1897 = vadd.f32 %v1385, 0.0
        %v1898 = vadd.f32 %v1386, 0.0
        %v1899 = vadd.f32 %v1387, 0.0
        %v1900 = vadd.f32 %v1388, 0.0
        %v1901 = vadd.f32 %v1389, 0.0
        %v1902 = vadd.f32 %v1390, 0.0
        %v1903 = vadd.f32 %v1391, 0.0
        %v1904 = vadd.f32 %v1392, 0.0
        %v1905 = vadd.f32 %v1393, 0.0
        %v1906 = vadd.f32 %v1394, 0.0
        %v1907 = vadd.f32 %v1395, 0.0
        %v1908 = vadd.f32 %v1396, 0.0
        %v1909 = vadd.f32 %v1397, 0.0
        %v1910 = vadd.f32 %v1398, 0.0
        %v1911 = vadd.f32 %v1399, 0.0
        %v1912 = vadd.f32 %v1400, 0.0
        %v1913 = vadd.f32 %v1401, 0.0
        %v1914 = vadd.f32 %v1402, 0.0
        %v1915 = vadd.f32 %v1403, 0.0
        %v1916 = vadd.f32 %v1404, 0.0
        %v1917 = vadd.f32 %v1405, 0.0
        %v1918 = vadd.f32 %v1406, 0.0
        %v1919 = vadd.f32 %v1407, 0.0
        %v1920 = vadd.f32 %v1408, 0.0
        %v1921 = vadd.f32 %v1409, 0.0
        %v1922 = vadd.f32 %v1410, 0.0
        %v1923 = vadd.f32 %v1411, 0.0
        %v1924 = vadd.f32 %v1412, 0.0
        %v1925 = vadd.f32 %v1413, 0.0
        %v1926 = vadd.f32 %v1414, 0.0
        %v1927 = vadd.f32 %v1415, 0.0
        %v1928 = vadd.f32 %v1416, 0.0
        %v1929 = vadd.f32 %v1417, 0.0
        %v1930 = vadd.f32 %v1418, 0.0
        %v1931 = vadd.f32 %v1419, 0.0
        %v1932 = vadd.f32 %v1420, 0.0
        %v1933 = vadd.f32 %v1421, 0.0
        %v1934 = vadd.f32 %v1422, 0.0
        %v1935 = vadd.f32 %v1423, 0.0
        %v1936 = vadd.f32 %v1424, 0.0
        %v1937 = vadd.f32 %v1425, 0.0
        %v1938 = vadd.f32 %v1426, 0.0
        %v1939 = vadd.f32 %v1427, 0.0
        %v1940 = vadd.f32 %v1428, 0.0
        %v1941 = vadd.f32 %v1429, 0.0
        %v1942 = vadd.f32 %v1430, 0.0
        %v1943 = vadd.f32 %v1431, 0.0
        %v1944 = vadd.f32 %v1432, 0.0
        %v1945 = vadd.f32 %v1433, 0.0
        %v1946 = vadd.f32 %v1434, 0.0
        %v1947 = vadd.f32 %v1435, 0.0
        %v1948 = vadd.f32 %v1436, 0.0
        %v1949 = vadd.f32 %v1437, 0.0
        %v1950 = vadd.f32 %v1438, 0.0
        %v1951 = vadd.f32 %v1439, 0.0
        %v1952 = vadd.f32 %v1440, 0.0
        %v1953 = vadd.f32 %v1441, 0.0
        %v1954 = vadd.f32 %v1442, 0.0
        %v1955 = vadd.f32 %v1443, 0.0
        %v1956 = vadd.f32 %v1444, 0.0
        %v1957 = vadd.f32 %v1445, 0.0
        %v1958 = vadd.f32 %v1446, 0.0
        %v1959 = vadd.f32 %v1447, 0.0
        %v1960 = vadd.f32 %v1448, 0.0
        %v1961 = vadd.f32 %v1449, 0.0
        %v1962 = vadd.f32 %v1450, 0.0
        %v1963 = vadd.f32 %v1451, 0.0
        %v1964 = vadd.f32 %v1452, 0.0
        %v1965 = vadd.f32 %v1453, 0.0
        %v1966 = vadd.f32 %v1454, 0.0
        %v1967 = vadd.f32 %v1455, 0.0
        %v1968 = vadd.f32 %v1456, 0.0
        %v1969 = vadd.f32 %v1457, 0.0
        %v1970 = vadd.f32 %v1458, 0.0
        %v1971 = vadd.f32 %v1459, 0.0
        %v1972 = vadd.f32 %v1460, 0.0
        %v1973 = vadd.f32 %v1461, 0.0
        %v1974 = vadd.f32 %v1462, 0.0
        %v1975 = vadd.f32 %v1463, 0.0
        %v1976 = vadd.f32 %v1464, 0.0
        %v1977 = vadd.f32 %v1465, 0.0
        %v1978 = vadd.f32 %v1466, 0.0
        %v1979 = vadd.f32 %v1467, 0.0
        %v1980 = vadd.f32 %v1468, 0.0
        %v1981 = vadd.f32 %v1469, 0.0
        %v1982 = vadd.f32 %v1470, 0.0
        %v1983 = vadd.f32 %v1471, 0.0
        %v1984 = vadd.f32 %v1472, 0.0
        %v1985 = vadd.f32 %v1473, 0.0
        %v1986 = vadd.f32 %v1474, 0.0
        %v1987 = vadd.f32 %v1475, 0.0
        %v1988 = vadd.f32 %v1476, 0.0
        %v1989 = vadd.f32 %v1477, 0.0
        %v1990 = vadd.f32 %v1478, 0.0
        %v1991 = vadd.f32 %v1479, 0.0
        %v1992 = vadd.f32 %v1480, 0.0
        %v1993 = vadd.f32 %v1481, 0.0
        %v1994 = vadd.f32 %v1482, 0.0
        %v1995 = vadd.f32 %v1483, 0.0
        %v1996 = vadd.f32 %v1484, 0.0
        %v1997 = vadd.f32 %v1485, 0.0
        %v1998 = vadd.f32 %v1486, 0.0
        %v1999 = vadd.f32 %v1487, 0.0
        %v2000 = vadd.f32 %v1488, 0.0
        %v2001 = vadd.f32 %v1489, 0.0
        %v2002 = vadd.f32 %v1490, 0.0
        %v2003 = vadd.f32 %v1491, 0.0
        %v2004 = vadd.f32 %v1492, 0.0
        %v2005 = vadd.f32 %v1493, 0.0
        %v2006 = vadd.f32 %v1494, 0.0
        %v2007 = vadd.f32 %v1495, 0.0
        %v2008 = vadd.f32 %v1496, 0.0
        %v2009 = vadd.f32 %v1497, 0.0
        %v2010 = vadd.f32 %v1498, 0.0
        %v2011 = vadd.f32 %v1499, 0.0
        %v2012 = vadd.f32 %v1500, 0.0
        %v2013 = vadd.f32 %v1501, 0.0
        %v2014 = vadd.f32 %v1502, 0.0
        %v2015 = vadd.f32 %v1503, 0.0
        %v2016 = vadd.f32 %v1504, 0.0
        %v2017 = vadd.f32 %v1505, 0.0
        %v2018 = vadd.f32 %v1506, 0.0
        %v2019 = vadd.f32 %v1507, 0.0
        %v2020 = vadd.f32 %v1508, 0.0
        %v2021 = vadd.f32 %v1509, 0.0
        %v2022 = vadd.f32 %v1510, 0.0
        %v2023 = vadd.f32 %v1511, 0.0
        %v2024 = vadd.f32 %v1512, 0.0
        %v2025 = vadd.f32 %v1513, 0.0
        %v2026 = vadd.f32 %v1514, 0.0
        %v2027 = vadd.f32 %v1515, 0.0
        %v2028 = vadd.f32 %v1516, 0.0
        %v2029 = vadd.f32 %v1517, 0.0
        %v2030 = vadd.f32 %v1518, 0.0
        %v2031 = vadd.f32 %v1519, 0.0
        %v2032 = vadd.f32 %v1520, 0.0
        %v2033 = vadd.f32 %v1521, 0.0
        %v2034 = vadd.f32 %v1522, 0.0
        %v2035 = vadd.f32 %v1523, 0.0
        %v2036 = vadd.f32 %v1524, 0.0
        %v2037 = vadd.f32 %v1525, 0.0
        %v2038 = vadd.f32 %v1526, 0.0
        %v2039 = vadd.f32 %v1527, 0.0
        %v2040 = vadd.f32 %v1528, 0.0
        %v2041 = vadd.f32 %v1529, 0.0
        %v2042 = vadd.f32 %v1530, 0.0
        %v2043 = vadd.f32 %v1531, 0.0
        %v2044 = vadd.f32 %v1532, 0.0
        %v2045 = vadd.f32 %v1533, 0.0
        %v2046 = vadd.f32 %v1534, 0.0
        %v2047 = vadd.f32 %v1535, 0.0
        %v2048 = vadd.f32 %v1536, 0.0
        %v2049 = vadd.f32 %v1537, 0.0
        %v2050 = vadd.f32 %v1538, 0.0
        %v2051 = vadd.f32 %v1539, 0.0
        %v2052 = vadd.f32 %v1540, 0.0
        %v2053 = vadd.f32 %v1541, 0.0
        %v2054 = vadd.f32 %v1542, 0.0
        %v2055 = vadd.f32 %v1543, 0.0
        %v2056 = vadd.f32 %v1544, 0.0
        %v2057 = vadd.f32 %v1545, 0.0
        %v2058 = vadd.f32 %v1546, 0.0
        %v2059 = vadd.f32 %v1547, 0.0
        %v2060 = vadd.f32 %v1548, 0.0
        %v2061 = vadd.f32 %v1549, 0.0
        %v2062 = vadd.f32 %v1550, 0.0
        %v2063 = vadd.f32 %v1551, 0.0
        %v2064 = vadd.f32 %v1552, 0.0
        %v2065 = vadd.f32 %v1553, 0.0
        %v2066 = vadd.f32 %v1554, 0.0
        %v2067 = vadd.f32 %v1555, 0.0
        %v2068 = vadd.f32 %v1556, 0.0
        %v2069 = vadd.f32 %v1557, 0.0
        %v2070 = vadd.f32 %v1558, 0.0
        %v2071 = vadd.f32 %v1559, 0.0
        %v2072 = vadd.f32 %v1560, 0.0
        %v2073 = vadd.f32 %v1561, 0.0
        %v2074 = vadd.f32 %v1562, 0.0
        %v2075 = vadd.f32 %v1563, 0.0
        %v2076 = vadd.f32 %v1564, 0.0
        %v2077 = vadd.f32 %v1565, 0.0
        %v2078 = vadd.f32 %v1566, 0.0
        %v2079 = vadd.f32 %v1567, 0.0
        %v2080 = vadd.f32 %v1568, 0.0
        %v2081 = vadd.f32 %v1569, 0.0
        %v2082 = vadd.f32 %v1570, 0.0
        %v2083 = vadd.f32 %v1571, 0.0
        %v2084 = vadd.f32 %v1572, 0.0
        %v2085 = vadd.f32 %v1573, 0.0
        %v2086 = vadd.f32 %v1574, 0.0
        %v2087 = vadd.f32 %v1575, 0.0
        %v2088 = vadd.f32 %v1576, 0.0
        %v2089 = vadd.f32 %v1577, 0.0
        %v2090 = vadd.f32 %v1578, 0.0
        %v2091 = vadd.f32 %v1579, 0.0
        %v2092 = vadd.f32 %v1580, 0.0
        %v2093 = vadd.f32 %v1581, 0.0
        %v2094 = vadd.f32 %v1582, 0.0
        %v2095 = vadd.f32 %v1583, 0.0
        %v2096 = vadd.f32 %v1584, 0.0
        %v2097 = vadd.f32 %v1585, 0.0
        %v2098 = vadd.f32 %v1586, 0.0
        %v2099 = vadd.f32 %v1587, 0.0
        %v2100 = vadd.f32 %v1588, 0.0
        %v2101 = vadd.f32 %v1589, 0.0
        %v2102 = vadd.f32 %v1590, 0.0
        %v2103 = vadd.f32 %v1591, 0.0
        %v2104 = vadd.f32 %v1592, 0.0
        %v2105 = vadd.f32 %v1593, 0.0
        %v2106 = vadd.f32 %v1594, 0.0
        %v2107 = vadd.f32 %v1595, 0.0
        %v2108 = vadd.f32 %v1596, 0.0
        %v2109 = vadd.f32 %v1597, 0.0
        %v2110 = vadd.f32 %v1598, 0.0
        %v2111 = vadd.f32 %v1599, 0.0
        %v2112 = vadd.f32 %v1600, 0.0
        %v2113 = vadd.f32 %v1601, 0.0
        %v2114 = vadd.f32 %v1602, 0.0
        %v2115 = vadd.f32 %v1603, 0.0
        %v2116 = vadd.f32 %v1604, 0.0
        %v2117 = vadd.f32 %v1605, 0.0
        %v2118 = vadd.f32 %v1606, 0.0
        %v2119 = vadd.f32 %v1607, 0.0
        %v2120 = vadd.f32 %v1608, 0.0
        %v2121 = vadd.f32 %v1609, 0.0
        %v2122 = vadd.f32 %v1610, 0.0
        %v2123 = vadd.f32 %v1611, 0.0
        %v2124 = vadd.f32 %v1612, 0.0
        %v2125 = vadd.f32 %v1613, 0.0
        %v2126 = vadd.f32 %v1614, 0.0
        %v2127 = vadd.f32 %v1615, 0.0
        %v2128 = vadd.f32 %v1616, 0.0
        %v2129 = vadd.f32 %v1617, 0.0
        %v2130 = vadd.f32 %v1618, 0.0
        %v2131 = vadd.f32 %v1619, 0.0
        %v2132 = vadd.f32 %v1620, 0.0
        %v2133 = vadd.f32 %v1621, 0.0
        %v2134 = vadd.f32 %v1622, 0.0
        %v2135 = vadd.f32 %v1623, 0.0
        %v2136 = vadd.f32 %v1624, 0.0
        %v2137 = vadd.f32 %v1625, 0.0
        %v2138 = vadd.f32 %v1626, 0.0
        %v2139 = vadd.f32 %v1627, 0.0
        %v2140 = vadd.f32 %v1628, 0.0
        %v2141 = vadd.f32 %v1629, 0.0
        %v2142 = vadd.f32 %v1630, 0.0
        %v2143 = vadd.f32 %v1631, 0.0
        %v2144 = vadd.f32 %v1632, 0.0
        %v2145 = vadd.f32 %v1633, 0.0
        %v2146 = vadd.f32 %v1634, 0.0
        %v2147 = vadd.f32 %v1635, 0.0
        %v2148 = vadd.f32 %v1636, 0.0
        %v2149 = vadd.f32 %v1637, 0.0
        %v2150 = vadd.f32 %v1638, 0.0
        %v2151 = vadd.f32 %v1639, 0.0
        %v2152 = vadd.f32 %v1640, 0.0
        %v2153 = vadd.f32 %v1641, 0.0
        %v2154 = vadd.f32 %v1642, 0.0
        %v2155 = vadd.f32 %v1643, 0.0
        %v2156 = vadd.f32 %v1644, 0.0
        %v2157 = vadd.f32 %v1645, 0.0
        %v2158 = vadd.f32 %v1646, 0.0
        %v2159 = vadd.f32 %v1647, 0.0
        %v2160 = vadd.f32 %v1648, 0.0
        %v2161 = vadd.f32 %v1649, 0.0
        %v2162 = vadd.f32 %v1650, 0.0
        %v2163 = vadd.f32 %v1651, 0.0
        %v2164 = vadd.f32 %v1652, 0.0
        %v2165 = vadd.f32 %v1653, 0.0
        %v2166 = vadd.f32 %v1654, 0.0
        %v2167 = vadd.f32 %v1655, 0.0
        %v2168 = vadd.f32 %v1656, 0.0
        %v2169 = vadd.f32 %v1657, 0.0
        %v2170 = vadd.f32 %v1658, 0.0
        %v2171 = vadd.f32 %v1659, 0.0
        %v2172 = vadd.f32 %v1660, 0.0
        %v2173 = vadd.f32 %v1661, 0.0
        %v2174 = vadd.f32 %v1662, 0.0
        %v2175 = vadd.f32 %v1663, 0.0
        %v2176 = vadd.f32 %v1664, 0.0
        %v2177 = vadd.f32 %v1665, 0.0
        %v2178 = vadd.f32 %v1666, 0.0
        %v2179 = vadd.f32 %v1667, 0.0
        %v2180 = vadd.f32 %v1668, 0.0
        %v2181 = vadd.f32 %v1669, 0.0
        %2182 = vset.pattern.permute.xlu0 1
        %2183 = vperm.xlu0 %2182, %v230
        %v2184 = vpop.permute.xlu0 %2183
        %2186 = vset.pattern.permute.xlu0 1
        %2187 = vperm.xlu0 %2186, %v231
        %v2188 = vpop.permute.xlu0 %2187
        %2190 = vset.pattern.permute.xlu0 1
        %2191 = vperm.xlu0 %2190, %v232
        %v2192 = vpop.permute.xlu0 %2191
        %2194 = vset.pattern.permute.xlu0 1
        %2195 = vperm.xlu0 %2194, %v233
        %v2196 = vpop.permute.xlu0 %2195
        %2198 = vset.pattern.permute.xlu0 1
        %2199 = vperm.xlu0 %2198, %v234
        %v2200 = vpop.permute.xlu0 %2199
        %2202 = vset.pattern.permute.xlu0 1
        %2203 = vperm.xlu0 %2202, %v235
        %v2204 = vpop.permute.xlu0 %2203
        %2206 = vset.pattern.permute.xlu0 1
        %2207 = vperm.xlu0 %2206, %v236
        %v2208 = vpop.permute.xlu0 %2207
        %2210 = vset.pattern.permute.xlu0 1
        %2211 = vperm.xlu0 %2210, %v237
        %v2212 = vpop.permute.xlu0 %2211
        %2214 = vset.pattern.permute.xlu0 1
        %2215 = vperm.xlu0 %2214, %v238
        %v2216 = vpop.permute.xlu0 %2215
        %2218 = vset.pattern.permute.xlu0 1
        %2219 = vperm.xlu0 %2218, %v239
        %v2220 = vpop.permute.xlu0 %2219
        %2222 = vset.pattern.permute.xlu0 1
        %2223 = vperm.xlu0 %2222, %v240
        %v2224 = vpop.permute.xlu0 %2223
        %2226 = vset.pattern.permute.xlu0 1
        %2227 = vperm.xlu0 %2226, %v241
        %v2228 = vpop.permute.xlu0 %2227
        %2230 = vset.pattern.permute.xlu0 1
        %2231 = vperm.xlu0 %2230, %v242
        %v2232 = vpop.permute.xlu0 %2231
        %2234 = vset.pattern.permute.xlu0 1
        %2235 = vperm.xlu0 %2234, %v243
        %v2236 = vpop.permute.xlu0 %2235
        %2238 = vset.pattern.permute.xlu0 1
        %2239 = vperm.xlu0 %2238, %v244
        %v2240 = vpop.permute.xlu0 %2239
        %2242 = vset.pattern.permute.xlu0 1
        %2243 = vperm.xlu0 %2242, %v245
        %v2244 = vpop.permute.xlu0 %2243
        %2246 = vset.pattern.permute.xlu0 1
        %2247 = vperm.xlu0 %2246, %v246
        %v2248 = vpop.permute.xlu0 %2247
        %2250 = vset.pattern.permute.xlu0 1
        %2251 = vperm.xlu0 %2250, %v247
        %v2252 = vpop.permute.xlu0 %2251
        %2254 = vset.pattern.permute.xlu0 1
        %2255 = vperm.xlu0 %2254, %v248
        %v2256 = vpop.permute.xlu0 %2255
        %2258 = vset.pattern.permute.xlu0 1
        %2259 = vperm.xlu0 %2258, %v249
        %v2260 = vpop.permute.xlu0 %2259
        %2262 = vset.pattern.permute.xlu0 1
        %2263 = vperm.xlu0 %2262, %v250
        %v2264 = vpop.permute.xlu0 %2263
        %2266 = vset.pattern.permute.xlu0 1
        %2267 = vperm.xlu0 %2266, %v251
        %v2268 = vpop.permute.xlu0 %2267
        %2270 = vset.pattern.permute.xlu0 1
        %2271 = vperm.xlu0 %2270, %v252
        %v2272 = vpop.permute.xlu0 %2271
        %2274 = vset.pattern.permute.xlu0 1
        %2275 = vperm.xlu0 %2274, %v253
        %v2276 = vpop.permute.xlu0 %2275
        %2278 = vset.pattern.permute.xlu0 1
        %2279 = vperm.xlu0 %2278, %v254
        %v2280 = vpop.permute.xlu0 %2279
        %2282 = vset.pattern.permute.xlu0 1
        %2283 = vperm.xlu0 %2282, %v255
        %v2284 = vpop.permute.xlu0 %2283
        %2286 = vset.pattern.permute.xlu0 1
        %2287 = vperm.xlu0 %2286, %v256
        %v2288 = vpop.permute.xlu0 %2287
        %2290 = vset.pattern.permute.xlu0 1
        %2291 = vperm.xlu0 %2290, %v257
        %v2292 = vpop.permute.xlu0 %2291
        %2294 = vset.pattern.permute.xlu0 1
        %2295 = vperm.xlu0 %2294, %v258
        %v2296 = vpop.permute.xlu0 %2295
        %2298 = vset.pattern.permute.xlu0 1
        %2299 = vperm.xlu0 %2298, %v259
        %v2300 = vpop.permute.xlu0 %2299
        %2302 = vset.pattern.permute.xlu0 1
        %2303 = vperm.xlu0 %2302, %v260
        %v2304 = vpop.permute.xlu0 %2303
        %2306 = vset.pattern.permute.xlu0 1
        %2307 = vperm.xlu0 %2306, %v261
        %v2308 = vpop.permute.xlu0 %2307
        %2310 = vset.pattern.permute.xlu0 1
        %2311 = vperm.xlu0 %2310, %v262
        %v2312 = vpop.permute.xlu0 %2311
        %2314 = vset.pattern.permute.xlu0 1
        %2315 = vperm.xlu0 %2314, %v263
        %v2316 = vpop.permute.xlu0 %2315
        %2318 = vset.pattern.permute.xlu0 1
        %2319 = vperm.xlu0 %2318, %v264
        %v2320 = vpop.permute.xlu0 %2319
        %2322 = vset.pattern.permute.xlu0 1
        %2323 = vperm.xlu0 %2322, %v265
        %v2324 = vpop.permute.xlu0 %2323
        %2326 = vset.pattern.permute.xlu0 1
        %2327 = vperm.xlu0 %2326, %v266
        %v2328 = vpop.permute.xlu0 %2327
        %2330 = vset.pattern.permute.xlu0 1
        %2331 = vperm.xlu0 %2330, %v267
        %v2332 = vpop.permute.xlu0 %2331
        %2334 = vset.pattern.permute.xlu0 1
        %2335 = vperm.xlu0 %2334, %v268
        %v2336 = vpop.permute.xlu0 %2335
        %2338 = vset.pattern.permute.xlu0 1
        %2339 = vperm.xlu0 %2338, %v269
        %v2340 = vpop.permute.xlu0 %2339
        %2342 = vset.pattern.permute.xlu0 1
        %2343 = vperm.xlu0 %2342, %v270
        %v2344 = vpop.permute.xlu0 %2343
        %2346 = vset.pattern.permute.xlu0 1
        %2347 = vperm.xlu0 %2346, %v271
        %v2348 = vpop.permute.xlu0 %2347
        %2350 = vset.pattern.permute.xlu0 1
        %2351 = vperm.xlu0 %2350, %v272
        %v2352 = vpop.permute.xlu0 %2351
        %2354 = vset.pattern.permute.xlu0 1
        %2355 = vperm.xlu0 %2354, %v273
        %v2356 = vpop.permute.xlu0 %2355
        %2358 = vset.pattern.permute.xlu0 1
        %2359 = vperm.xlu0 %2358, %v274
        %v2360 = vpop.permute.xlu0 %2359
        %2362 = vset.pattern.permute.xlu0 1
        %2363 = vperm.xlu0 %2362, %v275
        %v2364 = vpop.permute.xlu0 %2363
        %2366 = vset.pattern.permute.xlu0 1
        %2367 = vperm.xlu0 %2366, %v276
        %v2368 = vpop.permute.xlu0 %2367
        %2370 = vset.pattern.permute.xlu0 1
        %2371 = vperm.xlu0 %2370, %v277
        %v2372 = vpop.permute.xlu0 %2371
        %2374 = vset.pattern.permute.xlu0 1
        %2375 = vperm.xlu0 %2374, %v278
        %v2376 = vpop.permute.xlu0 %2375
        %2378 = vset.pattern.permute.xlu0 1
        %2379 = vperm.xlu0 %2378, %v279
        %v2380 = vpop.permute.xlu0 %2379
        %2382 = vset.pattern.permute.xlu0 1
        %2383 = vperm.xlu0 %2382, %v280
        %v2384 = vpop.permute.xlu0 %2383
        %2386 = vset.pattern.permute.xlu0 1
        %2387 = vperm.xlu0 %2386, %v281
        %v2388 = vpop.permute.xlu0 %2387
        %2390 = vset.pattern.permute.xlu0 1
        %2391 = vperm.xlu0 %2390, %v282
        %v2392 = vpop.permute.xlu0 %2391
        %2394 = vset.pattern.permute.xlu0 1
        %2395 = vperm.xlu0 %2394, %v283
        %v2396 = vpop.permute.xlu0 %2395
        %2398 = vset.pattern.permute.xlu0 1
        %2399 = vperm.xlu0 %2398, %v284
        %v2400 = vpop.permute.xlu0 %2399
        %2402 = vset.pattern.permute.xlu0 1
        %2403 = vperm.xlu0 %2402, %v285
        %v2404 = vpop.permute.xlu0 %2403
        %2406 = vset.pattern.permute.xlu0 1
        %2407 = vperm.xlu0 %2406, %v286
        %v2408 = vpop.permute.xlu0 %2407
        %2410 = vset.pattern.permute.xlu0 1
        %2411 = vperm.xlu0 %2410, %v287
        %v2412 = vpop.permute.xlu0 %2411
        %2414 = vset.pattern.permute.xlu0 1
        %2415 = vperm.xlu0 %2414, %v288
        %v2416 = vpop.permute.xlu0 %2415
        %2418 = vset.pattern.permute.xlu0 1
        %2419 = vperm.xlu0 %2418, %v289
        %v2420 = vpop.permute.xlu0 %2419
        %2422 = vset.pattern.permute.xlu0 1
        %2423 = vperm.xlu0 %2422, %v290
        %v2424 = vpop.permute.xlu0 %2423
        %2426 = vset.pattern.permute.xlu0 1
        %2427 = vperm.xlu0 %2426, %v291
        %v2428 = vpop.permute.xlu0 %2427
        %2430 = vset.pattern.permute.xlu0 1
        %2431 = vperm.xlu0 %2430, %v292
        %v2432 = vpop.permute.xlu0 %2431
        %2434 = vset.pattern.permute.xlu0 1
        %2435 = vperm.xlu0 %2434, %v293
        %v2436 = vpop.permute.xlu0 %2435
        %v2438 = vlaneseq
        %v2439 = vshrl.u32 %v2438, 7
        %v2440 = vsub.s32 1, %v2439
        %v2441 = vrot.slane %v222, %v2440
        %v2442 = vlaneseq
        %v2443 = vshrl.u32 %v2442, 7
        %v2444 = vsub.s32 1, %v2443
        %v2445 = vrot.slane %v223, %v2444
        %v2446 = vlaneseq
        %v2447 = vshrl.u32 %v2446, 7
        %v2448 = vsub.s32 1, %v2447
        %v2449 = vrot.slane %v224, %v2448
        %v2450 = vlaneseq
        %v2451 = vshrl.u32 %v2450, 7
        %v2452 = vsub.s32 1, %v2451
        %v2453 = vrot.slane %v225, %v2452
        %v2454 = vlaneseq
        %v2455 = vshrl.u32 %v2454, 7
        %v2456 = vsub.s32 1, %v2455
        %v2457 = vrot.slane %v226, %v2456
        %v2458 = vlaneseq
        %v2459 = vshrl.u32 %v2458, 7
        %v2460 = vsub.s32 1, %v2459
        %v2461 = vrot.slane %v227, %v2460
        %v2462 = vlaneseq
        %v2463 = vshrl.u32 %v2462, 7
        %v2464 = vsub.s32 1, %v2463
        %v2465 = vrot.slane %v228, %v2464
        %v2466 = vlaneseq
        %v2467 = vshrl.u32 %v2466, 7
        %v2468 = vsub.s32 1, %v2467
        %v2469 = vrot.slane %v229, %v2468
        %v2470 = vsub.f32 %v2184, %v2441
        %v2471 = vsub.f32 %v2184, %v2445
        %v2472 = vsub.f32 %v2184, %v2449
        %v2473 = vsub.f32 %v2184, %v2453
        %v2474 = vsub.f32 %v2184, %v2457
        %v2475 = vsub.f32 %v2184, %v2461
        %v2476 = vsub.f32 %v2184, %v2465
        %v2477 = vsub.f32 %v2184, %v2469
        %v2478 = vsub.f32 %v2188, %v2441
        %v2479 = vsub.f32 %v2188, %v2445
        %v2480 = vsub.f32 %v2188, %v2449
        %v2481 = vsub.f32 %v2188, %v2453
        %v2482 = vsub.f32 %v2188, %v2457
        %v2483 = vsub.f32 %v2188, %v2461
        %v2484 = vsub.f32 %v2188, %v2465
        %v2485 = vsub.f32 %v2188, %v2469
        %v2486 = vsub.f32 %v2192, %v2441
        %v2487 = vsub.f32 %v2192, %v2445
        %v2488 = vsub.f32 %v2192, %v2449
        %v2489 = vsub.f32 %v2192, %v2453
        %v2490 = vsub.f32 %v2192, %v2457
        %v2491 = vsub.f32 %v2192, %v2461
        %v2492 = vsub.f32 %v2192, %v2465
        %v2493 = vsub.f32 %v2192, %v2469
        %v2494 = vsub.f32 %v2196, %v2441
        %v2495 = vsub.f32 %v2196, %v2445
        %v2496 = vsub.f32 %v2196, %v2449
        %v2497 = vsub.f32 %v2196, %v2453
        %v2498 = vsub.f32 %v2196, %v2457
        %v2499 = vsub.f32 %v2196, %v2461
        %v2500 = vsub.f32 %v2196, %v2465
        %v2501 = vsub.f32 %v2196, %v2469
        %v2502 = vsub.f32 %v2200, %v2441
        %v2503 = vsub.f32 %v2200, %v2445
        %v2504 = vsub.f32 %v2200, %v2449
        %v2505 = vsub.f32 %v2200, %v2453
        %v2506 = vsub.f32 %v2200, %v2457
        %v2507 = vsub.f32 %v2200, %v2461
        %v2508 = vsub.f32 %v2200, %v2465
        %v2509 = vsub.f32 %v2200, %v2469
        %v2510 = vsub.f32 %v2204, %v2441
        %v2511 = vsub.f32 %v2204, %v2445
        %v2512 = vsub.f32 %v2204, %v2449
        %v2513 = vsub.f32 %v2204, %v2453
        %v2514 = vsub.f32 %v2204, %v2457
        %v2515 = vsub.f32 %v2204, %v2461
        %v2516 = vsub.f32 %v2204, %v2465
        %v2517 = vsub.f32 %v2204, %v2469
        %v2518 = vsub.f32 %v2208, %v2441
        %v2519 = vsub.f32 %v2208, %v2445
        %v2520 = vsub.f32 %v2208, %v2449
        %v2521 = vsub.f32 %v2208, %v2453
        %v2522 = vsub.f32 %v2208, %v2457
        %v2523 = vsub.f32 %v2208, %v2461
        %v2524 = vsub.f32 %v2208, %v2465
        %v2525 = vsub.f32 %v2208, %v2469
        %v2526 = vsub.f32 %v2212, %v2441
        %v2527 = vsub.f32 %v2212, %v2445
        %v2528 = vsub.f32 %v2212, %v2449
        %v2529 = vsub.f32 %v2212, %v2453
        %v2530 = vsub.f32 %v2212, %v2457
        %v2531 = vsub.f32 %v2212, %v2461
        %v2532 = vsub.f32 %v2212, %v2465
        %v2533 = vsub.f32 %v2212, %v2469
        %v2534 = vsub.f32 %v2216, %v2441
        %v2535 = vsub.f32 %v2216, %v2445
        %v2536 = vsub.f32 %v2216, %v2449
        %v2537 = vsub.f32 %v2216, %v2453
        %v2538 = vsub.f32 %v2216, %v2457
        %v2539 = vsub.f32 %v2216, %v2461
        %v2540 = vsub.f32 %v2216, %v2465
        %v2541 = vsub.f32 %v2216, %v2469
        %v2542 = vsub.f32 %v2220, %v2441
        %v2543 = vsub.f32 %v2220, %v2445
        %v2544 = vsub.f32 %v2220, %v2449
        %v2545 = vsub.f32 %v2220, %v2453
        %v2546 = vsub.f32 %v2220, %v2457
        %v2547 = vsub.f32 %v2220, %v2461
        %v2548 = vsub.f32 %v2220, %v2465
        %v2549 = vsub.f32 %v2220, %v2469
        %v2550 = vsub.f32 %v2224, %v2441
        %v2551 = vsub.f32 %v2224, %v2445
        %v2552 = vsub.f32 %v2224, %v2449
        %v2553 = vsub.f32 %v2224, %v2453
        %v2554 = vsub.f32 %v2224, %v2457
        %v2555 = vsub.f32 %v2224, %v2461
        %v2556 = vsub.f32 %v2224, %v2465
        %v2557 = vsub.f32 %v2224, %v2469
        %v2558 = vsub.f32 %v2228, %v2441
        %v2559 = vsub.f32 %v2228, %v2445
        %v2560 = vsub.f32 %v2228, %v2449
        %v2561 = vsub.f32 %v2228, %v2453
        %v2562 = vsub.f32 %v2228, %v2457
        %v2563 = vsub.f32 %v2228, %v2461
        %v2564 = vsub.f32 %v2228, %v2465
        %v2565 = vsub.f32 %v2228, %v2469
        %v2566 = vsub.f32 %v2232, %v2441
        %v2567 = vsub.f32 %v2232, %v2445
        %v2568 = vsub.f32 %v2232, %v2449
        %v2569 = vsub.f32 %v2232, %v2453
        %v2570 = vsub.f32 %v2232, %v2457
        %v2571 = vsub.f32 %v2232, %v2461
        %v2572 = vsub.f32 %v2232, %v2465
        %v2573 = vsub.f32 %v2232, %v2469
        %v2574 = vsub.f32 %v2236, %v2441
        %v2575 = vsub.f32 %v2236, %v2445
        %v2576 = vsub.f32 %v2236, %v2449
        %v2577 = vsub.f32 %v2236, %v2453
        %v2578 = vsub.f32 %v2236, %v2457
        %v2579 = vsub.f32 %v2236, %v2461
        %v2580 = vsub.f32 %v2236, %v2465
        %v2581 = vsub.f32 %v2236, %v2469
        %v2582 = vsub.f32 %v2240, %v2441
        %v2583 = vsub.f32 %v2240, %v2445
        %v2584 = vsub.f32 %v2240, %v2449
        %v2585 = vsub.f32 %v2240, %v2453
        %v2586 = vsub.f32 %v2240, %v2457
        %v2587 = vsub.f32 %v2240, %v2461
        %v2588 = vsub.f32 %v2240, %v2465
        %v2589 = vsub.f32 %v2240, %v2469
        %v2590 = vsub.f32 %v2244, %v2441
        %v2591 = vsub.f32 %v2244, %v2445
        %v2592 = vsub.f32 %v2244, %v2449
        %v2593 = vsub.f32 %v2244, %v2453
        %v2594 = vsub.f32 %v2244, %v2457
        %v2595 = vsub.f32 %v2244, %v2461
        %v2596 = vsub.f32 %v2244, %v2465
        %v2597 = vsub.f32 %v2244, %v2469
        %v2598 = vsub.f32 %v2248, %v2441
        %v2599 = vsub.f32 %v2248, %v2445
        %v2600 = vsub.f32 %v2248, %v2449
        %v2601 = vsub.f32 %v2248, %v2453
        %v2602 = vsub.f32 %v2248, %v2457
        %v2603 = vsub.f32 %v2248, %v2461
        %v2604 = vsub.f32 %v2248, %v2465
        %v2605 = vsub.f32 %v2248, %v2469
        %v2606 = vsub.f32 %v2252, %v2441
        %v2607 = vsub.f32 %v2252, %v2445
        %v2608 = vsub.f32 %v2252, %v2449
        %v2609 = vsub.f32 %v2252, %v2453
        %v2610 = vsub.f32 %v2252, %v2457
        %v2611 = vsub.f32 %v2252, %v2461
        %v2612 = vsub.f32 %v2252, %v2465
        %v2613 = vsub.f32 %v2252, %v2469
        %v2614 = vsub.f32 %v2256, %v2441
        %v2615 = vsub.f32 %v2256, %v2445
        %v2616 = vsub.f32 %v2256, %v2449
        %v2617 = vsub.f32 %v2256, %v2453
        %v2618 = vsub.f32 %v2256, %v2457
        %v2619 = vsub.f32 %v2256, %v2461
        %v2620 = vsub.f32 %v2256, %v2465
        %v2621 = vsub.f32 %v2256, %v2469
        %v2622 = vsub.f32 %v2260, %v2441
        %v2623 = vsub.f32 %v2260, %v2445
        %v2624 = vsub.f32 %v2260, %v2449
        %v2625 = vsub.f32 %v2260, %v2453
        %v2626 = vsub.f32 %v2260, %v2457
        %v2627 = vsub.f32 %v2260, %v2461
        %v2628 = vsub.f32 %v2260, %v2465
        %v2629 = vsub.f32 %v2260, %v2469
        %v2630 = vsub.f32 %v2264, %v2441
        %v2631 = vsub.f32 %v2264, %v2445
        %v2632 = vsub.f32 %v2264, %v2449
        %v2633 = vsub.f32 %v2264, %v2453
        %v2634 = vsub.f32 %v2264, %v2457
        %v2635 = vsub.f32 %v2264, %v2461
        %v2636 = vsub.f32 %v2264, %v2465
        %v2637 = vsub.f32 %v2264, %v2469
        %v2638 = vsub.f32 %v2268, %v2441
        %v2639 = vsub.f32 %v2268, %v2445
        %v2640 = vsub.f32 %v2268, %v2449
        %v2641 = vsub.f32 %v2268, %v2453
        %v2642 = vsub.f32 %v2268, %v2457
        %v2643 = vsub.f32 %v2268, %v2461
        %v2644 = vsub.f32 %v2268, %v2465
        %v2645 = vsub.f32 %v2268, %v2469
        %v2646 = vsub.f32 %v2272, %v2441
        %v2647 = vsub.f32 %v2272, %v2445
        %v2648 = vsub.f32 %v2272, %v2449
        %v2649 = vsub.f32 %v2272, %v2453
        %v2650 = vsub.f32 %v2272, %v2457
        %v2651 = vsub.f32 %v2272, %v2461
        %v2652 = vsub.f32 %v2272, %v2465
        %v2653 = vsub.f32 %v2272, %v2469
        %v2654 = vsub.f32 %v2276, %v2441
        %v2655 = vsub.f32 %v2276, %v2445
        %v2656 = vsub.f32 %v2276, %v2449
        %v2657 = vsub.f32 %v2276, %v2453
        %v2658 = vsub.f32 %v2276, %v2457
        %v2659 = vsub.f32 %v2276, %v2461
        %v2660 = vsub.f32 %v2276, %v2465
        %v2661 = vsub.f32 %v2276, %v2469
        %v2662 = vsub.f32 %v2280, %v2441
        %v2663 = vsub.f32 %v2280, %v2445
        %v2664 = vsub.f32 %v2280, %v2449
        %v2665 = vsub.f32 %v2280, %v2453
        %v2666 = vsub.f32 %v2280, %v2457
        %v2667 = vsub.f32 %v2280, %v2461
        %v2668 = vsub.f32 %v2280, %v2465
        %v2669 = vsub.f32 %v2280, %v2469
        %v2670 = vsub.f32 %v2284, %v2441
        %v2671 = vsub.f32 %v2284, %v2445
        %v2672 = vsub.f32 %v2284, %v2449
        %v2673 = vsub.f32 %v2284, %v2453
        %v2674 = vsub.f32 %v2284, %v2457
        %v2675 = vsub.f32 %v2284, %v2461
        %v2676 = vsub.f32 %v2284, %v2465
        %v2677 = vsub.f32 %v2284, %v2469
        %v2678 = vsub.f32 %v2288, %v2441
        %v2679 = vsub.f32 %v2288, %v2445
        %v2680 = vsub.f32 %v2288, %v2449
        %v2681 = vsub.f32 %v2288, %v2453
        %v2682 = vsub.f32 %v2288, %v2457
        %v2683 = vsub.f32 %v2288, %v2461
        %v2684 = vsub.f32 %v2288, %v2465
        %v2685 = vsub.f32 %v2288, %v2469
        %v2686 = vsub.f32 %v2292, %v2441
        %v2687 = vsub.f32 %v2292, %v2445
        %v2688 = vsub.f32 %v2292, %v2449
        %v2689 = vsub.f32 %v2292, %v2453
        %v2690 = vsub.f32 %v2292, %v2457
        %v2691 = vsub.f32 %v2292, %v2461
        %v2692 = vsub.f32 %v2292, %v2465
        %v2693 = vsub.f32 %v2292, %v2469
        %v2694 = vsub.f32 %v2296, %v2441
        %v2695 = vsub.f32 %v2296, %v2445
        %v2696 = vsub.f32 %v2296, %v2449
        %v2697 = vsub.f32 %v2296, %v2453
        %v2698 = vsub.f32 %v2296, %v2457
        %v2699 = vsub.f32 %v2296, %v2461
        %v2700 = vsub.f32 %v2296, %v2465
        %v2701 = vsub.f32 %v2296, %v2469
        %v2702 = vsub.f32 %v2300, %v2441
        %v2703 = vsub.f32 %v2300, %v2445
        %v2704 = vsub.f32 %v2300, %v2449
        %v2705 = vsub.f32 %v2300, %v2453
        %v2706 = vsub.f32 %v2300, %v2457
        %v2707 = vsub.f32 %v2300, %v2461
        %v2708 = vsub.f32 %v2300, %v2465
        %v2709 = vsub.f32 %v2300, %v2469
        %v2710 = vsub.f32 %v2304, %v2441
        %v2711 = vsub.f32 %v2304, %v2445
        %v2712 = vsub.f32 %v2304, %v2449
        %v2713 = vsub.f32 %v2304, %v2453
        %v2714 = vsub.f32 %v2304, %v2457
        %v2715 = vsub.f32 %v2304, %v2461
        %v2716 = vsub.f32 %v2304, %v2465
        %v2717 = vsub.f32 %v2304, %v2469
        %v2718 = vsub.f32 %v2308, %v2441
        %v2719 = vsub.f32 %v2308, %v2445
        %v2720 = vsub.f32 %v2308, %v2449
        %v2721 = vsub.f32 %v2308, %v2453
        %v2722 = vsub.f32 %v2308, %v2457
        %v2723 = vsub.f32 %v2308, %v2461
        %v2724 = vsub.f32 %v2308, %v2465
        %v2725 = vsub.f32 %v2308, %v2469
        %v2726 = vsub.f32 %v2312, %v2441
        %v2727 = vsub.f32 %v2312, %v2445
        %v2728 = vsub.f32 %v2312, %v2449
        %v2729 = vsub.f32 %v2312, %v2453
        %v2730 = vsub.f32 %v2312, %v2457
        %v2731 = vsub.f32 %v2312, %v2461
        %v2732 = vsub.f32 %v2312, %v2465
        %v2733 = vsub.f32 %v2312, %v2469
        %v2734 = vsub.f32 %v2316, %v2441
        %v2735 = vsub.f32 %v2316, %v2445
        %v2736 = vsub.f32 %v2316, %v2449
        %v2737 = vsub.f32 %v2316, %v2453
        %v2738 = vsub.f32 %v2316, %v2457
        %v2739 = vsub.f32 %v2316, %v2461
        %v2740 = vsub.f32 %v2316, %v2465
        %v2741 = vsub.f32 %v2316, %v2469
        %v2742 = vsub.f32 %v2320, %v2441
        %v2743 = vsub.f32 %v2320, %v2445
        %v2744 = vsub.f32 %v2320, %v2449
        %v2745 = vsub.f32 %v2320, %v2453
        %v2746 = vsub.f32 %v2320, %v2457
        %v2747 = vsub.f32 %v2320, %v2461
        %v2748 = vsub.f32 %v2320, %v2465
        %v2749 = vsub.f32 %v2320, %v2469
        %v2750 = vsub.f32 %v2324, %v2441
        %v2751 = vsub.f32 %v2324, %v2445
        %v2752 = vsub.f32 %v2324, %v2449
        %v2753 = vsub.f32 %v2324, %v2453
        %v2754 = vsub.f32 %v2324, %v2457
        %v2755 = vsub.f32 %v2324, %v2461
        %v2756 = vsub.f32 %v2324, %v2465
        %v2757 = vsub.f32 %v2324, %v2469
        %v2758 = vsub.f32 %v2328, %v2441
        %v2759 = vsub.f32 %v2328, %v2445
        %v2760 = vsub.f32 %v2328, %v2449
        %v2761 = vsub.f32 %v2328, %v2453
        %v2762 = vsub.f32 %v2328, %v2457
        %v2763 = vsub.f32 %v2328, %v2461
        %v2764 = vsub.f32 %v2328, %v2465
        %v2765 = vsub.f32 %v2328, %v2469
        %v2766 = vsub.f32 %v2332, %v2441
        %v2767 = vsub.f32 %v2332, %v2445
        %v2768 = vsub.f32 %v2332, %v2449
        %v2769 = vsub.f32 %v2332, %v2453
        %v2770 = vsub.f32 %v2332, %v2457
        %v2771 = vsub.f32 %v2332, %v2461
        %v2772 = vsub.f32 %v2332, %v2465
        %v2773 = vsub.f32 %v2332, %v2469
        %v2774 = vsub.f32 %v2336, %v2441
        %v2775 = vsub.f32 %v2336, %v2445
        %v2776 = vsub.f32 %v2336, %v2449
        %v2777 = vsub.f32 %v2336, %v2453
        %v2778 = vsub.f32 %v2336, %v2457
        %v2779 = vsub.f32 %v2336, %v2461
        %v2780 = vsub.f32 %v2336, %v2465
        %v2781 = vsub.f32 %v2336, %v2469
        %v2782 = vsub.f32 %v2340, %v2441
        %v2783 = vsub.f32 %v2340, %v2445
        %v2784 = vsub.f32 %v2340, %v2449
        %v2785 = vsub.f32 %v2340, %v2453
        %v2786 = vsub.f32 %v2340, %v2457
        %v2787 = vsub.f32 %v2340, %v2461
        %v2788 = vsub.f32 %v2340, %v2465
        %v2789 = vsub.f32 %v2340, %v2469
        %v2790 = vsub.f32 %v2344, %v2441
        %v2791 = vsub.f32 %v2344, %v2445
        %v2792 = vsub.f32 %v2344, %v2449
        %v2793 = vsub.f32 %v2344, %v2453
        %v2794 = vsub.f32 %v2344, %v2457
        %v2795 = vsub.f32 %v2344, %v2461
        %v2796 = vsub.f32 %v2344, %v2465
        %v2797 = vsub.f32 %v2344, %v2469
        %v2798 = vsub.f32 %v2348, %v2441
        %v2799 = vsub.f32 %v2348, %v2445
        %v2800 = vsub.f32 %v2348, %v2449
        %v2801 = vsub.f32 %v2348, %v2453
        %v2802 = vsub.f32 %v2348, %v2457
        %v2803 = vsub.f32 %v2348, %v2461
        %v2804 = vsub.f32 %v2348, %v2465
        %v2805 = vsub.f32 %v2348, %v2469
        %v2806 = vsub.f32 %v2352, %v2441
        %v2807 = vsub.f32 %v2352, %v2445
        %v2808 = vsub.f32 %v2352, %v2449
        %v2809 = vsub.f32 %v2352, %v2453
        %v2810 = vsub.f32 %v2352, %v2457
        %v2811 = vsub.f32 %v2352, %v2461
        %v2812 = vsub.f32 %v2352, %v2465
        %v2813 = vsub.f32 %v2352, %v2469
        %v2814 = vsub.f32 %v2356, %v2441
        %v2815 = vsub.f32 %v2356, %v2445
        %v2816 = vsub.f32 %v2356, %v2449
        %v2817 = vsub.f32 %v2356, %v2453
        %v2818 = vsub.f32 %v2356, %v2457
        %v2819 = vsub.f32 %v2356, %v2461
        %v2820 = vsub.f32 %v2356, %v2465
        %v2821 = vsub.f32 %v2356, %v2469
        %v2822 = vsub.f32 %v2360, %v2441
        %v2823 = vsub.f32 %v2360, %v2445
        %v2824 = vsub.f32 %v2360, %v2449
        %v2825 = vsub.f32 %v2360, %v2453
        %v2826 = vsub.f32 %v2360, %v2457
        %v2827 = vsub.f32 %v2360, %v2461
        %v2828 = vsub.f32 %v2360, %v2465
        %v2829 = vsub.f32 %v2360, %v2469
        %v2830 = vsub.f32 %v2364, %v2441
        %v2831 = vsub.f32 %v2364, %v2445
        %v2832 = vsub.f32 %v2364, %v2449
        %v2833 = vsub.f32 %v2364, %v2453
        %v2834 = vsub.f32 %v2364, %v2457
        %v2835 = vsub.f32 %v2364, %v2461
        %v2836 = vsub.f32 %v2364, %v2465
        %v2837 = vsub.f32 %v2364, %v2469
        %v2838 = vsub.f32 %v2368, %v2441
        %v2839 = vsub.f32 %v2368, %v2445
        %v2840 = vsub.f32 %v2368, %v2449
        %v2841 = vsub.f32 %v2368, %v2453
        %v2842 = vsub.f32 %v2368, %v2457
        %v2843 = vsub.f32 %v2368, %v2461
        %v2844 = vsub.f32 %v2368, %v2465
        %v2845 = vsub.f32 %v2368, %v2469
        %v2846 = vsub.f32 %v2372, %v2441
        %v2847 = vsub.f32 %v2372, %v2445
        %v2848 = vsub.f32 %v2372, %v2449
        %v2849 = vsub.f32 %v2372, %v2453
        %v2850 = vsub.f32 %v2372, %v2457
        %v2851 = vsub.f32 %v2372, %v2461
        %v2852 = vsub.f32 %v2372, %v2465
        %v2853 = vsub.f32 %v2372, %v2469
        %v2854 = vsub.f32 %v2376, %v2441
        %v2855 = vsub.f32 %v2376, %v2445
        %v2856 = vsub.f32 %v2376, %v2449
        %v2857 = vsub.f32 %v2376, %v2453
        %v2858 = vsub.f32 %v2376, %v2457
        %v2859 = vsub.f32 %v2376, %v2461
        %v2860 = vsub.f32 %v2376, %v2465
        %v2861 = vsub.f32 %v2376, %v2469
        %v2862 = vsub.f32 %v2380, %v2441
        %v2863 = vsub.f32 %v2380, %v2445
        %v2864 = vsub.f32 %v2380, %v2449
        %v2865 = vsub.f32 %v2380, %v2453
        %v2866 = vsub.f32 %v2380, %v2457
        %v2867 = vsub.f32 %v2380, %v2461
        %v2868 = vsub.f32 %v2380, %v2465
        %v2869 = vsub.f32 %v2380, %v2469
        %v2870 = vsub.f32 %v2384, %v2441
        %v2871 = vsub.f32 %v2384, %v2445
        %v2872 = vsub.f32 %v2384, %v2449
        %v2873 = vsub.f32 %v2384, %v2453
        %v2874 = vsub.f32 %v2384, %v2457
        %v2875 = vsub.f32 %v2384, %v2461
        %v2876 = vsub.f32 %v2384, %v2465
        %v2877 = vsub.f32 %v2384, %v2469
        %v2878 = vsub.f32 %v2388, %v2441
        %v2879 = vsub.f32 %v2388, %v2445
        %v2880 = vsub.f32 %v2388, %v2449
        %v2881 = vsub.f32 %v2388, %v2453
        %v2882 = vsub.f32 %v2388, %v2457
        %v2883 = vsub.f32 %v2388, %v2461
        %v2884 = vsub.f32 %v2388, %v2465
        %v2885 = vsub.f32 %v2388, %v2469
        %v2886 = vsub.f32 %v2392, %v2441
        %v2887 = vsub.f32 %v2392, %v2445
        %v2888 = vsub.f32 %v2392, %v2449
        %v2889 = vsub.f32 %v2392, %v2453
        %v2890 = vsub.f32 %v2392, %v2457
        %v2891 = vsub.f32 %v2392, %v2461
        %v2892 = vsub.f32 %v2392, %v2465
        %v2893 = vsub.f32 %v2392, %v2469
        %v2894 = vsub.f32 %v2396, %v2441
        %v2895 = vsub.f32 %v2396, %v2445
        %v2896 = vsub.f32 %v2396, %v2449
        %v2897 = vsub.f32 %v2396, %v2453
        %v2898 = vsub.f32 %v2396, %v2457
        %v2899 = vsub.f32 %v2396, %v2461
        %v2900 = vsub.f32 %v2396, %v2465
        %v2901 = vsub.f32 %v2396, %v2469
        %v2902 = vsub.f32 %v2400, %v2441
        %v2903 = vsub.f32 %v2400, %v2445
        %v2904 = vsub.f32 %v2400, %v2449
        %v2905 = vsub.f32 %v2400, %v2453
        %v2906 = vsub.f32 %v2400, %v2457
        %v2907 = vsub.f32 %v2400, %v2461
        %v2908 = vsub.f32 %v2400, %v2465
        %v2909 = vsub.f32 %v2400, %v2469
        %v2910 = vsub.f32 %v2404, %v2441
        %v2911 = vsub.f32 %v2404, %v2445
        %v2912 = vsub.f32 %v2404, %v2449
        %v2913 = vsub.f32 %v2404, %v2453
        %v2914 = vsub.f32 %v2404, %v2457
        %v2915 = vsub.f32 %v2404, %v2461
        %v2916 = vsub.f32 %v2404, %v2465
        %v2917 = vsub.f32 %v2404, %v2469
        %v2918 = vsub.f32 %v2408, %v2441
        %v2919 = vsub.f32 %v2408, %v2445
        %v2920 = vsub.f32 %v2408, %v2449
        %v2921 = vsub.f32 %v2408, %v2453
        %v2922 = vsub.f32 %v2408, %v2457
        %v2923 = vsub.f32 %v2408, %v2461
        %v2924 = vsub.f32 %v2408, %v2465
        %v2925 = vsub.f32 %v2408, %v2469
        %v2926 = vsub.f32 %v2412, %v2441
        %v2927 = vsub.f32 %v2412, %v2445
        %v2928 = vsub.f32 %v2412, %v2449
        %v2929 = vsub.f32 %v2412, %v2453
        %v2930 = vsub.f32 %v2412, %v2457
        %v2931 = vsub.f32 %v2412, %v2461
        %v2932 = vsub.f32 %v2412, %v2465
        %v2933 = vsub.f32 %v2412, %v2469
        %v2934 = vsub.f32 %v2416, %v2441
        %v2935 = vsub.f32 %v2416, %v2445
        %v2936 = vsub.f32 %v2416, %v2449
        %v2937 = vsub.f32 %v2416, %v2453
        %v2938 = vsub.f32 %v2416, %v2457
        %v2939 = vsub.f32 %v2416, %v2461
        %v2940 = vsub.f32 %v2416, %v2465
        %v2941 = vsub.f32 %v2416, %v2469
        %v2942 = vsub.f32 %v2420, %v2441
        %v2943 = vsub.f32 %v2420, %v2445
        %v2944 = vsub.f32 %v2420, %v2449
        %v2945 = vsub.f32 %v2420, %v2453
        %v2946 = vsub.f32 %v2420, %v2457
        %v2947 = vsub.f32 %v2420, %v2461
        %v2948 = vsub.f32 %v2420, %v2465
        %v2949 = vsub.f32 %v2420, %v2469
        %v2950 = vsub.f32 %v2424, %v2441
        %v2951 = vsub.f32 %v2424, %v2445
        %v2952 = vsub.f32 %v2424, %v2449
        %v2953 = vsub.f32 %v2424, %v2453
        %v2954 = vsub.f32 %v2424, %v2457
        %v2955 = vsub.f32 %v2424, %v2461
        %v2956 = vsub.f32 %v2424, %v2465
        %v2957 = vsub.f32 %v2424, %v2469
        %v2958 = vsub.f32 %v2428, %v2441
        %v2959 = vsub.f32 %v2428, %v2445
        %v2960 = vsub.f32 %v2428, %v2449
        %v2961 = vsub.f32 %v2428, %v2453
        %v2962 = vsub.f32 %v2428, %v2457
        %v2963 = vsub.f32 %v2428, %v2461
        %v2964 = vsub.f32 %v2428, %v2465
        %v2965 = vsub.f32 %v2428, %v2469
        %v2966 = vsub.f32 %v2432, %v2441
        %v2967 = vsub.f32 %v2432, %v2445
        %v2968 = vsub.f32 %v2432, %v2449
        %v2969 = vsub.f32 %v2432, %v2453
        %v2970 = vsub.f32 %v2432, %v2457
        %v2971 = vsub.f32 %v2432, %v2461
        %v2972 = vsub.f32 %v2432, %v2465
        %v2973 = vsub.f32 %v2432, %v2469
        %v2974 = vsub.f32 %v2436, %v2441
        %v2975 = vsub.f32 %v2436, %v2445
        %v2976 = vsub.f32 %v2436, %v2449
        %v2977 = vsub.f32 %v2436, %v2453
        %v2978 = vsub.f32 %v2436, %v2457
        %v2979 = vsub.f32 %v2436, %v2461
        %v2980 = vsub.f32 %v2436, %v2465
        %v2981 = vsub.f32 %v2436, %v2469
        %v2982 = vmul.f32 %v2470, %v2470
        %v2983 = vmul.f32 %v2471, %v2471
        %v2984 = vmul.f32 %v2472, %v2472
        %v2985 = vmul.f32 %v2473, %v2473
        %v2986 = vmul.f32 %v2474, %v2474
        %v2987 = vmul.f32 %v2475, %v2475
        %v2988 = vmul.f32 %v2476, %v2476
        %v2989 = vmul.f32 %v2477, %v2477
        %v2990 = vmul.f32 %v2478, %v2478
        %v2991 = vmul.f32 %v2479, %v2479
        %v2992 = vmul.f32 %v2480, %v2480
        %v2993 = vmul.f32 %v2481, %v2481
        %v2994 = vmul.f32 %v2482, %v2482
        %v2995 = vmul.f32 %v2483, %v2483
        %v2996 = vmul.f32 %v2484, %v2484
        %v2997 = vmul.f32 %v2485, %v2485
        %v2998 = vmul.f32 %v2486, %v2486
        %v2999 = vmul.f32 %v2487, %v2487
        %v3000 = vmul.f32 %v2488, %v2488
        %v3001 = vmul.f32 %v2489, %v2489
        %v3002 = vmul.f32 %v2490, %v2490
        %v3003 = vmul.f32 %v2491, %v2491
        %v3004 = vmul.f32 %v2492, %v2492
        %v3005 = vmul.f32 %v2493, %v2493
        %v3006 = vmul.f32 %v2494, %v2494
        %v3007 = vmul.f32 %v2495, %v2495
        %v3008 = vmul.f32 %v2496, %v2496
        %v3009 = vmul.f32 %v2497, %v2497
        %v3010 = vmul.f32 %v2498, %v2498
        %v3011 = vmul.f32 %v2499, %v2499
        %v3012 = vmul.f32 %v2500, %v2500
        %v3013 = vmul.f32 %v2501, %v2501
        %v3014 = vmul.f32 %v2502, %v2502
        %v3015 = vmul.f32 %v2503, %v2503
        %v3016 = vmul.f32 %v2504, %v2504
        %v3017 = vmul.f32 %v2505, %v2505
        %v3018 = vmul.f32 %v2506, %v2506
        %v3019 = vmul.f32 %v2507, %v2507
        %v3020 = vmul.f32 %v2508, %v2508
        %v3021 = vmul.f32 %v2509, %v2509
        %v3022 = vmul.f32 %v2510, %v2510
        %v3023 = vmul.f32 %v2511, %v2511
        %v3024 = vmul.f32 %v2512, %v2512
        %v3025 = vmul.f32 %v2513, %v2513
        %v3026 = vmul.f32 %v2514, %v2514
        %v3027 = vmul.f32 %v2515, %v2515
        %v3028 = vmul.f32 %v2516, %v2516
        %v3029 = vmul.f32 %v2517, %v2517
        %v3030 = vmul.f32 %v2518, %v2518
        %v3031 = vmul.f32 %v2519, %v2519
        %v3032 = vmul.f32 %v2520, %v2520
        %v3033 = vmul.f32 %v2521, %v2521
        %v3034 = vmul.f32 %v2522, %v2522
        %v3035 = vmul.f32 %v2523, %v2523
        %v3036 = vmul.f32 %v2524, %v2524
        %v3037 = vmul.f32 %v2525, %v2525
        %v3038 = vmul.f32 %v2526, %v2526
        %v3039 = vmul.f32 %v2527, %v2527
        %v3040 = vmul.f32 %v2528, %v2528
        %v3041 = vmul.f32 %v2529, %v2529
        %v3042 = vmul.f32 %v2530, %v2530
        %v3043 = vmul.f32 %v2531, %v2531
        %v3044 = vmul.f32 %v2532, %v2532
        %v3045 = vmul.f32 %v2533, %v2533
        %v3046 = vmul.f32 %v2534, %v2534
        %v3047 = vmul.f32 %v2535, %v2535
        %v3048 = vmul.f32 %v2536, %v2536
        %v3049 = vmul.f32 %v2537, %v2537
        %v3050 = vmul.f32 %v2538, %v2538
        %v3051 = vmul.f32 %v2539, %v2539
        %v3052 = vmul.f32 %v2540, %v2540
        %v3053 = vmul.f32 %v2541, %v2541
        %v3054 = vmul.f32 %v2542, %v2542
        %v3055 = vmul.f32 %v2543, %v2543
        %v3056 = vmul.f32 %v2544, %v2544
        %v3057 = vmul.f32 %v2545, %v2545
        %v3058 = vmul.f32 %v2546, %v2546
        %v3059 = vmul.f32 %v2547, %v2547
        %v3060 = vmul.f32 %v2548, %v2548
        %v3061 = vmul.f32 %v2549, %v2549
        %v3062 = vmul.f32 %v2550, %v2550
        %v3063 = vmul.f32 %v2551, %v2551
        %v3064 = vmul.f32 %v2552, %v2552
        %v3065 = vmul.f32 %v2553, %v2553
        %v3066 = vmul.f32 %v2554, %v2554
        %v3067 = vmul.f32 %v2555, %v2555
        %v3068 = vmul.f32 %v2556, %v2556
        %v3069 = vmul.f32 %v2557, %v2557
        %v3070 = vmul.f32 %v2558, %v2558
        %v3071 = vmul.f32 %v2559, %v2559
        %v3072 = vmul.f32 %v2560, %v2560
        %v3073 = vmul.f32 %v2561, %v2561
        %v3074 = vmul.f32 %v2562, %v2562
        %v3075 = vmul.f32 %v2563, %v2563
        %v3076 = vmul.f32 %v2564, %v2564
        %v3077 = vmul.f32 %v2565, %v2565
        %v3078 = vmul.f32 %v2566, %v2566
        %v3079 = vmul.f32 %v2567, %v2567
        %v3080 = vmul.f32 %v2568, %v2568
        %v3081 = vmul.f32 %v2569, %v2569
        %v3082 = vmul.f32 %v2570, %v2570
        %v3083 = vmul.f32 %v2571, %v2571
        %v3084 = vmul.f32 %v2572, %v2572
        %v3085 = vmul.f32 %v2573, %v2573
        %v3086 = vmul.f32 %v2574, %v2574
        %v3087 = vmul.f32 %v2575, %v2575
        %v3088 = vmul.f32 %v2576, %v2576
        %v3089 = vmul.f32 %v2577, %v2577
        %v3090 = vmul.f32 %v2578, %v2578
        %v3091 = vmul.f32 %v2579, %v2579
        %v3092 = vmul.f32 %v2580, %v2580
        %v3093 = vmul.f32 %v2581, %v2581
        %v3094 = vmul.f32 %v2582, %v2582
        %v3095 = vmul.f32 %v2583, %v2583
        %v3096 = vmul.f32 %v2584, %v2584
        %v3097 = vmul.f32 %v2585, %v2585
        %v3098 = vmul.f32 %v2586, %v2586
        %v3099 = vmul.f32 %v2587, %v2587
        %v3100 = vmul.f32 %v2588, %v2588
        %v3101 = vmul.f32 %v2589, %v2589
        %v3102 = vmul.f32 %v2590, %v2590
        %v3103 = vmul.f32 %v2591, %v2591
        %v3104 = vmul.f32 %v2592, %v2592
        %v3105 = vmul.f32 %v2593, %v2593
        %v3106 = vmul.f32 %v2594, %v2594
        %v3107 = vmul.f32 %v2595, %v2595
        %v3108 = vmul.f32 %v2596, %v2596
        %v3109 = vmul.f32 %v2597, %v2597
        %v3110 = vmul.f32 %v2598, %v2598
        %v3111 = vmul.f32 %v2599, %v2599
        %v3112 = vmul.f32 %v2600, %v2600
        %v3113 = vmul.f32 %v2601, %v2601
        %v3114 = vmul.f32 %v2602, %v2602
        %v3115 = vmul.f32 %v2603, %v2603
        %v3116 = vmul.f32 %v2604, %v2604
        %v3117 = vmul.f32 %v2605, %v2605
        %v3118 = vmul.f32 %v2606, %v2606
        %v3119 = vmul.f32 %v2607, %v2607
        %v3120 = vmul.f32 %v2608, %v2608
        %v3121 = vmul.f32 %v2609, %v2609
        %v3122 = vmul.f32 %v2610, %v2610
        %v3123 = vmul.f32 %v2611, %v2611
        %v3124 = vmul.f32 %v2612, %v2612
        %v3125 = vmul.f32 %v2613, %v2613
        %v3126 = vmul.f32 %v2614, %v2614
        %v3127 = vmul.f32 %v2615, %v2615
        %v3128 = vmul.f32 %v2616, %v2616
        %v3129 = vmul.f32 %v2617, %v2617
        %v3130 = vmul.f32 %v2618, %v2618
        %v3131 = vmul.f32 %v2619, %v2619
        %v3132 = vmul.f32 %v2620, %v2620
        %v3133 = vmul.f32 %v2621, %v2621
        %v3134 = vmul.f32 %v2622, %v2622
        %v3135 = vmul.f32 %v2623, %v2623
        %v3136 = vmul.f32 %v2624, %v2624
        %v3137 = vmul.f32 %v2625, %v2625
        %v3138 = vmul.f32 %v2626, %v2626
        %v3139 = vmul.f32 %v2627, %v2627
        %v3140 = vmul.f32 %v2628, %v2628
        %v3141 = vmul.f32 %v2629, %v2629
        %v3142 = vmul.f32 %v2630, %v2630
        %v3143 = vmul.f32 %v2631, %v2631
        %v3144 = vmul.f32 %v2632, %v2632
        %v3145 = vmul.f32 %v2633, %v2633
        %v3146 = vmul.f32 %v2634, %v2634
        %v3147 = vmul.f32 %v2635, %v2635
        %v3148 = vmul.f32 %v2636, %v2636
        %v3149 = vmul.f32 %v2637, %v2637
        %v3150 = vmul.f32 %v2638, %v2638
        %v3151 = vmul.f32 %v2639, %v2639
        %v3152 = vmul.f32 %v2640, %v2640
        %v3153 = vmul.f32 %v2641, %v2641
        %v3154 = vmul.f32 %v2642, %v2642
        %v3155 = vmul.f32 %v2643, %v2643
        %v3156 = vmul.f32 %v2644, %v2644
        %v3157 = vmul.f32 %v2645, %v2645
        %v3158 = vmul.f32 %v2646, %v2646
        %v3159 = vmul.f32 %v2647, %v2647
        %v3160 = vmul.f32 %v2648, %v2648
        %v3161 = vmul.f32 %v2649, %v2649
        %v3162 = vmul.f32 %v2650, %v2650
        %v3163 = vmul.f32 %v2651, %v2651
        %v3164 = vmul.f32 %v2652, %v2652
        %v3165 = vmul.f32 %v2653, %v2653
        %v3166 = vmul.f32 %v2654, %v2654
        %v3167 = vmul.f32 %v2655, %v2655
        %v3168 = vmul.f32 %v2656, %v2656
        %v3169 = vmul.f32 %v2657, %v2657
        %v3170 = vmul.f32 %v2658, %v2658
        %v3171 = vmul.f32 %v2659, %v2659
        %v3172 = vmul.f32 %v2660, %v2660
        %v3173 = vmul.f32 %v2661, %v2661
        %v3174 = vmul.f32 %v2662, %v2662
        %v3175 = vmul.f32 %v2663, %v2663
        %v3176 = vmul.f32 %v2664, %v2664
        %v3177 = vmul.f32 %v2665, %v2665
        %v3178 = vmul.f32 %v2666, %v2666
        %v3179 = vmul.f32 %v2667, %v2667
        %v3180 = vmul.f32 %v2668, %v2668
        %v3181 = vmul.f32 %v2669, %v2669
        %v3182 = vmul.f32 %v2670, %v2670
        %v3183 = vmul.f32 %v2671, %v2671
        %v3184 = vmul.f32 %v2672, %v2672
        %v3185 = vmul.f32 %v2673, %v2673
        %v3186 = vmul.f32 %v2674, %v2674
        %v3187 = vmul.f32 %v2675, %v2675
        %v3188 = vmul.f32 %v2676, %v2676
        %v3189 = vmul.f32 %v2677, %v2677
        %v3190 = vmul.f32 %v2678, %v2678
        %v3191 = vmul.f32 %v2679, %v2679
        %v3192 = vmul.f32 %v2680, %v2680
        %v3193 = vmul.f32 %v2681, %v2681
        %v3194 = vmul.f32 %v2682, %v2682
        %v3195 = vmul.f32 %v2683, %v2683
        %v3196 = vmul.f32 %v2684, %v2684
        %v3197 = vmul.f32 %v2685, %v2685
        %v3198 = vmul.f32 %v2686, %v2686
        %v3199 = vmul.f32 %v2687, %v2687
        %v3200 = vmul.f32 %v2688, %v2688
        %v3201 = vmul.f32 %v2689, %v2689
        %v3202 = vmul.f32 %v2690, %v2690
        %v3203 = vmul.f32 %v2691, %v2691
        %v3204 = vmul.f32 %v2692, %v2692
        %v3205 = vmul.f32 %v2693, %v2693
        %v3206 = vmul.f32 %v2694, %v2694
        %v3207 = vmul.f32 %v2695, %v2695
        %v3208 = vmul.f32 %v2696, %v2696
        %v3209 = vmul.f32 %v2697, %v2697
        %v3210 = vmul.f32 %v2698, %v2698
        %v3211 = vmul.f32 %v2699, %v2699
        %v3212 = vmul.f32 %v2700, %v2700
        %v3213 = vmul.f32 %v2701, %v2701
        %v3214 = vmul.f32 %v2702, %v2702
        %v3215 = vmul.f32 %v2703, %v2703
        %v3216 = vmul.f32 %v2704, %v2704
        %v3217 = vmul.f32 %v2705, %v2705
        %v3218 = vmul.f32 %v2706, %v2706
        %v3219 = vmul.f32 %v2707, %v2707
        %v3220 = vmul.f32 %v2708, %v2708
        %v3221 = vmul.f32 %v2709, %v2709
        %v3222 = vmul.f32 %v2710, %v2710
        %v3223 = vmul.f32 %v2711, %v2711
        %v3224 = vmul.f32 %v2712, %v2712
        %v3225 = vmul.f32 %v2713, %v2713
        %v3226 = vmul.f32 %v2714, %v2714
        %v3227 = vmul.f32 %v2715, %v2715
        %v3228 = vmul.f32 %v2716, %v2716
        %v3229 = vmul.f32 %v2717, %v2717
        %v3230 = vmul.f32 %v2718, %v2718
        %v3231 = vmul.f32 %v2719, %v2719
        %v3232 = vmul.f32 %v2720, %v2720
        %v3233 = vmul.f32 %v2721, %v2721
        %v3234 = vmul.f32 %v2722, %v2722
        %v3235 = vmul.f32 %v2723, %v2723
        %v3236 = vmul.f32 %v2724, %v2724
        %v3237 = vmul.f32 %v2725, %v2725
        %v3238 = vmul.f32 %v2726, %v2726
        %v3239 = vmul.f32 %v2727, %v2727
        %v3240 = vmul.f32 %v2728, %v2728
        %v3241 = vmul.f32 %v2729, %v2729
        %v3242 = vmul.f32 %v2730, %v2730
        %v3243 = vmul.f32 %v2731, %v2731
        %v3244 = vmul.f32 %v2732, %v2732
        %v3245 = vmul.f32 %v2733, %v2733
        %v3246 = vmul.f32 %v2734, %v2734
        %v3247 = vmul.f32 %v2735, %v2735
        %v3248 = vmul.f32 %v2736, %v2736
        %v3249 = vmul.f32 %v2737, %v2737
        %v3250 = vmul.f32 %v2738, %v2738
        %v3251 = vmul.f32 %v2739, %v2739
        %v3252 = vmul.f32 %v2740, %v2740
        %v3253 = vmul.f32 %v2741, %v2741
        %v3254 = vmul.f32 %v2742, %v2742
        %v3255 = vmul.f32 %v2743, %v2743
        %v3256 = vmul.f32 %v2744, %v2744
        %v3257 = vmul.f32 %v2745, %v2745
        %v3258 = vmul.f32 %v2746, %v2746
        %v3259 = vmul.f32 %v2747, %v2747
        %v3260 = vmul.f32 %v2748, %v2748
        %v3261 = vmul.f32 %v2749, %v2749
        %v3262 = vmul.f32 %v2750, %v2750
        %v3263 = vmul.f32 %v2751, %v2751
        %v3264 = vmul.f32 %v2752, %v2752
        %v3265 = vmul.f32 %v2753, %v2753
        %v3266 = vmul.f32 %v2754, %v2754
        %v3267 = vmul.f32 %v2755, %v2755
        %v3268 = vmul.f32 %v2756, %v2756
        %v3269 = vmul.f32 %v2757, %v2757
        %v3270 = vmul.f32 %v2758, %v2758
        %v3271 = vmul.f32 %v2759, %v2759
        %v3272 = vmul.f32 %v2760, %v2760
        %v3273 = vmul.f32 %v2761, %v2761
        %v3274 = vmul.f32 %v2762, %v2762
        %v3275 = vmul.f32 %v2763, %v2763
        %v3276 = vmul.f32 %v2764, %v2764
        %v3277 = vmul.f32 %v2765, %v2765
        %v3278 = vmul.f32 %v2766, %v2766
        %v3279 = vmul.f32 %v2767, %v2767
        %v3280 = vmul.f32 %v2768, %v2768
        %v3281 = vmul.f32 %v2769, %v2769
        %v3282 = vmul.f32 %v2770, %v2770
        %v3283 = vmul.f32 %v2771, %v2771
        %v3284 = vmul.f32 %v2772, %v2772
        %v3285 = vmul.f32 %v2773, %v2773
        %v3286 = vmul.f32 %v2774, %v2774
        %v3287 = vmul.f32 %v2775, %v2775
        %v3288 = vmul.f32 %v2776, %v2776
        %v3289 = vmul.f32 %v2777, %v2777
        %v3290 = vmul.f32 %v2778, %v2778
        %v3291 = vmul.f32 %v2779, %v2779
        %v3292 = vmul.f32 %v2780, %v2780
        %v3293 = vmul.f32 %v2781, %v2781
        %v3294 = vmul.f32 %v2782, %v2782
        %v3295 = vmul.f32 %v2783, %v2783
        %v3296 = vmul.f32 %v2784, %v2784
        %v3297 = vmul.f32 %v2785, %v2785
        %v3298 = vmul.f32 %v2786, %v2786
        %v3299 = vmul.f32 %v2787, %v2787
        %v3300 = vmul.f32 %v2788, %v2788
        %v3301 = vmul.f32 %v2789, %v2789
        %v3302 = vmul.f32 %v2790, %v2790
        %v3303 = vmul.f32 %v2791, %v2791
        %v3304 = vmul.f32 %v2792, %v2792
        %v3305 = vmul.f32 %v2793, %v2793
        %v3306 = vmul.f32 %v2794, %v2794
        %v3307 = vmul.f32 %v2795, %v2795
        %v3308 = vmul.f32 %v2796, %v2796
        %v3309 = vmul.f32 %v2797, %v2797
        %v3310 = vmul.f32 %v2798, %v2798
        %v3311 = vmul.f32 %v2799, %v2799
        %v3312 = vmul.f32 %v2800, %v2800
        %v3313 = vmul.f32 %v2801, %v2801
        %v3314 = vmul.f32 %v2802, %v2802
        %v3315 = vmul.f32 %v2803, %v2803
        %v3316 = vmul.f32 %v2804, %v2804
        %v3317 = vmul.f32 %v2805, %v2805
        %v3318 = vmul.f32 %v2806, %v2806
        %v3319 = vmul.f32 %v2807, %v2807
        %v3320 = vmul.f32 %v2808, %v2808
        %v3321 = vmul.f32 %v2809, %v2809
        %v3322 = vmul.f32 %v2810, %v2810
        %v3323 = vmul.f32 %v2811, %v2811
        %v3324 = vmul.f32 %v2812, %v2812
        %v3325 = vmul.f32 %v2813, %v2813
        %v3326 = vmul.f32 %v2814, %v2814
        %v3327 = vmul.f32 %v2815, %v2815
        %v3328 = vmul.f32 %v2816, %v2816
        %v3329 = vmul.f32 %v2817, %v2817
        %v3330 = vmul.f32 %v2818, %v2818
        %v3331 = vmul.f32 %v2819, %v2819
        %v3332 = vmul.f32 %v2820, %v2820
        %v3333 = vmul.f32 %v2821, %v2821
        %v3334 = vmul.f32 %v2822, %v2822
        %v3335 = vmul.f32 %v2823, %v2823
        %v3336 = vmul.f32 %v2824, %v2824
        %v3337 = vmul.f32 %v2825, %v2825
        %v3338 = vmul.f32 %v2826, %v2826
        %v3339 = vmul.f32 %v2827, %v2827
        %v3340 = vmul.f32 %v2828, %v2828
        %v3341 = vmul.f32 %v2829, %v2829
        %v3342 = vmul.f32 %v2830, %v2830
        %v3343 = vmul.f32 %v2831, %v2831
        %v3344 = vmul.f32 %v2832, %v2832
        %v3345 = vmul.f32 %v2833, %v2833
        %v3346 = vmul.f32 %v2834, %v2834
        %v3347 = vmul.f32 %v2835, %v2835
        %v3348 = vmul.f32 %v2836, %v2836
        %v3349 = vmul.f32 %v2837, %v2837
        %v3350 = vmul.f32 %v2838, %v2838
        %v3351 = vmul.f32 %v2839, %v2839
        %v3352 = vmul.f32 %v2840, %v2840
        %v3353 = vmul.f32 %v2841, %v2841
        %v3354 = vmul.f32 %v2842, %v2842
        %v3355 = vmul.f32 %v2843, %v2843
        %v3356 = vmul.f32 %v2844, %v2844
        %v3357 = vmul.f32 %v2845, %v2845
        %v3358 = vmul.f32 %v2846, %v2846
        %v3359 = vmul.f32 %v2847, %v2847
        %v3360 = vmul.f32 %v2848, %v2848
        %v3361 = vmul.f32 %v2849, %v2849
        %v3362 = vmul.f32 %v2850, %v2850
        %v3363 = vmul.f32 %v2851, %v2851
        %v3364 = vmul.f32 %v2852, %v2852
        %v3365 = vmul.f32 %v2853, %v2853
        %v3366 = vmul.f32 %v2854, %v2854
        %v3367 = vmul.f32 %v2855, %v2855
        %v3368 = vmul.f32 %v2856, %v2856
        %v3369 = vmul.f32 %v2857, %v2857
        %v3370 = vmul.f32 %v2858, %v2858
        %v3371 = vmul.f32 %v2859, %v2859
        %v3372 = vmul.f32 %v2860, %v2860
        %v3373 = vmul.f32 %v2861, %v2861
        %v3374 = vmul.f32 %v2862, %v2862
        %v3375 = vmul.f32 %v2863, %v2863
        %v3376 = vmul.f32 %v2864, %v2864
        %v3377 = vmul.f32 %v2865, %v2865
        %v3378 = vmul.f32 %v2866, %v2866
        %v3379 = vmul.f32 %v2867, %v2867
        %v3380 = vmul.f32 %v2868, %v2868
        %v3381 = vmul.f32 %v2869, %v2869
        %v3382 = vmul.f32 %v2870, %v2870
        %v3383 = vmul.f32 %v2871, %v2871
        %v3384 = vmul.f32 %v2872, %v2872
        %v3385 = vmul.f32 %v2873, %v2873
        %v3386 = vmul.f32 %v2874, %v2874
        %v3387 = vmul.f32 %v2875, %v2875
        %v3388 = vmul.f32 %v2876, %v2876
        %v3389 = vmul.f32 %v2877, %v2877
        %v3390 = vmul.f32 %v2878, %v2878
        %v3391 = vmul.f32 %v2879, %v2879
        %v3392 = vmul.f32 %v2880, %v2880
        %v3393 = vmul.f32 %v2881, %v2881
        %v3394 = vmul.f32 %v2882, %v2882
        %v3395 = vmul.f32 %v2883, %v2883
        %v3396 = vmul.f32 %v2884, %v2884
        %v3397 = vmul.f32 %v2885, %v2885
        %v3398 = vmul.f32 %v2886, %v2886
        %v3399 = vmul.f32 %v2887, %v2887
        %v3400 = vmul.f32 %v2888, %v2888
        %v3401 = vmul.f32 %v2889, %v2889
        %v3402 = vmul.f32 %v2890, %v2890
        %v3403 = vmul.f32 %v2891, %v2891
        %v3404 = vmul.f32 %v2892, %v2892
        %v3405 = vmul.f32 %v2893, %v2893
        %v3406 = vmul.f32 %v2894, %v2894
        %v3407 = vmul.f32 %v2895, %v2895
        %v3408 = vmul.f32 %v2896, %v2896
        %v3409 = vmul.f32 %v2897, %v2897
        %v3410 = vmul.f32 %v2898, %v2898
        %v3411 = vmul.f32 %v2899, %v2899
        %v3412 = vmul.f32 %v2900, %v2900
        %v3413 = vmul.f32 %v2901, %v2901
        %v3414 = vmul.f32 %v2902, %v2902
        %v3415 = vmul.f32 %v2903, %v2903
        %v3416 = vmul.f32 %v2904, %v2904
        %v3417 = vmul.f32 %v2905, %v2905
        %v3418 = vmul.f32 %v2906, %v2906
        %v3419 = vmul.f32 %v2907, %v2907
        %v3420 = vmul.f32 %v2908, %v2908
        %v3421 = vmul.f32 %v2909, %v2909
        %v3422 = vmul.f32 %v2910, %v2910
        %v3423 = vmul.f32 %v2911, %v2911
        %v3424 = vmul.f32 %v2912, %v2912
        %v3425 = vmul.f32 %v2913, %v2913
        %v3426 = vmul.f32 %v2914, %v2914
        %v3427 = vmul.f32 %v2915, %v2915
        %v3428 = vmul.f32 %v2916, %v2916
        %v3429 = vmul.f32 %v2917, %v2917
        %v3430 = vmul.f32 %v2918, %v2918
        %v3431 = vmul.f32 %v2919, %v2919
        %v3432 = vmul.f32 %v2920, %v2920
        %v3433 = vmul.f32 %v2921, %v2921
        %v3434 = vmul.f32 %v2922, %v2922
        %v3435 = vmul.f32 %v2923, %v2923
        %v3436 = vmul.f32 %v2924, %v2924
        %v3437 = vmul.f32 %v2925, %v2925
        %v3438 = vmul.f32 %v2926, %v2926
        %v3439 = vmul.f32 %v2927, %v2927
        %v3440 = vmul.f32 %v2928, %v2928
        %v3441 = vmul.f32 %v2929, %v2929
        %v3442 = vmul.f32 %v2930, %v2930
        %v3443 = vmul.f32 %v2931, %v2931
        %v3444 = vmul.f32 %v2932, %v2932
        %v3445 = vmul.f32 %v2933, %v2933
        %v3446 = vmul.f32 %v2934, %v2934
        %v3447 = vmul.f32 %v2935, %v2935
        %v3448 = vmul.f32 %v2936, %v2936
        %v3449 = vmul.f32 %v2937, %v2937
        %v3450 = vmul.f32 %v2938, %v2938
        %v3451 = vmul.f32 %v2939, %v2939
        %v3452 = vmul.f32 %v2940, %v2940
        %v3453 = vmul.f32 %v2941, %v2941
        %v3454 = vmul.f32 %v2942, %v2942
        %v3455 = vmul.f32 %v2943, %v2943
        %v3456 = vmul.f32 %v2944, %v2944
        %v3457 = vmul.f32 %v2945, %v2945
        %v3458 = vmul.f32 %v2946, %v2946
        %v3459 = vmul.f32 %v2947, %v2947
        %v3460 = vmul.f32 %v2948, %v2948
        %v3461 = vmul.f32 %v2949, %v2949
        %v3462 = vmul.f32 %v2950, %v2950
        %v3463 = vmul.f32 %v2951, %v2951
        %v3464 = vmul.f32 %v2952, %v2952
        %v3465 = vmul.f32 %v2953, %v2953
        %v3466 = vmul.f32 %v2954, %v2954
        %v3467 = vmul.f32 %v2955, %v2955
        %v3468 = vmul.f32 %v2956, %v2956
        %v3469 = vmul.f32 %v2957, %v2957
        %v3470 = vmul.f32 %v2958, %v2958
        %v3471 = vmul.f32 %v2959, %v2959
        %v3472 = vmul.f32 %v2960, %v2960
        %v3473 = vmul.f32 %v2961, %v2961
        %v3474 = vmul.f32 %v2962, %v2962
        %v3475 = vmul.f32 %v2963, %v2963
        %v3476 = vmul.f32 %v2964, %v2964
        %v3477 = vmul.f32 %v2965, %v2965
        %v3478 = vmul.f32 %v2966, %v2966
        %v3479 = vmul.f32 %v2967, %v2967
        %v3480 = vmul.f32 %v2968, %v2968
        %v3481 = vmul.f32 %v2969, %v2969
        %v3482 = vmul.f32 %v2970, %v2970
        %v3483 = vmul.f32 %v2971, %v2971
        %v3484 = vmul.f32 %v2972, %v2972
        %v3485 = vmul.f32 %v2973, %v2973
        %v3486 = vmul.f32 %v2974, %v2974
        %v3487 = vmul.f32 %v2975, %v2975
        %v3488 = vmul.f32 %v2976, %v2976
        %v3489 = vmul.f32 %v2977, %v2977
        %v3490 = vmul.f32 %v2978, %v2978
        %v3491 = vmul.f32 %v2979, %v2979
        %v3492 = vmul.f32 %v2980, %v2980
        %v3493 = vmul.f32 %v2981, %v2981
        %v3494 = vadd.f32 %v1670, %v2982
        %v3495 = vadd.f32 %v1671, %v2983
        %v3496 = vadd.f32 %v1672, %v2984
        %v3497 = vadd.f32 %v1673, %v2985
        %v3498 = vadd.f32 %v1674, %v2986
        %v3499 = vadd.f32 %v1675, %v2987
        %v3500 = vadd.f32 %v1676, %v2988
        %v3501 = vadd.f32 %v1677, %v2989
        %v3502 = vadd.f32 %v1678, %v2990
        %v3503 = vadd.f32 %v1679, %v2991
        %v3504 = vadd.f32 %v1680, %v2992
        %v3505 = vadd.f32 %v1681, %v2993
        %v3506 = vadd.f32 %v1682, %v2994
        %v3507 = vadd.f32 %v1683, %v2995
        %v3508 = vadd.f32 %v1684, %v2996
        %v3509 = vadd.f32 %v1685, %v2997
        %v3510 = vadd.f32 %v1686, %v2998
        %v3511 = vadd.f32 %v1687, %v2999
        %v3512 = vadd.f32 %v1688, %v3000
        %v3513 = vadd.f32 %v1689, %v3001
        %v3514 = vadd.f32 %v1690, %v3002
        %v3515 = vadd.f32 %v1691, %v3003
        %v3516 = vadd.f32 %v1692, %v3004
        %v3517 = vadd.f32 %v1693, %v3005
        %v3518 = vadd.f32 %v1694, %v3006
        %v3519 = vadd.f32 %v1695, %v3007
        %v3520 = vadd.f32 %v1696, %v3008
        %v3521 = vadd.f32 %v1697, %v3009
        %v3522 = vadd.f32 %v1698, %v3010
        %v3523 = vadd.f32 %v1699, %v3011
        %v3524 = vadd.f32 %v1700, %v3012
        %v3525 = vadd.f32 %v1701, %v3013
        %v3526 = vadd.f32 %v1702, %v3014
        %v3527 = vadd.f32 %v1703, %v3015
        %v3528 = vadd.f32 %v1704, %v3016
        %v3529 = vadd.f32 %v1705, %v3017
        %v3530 = vadd.f32 %v1706, %v3018
        %v3531 = vadd.f32 %v1707, %v3019
        %v3532 = vadd.f32 %v1708, %v3020
        %v3533 = vadd.f32 %v1709, %v3021
        %v3534 = vadd.f32 %v1710, %v3022
        %v3535 = vadd.f32 %v1711, %v3023
        %v3536 = vadd.f32 %v1712, %v3024
        %v3537 = vadd.f32 %v1713, %v3025
        %v3538 = vadd.f32 %v1714, %v3026
        %v3539 = vadd.f32 %v1715, %v3027
        %v3540 = vadd.f32 %v1716, %v3028
        %v3541 = vadd.f32 %v1717, %v3029
        %v3542 = vadd.f32 %v1718, %v3030
        %v3543 = vadd.f32 %v1719, %v3031
        %v3544 = vadd.f32 %v1720, %v3032
        %v3545 = vadd.f32 %v1721, %v3033
        %v3546 = vadd.f32 %v1722, %v3034
        %v3547 = vadd.f32 %v1723, %v3035
        %v3548 = vadd.f32 %v1724, %v3036
        %v3549 = vadd.f32 %v1725, %v3037
        %v3550 = vadd.f32 %v1726, %v3038
        %v3551 = vadd.f32 %v1727, %v3039
        %v3552 = vadd.f32 %v1728, %v3040
        %v3553 = vadd.f32 %v1729, %v3041
        %v3554 = vadd.f32 %v1730, %v3042
        %v3555 = vadd.f32 %v1731, %v3043
        %v3556 = vadd.f32 %v1732, %v3044
        %v3557 = vadd.f32 %v1733, %v3045
        %v3558 = vadd.f32 %v1734, %v3046
        %v3559 = vadd.f32 %v1735, %v3047
        %v3560 = vadd.f32 %v1736, %v3048
        %v3561 = vadd.f32 %v1737, %v3049
        %v3562 = vadd.f32 %v1738, %v3050
        %v3563 = vadd.f32 %v1739, %v3051
        %v3564 = vadd.f32 %v1740, %v3052
        %v3565 = vadd.f32 %v1741, %v3053
        %v3566 = vadd.f32 %v1742, %v3054
        %v3567 = vadd.f32 %v1743, %v3055
        %v3568 = vadd.f32 %v1744, %v3056
        %v3569 = vadd.f32 %v1745, %v3057
        %v3570 = vadd.f32 %v1746, %v3058
        %v3571 = vadd.f32 %v1747, %v3059
        %v3572 = vadd.f32 %v1748, %v3060
        %v3573 = vadd.f32 %v1749, %v3061
        %v3574 = vadd.f32 %v1750, %v3062
        %v3575 = vadd.f32 %v1751, %v3063
        %v3576 = vadd.f32 %v1752, %v3064
        %v3577 = vadd.f32 %v1753, %v3065
        %v3578 = vadd.f32 %v1754, %v3066
        %v3579 = vadd.f32 %v1755, %v3067
        %v3580 = vadd.f32 %v1756, %v3068
        %v3581 = vadd.f32 %v1757, %v3069
        %v3582 = vadd.f32 %v1758, %v3070
        %v3583 = vadd.f32 %v1759, %v3071
        %v3584 = vadd.f32 %v1760, %v3072
        %v3585 = vadd.f32 %v1761, %v3073
        %v3586 = vadd.f32 %v1762, %v3074
        %v3587 = vadd.f32 %v1763, %v3075
        %v3588 = vadd.f32 %v1764, %v3076
        %v3589 = vadd.f32 %v1765, %v3077
        %v3590 = vadd.f32 %v1766, %v3078
        %v3591 = vadd.f32 %v1767, %v3079
        %v3592 = vadd.f32 %v1768, %v3080
        %v3593 = vadd.f32 %v1769, %v3081
        %v3594 = vadd.f32 %v1770, %v3082
        %v3595 = vadd.f32 %v1771, %v3083
        %v3596 = vadd.f32 %v1772, %v3084
        %v3597 = vadd.f32 %v1773, %v3085
        %v3598 = vadd.f32 %v1774, %v3086
        %v3599 = vadd.f32 %v1775, %v3087
        %v3600 = vadd.f32 %v1776, %v3088
        %v3601 = vadd.f32 %v1777, %v3089
        %v3602 = vadd.f32 %v1778, %v3090
        %v3603 = vadd.f32 %v1779, %v3091
        %v3604 = vadd.f32 %v1780, %v3092
        %v3605 = vadd.f32 %v1781, %v3093
        %v3606 = vadd.f32 %v1782, %v3094
        %v3607 = vadd.f32 %v1783, %v3095
        %v3608 = vadd.f32 %v1784, %v3096
        %v3609 = vadd.f32 %v1785, %v3097
        %v3610 = vadd.f32 %v1786, %v3098
        %v3611 = vadd.f32 %v1787, %v3099
        %v3612 = vadd.f32 %v1788, %v3100
        %v3613 = vadd.f32 %v1789, %v3101
        %v3614 = vadd.f32 %v1790, %v3102
        %v3615 = vadd.f32 %v1791, %v3103
        %v3616 = vadd.f32 %v1792, %v3104
        %v3617 = vadd.f32 %v1793, %v3105
        %v3618 = vadd.f32 %v1794, %v3106
        %v3619 = vadd.f32 %v1795, %v3107
        %v3620 = vadd.f32 %v1796, %v3108
        %v3621 = vadd.f32 %v1797, %v3109
        %v3622 = vadd.f32 %v1798, %v3110
        %v3623 = vadd.f32 %v1799, %v3111
        %v3624 = vadd.f32 %v1800, %v3112
        %v3625 = vadd.f32 %v1801, %v3113
        %v3626 = vadd.f32 %v1802, %v3114
        %v3627 = vadd.f32 %v1803, %v3115
        %v3628 = vadd.f32 %v1804, %v3116
        %v3629 = vadd.f32 %v1805, %v3117
        %v3630 = vadd.f32 %v1806, %v3118
        %v3631 = vadd.f32 %v1807, %v3119
        %v3632 = vadd.f32 %v1808, %v3120
        %v3633 = vadd.f32 %v1809, %v3121
        %v3634 = vadd.f32 %v1810, %v3122
        %v3635 = vadd.f32 %v1811, %v3123
        %v3636 = vadd.f32 %v1812, %v3124
        %v3637 = vadd.f32 %v1813, %v3125
        %v3638 = vadd.f32 %v1814, %v3126
        %v3639 = vadd.f32 %v1815, %v3127
        %v3640 = vadd.f32 %v1816, %v3128
        %v3641 = vadd.f32 %v1817, %v3129
        %v3642 = vadd.f32 %v1818, %v3130
        %v3643 = vadd.f32 %v1819, %v3131
        %v3644 = vadd.f32 %v1820, %v3132
        %v3645 = vadd.f32 %v1821, %v3133
        %v3646 = vadd.f32 %v1822, %v3134
        %v3647 = vadd.f32 %v1823, %v3135
        %v3648 = vadd.f32 %v1824, %v3136
        %v3649 = vadd.f32 %v1825, %v3137
        %v3650 = vadd.f32 %v1826, %v3138
        %v3651 = vadd.f32 %v1827, %v3139
        %v3652 = vadd.f32 %v1828, %v3140
        %v3653 = vadd.f32 %v1829, %v3141
        %v3654 = vadd.f32 %v1830, %v3142
        %v3655 = vadd.f32 %v1831, %v3143
        %v3656 = vadd.f32 %v1832, %v3144
        %v3657 = vadd.f32 %v1833, %v3145
        %v3658 = vadd.f32 %v1834, %v3146
        %v3659 = vadd.f32 %v1835, %v3147
        %v3660 = vadd.f32 %v1836, %v3148
        %v3661 = vadd.f32 %v1837, %v3149
        %v3662 = vadd.f32 %v1838, %v3150
        %v3663 = vadd.f32 %v1839, %v3151
        %v3664 = vadd.f32 %v1840, %v3152
        %v3665 = vadd.f32 %v1841, %v3153
        %v3666 = vadd.f32 %v1842, %v3154
        %v3667 = vadd.f32 %v1843, %v3155
        %v3668 = vadd.f32 %v1844, %v3156
        %v3669 = vadd.f32 %v1845, %v3157
        %v3670 = vadd.f32 %v1846, %v3158
        %v3671 = vadd.f32 %v1847, %v3159
        %v3672 = vadd.f32 %v1848, %v3160
        %v3673 = vadd.f32 %v1849, %v3161
        %v3674 = vadd.f32 %v1850, %v3162
        %v3675 = vadd.f32 %v1851, %v3163
        %v3676 = vadd.f32 %v1852, %v3164
        %v3677 = vadd.f32 %v1853, %v3165
        %v3678 = vadd.f32 %v1854, %v3166
        %v3679 = vadd.f32 %v1855, %v3167
        %v3680 = vadd.f32 %v1856, %v3168
        %v3681 = vadd.f32 %v1857, %v3169
        %v3682 = vadd.f32 %v1858, %v3170
        %v3683 = vadd.f32 %v1859, %v3171
        %v3684 = vadd.f32 %v1860, %v3172
        %v3685 = vadd.f32 %v1861, %v3173
        %v3686 = vadd.f32 %v1862, %v3174
        %v3687 = vadd.f32 %v1863, %v3175
        %v3688 = vadd.f32 %v1864, %v3176
        %v3689 = vadd.f32 %v1865, %v3177
        %v3690 = vadd.f32 %v1866, %v3178
        %v3691 = vadd.f32 %v1867, %v3179
        %v3692 = vadd.f32 %v1868, %v3180
        %v3693 = vadd.f32 %v1869, %v3181
        %v3694 = vadd.f32 %v1870, %v3182
        %v3695 = vadd.f32 %v1871, %v3183
        %v3696 = vadd.f32 %v1872, %v3184
        %v3697 = vadd.f32 %v1873, %v3185
        %v3698 = vadd.f32 %v1874, %v3186
        %v3699 = vadd.f32 %v1875, %v3187
        %v3700 = vadd.f32 %v1876, %v3188
        %v3701 = vadd.f32 %v1877, %v3189
        %v3702 = vadd.f32 %v1878, %v3190
        %v3703 = vadd.f32 %v1879, %v3191
        %v3704 = vadd.f32 %v1880, %v3192
        %v3705 = vadd.f32 %v1881, %v3193
        %v3706 = vadd.f32 %v1882, %v3194
        %v3707 = vadd.f32 %v1883, %v3195
        %v3708 = vadd.f32 %v1884, %v3196
        %v3709 = vadd.f32 %v1885, %v3197
        %v3710 = vadd.f32 %v1886, %v3198
        %v3711 = vadd.f32 %v1887, %v3199
        %v3712 = vadd.f32 %v1888, %v3200
        %v3713 = vadd.f32 %v1889, %v3201
        %v3714 = vadd.f32 %v1890, %v3202
        %v3715 = vadd.f32 %v1891, %v3203
        %v3716 = vadd.f32 %v1892, %v3204
        %v3717 = vadd.f32 %v1893, %v3205
        %v3718 = vadd.f32 %v1894, %v3206
        %v3719 = vadd.f32 %v1895, %v3207
        %v3720 = vadd.f32 %v1896, %v3208
        %v3721 = vadd.f32 %v1897, %v3209
        %v3722 = vadd.f32 %v1898, %v3210
        %v3723 = vadd.f32 %v1899, %v3211
        %v3724 = vadd.f32 %v1900, %v3212
        %v3725 = vadd.f32 %v1901, %v3213
        %v3726 = vadd.f32 %v1902, %v3214
        %v3727 = vadd.f32 %v1903, %v3215
        %v3728 = vadd.f32 %v1904, %v3216
        %v3729 = vadd.f32 %v1905, %v3217
        %v3730 = vadd.f32 %v1906, %v3218
        %v3731 = vadd.f32 %v1907, %v3219
        %v3732 = vadd.f32 %v1908, %v3220
        %v3733 = vadd.f32 %v1909, %v3221
        %v3734 = vadd.f32 %v1910, %v3222
        %v3735 = vadd.f32 %v1911, %v3223
        %v3736 = vadd.f32 %v1912, %v3224
        %v3737 = vadd.f32 %v1913, %v3225
        %v3738 = vadd.f32 %v1914, %v3226
        %v3739 = vadd.f32 %v1915, %v3227
        %v3740 = vadd.f32 %v1916, %v3228
        %v3741 = vadd.f32 %v1917, %v3229
        %v3742 = vadd.f32 %v1918, %v3230
        %v3743 = vadd.f32 %v1919, %v3231
        %v3744 = vadd.f32 %v1920, %v3232
        %v3745 = vadd.f32 %v1921, %v3233
        %v3746 = vadd.f32 %v1922, %v3234
        %v3747 = vadd.f32 %v1923, %v3235
        %v3748 = vadd.f32 %v1924, %v3236
        %v3749 = vadd.f32 %v1925, %v3237
        %v3750 = vadd.f32 %v1926, %v3238
        %v3751 = vadd.f32 %v1927, %v3239
        %v3752 = vadd.f32 %v1928, %v3240
        %v3753 = vadd.f32 %v1929, %v3241
        %v3754 = vadd.f32 %v1930, %v3242
        %v3755 = vadd.f32 %v1931, %v3243
        %v3756 = vadd.f32 %v1932, %v3244
        %v3757 = vadd.f32 %v1933, %v3245
        %v3758 = vadd.f32 %v1934, %v3246
        %v3759 = vadd.f32 %v1935, %v3247
        %v3760 = vadd.f32 %v1936, %v3248
        %v3761 = vadd.f32 %v1937, %v3249
        %v3762 = vadd.f32 %v1938, %v3250
        %v3763 = vadd.f32 %v1939, %v3251
        %v3764 = vadd.f32 %v1940, %v3252
        %v3765 = vadd.f32 %v1941, %v3253
        %v3766 = vadd.f32 %v1942, %v3254
        %v3767 = vadd.f32 %v1943, %v3255
        %v3768 = vadd.f32 %v1944, %v3256
        %v3769 = vadd.f32 %v1945, %v3257
        %v3770 = vadd.f32 %v1946, %v3258
        %v3771 = vadd.f32 %v1947, %v3259
        %v3772 = vadd.f32 %v1948, %v3260
        %v3773 = vadd.f32 %v1949, %v3261
        %v3774 = vadd.f32 %v1950, %v3262
        %v3775 = vadd.f32 %v1951, %v3263
        %v3776 = vadd.f32 %v1952, %v3264
        %v3777 = vadd.f32 %v1953, %v3265
        %v3778 = vadd.f32 %v1954, %v3266
        %v3779 = vadd.f32 %v1955, %v3267
        %v3780 = vadd.f32 %v1956, %v3268
        %v3781 = vadd.f32 %v1957, %v3269
        %v3782 = vadd.f32 %v1958, %v3270
        %v3783 = vadd.f32 %v1959, %v3271
        %v3784 = vadd.f32 %v1960, %v3272
        %v3785 = vadd.f32 %v1961, %v3273
        %v3786 = vadd.f32 %v1962, %v3274
        %v3787 = vadd.f32 %v1963, %v3275
        %v3788 = vadd.f32 %v1964, %v3276
        %v3789 = vadd.f32 %v1965, %v3277
        %v3790 = vadd.f32 %v1966, %v3278
        %v3791 = vadd.f32 %v1967, %v3279
        %v3792 = vadd.f32 %v1968, %v3280
        %v3793 = vadd.f32 %v1969, %v3281
        %v3794 = vadd.f32 %v1970, %v3282
        %v3795 = vadd.f32 %v1971, %v3283
        %v3796 = vadd.f32 %v1972, %v3284
        %v3797 = vadd.f32 %v1973, %v3285
        %v3798 = vadd.f32 %v1974, %v3286
        %v3799 = vadd.f32 %v1975, %v3287
        %v3800 = vadd.f32 %v1976, %v3288
        %v3801 = vadd.f32 %v1977, %v3289
        %v3802 = vadd.f32 %v1978, %v3290
        %v3803 = vadd.f32 %v1979, %v3291
        %v3804 = vadd.f32 %v1980, %v3292
        %v3805 = vadd.f32 %v1981, %v3293
        %v3806 = vadd.f32 %v1982, %v3294
        %v3807 = vadd.f32 %v1983, %v3295
        %v3808 = vadd.f32 %v1984, %v3296
        %v3809 = vadd.f32 %v1985, %v3297
        %v3810 = vadd.f32 %v1986, %v3298
        %v3811 = vadd.f32 %v1987, %v3299
        %v3812 = vadd.f32 %v1988, %v3300
        %v3813 = vadd.f32 %v1989, %v3301
        %v3814 = vadd.f32 %v1990, %v3302
        %v3815 = vadd.f32 %v1991, %v3303
        %v3816 = vadd.f32 %v1992, %v3304
        %v3817 = vadd.f32 %v1993, %v3305
        %v3818 = vadd.f32 %v1994, %v3306
        %v3819 = vadd.f32 %v1995, %v3307
        %v3820 = vadd.f32 %v1996, %v3308
        %v3821 = vadd.f32 %v1997, %v3309
        %v3822 = vadd.f32 %v1998, %v3310
        %v3823 = vadd.f32 %v1999, %v3311
        %v3824 = vadd.f32 %v2000, %v3312
        %v3825 = vadd.f32 %v2001, %v3313
        %v3826 = vadd.f32 %v2002, %v3314
        %v3827 = vadd.f32 %v2003, %v3315
        %v3828 = vadd.f32 %v2004, %v3316
        %v3829 = vadd.f32 %v2005, %v3317
        %v3830 = vadd.f32 %v2006, %v3318
        %v3831 = vadd.f32 %v2007, %v3319
        %v3832 = vadd.f32 %v2008, %v3320
        %v3833 = vadd.f32 %v2009, %v3321
        %v3834 = vadd.f32 %v2010, %v3322
        %v3835 = vadd.f32 %v2011, %v3323
        %v3836 = vadd.f32 %v2012, %v3324
        %v3837 = vadd.f32 %v2013, %v3325
        %v3838 = vadd.f32 %v2014, %v3326
        %v3839 = vadd.f32 %v2015, %v3327
        %v3840 = vadd.f32 %v2016, %v3328
        %v3841 = vadd.f32 %v2017, %v3329
        %v3842 = vadd.f32 %v2018, %v3330
        %v3843 = vadd.f32 %v2019, %v3331
        %v3844 = vadd.f32 %v2020, %v3332
        %v3845 = vadd.f32 %v2021, %v3333
        %v3846 = vadd.f32 %v2022, %v3334
        %v3847 = vadd.f32 %v2023, %v3335
        %v3848 = vadd.f32 %v2024, %v3336
        %v3849 = vadd.f32 %v2025, %v3337
        %v3850 = vadd.f32 %v2026, %v3338
        %v3851 = vadd.f32 %v2027, %v3339
        %v3852 = vadd.f32 %v2028, %v3340
        %v3853 = vadd.f32 %v2029, %v3341
        %v3854 = vadd.f32 %v2030, %v3342
        %v3855 = vadd.f32 %v2031, %v3343
        %v3856 = vadd.f32 %v2032, %v3344
        %v3857 = vadd.f32 %v2033, %v3345
        %v3858 = vadd.f32 %v2034, %v3346
        %v3859 = vadd.f32 %v2035, %v3347
        %v3860 = vadd.f32 %v2036, %v3348
        %v3861 = vadd.f32 %v2037, %v3349
        %v3862 = vadd.f32 %v2038, %v3350
        %v3863 = vadd.f32 %v2039, %v3351
        %v3864 = vadd.f32 %v2040, %v3352
        %v3865 = vadd.f32 %v2041, %v3353
        %v3866 = vadd.f32 %v2042, %v3354
        %v3867 = vadd.f32 %v2043, %v3355
        %v3868 = vadd.f32 %v2044, %v3356
        %v3869 = vadd.f32 %v2045, %v3357
        %v3870 = vadd.f32 %v2046, %v3358
        %v3871 = vadd.f32 %v2047, %v3359
        %v3872 = vadd.f32 %v2048, %v3360
        %v3873 = vadd.f32 %v2049, %v3361
        %v3874 = vadd.f32 %v2050, %v3362
        %v3875 = vadd.f32 %v2051, %v3363
        %v3876 = vadd.f32 %v2052, %v3364
        %v3877 = vadd.f32 %v2053, %v3365
        %v3878 = vadd.f32 %v2054, %v3366
        %v3879 = vadd.f32 %v2055, %v3367
        %v3880 = vadd.f32 %v2056, %v3368
        %v3881 = vadd.f32 %v2057, %v3369
        %v3882 = vadd.f32 %v2058, %v3370
        %v3883 = vadd.f32 %v2059, %v3371
        %v3884 = vadd.f32 %v2060, %v3372
        %v3885 = vadd.f32 %v2061, %v3373
        %v3886 = vadd.f32 %v2062, %v3374
        %v3887 = vadd.f32 %v2063, %v3375
        %v3888 = vadd.f32 %v2064, %v3376
        %v3889 = vadd.f32 %v2065, %v3377
        %v3890 = vadd.f32 %v2066, %v3378
        %v3891 = vadd.f32 %v2067, %v3379
        %v3892 = vadd.f32 %v2068, %v3380
        %v3893 = vadd.f32 %v2069, %v3381
        %v3894 = vadd.f32 %v2070, %v3382
        %v3895 = vadd.f32 %v2071, %v3383
        %v3896 = vadd.f32 %v2072, %v3384
        %v3897 = vadd.f32 %v2073, %v3385
        %v3898 = vadd.f32 %v2074, %v3386
        %v3899 = vadd.f32 %v2075, %v3387
        %v3900 = vadd.f32 %v2076, %v3388
        %v3901 = vadd.f32 %v2077, %v3389
        %v3902 = vadd.f32 %v2078, %v3390
        %v3903 = vadd.f32 %v2079, %v3391
        %v3904 = vadd.f32 %v2080, %v3392
        %v3905 = vadd.f32 %v2081, %v3393
        %v3906 = vadd.f32 %v2082, %v3394
        %v3907 = vadd.f32 %v2083, %v3395
        %v3908 = vadd.f32 %v2084, %v3396
        %v3909 = vadd.f32 %v2085, %v3397
        %v3910 = vadd.f32 %v2086, %v3398
        %v3911 = vadd.f32 %v2087, %v3399
        %v3912 = vadd.f32 %v2088, %v3400
        %v3913 = vadd.f32 %v2089, %v3401
        %v3914 = vadd.f32 %v2090, %v3402
        %v3915 = vadd.f32 %v2091, %v3403
        %v3916 = vadd.f32 %v2092, %v3404
        %v3917 = vadd.f32 %v2093, %v3405
        %v3918 = vadd.f32 %v2094, %v3406
        %v3919 = vadd.f32 %v2095, %v3407
        %v3920 = vadd.f32 %v2096, %v3408
        %v3921 = vadd.f32 %v2097, %v3409
        %v3922 = vadd.f32 %v2098, %v3410
        %v3923 = vadd.f32 %v2099, %v3411
        %v3924 = vadd.f32 %v2100, %v3412
        %v3925 = vadd.f32 %v2101, %v3413
        %v3926 = vadd.f32 %v2102, %v3414
        %v3927 = vadd.f32 %v2103, %v3415
        %v3928 = vadd.f32 %v2104, %v3416
        %v3929 = vadd.f32 %v2105, %v3417
        %v3930 = vadd.f32 %v2106, %v3418
        %v3931 = vadd.f32 %v2107, %v3419
        %v3932 = vadd.f32 %v2108, %v3420
        %v3933 = vadd.f32 %v2109, %v3421
        %v3934 = vadd.f32 %v2110, %v3422
        %v3935 = vadd.f32 %v2111, %v3423
        %v3936 = vadd.f32 %v2112, %v3424
        %v3937 = vadd.f32 %v2113, %v3425
        %v3938 = vadd.f32 %v2114, %v3426
        %v3939 = vadd.f32 %v2115, %v3427
        %v3940 = vadd.f32 %v2116, %v3428
        %v3941 = vadd.f32 %v2117, %v3429
        %v3942 = vadd.f32 %v2118, %v3430
        %v3943 = vadd.f32 %v2119, %v3431
        %v3944 = vadd.f32 %v2120, %v3432
        %v3945 = vadd.f32 %v2121, %v3433
        %v3946 = vadd.f32 %v2122, %v3434
        %v3947 = vadd.f32 %v2123, %v3435
        %v3948 = vadd.f32 %v2124, %v3436
        %v3949 = vadd.f32 %v2125, %v3437
        %v3950 = vadd.f32 %v2126, %v3438
        %v3951 = vadd.f32 %v2127, %v3439
        %v3952 = vadd.f32 %v2128, %v3440
        %v3953 = vadd.f32 %v2129, %v3441
        %v3954 = vadd.f32 %v2130, %v3442
        %v3955 = vadd.f32 %v2131, %v3443
        %v3956 = vadd.f32 %v2132, %v3444
        %v3957 = vadd.f32 %v2133, %v3445
        %v3958 = vadd.f32 %v2134, %v3446
        %v3959 = vadd.f32 %v2135, %v3447
        %v3960 = vadd.f32 %v2136, %v3448
        %v3961 = vadd.f32 %v2137, %v3449
        %v3962 = vadd.f32 %v2138, %v3450
        %v3963 = vadd.f32 %v2139, %v3451
        %v3964 = vadd.f32 %v2140, %v3452
        %v3965 = vadd.f32 %v2141, %v3453
        %v3966 = vadd.f32 %v2142, %v3454
        %v3967 = vadd.f32 %v2143, %v3455
        %v3968 = vadd.f32 %v2144, %v3456
        %v3969 = vadd.f32 %v2145, %v3457
        %v3970 = vadd.f32 %v2146, %v3458
        %v3971 = vadd.f32 %v2147, %v3459
        %v3972 = vadd.f32 %v2148, %v3460
        %v3973 = vadd.f32 %v2149, %v3461
        %v3974 = vadd.f32 %v2150, %v3462
        %v3975 = vadd.f32 %v2151, %v3463
        %v3976 = vadd.f32 %v2152, %v3464
        %v3977 = vadd.f32 %v2153, %v3465
        %v3978 = vadd.f32 %v2154, %v3466
        %v3979 = vadd.f32 %v2155, %v3467
        %v3980 = vadd.f32 %v2156, %v3468
        %v3981 = vadd.f32 %v2157, %v3469
        %v3982 = vadd.f32 %v2158, %v3470
        %v3983 = vadd.f32 %v2159, %v3471
        %v3984 = vadd.f32 %v2160, %v3472
        %v3985 = vadd.f32 %v2161, %v3473
        %v3986 = vadd.f32 %v2162, %v3474
        %v3987 = vadd.f32 %v2163, %v3475
        %v3988 = vadd.f32 %v2164, %v3476
        %v3989 = vadd.f32 %v2165, %v3477
        %v3990 = vadd.f32 %v2166, %v3478
        %v3991 = vadd.f32 %v2167, %v3479
        %v3992 = vadd.f32 %v2168, %v3480
        %v3993 = vadd.f32 %v2169, %v3481
        %v3994 = vadd.f32 %v2170, %v3482
        %v3995 = vadd.f32 %v2171, %v3483
        %v3996 = vadd.f32 %v2172, %v3484
        %v3997 = vadd.f32 %v2173, %v3485
        %v3998 = vadd.f32 %v2174, %v3486
        %v3999 = vadd.f32 %v2175, %v3487
        %v4000 = vadd.f32 %v2176, %v3488
        %v4001 = vadd.f32 %v2177, %v3489
        %v4002 = vadd.f32 %v2178, %v3490
        %v4003 = vadd.f32 %v2179, %v3491
        %v4004 = vadd.f32 %v2180, %v3492
        %v4005 = vadd.f32 %v2181, %v3493
        %4006 = vset.pattern.permute.xlu0 2
        %4007 = vperm.xlu0 %4006, %v230
        %v4008 = vpop.permute.xlu0 %4007
        %4010 = vset.pattern.permute.xlu0 2
        %4011 = vperm.xlu0 %4010, %v231
        %v4012 = vpop.permute.xlu0 %4011
        %4014 = vset.pattern.permute.xlu0 2
        %4015 = vperm.xlu0 %4014, %v232
        %v4016 = vpop.permute.xlu0 %4015
        %4018 = vset.pattern.permute.xlu0 2
        %4019 = vperm.xlu0 %4018, %v233
        %v4020 = vpop.permute.xlu0 %4019
        %4022 = vset.pattern.permute.xlu0 2
        %4023 = vperm.xlu0 %4022, %v234
        %v4024 = vpop.permute.xlu0 %4023
        %4026 = vset.pattern.permute.xlu0 2
        %4027 = vperm.xlu0 %4026, %v235
        %v4028 = vpop.permute.xlu0 %4027
        %4030 = vset.pattern.permute.xlu0 2
        %4031 = vperm.xlu0 %4030, %v236
        %v4032 = vpop.permute.xlu0 %4031
        %4034 = vset.pattern.permute.xlu0 2
        %4035 = vperm.xlu0 %4034, %v237
        %v4036 = vpop.permute.xlu0 %4035
        %4038 = vset.pattern.permute.xlu0 2
        %4039 = vperm.xlu0 %4038, %v238
        %v4040 = vpop.permute.xlu0 %4039
        %4042 = vset.pattern.permute.xlu0 2
        %4043 = vperm.xlu0 %4042, %v239
        %v4044 = vpop.permute.xlu0 %4043
        %4046 = vset.pattern.permute.xlu0 2
        %4047 = vperm.xlu0 %4046, %v240
        %v4048 = vpop.permute.xlu0 %4047
        %4050 = vset.pattern.permute.xlu0 2
        %4051 = vperm.xlu0 %4050, %v241
        %v4052 = vpop.permute.xlu0 %4051
        %4054 = vset.pattern.permute.xlu0 2
        %4055 = vperm.xlu0 %4054, %v242
        %v4056 = vpop.permute.xlu0 %4055
        %4058 = vset.pattern.permute.xlu0 2
        %4059 = vperm.xlu0 %4058, %v243
        %v4060 = vpop.permute.xlu0 %4059
        %4062 = vset.pattern.permute.xlu0 2
        %4063 = vperm.xlu0 %4062, %v244
        %v4064 = vpop.permute.xlu0 %4063
        %4066 = vset.pattern.permute.xlu0 2
        %4067 = vperm.xlu0 %4066, %v245
        %v4068 = vpop.permute.xlu0 %4067
        %4070 = vset.pattern.permute.xlu0 2
        %4071 = vperm.xlu0 %4070, %v246
        %v4072 = vpop.permute.xlu0 %4071
        %4074 = vset.pattern.permute.xlu0 2
        %4075 = vperm.xlu0 %4074, %v247
        %v4076 = vpop.permute.xlu0 %4075
        %4078 = vset.pattern.permute.xlu0 2
        %4079 = vperm.xlu0 %4078, %v248
        %v4080 = vpop.permute.xlu0 %4079
        %4082 = vset.pattern.permute.xlu0 2
        %4083 = vperm.xlu0 %4082, %v249
        %v4084 = vpop.permute.xlu0 %4083
        %4086 = vset.pattern.permute.xlu0 2
        %4087 = vperm.xlu0 %4086, %v250
        %v4088 = vpop.permute.xlu0 %4087
        %4090 = vset.pattern.permute.xlu0 2
        %4091 = vperm.xlu0 %4090, %v251
        %v4092 = vpop.permute.xlu0 %4091
        %4094 = vset.pattern.permute.xlu0 2
        %4095 = vperm.xlu0 %4094, %v252
        %v4096 = vpop.permute.xlu0 %4095
        %4098 = vset.pattern.permute.xlu0 2
        %4099 = vperm.xlu0 %4098, %v253
        %v4100 = vpop.permute.xlu0 %4099
        %4102 = vset.pattern.permute.xlu0 2
        %4103 = vperm.xlu0 %4102, %v254
        %v4104 = vpop.permute.xlu0 %4103
        %4106 = vset.pattern.permute.xlu0 2
        %4107 = vperm.xlu0 %4106, %v255
        %v4108 = vpop.permute.xlu0 %4107
        %4110 = vset.pattern.permute.xlu0 2
        %4111 = vperm.xlu0 %4110, %v256
        %v4112 = vpop.permute.xlu0 %4111
        %4114 = vset.pattern.permute.xlu0 2
        %4115 = vperm.xlu0 %4114, %v257
        %v4116 = vpop.permute.xlu0 %4115
        %4118 = vset.pattern.permute.xlu0 2
        %4119 = vperm.xlu0 %4118, %v258
        %v4120 = vpop.permute.xlu0 %4119
        %4122 = vset.pattern.permute.xlu0 2
        %4123 = vperm.xlu0 %4122, %v259
        %v4124 = vpop.permute.xlu0 %4123
        %4126 = vset.pattern.permute.xlu0 2
        %4127 = vperm.xlu0 %4126, %v260
        %v4128 = vpop.permute.xlu0 %4127
        %4130 = vset.pattern.permute.xlu0 2
        %4131 = vperm.xlu0 %4130, %v261
        %v4132 = vpop.permute.xlu0 %4131
        %4134 = vset.pattern.permute.xlu0 2
        %4135 = vperm.xlu0 %4134, %v262
        %v4136 = vpop.permute.xlu0 %4135
        %4138 = vset.pattern.permute.xlu0 2
        %4139 = vperm.xlu0 %4138, %v263
        %v4140 = vpop.permute.xlu0 %4139
        %4142 = vset.pattern.permute.xlu0 2
        %4143 = vperm.xlu0 %4142, %v264
        %v4144 = vpop.permute.xlu0 %4143
        %4146 = vset.pattern.permute.xlu0 2
        %4147 = vperm.xlu0 %4146, %v265
        %v4148 = vpop.permute.xlu0 %4147
        %4150 = vset.pattern.permute.xlu0 2
        %4151 = vperm.xlu0 %4150, %v266
        %v4152 = vpop.permute.xlu0 %4151
        %4154 = vset.pattern.permute.xlu0 2
        %4155 = vperm.xlu0 %4154, %v267
        %v4156 = vpop.permute.xlu0 %4155
        %4158 = vset.pattern.permute.xlu0 2
        %4159 = vperm.xlu0 %4158, %v268
        %v4160 = vpop.permute.xlu0 %4159
        %4162 = vset.pattern.permute.xlu0 2
        %4163 = vperm.xlu0 %4162, %v269
        %v4164 = vpop.permute.xlu0 %4163
        %4166 = vset.pattern.permute.xlu0 2
        %4167 = vperm.xlu0 %4166, %v270
        %v4168 = vpop.permute.xlu0 %4167
        %4170 = vset.pattern.permute.xlu0 2
        %4171 = vperm.xlu0 %4170, %v271
        %v4172 = vpop.permute.xlu0 %4171
        %4174 = vset.pattern.permute.xlu0 2
        %4175 = vperm.xlu0 %4174, %v272
        %v4176 = vpop.permute.xlu0 %4175
        %4178 = vset.pattern.permute.xlu0 2
        %4179 = vperm.xlu0 %4178, %v273
        %v4180 = vpop.permute.xlu0 %4179
        %4182 = vset.pattern.permute.xlu0 2
        %4183 = vperm.xlu0 %4182, %v274
        %v4184 = vpop.permute.xlu0 %4183
        %4186 = vset.pattern.permute.xlu0 2
        %4187 = vperm.xlu0 %4186, %v275
        %v4188 = vpop.permute.xlu0 %4187
        %4190 = vset.pattern.permute.xlu0 2
        %4191 = vperm.xlu0 %4190, %v276
        %v4192 = vpop.permute.xlu0 %4191
        %4194 = vset.pattern.permute.xlu0 2
        %4195 = vperm.xlu0 %4194, %v277
        %v4196 = vpop.permute.xlu0 %4195
        %4198 = vset.pattern.permute.xlu0 2
        %4199 = vperm.xlu0 %4198, %v278
        %v4200 = vpop.permute.xlu0 %4199
        %4202 = vset.pattern.permute.xlu0 2
        %4203 = vperm.xlu0 %4202, %v279
        %v4204 = vpop.permute.xlu0 %4203
        %4206 = vset.pattern.permute.xlu0 2
        %4207 = vperm.xlu0 %4206, %v280
        %v4208 = vpop.permute.xlu0 %4207
        %4210 = vset.pattern.permute.xlu0 2
        %4211 = vperm.xlu0 %4210, %v281
        %v4212 = vpop.permute.xlu0 %4211
        %4214 = vset.pattern.permute.xlu0 2
        %4215 = vperm.xlu0 %4214, %v282
        %v4216 = vpop.permute.xlu0 %4215
        %4218 = vset.pattern.permute.xlu0 2
        %4219 = vperm.xlu0 %4218, %v283
        %v4220 = vpop.permute.xlu0 %4219
        %4222 = vset.pattern.permute.xlu0 2
        %4223 = vperm.xlu0 %4222, %v284
        %v4224 = vpop.permute.xlu0 %4223
        %4226 = vset.pattern.permute.xlu0 2
        %4227 = vperm.xlu0 %4226, %v285
        %v4228 = vpop.permute.xlu0 %4227
        %4230 = vset.pattern.permute.xlu0 2
        %4231 = vperm.xlu0 %4230, %v286
        %v4232 = vpop.permute.xlu0 %4231
        %4234 = vset.pattern.permute.xlu0 2
        %4235 = vperm.xlu0 %4234, %v287
        %v4236 = vpop.permute.xlu0 %4235
        %4238 = vset.pattern.permute.xlu0 2
        %4239 = vperm.xlu0 %4238, %v288
        %v4240 = vpop.permute.xlu0 %4239
        %4242 = vset.pattern.permute.xlu0 2
        %4243 = vperm.xlu0 %4242, %v289
        %v4244 = vpop.permute.xlu0 %4243
        %4246 = vset.pattern.permute.xlu0 2
        %4247 = vperm.xlu0 %4246, %v290
        %v4248 = vpop.permute.xlu0 %4247
        %4250 = vset.pattern.permute.xlu0 2
        %4251 = vperm.xlu0 %4250, %v291
        %v4252 = vpop.permute.xlu0 %4251
        %4254 = vset.pattern.permute.xlu0 2
        %4255 = vperm.xlu0 %4254, %v292
        %v4256 = vpop.permute.xlu0 %4255
        %4258 = vset.pattern.permute.xlu0 2
        %4259 = vperm.xlu0 %4258, %v293
        %v4260 = vpop.permute.xlu0 %4259
        %v4262 = vlaneseq
        %v4263 = vshrl.u32 %v4262, 7
        %v4264 = vsub.s32 2, %v4263
        %v4265 = vrot.slane %v222, %v4264
        %v4266 = vlaneseq
        %v4267 = vshrl.u32 %v4266, 7
        %v4268 = vsub.s32 2, %v4267
        %v4269 = vrot.slane %v223, %v4268
        %v4270 = vlaneseq
        %v4271 = vshrl.u32 %v4270, 7
        %v4272 = vsub.s32 2, %v4271
        %v4273 = vrot.slane %v224, %v4272
        %v4274 = vlaneseq
        %v4275 = vshrl.u32 %v4274, 7
        %v4276 = vsub.s32 2, %v4275
        %v4277 = vrot.slane %v225, %v4276
        %v4278 = vlaneseq
        %v4279 = vshrl.u32 %v4278, 7
        %v4280 = vsub.s32 2, %v4279
        %v4281 = vrot.slane %v226, %v4280
        %v4282 = vlaneseq
        %v4283 = vshrl.u32 %v4282, 7
        %v4284 = vsub.s32 2, %v4283
        %v4285 = vrot.slane %v227, %v4284
        %v4286 = vlaneseq
        %v4287 = vshrl.u32 %v4286, 7
        %v4288 = vsub.s32 2, %v4287
        %v4289 = vrot.slane %v228, %v4288
        %v4290 = vlaneseq
        %v4291 = vshrl.u32 %v4290, 7
        %v4292 = vsub.s32 2, %v4291
        %v4293 = vrot.slane %v229, %v4292
        %v4294 = vsub.f32 %v4008, %v4265
        %v4295 = vsub.f32 %v4008, %v4269
        %v4296 = vsub.f32 %v4008, %v4273
        %v4297 = vsub.f32 %v4008, %v4277
        %v4298 = vsub.f32 %v4008, %v4281
        %v4299 = vsub.f32 %v4008, %v4285
        %v4300 = vsub.f32 %v4008, %v4289
        %v4301 = vsub.f32 %v4008, %v4293
        %v4302 = vsub.f32 %v4012, %v4265
        %v4303 = vsub.f32 %v4012, %v4269
        %v4304 = vsub.f32 %v4012, %v4273
        %v4305 = vsub.f32 %v4012, %v4277
        %v4306 = vsub.f32 %v4012, %v4281
        %v4307 = vsub.f32 %v4012, %v4285
        %v4308 = vsub.f32 %v4012, %v4289
        %v4309 = vsub.f32 %v4012, %v4293
        %v4310 = vsub.f32 %v4016, %v4265
        %v4311 = vsub.f32 %v4016, %v4269
        %v4312 = vsub.f32 %v4016, %v4273
        %v4313 = vsub.f32 %v4016, %v4277
        %v4314 = vsub.f32 %v4016, %v4281
        %v4315 = vsub.f32 %v4016, %v4285
        %v4316 = vsub.f32 %v4016, %v4289
        %v4317 = vsub.f32 %v4016, %v4293
        %v4318 = vsub.f32 %v4020, %v4265
        %v4319 = vsub.f32 %v4020, %v4269
        %v4320 = vsub.f32 %v4020, %v4273
        %v4321 = vsub.f32 %v4020, %v4277
        %v4322 = vsub.f32 %v4020, %v4281
        %v4323 = vsub.f32 %v4020, %v4285
        %v4324 = vsub.f32 %v4020, %v4289
        %v4325 = vsub.f32 %v4020, %v4293
        %v4326 = vsub.f32 %v4024, %v4265
        %v4327 = vsub.f32 %v4024, %v4269
        %v4328 = vsub.f32 %v4024, %v4273
        %v4329 = vsub.f32 %v4024, %v4277
        %v4330 = vsub.f32 %v4024, %v4281
        %v4331 = vsub.f32 %v4024, %v4285
        %v4332 = vsub.f32 %v4024, %v4289
        %v4333 = vsub.f32 %v4024, %v4293
        %v4334 = vsub.f32 %v4028, %v4265
        %v4335 = vsub.f32 %v4028, %v4269
        %v4336 = vsub.f32 %v4028, %v4273
        %v4337 = vsub.f32 %v4028, %v4277
        %v4338 = vsub.f32 %v4028, %v4281
        %v4339 = vsub.f32 %v4028, %v4285
        %v4340 = vsub.f32 %v4028, %v4289
        %v4341 = vsub.f32 %v4028, %v4293
        %v4342 = vsub.f32 %v4032, %v4265
        %v4343 = vsub.f32 %v4032, %v4269
        %v4344 = vsub.f32 %v4032, %v4273
        %v4345 = vsub.f32 %v4032, %v4277
        %v4346 = vsub.f32 %v4032, %v4281
        %v4347 = vsub.f32 %v4032, %v4285
        %v4348 = vsub.f32 %v4032, %v4289
        %v4349 = vsub.f32 %v4032, %v4293
        %v4350 = vsub.f32 %v4036, %v4265
        %v4351 = vsub.f32 %v4036, %v4269
        %v4352 = vsub.f32 %v4036, %v4273
        %v4353 = vsub.f32 %v4036, %v4277
        %v4354 = vsub.f32 %v4036, %v4281
        %v4355 = vsub.f32 %v4036, %v4285
        %v4356 = vsub.f32 %v4036, %v4289
        %v4357 = vsub.f32 %v4036, %v4293
        %v4358 = vsub.f32 %v4040, %v4265
        %v4359 = vsub.f32 %v4040, %v4269
        %v4360 = vsub.f32 %v4040, %v4273
        %v4361 = vsub.f32 %v4040, %v4277
        %v4362 = vsub.f32 %v4040, %v4281
        %v4363 = vsub.f32 %v4040, %v4285
        %v4364 = vsub.f32 %v4040, %v4289
        %v4365 = vsub.f32 %v4040, %v4293
        %v4366 = vsub.f32 %v4044, %v4265
        %v4367 = vsub.f32 %v4044, %v4269
        %v4368 = vsub.f32 %v4044, %v4273
        %v4369 = vsub.f32 %v4044, %v4277
        %v4370 = vsub.f32 %v4044, %v4281
        %v4371 = vsub.f32 %v4044, %v4285
        %v4372 = vsub.f32 %v4044, %v4289
        %v4373 = vsub.f32 %v4044, %v4293
        %v4374 = vsub.f32 %v4048, %v4265
        %v4375 = vsub.f32 %v4048, %v4269
        %v4376 = vsub.f32 %v4048, %v4273
        %v4377 = vsub.f32 %v4048, %v4277
        %v4378 = vsub.f32 %v4048, %v4281
        %v4379 = vsub.f32 %v4048, %v4285
        %v4380 = vsub.f32 %v4048, %v4289
        %v4381 = vsub.f32 %v4048, %v4293
        %v4382 = vsub.f32 %v4052, %v4265
        %v4383 = vsub.f32 %v4052, %v4269
        %v4384 = vsub.f32 %v4052, %v4273
        %v4385 = vsub.f32 %v4052, %v4277
        %v4386 = vsub.f32 %v4052, %v4281
        %v4387 = vsub.f32 %v4052, %v4285
        %v4388 = vsub.f32 %v4052, %v4289
        %v4389 = vsub.f32 %v4052, %v4293
        %v4390 = vsub.f32 %v4056, %v4265
        %v4391 = vsub.f32 %v4056, %v4269
        %v4392 = vsub.f32 %v4056, %v4273
        %v4393 = vsub.f32 %v4056, %v4277
        %v4394 = vsub.f32 %v4056, %v4281
        %v4395 = vsub.f32 %v4056, %v4285
        %v4396 = vsub.f32 %v4056, %v4289
        %v4397 = vsub.f32 %v4056, %v4293
        %v4398 = vsub.f32 %v4060, %v4265
        %v4399 = vsub.f32 %v4060, %v4269
        %v4400 = vsub.f32 %v4060, %v4273
        %v4401 = vsub.f32 %v4060, %v4277
        %v4402 = vsub.f32 %v4060, %v4281
        %v4403 = vsub.f32 %v4060, %v4285
        %v4404 = vsub.f32 %v4060, %v4289
        %v4405 = vsub.f32 %v4060, %v4293
        %v4406 = vsub.f32 %v4064, %v4265
        %v4407 = vsub.f32 %v4064, %v4269
        %v4408 = vsub.f32 %v4064, %v4273
        %v4409 = vsub.f32 %v4064, %v4277
        %v4410 = vsub.f32 %v4064, %v4281
        %v4411 = vsub.f32 %v4064, %v4285
        %v4412 = vsub.f32 %v4064, %v4289
        %v4413 = vsub.f32 %v4064, %v4293
        %v4414 = vsub.f32 %v4068, %v4265
        %v4415 = vsub.f32 %v4068, %v4269
        %v4416 = vsub.f32 %v4068, %v4273
        %v4417 = vsub.f32 %v4068, %v4277
        %v4418 = vsub.f32 %v4068, %v4281
        %v4419 = vsub.f32 %v4068, %v4285
        %v4420 = vsub.f32 %v4068, %v4289
        %v4421 = vsub.f32 %v4068, %v4293
        %v4422 = vsub.f32 %v4072, %v4265
        %v4423 = vsub.f32 %v4072, %v4269
        %v4424 = vsub.f32 %v4072, %v4273
        %v4425 = vsub.f32 %v4072, %v4277
        %v4426 = vsub.f32 %v4072, %v4281
        %v4427 = vsub.f32 %v4072, %v4285
        %v4428 = vsub.f32 %v4072, %v4289
        %v4429 = vsub.f32 %v4072, %v4293
        %v4430 = vsub.f32 %v4076, %v4265
        %v4431 = vsub.f32 %v4076, %v4269
        %v4432 = vsub.f32 %v4076, %v4273
        %v4433 = vsub.f32 %v4076, %v4277
        %v4434 = vsub.f32 %v4076, %v4281
        %v4435 = vsub.f32 %v4076, %v4285
        %v4436 = vsub.f32 %v4076, %v4289
        %v4437 = vsub.f32 %v4076, %v4293
        %v4438 = vsub.f32 %v4080, %v4265
        %v4439 = vsub.f32 %v4080, %v4269
        %v4440 = vsub.f32 %v4080, %v4273
        %v4441 = vsub.f32 %v4080, %v4277
        %v4442 = vsub.f32 %v4080, %v4281
        %v4443 = vsub.f32 %v4080, %v4285
        %v4444 = vsub.f32 %v4080, %v4289
        %v4445 = vsub.f32 %v4080, %v4293
        %v4446 = vsub.f32 %v4084, %v4265
        %v4447 = vsub.f32 %v4084, %v4269
        %v4448 = vsub.f32 %v4084, %v4273
        %v4449 = vsub.f32 %v4084, %v4277
        %v4450 = vsub.f32 %v4084, %v4281
        %v4451 = vsub.f32 %v4084, %v4285
        %v4452 = vsub.f32 %v4084, %v4289
        %v4453 = vsub.f32 %v4084, %v4293
        %v4454 = vsub.f32 %v4088, %v4265
        %v4455 = vsub.f32 %v4088, %v4269
        %v4456 = vsub.f32 %v4088, %v4273
        %v4457 = vsub.f32 %v4088, %v4277
        %v4458 = vsub.f32 %v4088, %v4281
        %v4459 = vsub.f32 %v4088, %v4285
        %v4460 = vsub.f32 %v4088, %v4289
        %v4461 = vsub.f32 %v4088, %v4293
        %v4462 = vsub.f32 %v4092, %v4265
        %v4463 = vsub.f32 %v4092, %v4269
        %v4464 = vsub.f32 %v4092, %v4273
        %v4465 = vsub.f32 %v4092, %v4277
        %v4466 = vsub.f32 %v4092, %v4281
        %v4467 = vsub.f32 %v4092, %v4285
        %v4468 = vsub.f32 %v4092, %v4289
        %v4469 = vsub.f32 %v4092, %v4293
        %v4470 = vsub.f32 %v4096, %v4265
        %v4471 = vsub.f32 %v4096, %v4269
        %v4472 = vsub.f32 %v4096, %v4273
        %v4473 = vsub.f32 %v4096, %v4277
        %v4474 = vsub.f32 %v4096, %v4281
        %v4475 = vsub.f32 %v4096, %v4285
        %v4476 = vsub.f32 %v4096, %v4289
        %v4477 = vsub.f32 %v4096, %v4293
        %v4478 = vsub.f32 %v4100, %v4265
        %v4479 = vsub.f32 %v4100, %v4269
        %v4480 = vsub.f32 %v4100, %v4273
        %v4481 = vsub.f32 %v4100, %v4277
        %v4482 = vsub.f32 %v4100, %v4281
        %v4483 = vsub.f32 %v4100, %v4285
        %v4484 = vsub.f32 %v4100, %v4289
        %v4485 = vsub.f32 %v4100, %v4293
        %v4486 = vsub.f32 %v4104, %v4265
        %v4487 = vsub.f32 %v4104, %v4269
        %v4488 = vsub.f32 %v4104, %v4273
        %v4489 = vsub.f32 %v4104, %v4277
        %v4490 = vsub.f32 %v4104, %v4281
        %v4491 = vsub.f32 %v4104, %v4285
        %v4492 = vsub.f32 %v4104, %v4289
        %v4493 = vsub.f32 %v4104, %v4293
        %v4494 = vsub.f32 %v4108, %v4265
        %v4495 = vsub.f32 %v4108, %v4269
        %v4496 = vsub.f32 %v4108, %v4273
        %v4497 = vsub.f32 %v4108, %v4277
        %v4498 = vsub.f32 %v4108, %v4281
        %v4499 = vsub.f32 %v4108, %v4285
        %v4500 = vsub.f32 %v4108, %v4289
        %v4501 = vsub.f32 %v4108, %v4293
        %v4502 = vsub.f32 %v4112, %v4265
        %v4503 = vsub.f32 %v4112, %v4269
        %v4504 = vsub.f32 %v4112, %v4273
        %v4505 = vsub.f32 %v4112, %v4277
        %v4506 = vsub.f32 %v4112, %v4281
        %v4507 = vsub.f32 %v4112, %v4285
        %v4508 = vsub.f32 %v4112, %v4289
        %v4509 = vsub.f32 %v4112, %v4293
        %v4510 = vsub.f32 %v4116, %v4265
        %v4511 = vsub.f32 %v4116, %v4269
        %v4512 = vsub.f32 %v4116, %v4273
        %v4513 = vsub.f32 %v4116, %v4277
        %v4514 = vsub.f32 %v4116, %v4281
        %v4515 = vsub.f32 %v4116, %v4285
        %v4516 = vsub.f32 %v4116, %v4289
        %v4517 = vsub.f32 %v4116, %v4293
        %v4518 = vsub.f32 %v4120, %v4265
        %v4519 = vsub.f32 %v4120, %v4269
        %v4520 = vsub.f32 %v4120, %v4273
        %v4521 = vsub.f32 %v4120, %v4277
        %v4522 = vsub.f32 %v4120, %v4281
        %v4523 = vsub.f32 %v4120, %v4285
        %v4524 = vsub.f32 %v4120, %v4289
        %v4525 = vsub.f32 %v4120, %v4293
        %v4526 = vsub.f32 %v4124, %v4265
        %v4527 = vsub.f32 %v4124, %v4269
        %v4528 = vsub.f32 %v4124, %v4273
        %v4529 = vsub.f32 %v4124, %v4277
        %v4530 = vsub.f32 %v4124, %v4281
        %v4531 = vsub.f32 %v4124, %v4285
        %v4532 = vsub.f32 %v4124, %v4289
        %v4533 = vsub.f32 %v4124, %v4293
        %v4534 = vsub.f32 %v4128, %v4265
        %v4535 = vsub.f32 %v4128, %v4269
        %v4536 = vsub.f32 %v4128, %v4273
        %v4537 = vsub.f32 %v4128, %v4277
        %v4538 = vsub.f32 %v4128, %v4281
        %v4539 = vsub.f32 %v4128, %v4285
        %v4540 = vsub.f32 %v4128, %v4289
        %v4541 = vsub.f32 %v4128, %v4293
        %v4542 = vsub.f32 %v4132, %v4265
        %v4543 = vsub.f32 %v4132, %v4269
        %v4544 = vsub.f32 %v4132, %v4273
        %v4545 = vsub.f32 %v4132, %v4277
        %v4546 = vsub.f32 %v4132, %v4281
        %v4547 = vsub.f32 %v4132, %v4285
        %v4548 = vsub.f32 %v4132, %v4289
        %v4549 = vsub.f32 %v4132, %v4293
        %v4550 = vsub.f32 %v4136, %v4265
        %v4551 = vsub.f32 %v4136, %v4269
        %v4552 = vsub.f32 %v4136, %v4273
        %v4553 = vsub.f32 %v4136, %v4277
        %v4554 = vsub.f32 %v4136, %v4281
        %v4555 = vsub.f32 %v4136, %v4285
        %v4556 = vsub.f32 %v4136, %v4289
        %v4557 = vsub.f32 %v4136, %v4293
        %v4558 = vsub.f32 %v4140, %v4265
        %v4559 = vsub.f32 %v4140, %v4269
        %v4560 = vsub.f32 %v4140, %v4273
        %v4561 = vsub.f32 %v4140, %v4277
        %v4562 = vsub.f32 %v4140, %v4281
        %v4563 = vsub.f32 %v4140, %v4285
        %v4564 = vsub.f32 %v4140, %v4289
        %v4565 = vsub.f32 %v4140, %v4293
        %v4566 = vsub.f32 %v4144, %v4265
        %v4567 = vsub.f32 %v4144, %v4269
        %v4568 = vsub.f32 %v4144, %v4273
        %v4569 = vsub.f32 %v4144, %v4277
        %v4570 = vsub.f32 %v4144, %v4281
        %v4571 = vsub.f32 %v4144, %v4285
        %v4572 = vsub.f32 %v4144, %v4289
        %v4573 = vsub.f32 %v4144, %v4293
        %v4574 = vsub.f32 %v4148, %v4265
        %v4575 = vsub.f32 %v4148, %v4269
        %v4576 = vsub.f32 %v4148, %v4273
        %v4577 = vsub.f32 %v4148, %v4277
        %v4578 = vsub.f32 %v4148, %v4281
        %v4579 = vsub.f32 %v4148, %v4285
        %v4580 = vsub.f32 %v4148, %v4289
        %v4581 = vsub.f32 %v4148, %v4293
        %v4582 = vsub.f32 %v4152, %v4265
        %v4583 = vsub.f32 %v4152, %v4269
        %v4584 = vsub.f32 %v4152, %v4273
        %v4585 = vsub.f32 %v4152, %v4277
        %v4586 = vsub.f32 %v4152, %v4281
        %v4587 = vsub.f32 %v4152, %v4285
        %v4588 = vsub.f32 %v4152, %v4289
        %v4589 = vsub.f32 %v4152, %v4293
        %v4590 = vsub.f32 %v4156, %v4265
        %v4591 = vsub.f32 %v4156, %v4269
        %v4592 = vsub.f32 %v4156, %v4273
        %v4593 = vsub.f32 %v4156, %v4277
        %v4594 = vsub.f32 %v4156, %v4281
        %v4595 = vsub.f32 %v4156, %v4285
        %v4596 = vsub.f32 %v4156, %v4289
        %v4597 = vsub.f32 %v4156, %v4293
        %v4598 = vsub.f32 %v4160, %v4265
        %v4599 = vsub.f32 %v4160, %v4269
        %v4600 = vsub.f32 %v4160, %v4273
        %v4601 = vsub.f32 %v4160, %v4277
        %v4602 = vsub.f32 %v4160, %v4281
        %v4603 = vsub.f32 %v4160, %v4285
        %v4604 = vsub.f32 %v4160, %v4289
        %v4605 = vsub.f32 %v4160, %v4293
        %v4606 = vsub.f32 %v4164, %v4265
        %v4607 = vsub.f32 %v4164, %v4269
        %v4608 = vsub.f32 %v4164, %v4273
        %v4609 = vsub.f32 %v4164, %v4277
        %v4610 = vsub.f32 %v4164, %v4281
        %v4611 = vsub.f32 %v4164, %v4285
        %v4612 = vsub.f32 %v4164, %v4289
        %v4613 = vsub.f32 %v4164, %v4293
        %v4614 = vsub.f32 %v4168, %v4265
        %v4615 = vsub.f32 %v4168, %v4269
        %v4616 = vsub.f32 %v4168, %v4273
        %v4617 = vsub.f32 %v4168, %v4277
        %v4618 = vsub.f32 %v4168, %v4281
        %v4619 = vsub.f32 %v4168, %v4285
        %v4620 = vsub.f32 %v4168, %v4289
        %v4621 = vsub.f32 %v4168, %v4293
        %v4622 = vsub.f32 %v4172, %v4265
        %v4623 = vsub.f32 %v4172, %v4269
        %v4624 = vsub.f32 %v4172, %v4273
        %v4625 = vsub.f32 %v4172, %v4277
        %v4626 = vsub.f32 %v4172, %v4281
        %v4627 = vsub.f32 %v4172, %v4285
        %v4628 = vsub.f32 %v4172, %v4289
        %v4629 = vsub.f32 %v4172, %v4293
        %v4630 = vsub.f32 %v4176, %v4265
        %v4631 = vsub.f32 %v4176, %v4269
        %v4632 = vsub.f32 %v4176, %v4273
        %v4633 = vsub.f32 %v4176, %v4277
        %v4634 = vsub.f32 %v4176, %v4281
        %v4635 = vsub.f32 %v4176, %v4285
        %v4636 = vsub.f32 %v4176, %v4289
        %v4637 = vsub.f32 %v4176, %v4293
        %v4638 = vsub.f32 %v4180, %v4265
        %v4639 = vsub.f32 %v4180, %v4269
        %v4640 = vsub.f32 %v4180, %v4273
        %v4641 = vsub.f32 %v4180, %v4277
        %v4642 = vsub.f32 %v4180, %v4281
        %v4643 = vsub.f32 %v4180, %v4285
        %v4644 = vsub.f32 %v4180, %v4289
        %v4645 = vsub.f32 %v4180, %v4293
        %v4646 = vsub.f32 %v4184, %v4265
        %v4647 = vsub.f32 %v4184, %v4269
        %v4648 = vsub.f32 %v4184, %v4273
        %v4649 = vsub.f32 %v4184, %v4277
        %v4650 = vsub.f32 %v4184, %v4281
        %v4651 = vsub.f32 %v4184, %v4285
        %v4652 = vsub.f32 %v4184, %v4289
        %v4653 = vsub.f32 %v4184, %v4293
        %v4654 = vsub.f32 %v4188, %v4265
        %v4655 = vsub.f32 %v4188, %v4269
        %v4656 = vsub.f32 %v4188, %v4273
        %v4657 = vsub.f32 %v4188, %v4277
        %v4658 = vsub.f32 %v4188, %v4281
        %v4659 = vsub.f32 %v4188, %v4285
        %v4660 = vsub.f32 %v4188, %v4289
        %v4661 = vsub.f32 %v4188, %v4293
        %v4662 = vsub.f32 %v4192, %v4265
        %v4663 = vsub.f32 %v4192, %v4269
        %v4664 = vsub.f32 %v4192, %v4273
        %v4665 = vsub.f32 %v4192, %v4277
        %v4666 = vsub.f32 %v4192, %v4281
        %v4667 = vsub.f32 %v4192, %v4285
        %v4668 = vsub.f32 %v4192, %v4289
        %v4669 = vsub.f32 %v4192, %v4293
        %v4670 = vsub.f32 %v4196, %v4265
        %v4671 = vsub.f32 %v4196, %v4269
        %v4672 = vsub.f32 %v4196, %v4273
        %v4673 = vsub.f32 %v4196, %v4277
        %v4674 = vsub.f32 %v4196, %v4281
        %v4675 = vsub.f32 %v4196, %v4285
        %v4676 = vsub.f32 %v4196, %v4289
        %v4677 = vsub.f32 %v4196, %v4293
        %v4678 = vsub.f32 %v4200, %v4265
        %v4679 = vsub.f32 %v4200, %v4269
        %v4680 = vsub.f32 %v4200, %v4273
        %v4681 = vsub.f32 %v4200, %v4277
        %v4682 = vsub.f32 %v4200, %v4281
        %v4683 = vsub.f32 %v4200, %v4285
        %v4684 = vsub.f32 %v4200, %v4289
        %v4685 = vsub.f32 %v4200, %v4293
        %v4686 = vsub.f32 %v4204, %v4265
        %v4687 = vsub.f32 %v4204, %v4269
        %v4688 = vsub.f32 %v4204, %v4273
        %v4689 = vsub.f32 %v4204, %v4277
        %v4690 = vsub.f32 %v4204, %v4281
        %v4691 = vsub.f32 %v4204, %v4285
        %v4692 = vsub.f32 %v4204, %v4289
        %v4693 = vsub.f32 %v4204, %v4293
        %v4694 = vsub.f32 %v4208, %v4265
        %v4695 = vsub.f32 %v4208, %v4269
        %v4696 = vsub.f32 %v4208, %v4273
        %v4697 = vsub.f32 %v4208, %v4277
        %v4698 = vsub.f32 %v4208, %v4281
        %v4699 = vsub.f32 %v4208, %v4285
        %v4700 = vsub.f32 %v4208, %v4289
        %v4701 = vsub.f32 %v4208, %v4293
        %v4702 = vsub.f32 %v4212, %v4265
        %v4703 = vsub.f32 %v4212, %v4269
        %v4704 = vsub.f32 %v4212, %v4273
        %v4705 = vsub.f32 %v4212, %v4277
        %v4706 = vsub.f32 %v4212, %v4281
        %v4707 = vsub.f32 %v4212, %v4285
        %v4708 = vsub.f32 %v4212, %v4289
        %v4709 = vsub.f32 %v4212, %v4293
        %v4710 = vsub.f32 %v4216, %v4265
        %v4711 = vsub.f32 %v4216, %v4269
        %v4712 = vsub.f32 %v4216, %v4273
        %v4713 = vsub.f32 %v4216, %v4277
        %v4714 = vsub.f32 %v4216, %v4281
        %v4715 = vsub.f32 %v4216, %v4285
        %v4716 = vsub.f32 %v4216, %v4289
        %v4717 = vsub.f32 %v4216, %v4293
        %v4718 = vsub.f32 %v4220, %v4265
        %v4719 = vsub.f32 %v4220, %v4269
        %v4720 = vsub.f32 %v4220, %v4273
        %v4721 = vsub.f32 %v4220, %v4277
        %v4722 = vsub.f32 %v4220, %v4281
        %v4723 = vsub.f32 %v4220, %v4285
        %v4724 = vsub.f32 %v4220, %v4289
        %v4725 = vsub.f32 %v4220, %v4293
        %v4726 = vsub.f32 %v4224, %v4265
        %v4727 = vsub.f32 %v4224, %v4269
        %v4728 = vsub.f32 %v4224, %v4273
        %v4729 = vsub.f32 %v4224, %v4277
        %v4730 = vsub.f32 %v4224, %v4281
        %v4731 = vsub.f32 %v4224, %v4285
        %v4732 = vsub.f32 %v4224, %v4289
        %v4733 = vsub.f32 %v4224, %v4293
        %v4734 = vsub.f32 %v4228, %v4265
        %v4735 = vsub.f32 %v4228, %v4269
        %v4736 = vsub.f32 %v4228, %v4273
        %v4737 = vsub.f32 %v4228, %v4277
        %v4738 = vsub.f32 %v4228, %v4281
        %v4739 = vsub.f32 %v4228, %v4285
        %v4740 = vsub.f32 %v4228, %v4289
        %v4741 = vsub.f32 %v4228, %v4293
        %v4742 = vsub.f32 %v4232, %v4265
        %v4743 = vsub.f32 %v4232, %v4269
        %v4744 = vsub.f32 %v4232, %v4273
        %v4745 = vsub.f32 %v4232, %v4277
        %v4746 = vsub.f32 %v4232, %v4281
        %v4747 = vsub.f32 %v4232, %v4285
        %v4748 = vsub.f32 %v4232, %v4289
        %v4749 = vsub.f32 %v4232, %v4293
        %v4750 = vsub.f32 %v4236, %v4265
        %v4751 = vsub.f32 %v4236, %v4269
        %v4752 = vsub.f32 %v4236, %v4273
        %v4753 = vsub.f32 %v4236, %v4277
        %v4754 = vsub.f32 %v4236, %v4281
        %v4755 = vsub.f32 %v4236, %v4285
        %v4756 = vsub.f32 %v4236, %v4289
        %v4757 = vsub.f32 %v4236, %v4293
        %v4758 = vsub.f32 %v4240, %v4265
        %v4759 = vsub.f32 %v4240, %v4269
        %v4760 = vsub.f32 %v4240, %v4273
        %v4761 = vsub.f32 %v4240, %v4277
        %v4762 = vsub.f32 %v4240, %v4281
        %v4763 = vsub.f32 %v4240, %v4285
        %v4764 = vsub.f32 %v4240, %v4289
        %v4765 = vsub.f32 %v4240, %v4293
        %v4766 = vsub.f32 %v4244, %v4265
        %v4767 = vsub.f32 %v4244, %v4269
        %v4768 = vsub.f32 %v4244, %v4273
        %v4769 = vsub.f32 %v4244, %v4277
        %v4770 = vsub.f32 %v4244, %v4281
        %v4771 = vsub.f32 %v4244, %v4285
        %v4772 = vsub.f32 %v4244, %v4289
        %v4773 = vsub.f32 %v4244, %v4293
        %v4774 = vsub.f32 %v4248, %v4265
        %v4775 = vsub.f32 %v4248, %v4269
        %v4776 = vsub.f32 %v4248, %v4273
        %v4777 = vsub.f32 %v4248, %v4277
        %v4778 = vsub.f32 %v4248, %v4281
        %v4779 = vsub.f32 %v4248, %v4285
        %v4780 = vsub.f32 %v4248, %v4289
        %v4781 = vsub.f32 %v4248, %v4293
        %v4782 = vsub.f32 %v4252, %v4265
        %v4783 = vsub.f32 %v4252, %v4269
        %v4784 = vsub.f32 %v4252, %v4273
        %v4785 = vsub.f32 %v4252, %v4277
        %v4786 = vsub.f32 %v4252, %v4281
        %v4787 = vsub.f32 %v4252, %v4285
        %v4788 = vsub.f32 %v4252, %v4289
        %v4789 = vsub.f32 %v4252, %v4293
        %v4790 = vsub.f32 %v4256, %v4265
        %v4791 = vsub.f32 %v4256, %v4269
        %v4792 = vsub.f32 %v4256, %v4273
        %v4793 = vsub.f32 %v4256, %v4277
        %v4794 = vsub.f32 %v4256, %v4281
        %v4795 = vsub.f32 %v4256, %v4285
        %v4796 = vsub.f32 %v4256, %v4289
        %v4797 = vsub.f32 %v4256, %v4293
        %v4798 = vsub.f32 %v4260, %v4265
        %v4799 = vsub.f32 %v4260, %v4269
        %v4800 = vsub.f32 %v4260, %v4273
        %v4801 = vsub.f32 %v4260, %v4277
        %v4802 = vsub.f32 %v4260, %v4281
        %v4803 = vsub.f32 %v4260, %v4285
        %v4804 = vsub.f32 %v4260, %v4289
        %v4805 = vsub.f32 %v4260, %v4293
        %v4806 = vmul.f32 %v4294, %v4294
        %v4807 = vmul.f32 %v4295, %v4295
        %v4808 = vmul.f32 %v4296, %v4296
        %v4809 = vmul.f32 %v4297, %v4297
        %v4810 = vmul.f32 %v4298, %v4298
        %v4811 = vmul.f32 %v4299, %v4299
        %v4812 = vmul.f32 %v4300, %v4300
        %v4813 = vmul.f32 %v4301, %v4301
        %v4814 = vmul.f32 %v4302, %v4302
        %v4815 = vmul.f32 %v4303, %v4303
        %v4816 = vmul.f32 %v4304, %v4304
        %v4817 = vmul.f32 %v4305, %v4305
        %v4818 = vmul.f32 %v4306, %v4306
        %v4819 = vmul.f32 %v4307, %v4307
        %v4820 = vmul.f32 %v4308, %v4308
        %v4821 = vmul.f32 %v4309, %v4309
        %v4822 = vmul.f32 %v4310, %v4310
        %v4823 = vmul.f32 %v4311, %v4311
        %v4824 = vmul.f32 %v4312, %v4312
        %v4825 = vmul.f32 %v4313, %v4313
        %v4826 = vmul.f32 %v4314, %v4314
        %v4827 = vmul.f32 %v4315, %v4315
        %v4828 = vmul.f32 %v4316, %v4316
        %v4829 = vmul.f32 %v4317, %v4317
        %v4830 = vmul.f32 %v4318, %v4318
        %v4831 = vmul.f32 %v4319, %v4319
        %v4832 = vmul.f32 %v4320, %v4320
        %v4833 = vmul.f32 %v4321, %v4321
        %v4834 = vmul.f32 %v4322, %v4322
        %v4835 = vmul.f32 %v4323, %v4323
        %v4836 = vmul.f32 %v4324, %v4324
        %v4837 = vmul.f32 %v4325, %v4325
        %v4838 = vmul.f32 %v4326, %v4326
        %v4839 = vmul.f32 %v4327, %v4327
        %v4840 = vmul.f32 %v4328, %v4328
        %v4841 = vmul.f32 %v4329, %v4329
        %v4842 = vmul.f32 %v4330, %v4330
        %v4843 = vmul.f32 %v4331, %v4331
        %v4844 = vmul.f32 %v4332, %v4332
        %v4845 = vmul.f32 %v4333, %v4333
        %v4846 = vmul.f32 %v4334, %v4334
        %v4847 = vmul.f32 %v4335, %v4335
        %v4848 = vmul.f32 %v4336, %v4336
        %v4849 = vmul.f32 %v4337, %v4337
        %v4850 = vmul.f32 %v4338, %v4338
        %v4851 = vmul.f32 %v4339, %v4339
        %v4852 = vmul.f32 %v4340, %v4340
        %v4853 = vmul.f32 %v4341, %v4341
        %v4854 = vmul.f32 %v4342, %v4342
        %v4855 = vmul.f32 %v4343, %v4343
        %v4856 = vmul.f32 %v4344, %v4344
        %v4857 = vmul.f32 %v4345, %v4345
        %v4858 = vmul.f32 %v4346, %v4346
        %v4859 = vmul.f32 %v4347, %v4347
        %v4860 = vmul.f32 %v4348, %v4348
        %v4861 = vmul.f32 %v4349, %v4349
        %v4862 = vmul.f32 %v4350, %v4350
        %v4863 = vmul.f32 %v4351, %v4351
        %v4864 = vmul.f32 %v4352, %v4352
        %v4865 = vmul.f32 %v4353, %v4353
        %v4866 = vmul.f32 %v4354, %v4354
        %v4867 = vmul.f32 %v4355, %v4355
        %v4868 = vmul.f32 %v4356, %v4356
        %v4869 = vmul.f32 %v4357, %v4357
        %v4870 = vmul.f32 %v4358, %v4358
        %v4871 = vmul.f32 %v4359, %v4359
        %v4872 = vmul.f32 %v4360, %v4360
        %v4873 = vmul.f32 %v4361, %v4361
        %v4874 = vmul.f32 %v4362, %v4362
        %v4875 = vmul.f32 %v4363, %v4363
        %v4876 = vmul.f32 %v4364, %v4364
        %v4877 = vmul.f32 %v4365, %v4365
        %v4878 = vmul.f32 %v4366, %v4366
        %v4879 = vmul.f32 %v4367, %v4367
        %v4880 = vmul.f32 %v4368, %v4368
        %v4881 = vmul.f32 %v4369, %v4369
        %v4882 = vmul.f32 %v4370, %v4370
        %v4883 = vmul.f32 %v4371, %v4371
        %v4884 = vmul.f32 %v4372, %v4372
        %v4885 = vmul.f32 %v4373, %v4373
        %v4886 = vmul.f32 %v4374, %v4374
        %v4887 = vmul.f32 %v4375, %v4375
        %v4888 = vmul.f32 %v4376, %v4376
        %v4889 = vmul.f32 %v4377, %v4377
        %v4890 = vmul.f32 %v4378, %v4378
        %v4891 = vmul.f32 %v4379, %v4379
        %v4892 = vmul.f32 %v4380, %v4380
        %v4893 = vmul.f32 %v4381, %v4381
        %v4894 = vmul.f32 %v4382, %v4382
        %v4895 = vmul.f32 %v4383, %v4383
        %v4896 = vmul.f32 %v4384, %v4384
        %v4897 = vmul.f32 %v4385, %v4385
        %v4898 = vmul.f32 %v4386, %v4386
        %v4899 = vmul.f32 %v4387, %v4387
        %v4900 = vmul.f32 %v4388, %v4388
        %v4901 = vmul.f32 %v4389, %v4389
        %v4902 = vmul.f32 %v4390, %v4390
        %v4903 = vmul.f32 %v4391, %v4391
        %v4904 = vmul.f32 %v4392, %v4392
        %v4905 = vmul.f32 %v4393, %v4393
        %v4906 = vmul.f32 %v4394, %v4394
        %v4907 = vmul.f32 %v4395, %v4395
        %v4908 = vmul.f32 %v4396, %v4396
        %v4909 = vmul.f32 %v4397, %v4397
        %v4910 = vmul.f32 %v4398, %v4398
        %v4911 = vmul.f32 %v4399, %v4399
        %v4912 = vmul.f32 %v4400, %v4400
        %v4913 = vmul.f32 %v4401, %v4401
        %v4914 = vmul.f32 %v4402, %v4402
        %v4915 = vmul.f32 %v4403, %v4403
        %v4916 = vmul.f32 %v4404, %v4404
        %v4917 = vmul.f32 %v4405, %v4405
        %v4918 = vmul.f32 %v4406, %v4406
        %v4919 = vmul.f32 %v4407, %v4407
        %v4920 = vmul.f32 %v4408, %v4408
        %v4921 = vmul.f32 %v4409, %v4409
        %v4922 = vmul.f32 %v4410, %v4410
        %v4923 = vmul.f32 %v4411, %v4411
        %v4924 = vmul.f32 %v4412, %v4412
        %v4925 = vmul.f32 %v4413, %v4413
        %v4926 = vmul.f32 %v4414, %v4414
        %v4927 = vmul.f32 %v4415, %v4415
        %v4928 = vmul.f32 %v4416, %v4416
        %v4929 = vmul.f32 %v4417, %v4417
        %v4930 = vmul.f32 %v4418, %v4418
        %v4931 = vmul.f32 %v4419, %v4419
        %v4932 = vmul.f32 %v4420, %v4420
        %v4933 = vmul.f32 %v4421, %v4421
        %v4934 = vmul.f32 %v4422, %v4422
        %v4935 = vmul.f32 %v4423, %v4423
        %v4936 = vmul.f32 %v4424, %v4424
        %v4937 = vmul.f32 %v4425, %v4425
        %v4938 = vmul.f32 %v4426, %v4426
        %v4939 = vmul.f32 %v4427, %v4427
        %v4940 = vmul.f32 %v4428, %v4428
        %v4941 = vmul.f32 %v4429, %v4429
        %v4942 = vmul.f32 %v4430, %v4430
        %v4943 = vmul.f32 %v4431, %v4431
        %v4944 = vmul.f32 %v4432, %v4432
        %v4945 = vmul.f32 %v4433, %v4433
        %v4946 = vmul.f32 %v4434, %v4434
        %v4947 = vmul.f32 %v4435, %v4435
        %v4948 = vmul.f32 %v4436, %v4436
        %v4949 = vmul.f32 %v4437, %v4437
        %v4950 = vmul.f32 %v4438, %v4438
        %v4951 = vmul.f32 %v4439, %v4439
        %v4952 = vmul.f32 %v4440, %v4440
        %v4953 = vmul.f32 %v4441, %v4441
        %v4954 = vmul.f32 %v4442, %v4442
        %v4955 = vmul.f32 %v4443, %v4443
        %v4956 = vmul.f32 %v4444, %v4444
        %v4957 = vmul.f32 %v4445, %v4445
        %v4958 = vmul.f32 %v4446, %v4446
        %v4959 = vmul.f32 %v4447, %v4447
        %v4960 = vmul.f32 %v4448, %v4448
        %v4961 = vmul.f32 %v4449, %v4449
        %v4962 = vmul.f32 %v4450, %v4450
        %v4963 = vmul.f32 %v4451, %v4451
        %v4964 = vmul.f32 %v4452, %v4452
        %v4965 = vmul.f32 %v4453, %v4453
        %v4966 = vmul.f32 %v4454, %v4454
        %v4967 = vmul.f32 %v4455, %v4455
        %v4968 = vmul.f32 %v4456, %v4456
        %v4969 = vmul.f32 %v4457, %v4457
        %v4970 = vmul.f32 %v4458, %v4458
        %v4971 = vmul.f32 %v4459, %v4459
        %v4972 = vmul.f32 %v4460, %v4460
        %v4973 = vmul.f32 %v4461, %v4461
        %v4974 = vmul.f32 %v4462, %v4462
        %v4975 = vmul.f32 %v4463, %v4463
        %v4976 = vmul.f32 %v4464, %v4464
        %v4977 = vmul.f32 %v4465, %v4465
        %v4978 = vmul.f32 %v4466, %v4466
        %v4979 = vmul.f32 %v4467, %v4467
        %v4980 = vmul.f32 %v4468, %v4468
        %v4981 = vmul.f32 %v4469, %v4469
        %v4982 = vmul.f32 %v4470, %v4470
        %v4983 = vmul.f32 %v4471, %v4471
        %v4984 = vmul.f32 %v4472, %v4472
        %v4985 = vmul.f32 %v4473, %v4473
        %v4986 = vmul.f32 %v4474, %v4474
        %v4987 = vmul.f32 %v4475, %v4475
        %v4988 = vmul.f32 %v4476, %v4476
        %v4989 = vmul.f32 %v4477, %v4477
        %v4990 = vmul.f32 %v4478, %v4478
        %v4991 = vmul.f32 %v4479, %v4479
        %v4992 = vmul.f32 %v4480, %v4480
        %v4993 = vmul.f32 %v4481, %v4481
        %v4994 = vmul.f32 %v4482, %v4482
        %v4995 = vmul.f32 %v4483, %v4483
        %v4996 = vmul.f32 %v4484, %v4484
        %v4997 = vmul.f32 %v4485, %v4485
        %v4998 = vmul.f32 %v4486, %v4486
        %v4999 = vmul.f32 %v4487, %v4487
        %v5000 = vmul.f32 %v4488, %v4488
        %v5001 = vmul.f32 %v4489, %v4489
        %v5002 = vmul.f32 %v4490, %v4490
        %v5003 = vmul.f32 %v4491, %v4491
        %v5004 = vmul.f32 %v4492, %v4492
        %v5005 = vmul.f32 %v4493, %v4493
        %v5006 = vmul.f32 %v4494, %v4494
        %v5007 = vmul.f32 %v4495, %v4495
        %v5008 = vmul.f32 %v4496, %v4496
        %v5009 = vmul.f32 %v4497, %v4497
        %v5010 = vmul.f32 %v4498, %v4498
        %v5011 = vmul.f32 %v4499, %v4499
        %v5012 = vmul.f32 %v4500, %v4500
        %v5013 = vmul.f32 %v4501, %v4501
        %v5014 = vmul.f32 %v4502, %v4502
        %v5015 = vmul.f32 %v4503, %v4503
        %v5016 = vmul.f32 %v4504, %v4504
        %v5017 = vmul.f32 %v4505, %v4505
        %v5018 = vmul.f32 %v4506, %v4506
        %v5019 = vmul.f32 %v4507, %v4507
        %v5020 = vmul.f32 %v4508, %v4508
        %v5021 = vmul.f32 %v4509, %v4509
        %v5022 = vmul.f32 %v4510, %v4510
        %v5023 = vmul.f32 %v4511, %v4511
        %v5024 = vmul.f32 %v4512, %v4512
        %v5025 = vmul.f32 %v4513, %v4513
        %v5026 = vmul.f32 %v4514, %v4514
        %v5027 = vmul.f32 %v4515, %v4515
        %v5028 = vmul.f32 %v4516, %v4516
        %v5029 = vmul.f32 %v4517, %v4517
        %v5030 = vmul.f32 %v4518, %v4518
        %v5031 = vmul.f32 %v4519, %v4519
        %v5032 = vmul.f32 %v4520, %v4520
        %v5033 = vmul.f32 %v4521, %v4521
        %v5034 = vmul.f32 %v4522, %v4522
        %v5035 = vmul.f32 %v4523, %v4523
        %v5036 = vmul.f32 %v4524, %v4524
        %v5037 = vmul.f32 %v4525, %v4525
        %v5038 = vmul.f32 %v4526, %v4526
        %v5039 = vmul.f32 %v4527, %v4527
        %v5040 = vmul.f32 %v4528, %v4528
        %v5041 = vmul.f32 %v4529, %v4529
        %v5042 = vmul.f32 %v4530, %v4530
        %v5043 = vmul.f32 %v4531, %v4531
        %v5044 = vmul.f32 %v4532, %v4532
        %v5045 = vmul.f32 %v4533, %v4533
        %v5046 = vmul.f32 %v4534, %v4534
        %v5047 = vmul.f32 %v4535, %v4535
        %v5048 = vmul.f32 %v4536, %v4536
        %v5049 = vmul.f32 %v4537, %v4537
        %v5050 = vmul.f32 %v4538, %v4538
        %v5051 = vmul.f32 %v4539, %v4539
        %v5052 = vmul.f32 %v4540, %v4540
        %v5053 = vmul.f32 %v4541, %v4541
        %v5054 = vmul.f32 %v4542, %v4542
        %v5055 = vmul.f32 %v4543, %v4543
        %v5056 = vmul.f32 %v4544, %v4544
        %v5057 = vmul.f32 %v4545, %v4545
        %v5058 = vmul.f32 %v4546, %v4546
        %v5059 = vmul.f32 %v4547, %v4547
        %v5060 = vmul.f32 %v4548, %v4548
        %v5061 = vmul.f32 %v4549, %v4549
        %v5062 = vmul.f32 %v4550, %v4550
        %v5063 = vmul.f32 %v4551, %v4551
        %v5064 = vmul.f32 %v4552, %v4552
        %v5065 = vmul.f32 %v4553, %v4553
        %v5066 = vmul.f32 %v4554, %v4554
        %v5067 = vmul.f32 %v4555, %v4555
        %v5068 = vmul.f32 %v4556, %v4556
        %v5069 = vmul.f32 %v4557, %v4557
        %v5070 = vmul.f32 %v4558, %v4558
        %v5071 = vmul.f32 %v4559, %v4559
        %v5072 = vmul.f32 %v4560, %v4560
        %v5073 = vmul.f32 %v4561, %v4561
        %v5074 = vmul.f32 %v4562, %v4562
        %v5075 = vmul.f32 %v4563, %v4563
        %v5076 = vmul.f32 %v4564, %v4564
        %v5077 = vmul.f32 %v4565, %v4565
        %v5078 = vmul.f32 %v4566, %v4566
        %v5079 = vmul.f32 %v4567, %v4567
        %v5080 = vmul.f32 %v4568, %v4568
        %v5081 = vmul.f32 %v4569, %v4569
        %v5082 = vmul.f32 %v4570, %v4570
        %v5083 = vmul.f32 %v4571, %v4571
        %v5084 = vmul.f32 %v4572, %v4572
        %v5085 = vmul.f32 %v4573, %v4573
        %v5086 = vmul.f32 %v4574, %v4574
        %v5087 = vmul.f32 %v4575, %v4575
        %v5088 = vmul.f32 %v4576, %v4576
        %v5089 = vmul.f32 %v4577, %v4577
        %v5090 = vmul.f32 %v4578, %v4578
        %v5091 = vmul.f32 %v4579, %v4579
        %v5092 = vmul.f32 %v4580, %v4580
        %v5093 = vmul.f32 %v4581, %v4581
        %v5094 = vmul.f32 %v4582, %v4582
        %v5095 = vmul.f32 %v4583, %v4583
        %v5096 = vmul.f32 %v4584, %v4584
        %v5097 = vmul.f32 %v4585, %v4585
        %v5098 = vmul.f32 %v4586, %v4586
        %v5099 = vmul.f32 %v4587, %v4587
        %v5100 = vmul.f32 %v4588, %v4588
        %v5101 = vmul.f32 %v4589, %v4589
        %v5102 = vmul.f32 %v4590, %v4590
        %v5103 = vmul.f32 %v4591, %v4591
        %v5104 = vmul.f32 %v4592, %v4592
        %v5105 = vmul.f32 %v4593, %v4593
        %v5106 = vmul.f32 %v4594, %v4594
        %v5107 = vmul.f32 %v4595, %v4595
        %v5108 = vmul.f32 %v4596, %v4596
        %v5109 = vmul.f32 %v4597, %v4597
        %v5110 = vmul.f32 %v4598, %v4598
        %v5111 = vmul.f32 %v4599, %v4599
        %v5112 = vmul.f32 %v4600, %v4600
        %v5113 = vmul.f32 %v4601, %v4601
        %v5114 = vmul.f32 %v4602, %v4602
        %v5115 = vmul.f32 %v4603, %v4603
        %v5116 = vmul.f32 %v4604, %v4604
        %v5117 = vmul.f32 %v4605, %v4605
        %v5118 = vmul.f32 %v4606, %v4606
        %v5119 = vmul.f32 %v4607, %v4607
        %v5120 = vmul.f32 %v4608, %v4608
        %v5121 = vmul.f32 %v4609, %v4609
        %v5122 = vmul.f32 %v4610, %v4610
        %v5123 = vmul.f32 %v4611, %v4611
        %v5124 = vmul.f32 %v4612, %v4612
        %v5125 = vmul.f32 %v4613, %v4613
        %v5126 = vmul.f32 %v4614, %v4614
        %v5127 = vmul.f32 %v4615, %v4615
        %v5128 = vmul.f32 %v4616, %v4616
        %v5129 = vmul.f32 %v4617, %v4617
        %v5130 = vmul.f32 %v4618, %v4618
        %v5131 = vmul.f32 %v4619, %v4619
        %v5132 = vmul.f32 %v4620, %v4620
        %v5133 = vmul.f32 %v4621, %v4621
        %v5134 = vmul.f32 %v4622, %v4622
        %v5135 = vmul.f32 %v4623, %v4623
        %v5136 = vmul.f32 %v4624, %v4624
        %v5137 = vmul.f32 %v4625, %v4625
        %v5138 = vmul.f32 %v4626, %v4626
        %v5139 = vmul.f32 %v4627, %v4627
        %v5140 = vmul.f32 %v4628, %v4628
        %v5141 = vmul.f32 %v4629, %v4629
        %v5142 = vmul.f32 %v4630, %v4630
        %v5143 = vmul.f32 %v4631, %v4631
        %v5144 = vmul.f32 %v4632, %v4632
        %v5145 = vmul.f32 %v4633, %v4633
        %v5146 = vmul.f32 %v4634, %v4634
        %v5147 = vmul.f32 %v4635, %v4635
        %v5148 = vmul.f32 %v4636, %v4636
        %v5149 = vmul.f32 %v4637, %v4637
        %v5150 = vmul.f32 %v4638, %v4638
        %v5151 = vmul.f32 %v4639, %v4639
        %v5152 = vmul.f32 %v4640, %v4640
        %v5153 = vmul.f32 %v4641, %v4641
        %v5154 = vmul.f32 %v4642, %v4642
        %v5155 = vmul.f32 %v4643, %v4643
        %v5156 = vmul.f32 %v4644, %v4644
        %v5157 = vmul.f32 %v4645, %v4645
        %v5158 = vmul.f32 %v4646, %v4646
        %v5159 = vmul.f32 %v4647, %v4647
        %v5160 = vmul.f32 %v4648, %v4648
        %v5161 = vmul.f32 %v4649, %v4649
        %v5162 = vmul.f32 %v4650, %v4650
        %v5163 = vmul.f32 %v4651, %v4651
        %v5164 = vmul.f32 %v4652, %v4652
        %v5165 = vmul.f32 %v4653, %v4653
        %v5166 = vmul.f32 %v4654, %v4654
        %v5167 = vmul.f32 %v4655, %v4655
        %v5168 = vmul.f32 %v4656, %v4656
        %v5169 = vmul.f32 %v4657, %v4657
        %v5170 = vmul.f32 %v4658, %v4658
        %v5171 = vmul.f32 %v4659, %v4659
        %v5172 = vmul.f32 %v4660, %v4660
        %v5173 = vmul.f32 %v4661, %v4661
        %v5174 = vmul.f32 %v4662, %v4662
        %v5175 = vmul.f32 %v4663, %v4663
        %v5176 = vmul.f32 %v4664, %v4664
        %v5177 = vmul.f32 %v4665, %v4665
        %v5178 = vmul.f32 %v4666, %v4666
        %v5179 = vmul.f32 %v4667, %v4667
        %v5180 = vmul.f32 %v4668, %v4668
        %v5181 = vmul.f32 %v4669, %v4669
        %v5182 = vmul.f32 %v4670, %v4670
        %v5183 = vmul.f32 %v4671, %v4671
        %v5184 = vmul.f32 %v4672, %v4672
        %v5185 = vmul.f32 %v4673, %v4673
        %v5186 = vmul.f32 %v4674, %v4674
        %v5187 = vmul.f32 %v4675, %v4675
        %v5188 = vmul.f32 %v4676, %v4676
        %v5189 = vmul.f32 %v4677, %v4677
        %v5190 = vmul.f32 %v4678, %v4678
        %v5191 = vmul.f32 %v4679, %v4679
        %v5192 = vmul.f32 %v4680, %v4680
        %v5193 = vmul.f32 %v4681, %v4681
        %v5194 = vmul.f32 %v4682, %v4682
        %v5195 = vmul.f32 %v4683, %v4683
        %v5196 = vmul.f32 %v4684, %v4684
        %v5197 = vmul.f32 %v4685, %v4685
        %v5198 = vmul.f32 %v4686, %v4686
        %v5199 = vmul.f32 %v4687, %v4687
        %v5200 = vmul.f32 %v4688, %v4688
        %v5201 = vmul.f32 %v4689, %v4689
        %v5202 = vmul.f32 %v4690, %v4690
        %v5203 = vmul.f32 %v4691, %v4691
        %v5204 = vmul.f32 %v4692, %v4692
        %v5205 = vmul.f32 %v4693, %v4693
        %v5206 = vmul.f32 %v4694, %v4694
        %v5207 = vmul.f32 %v4695, %v4695
        %v5208 = vmul.f32 %v4696, %v4696
        %v5209 = vmul.f32 %v4697, %v4697
        %v5210 = vmul.f32 %v4698, %v4698
        %v5211 = vmul.f32 %v4699, %v4699
        %v5212 = vmul.f32 %v4700, %v4700
        %v5213 = vmul.f32 %v4701, %v4701
        %v5214 = vmul.f32 %v4702, %v4702
        %v5215 = vmul.f32 %v4703, %v4703
        %v5216 = vmul.f32 %v4704, %v4704
        %v5217 = vmul.f32 %v4705, %v4705
        %v5218 = vmul.f32 %v4706, %v4706
        %v5219 = vmul.f32 %v4707, %v4707
        %v5220 = vmul.f32 %v4708, %v4708
        %v5221 = vmul.f32 %v4709, %v4709
        %v5222 = vmul.f32 %v4710, %v4710
        %v5223 = vmul.f32 %v4711, %v4711
        %v5224 = vmul.f32 %v4712, %v4712
        %v5225 = vmul.f32 %v4713, %v4713
        %v5226 = vmul.f32 %v4714, %v4714
        %v5227 = vmul.f32 %v4715, %v4715
        %v5228 = vmul.f32 %v4716, %v4716
        %v5229 = vmul.f32 %v4717, %v4717
        %v5230 = vmul.f32 %v4718, %v4718
        %v5231 = vmul.f32 %v4719, %v4719
        %v5232 = vmul.f32 %v4720, %v4720
        %v5233 = vmul.f32 %v4721, %v4721
        %v5234 = vmul.f32 %v4722, %v4722
        %v5235 = vmul.f32 %v4723, %v4723
        %v5236 = vmul.f32 %v4724, %v4724
        %v5237 = vmul.f32 %v4725, %v4725
        %v5238 = vmul.f32 %v4726, %v4726
        %v5239 = vmul.f32 %v4727, %v4727
        %v5240 = vmul.f32 %v4728, %v4728
        %v5241 = vmul.f32 %v4729, %v4729
        %v5242 = vmul.f32 %v4730, %v4730
        %v5243 = vmul.f32 %v4731, %v4731
        %v5244 = vmul.f32 %v4732, %v4732
        %v5245 = vmul.f32 %v4733, %v4733
        %v5246 = vmul.f32 %v4734, %v4734
        %v5247 = vmul.f32 %v4735, %v4735
        %v5248 = vmul.f32 %v4736, %v4736
        %v5249 = vmul.f32 %v4737, %v4737
        %v5250 = vmul.f32 %v4738, %v4738
        %v5251 = vmul.f32 %v4739, %v4739
        %v5252 = vmul.f32 %v4740, %v4740
        %v5253 = vmul.f32 %v4741, %v4741
        %v5254 = vmul.f32 %v4742, %v4742
        %v5255 = vmul.f32 %v4743, %v4743
        %v5256 = vmul.f32 %v4744, %v4744
        %v5257 = vmul.f32 %v4745, %v4745
        %v5258 = vmul.f32 %v4746, %v4746
        %v5259 = vmul.f32 %v4747, %v4747
        %v5260 = vmul.f32 %v4748, %v4748
        %v5261 = vmul.f32 %v4749, %v4749
        %v5262 = vmul.f32 %v4750, %v4750
        %v5263 = vmul.f32 %v4751, %v4751
        %v5264 = vmul.f32 %v4752, %v4752
        %v5265 = vmul.f32 %v4753, %v4753
        %v5266 = vmul.f32 %v4754, %v4754
        %v5267 = vmul.f32 %v4755, %v4755
        %v5268 = vmul.f32 %v4756, %v4756
        %v5269 = vmul.f32 %v4757, %v4757
        %v5270 = vmul.f32 %v4758, %v4758
        %v5271 = vmul.f32 %v4759, %v4759
        %v5272 = vmul.f32 %v4760, %v4760
        %v5273 = vmul.f32 %v4761, %v4761
        %v5274 = vmul.f32 %v4762, %v4762
        %v5275 = vmul.f32 %v4763, %v4763
        %v5276 = vmul.f32 %v4764, %v4764
        %v5277 = vmul.f32 %v4765, %v4765
        %v5278 = vmul.f32 %v4766, %v4766
        %v5279 = vmul.f32 %v4767, %v4767
        %v5280 = vmul.f32 %v4768, %v4768
        %v5281 = vmul.f32 %v4769, %v4769
        %v5282 = vmul.f32 %v4770, %v4770
        %v5283 = vmul.f32 %v4771, %v4771
        %v5284 = vmul.f32 %v4772, %v4772
        %v5285 = vmul.f32 %v4773, %v4773
        %v5286 = vmul.f32 %v4774, %v4774
        %v5287 = vmul.f32 %v4775, %v4775
        %v5288 = vmul.f32 %v4776, %v4776
        %v5289 = vmul.f32 %v4777, %v4777
        %v5290 = vmul.f32 %v4778, %v4778
        %v5291 = vmul.f32 %v4779, %v4779
        %v5292 = vmul.f32 %v4780, %v4780
        %v5293 = vmul.f32 %v4781, %v4781
        %v5294 = vmul.f32 %v4782, %v4782
        %v5295 = vmul.f32 %v4783, %v4783
        %v5296 = vmul.f32 %v4784, %v4784
        %v5297 = vmul.f32 %v4785, %v4785
        %v5298 = vmul.f32 %v4786, %v4786
        %v5299 = vmul.f32 %v4787, %v4787
        %v5300 = vmul.f32 %v4788, %v4788
        %v5301 = vmul.f32 %v4789, %v4789
        %v5302 = vmul.f32 %v4790, %v4790
        %v5303 = vmul.f32 %v4791, %v4791
        %v5304 = vmul.f32 %v4792, %v4792
        %v5305 = vmul.f32 %v4793, %v4793
        %v5306 = vmul.f32 %v4794, %v4794
        %v5307 = vmul.f32 %v4795, %v4795
        %v5308 = vmul.f32 %v4796, %v4796
        %v5309 = vmul.f32 %v4797, %v4797
        %v5310 = vmul.f32 %v4798, %v4798
        %v5311 = vmul.f32 %v4799, %v4799
        %v5312 = vmul.f32 %v4800, %v4800
        %v5313 = vmul.f32 %v4801, %v4801
        %v5314 = vmul.f32 %v4802, %v4802
        %v5315 = vmul.f32 %v4803, %v4803
        %v5316 = vmul.f32 %v4804, %v4804
        %v5317 = vmul.f32 %v4805, %v4805
        %v5318 = vadd.f32 %v3494, %v4806
        %v5319 = vadd.f32 %v3495, %v4807
        %v5320 = vadd.f32 %v3496, %v4808
        %v5321 = vadd.f32 %v3497, %v4809
        %v5322 = vadd.f32 %v3498, %v4810
        %v5323 = vadd.f32 %v3499, %v4811
        %v5324 = vadd.f32 %v3500, %v4812
        %v5325 = vadd.f32 %v3501, %v4813
        %v5326 = vadd.f32 %v3502, %v4814
        %v5327 = vadd.f32 %v3503, %v4815
        %v5328 = vadd.f32 %v3504, %v4816
        %v5329 = vadd.f32 %v3505, %v4817
        %v5330 = vadd.f32 %v3506, %v4818
        %v5331 = vadd.f32 %v3507, %v4819
        %v5332 = vadd.f32 %v3508, %v4820
        %v5333 = vadd.f32 %v3509, %v4821
        %v5334 = vadd.f32 %v3510, %v4822
        %v5335 = vadd.f32 %v3511, %v4823
        %v5336 = vadd.f32 %v3512, %v4824
        %v5337 = vadd.f32 %v3513, %v4825
        %v5338 = vadd.f32 %v3514, %v4826
        %v5339 = vadd.f32 %v3515, %v4827
        %v5340 = vadd.f32 %v3516, %v4828
        %v5341 = vadd.f32 %v3517, %v4829
        %v5342 = vadd.f32 %v3518, %v4830
        %v5343 = vadd.f32 %v3519, %v4831
        %v5344 = vadd.f32 %v3520, %v4832
        %v5345 = vadd.f32 %v3521, %v4833
        %v5346 = vadd.f32 %v3522, %v4834
        %v5347 = vadd.f32 %v3523, %v4835
        %v5348 = vadd.f32 %v3524, %v4836
        %v5349 = vadd.f32 %v3525, %v4837
        %v5350 = vadd.f32 %v3526, %v4838
        %v5351 = vadd.f32 %v3527, %v4839
        %v5352 = vadd.f32 %v3528, %v4840
        %v5353 = vadd.f32 %v3529, %v4841
        %v5354 = vadd.f32 %v3530, %v4842
        %v5355 = vadd.f32 %v3531, %v4843
        %v5356 = vadd.f32 %v3532, %v4844
        %v5357 = vadd.f32 %v3533, %v4845
        %v5358 = vadd.f32 %v3534, %v4846
        %v5359 = vadd.f32 %v3535, %v4847
        %v5360 = vadd.f32 %v3536, %v4848
        %v5361 = vadd.f32 %v3537, %v4849
        %v5362 = vadd.f32 %v3538, %v4850
        %v5363 = vadd.f32 %v3539, %v4851
        %v5364 = vadd.f32 %v3540, %v4852
        %v5365 = vadd.f32 %v3541, %v4853
        %v5366 = vadd.f32 %v3542, %v4854
        %v5367 = vadd.f32 %v3543, %v4855
        %v5368 = vadd.f32 %v3544, %v4856
        %v5369 = vadd.f32 %v3545, %v4857
        %v5370 = vadd.f32 %v3546, %v4858
        %v5371 = vadd.f32 %v3547, %v4859
        %v5372 = vadd.f32 %v3548, %v4860
        %v5373 = vadd.f32 %v3549, %v4861
        %v5374 = vadd.f32 %v3550, %v4862
        %v5375 = vadd.f32 %v3551, %v4863
        %v5376 = vadd.f32 %v3552, %v4864
        %v5377 = vadd.f32 %v3553, %v4865
        %v5378 = vadd.f32 %v3554, %v4866
        %v5379 = vadd.f32 %v3555, %v4867
        %v5380 = vadd.f32 %v3556, %v4868
        %v5381 = vadd.f32 %v3557, %v4869
        %v5382 = vadd.f32 %v3558, %v4870
        %v5383 = vadd.f32 %v3559, %v4871
        %v5384 = vadd.f32 %v3560, %v4872
        %v5385 = vadd.f32 %v3561, %v4873
        %v5386 = vadd.f32 %v3562, %v4874
        %v5387 = vadd.f32 %v3563, %v4875
        %v5388 = vadd.f32 %v3564, %v4876
        %v5389 = vadd.f32 %v3565, %v4877
        %v5390 = vadd.f32 %v3566, %v4878
        %v5391 = vadd.f32 %v3567, %v4879
        %v5392 = vadd.f32 %v3568, %v4880
        %v5393 = vadd.f32 %v3569, %v4881
        %v5394 = vadd.f32 %v3570, %v4882
        %v5395 = vadd.f32 %v3571, %v4883
        %v5396 = vadd.f32 %v3572, %v4884
        %v5397 = vadd.f32 %v3573, %v4885
        %v5398 = vadd.f32 %v3574, %v4886
        %v5399 = vadd.f32 %v3575, %v4887
        %v5400 = vadd.f32 %v3576, %v4888
        %v5401 = vadd.f32 %v3577, %v4889
        %v5402 = vadd.f32 %v3578, %v4890
        %v5403 = vadd.f32 %v3579, %v4891
        %v5404 = vadd.f32 %v3580, %v4892
        %v5405 = vadd.f32 %v3581, %v4893
        %v5406 = vadd.f32 %v3582, %v4894
        %v5407 = vadd.f32 %v3583, %v4895
        %v5408 = vadd.f32 %v3584, %v4896
        %v5409 = vadd.f32 %v3585, %v4897
        %v5410 = vadd.f32 %v3586, %v4898
        %v5411 = vadd.f32 %v3587, %v4899
        %v5412 = vadd.f32 %v3588, %v4900
        %v5413 = vadd.f32 %v3589, %v4901
        %v5414 = vadd.f32 %v3590, %v4902
        %v5415 = vadd.f32 %v3591, %v4903
        %v5416 = vadd.f32 %v3592, %v4904
        %v5417 = vadd.f32 %v3593, %v4905
        %v5418 = vadd.f32 %v3594, %v4906
        %v5419 = vadd.f32 %v3595, %v4907
        %v5420 = vadd.f32 %v3596, %v4908
        %v5421 = vadd.f32 %v3597, %v4909
        %v5422 = vadd.f32 %v3598, %v4910
        %v5423 = vadd.f32 %v3599, %v4911
        %v5424 = vadd.f32 %v3600, %v4912
        %v5425 = vadd.f32 %v3601, %v4913
        %v5426 = vadd.f32 %v3602, %v4914
        %v5427 = vadd.f32 %v3603, %v4915
        %v5428 = vadd.f32 %v3604, %v4916
        %v5429 = vadd.f32 %v3605, %v4917
        %v5430 = vadd.f32 %v3606, %v4918
        %v5431 = vadd.f32 %v3607, %v4919
        %v5432 = vadd.f32 %v3608, %v4920
        %v5433 = vadd.f32 %v3609, %v4921
        %v5434 = vadd.f32 %v3610, %v4922
        %v5435 = vadd.f32 %v3611, %v4923
        %v5436 = vadd.f32 %v3612, %v4924
        %v5437 = vadd.f32 %v3613, %v4925
        %v5438 = vadd.f32 %v3614, %v4926
        %v5439 = vadd.f32 %v3615, %v4927
        %v5440 = vadd.f32 %v3616, %v4928
        %v5441 = vadd.f32 %v3617, %v4929
        %v5442 = vadd.f32 %v3618, %v4930
        %v5443 = vadd.f32 %v3619, %v4931
        %v5444 = vadd.f32 %v3620, %v4932
        %v5445 = vadd.f32 %v3621, %v4933
        %v5446 = vadd.f32 %v3622, %v4934
        %v5447 = vadd.f32 %v3623, %v4935
        %v5448 = vadd.f32 %v3624, %v4936
        %v5449 = vadd.f32 %v3625, %v4937
        %v5450 = vadd.f32 %v3626, %v4938
        %v5451 = vadd.f32 %v3627, %v4939
        %v5452 = vadd.f32 %v3628, %v4940
        %v5453 = vadd.f32 %v3629, %v4941
        %v5454 = vadd.f32 %v3630, %v4942
        %v5455 = vadd.f32 %v3631, %v4943
        %v5456 = vadd.f32 %v3632, %v4944
        %v5457 = vadd.f32 %v3633, %v4945
        %v5458 = vadd.f32 %v3634, %v4946
        %v5459 = vadd.f32 %v3635, %v4947
        %v5460 = vadd.f32 %v3636, %v4948
        %v5461 = vadd.f32 %v3637, %v4949
        %v5462 = vadd.f32 %v3638, %v4950
        %v5463 = vadd.f32 %v3639, %v4951
        %v5464 = vadd.f32 %v3640, %v4952
        %v5465 = vadd.f32 %v3641, %v4953
        %v5466 = vadd.f32 %v3642, %v4954
        %v5467 = vadd.f32 %v3643, %v4955
        %v5468 = vadd.f32 %v3644, %v4956
        %v5469 = vadd.f32 %v3645, %v4957
        %v5470 = vadd.f32 %v3646, %v4958
        %v5471 = vadd.f32 %v3647, %v4959
        %v5472 = vadd.f32 %v3648, %v4960
        %v5473 = vadd.f32 %v3649, %v4961
        %v5474 = vadd.f32 %v3650, %v4962
        %v5475 = vadd.f32 %v3651, %v4963
        %v5476 = vadd.f32 %v3652, %v4964
        %v5477 = vadd.f32 %v3653, %v4965
        %v5478 = vadd.f32 %v3654, %v4966
        %v5479 = vadd.f32 %v3655, %v4967
        %v5480 = vadd.f32 %v3656, %v4968
        %v5481 = vadd.f32 %v3657, %v4969
        %v5482 = vadd.f32 %v3658, %v4970
        %v5483 = vadd.f32 %v3659, %v4971
        %v5484 = vadd.f32 %v3660, %v4972
        %v5485 = vadd.f32 %v3661, %v4973
        %v5486 = vadd.f32 %v3662, %v4974
        %v5487 = vadd.f32 %v3663, %v4975
        %v5488 = vadd.f32 %v3664, %v4976
        %v5489 = vadd.f32 %v3665, %v4977
        %v5490 = vadd.f32 %v3666, %v4978
        %v5491 = vadd.f32 %v3667, %v4979
        %v5492 = vadd.f32 %v3668, %v4980
        %v5493 = vadd.f32 %v3669, %v4981
        %v5494 = vadd.f32 %v3670, %v4982
        %v5495 = vadd.f32 %v3671, %v4983
        %v5496 = vadd.f32 %v3672, %v4984
        %v5497 = vadd.f32 %v3673, %v4985
        %v5498 = vadd.f32 %v3674, %v4986
        %v5499 = vadd.f32 %v3675, %v4987
        %v5500 = vadd.f32 %v3676, %v4988
        %v5501 = vadd.f32 %v3677, %v4989
        %v5502 = vadd.f32 %v3678, %v4990
        %v5503 = vadd.f32 %v3679, %v4991
        %v5504 = vadd.f32 %v3680, %v4992
        %v5505 = vadd.f32 %v3681, %v4993
        %v5506 = vadd.f32 %v3682, %v4994
        %v5507 = vadd.f32 %v3683, %v4995
        %v5508 = vadd.f32 %v3684, %v4996
        %v5509 = vadd.f32 %v3685, %v4997
        %v5510 = vadd.f32 %v3686, %v4998
        %v5511 = vadd.f32 %v3687, %v4999
        %v5512 = vadd.f32 %v3688, %v5000
        %v5513 = vadd.f32 %v3689, %v5001
        %v5514 = vadd.f32 %v3690, %v5002
        %v5515 = vadd.f32 %v3691, %v5003
        %v5516 = vadd.f32 %v3692, %v5004
        %v5517 = vadd.f32 %v3693, %v5005
        %v5518 = vadd.f32 %v3694, %v5006
        %v5519 = vadd.f32 %v3695, %v5007
        %v5520 = vadd.f32 %v3696, %v5008
        %v5521 = vadd.f32 %v3697, %v5009
        %v5522 = vadd.f32 %v3698, %v5010
        %v5523 = vadd.f32 %v3699, %v5011
        %v5524 = vadd.f32 %v3700, %v5012
        %v5525 = vadd.f32 %v3701, %v5013
        %v5526 = vadd.f32 %v3702, %v5014
        %v5527 = vadd.f32 %v3703, %v5015
        %v5528 = vadd.f32 %v3704, %v5016
        %v5529 = vadd.f32 %v3705, %v5017
        %v5530 = vadd.f32 %v3706, %v5018
        %v5531 = vadd.f32 %v3707, %v5019
        %v5532 = vadd.f32 %v3708, %v5020
        %v5533 = vadd.f32 %v3709, %v5021
        %v5534 = vadd.f32 %v3710, %v5022
        %v5535 = vadd.f32 %v3711, %v5023
        %v5536 = vadd.f32 %v3712, %v5024
        %v5537 = vadd.f32 %v3713, %v5025
        %v5538 = vadd.f32 %v3714, %v5026
        %v5539 = vadd.f32 %v3715, %v5027
        %v5540 = vadd.f32 %v3716, %v5028
        %v5541 = vadd.f32 %v3717, %v5029
        %v5542 = vadd.f32 %v3718, %v5030
        %v5543 = vadd.f32 %v3719, %v5031
        %v5544 = vadd.f32 %v3720, %v5032
        %v5545 = vadd.f32 %v3721, %v5033
        %v5546 = vadd.f32 %v3722, %v5034
        %v5547 = vadd.f32 %v3723, %v5035
        %v5548 = vadd.f32 %v3724, %v5036
        %v5549 = vadd.f32 %v3725, %v5037
        %v5550 = vadd.f32 %v3726, %v5038
        %v5551 = vadd.f32 %v3727, %v5039
        %v5552 = vadd.f32 %v3728, %v5040
        %v5553 = vadd.f32 %v3729, %v5041
        %v5554 = vadd.f32 %v3730, %v5042
        %v5555 = vadd.f32 %v3731, %v5043
        %v5556 = vadd.f32 %v3732, %v5044
        %v5557 = vadd.f32 %v3733, %v5045
        %v5558 = vadd.f32 %v3734, %v5046
        %v5559 = vadd.f32 %v3735, %v5047
        %v5560 = vadd.f32 %v3736, %v5048
        %v5561 = vadd.f32 %v3737, %v5049
        %v5562 = vadd.f32 %v3738, %v5050
        %v5563 = vadd.f32 %v3739, %v5051
        %v5564 = vadd.f32 %v3740, %v5052
        %v5565 = vadd.f32 %v3741, %v5053
        %v5566 = vadd.f32 %v3742, %v5054
        %v5567 = vadd.f32 %v3743, %v5055
        %v5568 = vadd.f32 %v3744, %v5056
        %v5569 = vadd.f32 %v3745, %v5057
        %v5570 = vadd.f32 %v3746, %v5058
        %v5571 = vadd.f32 %v3747, %v5059
        %v5572 = vadd.f32 %v3748, %v5060
        %v5573 = vadd.f32 %v3749, %v5061
        %v5574 = vadd.f32 %v3750, %v5062
        %v5575 = vadd.f32 %v3751, %v5063
        %v5576 = vadd.f32 %v3752, %v5064
        %v5577 = vadd.f32 %v3753, %v5065
        %v5578 = vadd.f32 %v3754, %v5066
        %v5579 = vadd.f32 %v3755, %v5067
        %v5580 = vadd.f32 %v3756, %v5068
        %v5581 = vadd.f32 %v3757, %v5069
        %v5582 = vadd.f32 %v3758, %v5070
        %v5583 = vadd.f32 %v3759, %v5071
        %v5584 = vadd.f32 %v3760, %v5072
        %v5585 = vadd.f32 %v3761, %v5073
        %v5586 = vadd.f32 %v3762, %v5074
        %v5587 = vadd.f32 %v3763, %v5075
        %v5588 = vadd.f32 %v3764, %v5076
        %v5589 = vadd.f32 %v3765, %v5077
        %v5590 = vadd.f32 %v3766, %v5078
        %v5591 = vadd.f32 %v3767, %v5079
        %v5592 = vadd.f32 %v3768, %v5080
        %v5593 = vadd.f32 %v3769, %v5081
        %v5594 = vadd.f32 %v3770, %v5082
        %v5595 = vadd.f32 %v3771, %v5083
        %v5596 = vadd.f32 %v3772, %v5084
        %v5597 = vadd.f32 %v3773, %v5085
        %v5598 = vadd.f32 %v3774, %v5086
        %v5599 = vadd.f32 %v3775, %v5087
        %v5600 = vadd.f32 %v3776, %v5088
        %v5601 = vadd.f32 %v3777, %v5089
        %v5602 = vadd.f32 %v3778, %v5090
        %v5603 = vadd.f32 %v3779, %v5091
        %v5604 = vadd.f32 %v3780, %v5092
        %v5605 = vadd.f32 %v3781, %v5093
        %v5606 = vadd.f32 %v3782, %v5094
        %v5607 = vadd.f32 %v3783, %v5095
        %v5608 = vadd.f32 %v3784, %v5096
        %v5609 = vadd.f32 %v3785, %v5097
        %v5610 = vadd.f32 %v3786, %v5098
        %v5611 = vadd.f32 %v3787, %v5099
        %v5612 = vadd.f32 %v3788, %v5100
        %v5613 = vadd.f32 %v3789, %v5101
        %v5614 = vadd.f32 %v3790, %v5102
        %v5615 = vadd.f32 %v3791, %v5103
        %v5616 = vadd.f32 %v3792, %v5104
        %v5617 = vadd.f32 %v3793, %v5105
        %v5618 = vadd.f32 %v3794, %v5106
        %v5619 = vadd.f32 %v3795, %v5107
        %v5620 = vadd.f32 %v3796, %v5108
        %v5621 = vadd.f32 %v3797, %v5109
        %v5622 = vadd.f32 %v3798, %v5110
        %v5623 = vadd.f32 %v3799, %v5111
        %v5624 = vadd.f32 %v3800, %v5112
        %v5625 = vadd.f32 %v3801, %v5113
        %v5626 = vadd.f32 %v3802, %v5114
        %v5627 = vadd.f32 %v3803, %v5115
        %v5628 = vadd.f32 %v3804, %v5116
        %v5629 = vadd.f32 %v3805, %v5117
        %v5630 = vadd.f32 %v3806, %v5118
        %v5631 = vadd.f32 %v3807, %v5119
        %v5632 = vadd.f32 %v3808, %v5120
        %v5633 = vadd.f32 %v3809, %v5121
        %v5634 = vadd.f32 %v3810, %v5122
        %v5635 = vadd.f32 %v3811, %v5123
        %v5636 = vadd.f32 %v3812, %v5124
        %v5637 = vadd.f32 %v3813, %v5125
        %v5638 = vadd.f32 %v3814, %v5126
        %v5639 = vadd.f32 %v3815, %v5127
        %v5640 = vadd.f32 %v3816, %v5128
        %v5641 = vadd.f32 %v3817, %v5129
        %v5642 = vadd.f32 %v3818, %v5130
        %v5643 = vadd.f32 %v3819, %v5131
        %v5644 = vadd.f32 %v3820, %v5132
        %v5645 = vadd.f32 %v3821, %v5133
        %v5646 = vadd.f32 %v3822, %v5134
        %v5647 = vadd.f32 %v3823, %v5135
        %v5648 = vadd.f32 %v3824, %v5136
        %v5649 = vadd.f32 %v3825, %v5137
        %v5650 = vadd.f32 %v3826, %v5138
        %v5651 = vadd.f32 %v3827, %v5139
        %v5652 = vadd.f32 %v3828, %v5140
        %v5653 = vadd.f32 %v3829, %v5141
        %v5654 = vadd.f32 %v3830, %v5142
        %v5655 = vadd.f32 %v3831, %v5143
        %v5656 = vadd.f32 %v3832, %v5144
        %v5657 = vadd.f32 %v3833, %v5145
        %v5658 = vadd.f32 %v3834, %v5146
        %v5659 = vadd.f32 %v3835, %v5147
        %v5660 = vadd.f32 %v3836, %v5148
        %v5661 = vadd.f32 %v3837, %v5149
        %v5662 = vadd.f32 %v3838, %v5150
        %v5663 = vadd.f32 %v3839, %v5151
        %v5664 = vadd.f32 %v3840, %v5152
        %v5665 = vadd.f32 %v3841, %v5153
        %v5666 = vadd.f32 %v3842, %v5154
        %v5667 = vadd.f32 %v3843, %v5155
        %v5668 = vadd.f32 %v3844, %v5156
        %v5669 = vadd.f32 %v3845, %v5157
        %v5670 = vadd.f32 %v3846, %v5158
        %v5671 = vadd.f32 %v3847, %v5159
        %v5672 = vadd.f32 %v3848, %v5160
        %v5673 = vadd.f32 %v3849, %v5161
        %v5674 = vadd.f32 %v3850, %v5162
        %v5675 = vadd.f32 %v3851, %v5163
        %v5676 = vadd.f32 %v3852, %v5164
        %v5677 = vadd.f32 %v3853, %v5165
        %v5678 = vadd.f32 %v3854, %v5166
        %v5679 = vadd.f32 %v3855, %v5167
        %v5680 = vadd.f32 %v3856, %v5168
        %v5681 = vadd.f32 %v3857, %v5169
        %v5682 = vadd.f32 %v3858, %v5170
        %v5683 = vadd.f32 %v3859, %v5171
        %v5684 = vadd.f32 %v3860, %v5172
        %v5685 = vadd.f32 %v3861, %v5173
        %v5686 = vadd.f32 %v3862, %v5174
        %v5687 = vadd.f32 %v3863, %v5175
        %v5688 = vadd.f32 %v3864, %v5176
        %v5689 = vadd.f32 %v3865, %v5177
        %v5690 = vadd.f32 %v3866, %v5178
        %v5691 = vadd.f32 %v3867, %v5179
        %v5692 = vadd.f32 %v3868, %v5180
        %v5693 = vadd.f32 %v3869, %v5181
        %v5694 = vadd.f32 %v3870, %v5182
        %v5695 = vadd.f32 %v3871, %v5183
        %v5696 = vadd.f32 %v3872, %v5184
        %v5697 = vadd.f32 %v3873, %v5185
        %v5698 = vadd.f32 %v3874, %v5186
        %v5699 = vadd.f32 %v3875, %v5187
        %v5700 = vadd.f32 %v3876, %v5188
        %v5701 = vadd.f32 %v3877, %v5189
        %v5702 = vadd.f32 %v3878, %v5190
        %v5703 = vadd.f32 %v3879, %v5191
        %v5704 = vadd.f32 %v3880, %v5192
        %v5705 = vadd.f32 %v3881, %v5193
        %v5706 = vadd.f32 %v3882, %v5194
        %v5707 = vadd.f32 %v3883, %v5195
        %v5708 = vadd.f32 %v3884, %v5196
        %v5709 = vadd.f32 %v3885, %v5197
        %v5710 = vadd.f32 %v3886, %v5198
        %v5711 = vadd.f32 %v3887, %v5199
        %v5712 = vadd.f32 %v3888, %v5200
        %v5713 = vadd.f32 %v3889, %v5201
        %v5714 = vadd.f32 %v3890, %v5202
        %v5715 = vadd.f32 %v3891, %v5203
        %v5716 = vadd.f32 %v3892, %v5204
        %v5717 = vadd.f32 %v3893, %v5205
        %v5718 = vadd.f32 %v3894, %v5206
        %v5719 = vadd.f32 %v3895, %v5207
        %v5720 = vadd.f32 %v3896, %v5208
        %v5721 = vadd.f32 %v3897, %v5209
        %v5722 = vadd.f32 %v3898, %v5210
        %v5723 = vadd.f32 %v3899, %v5211
        %v5724 = vadd.f32 %v3900, %v5212
        %v5725 = vadd.f32 %v3901, %v5213
        %v5726 = vadd.f32 %v3902, %v5214
        %v5727 = vadd.f32 %v3903, %v5215
        %v5728 = vadd.f32 %v3904, %v5216
        %v5729 = vadd.f32 %v3905, %v5217
        %v5730 = vadd.f32 %v3906, %v5218
        %v5731 = vadd.f32 %v3907, %v5219
        %v5732 = vadd.f32 %v3908, %v5220
        %v5733 = vadd.f32 %v3909, %v5221
        %v5734 = vadd.f32 %v3910, %v5222
        %v5735 = vadd.f32 %v3911, %v5223
        %v5736 = vadd.f32 %v3912, %v5224
        %v5737 = vadd.f32 %v3913, %v5225
        %v5738 = vadd.f32 %v3914, %v5226
        %v5739 = vadd.f32 %v3915, %v5227
        %v5740 = vadd.f32 %v3916, %v5228
        %v5741 = vadd.f32 %v3917, %v5229
        %v5742 = vadd.f32 %v3918, %v5230
        %v5743 = vadd.f32 %v3919, %v5231
        %v5744 = vadd.f32 %v3920, %v5232
        %v5745 = vadd.f32 %v3921, %v5233
        %v5746 = vadd.f32 %v3922, %v5234
        %v5747 = vadd.f32 %v3923, %v5235
        %v5748 = vadd.f32 %v3924, %v5236
        %v5749 = vadd.f32 %v3925, %v5237
        %v5750 = vadd.f32 %v3926, %v5238
        %v5751 = vadd.f32 %v3927, %v5239
        %v5752 = vadd.f32 %v3928, %v5240
        %v5753 = vadd.f32 %v3929, %v5241
        %v5754 = vadd.f32 %v3930, %v5242
        %v5755 = vadd.f32 %v3931, %v5243
        %v5756 = vadd.f32 %v3932, %v5244
        %v5757 = vadd.f32 %v3933, %v5245
        %v5758 = vadd.f32 %v3934, %v5246
        %v5759 = vadd.f32 %v3935, %v5247
        %v5760 = vadd.f32 %v3936, %v5248
        %v5761 = vadd.f32 %v3937, %v5249
        %v5762 = vadd.f32 %v3938, %v5250
        %v5763 = vadd.f32 %v3939, %v5251
        %v5764 = vadd.f32 %v3940, %v5252
        %v5765 = vadd.f32 %v3941, %v5253
        %v5766 = vadd.f32 %v3942, %v5254
        %v5767 = vadd.f32 %v3943, %v5255
        %v5768 = vadd.f32 %v3944, %v5256
        %v5769 = vadd.f32 %v3945, %v5257
        %v5770 = vadd.f32 %v3946, %v5258
        %v5771 = vadd.f32 %v3947, %v5259
        %v5772 = vadd.f32 %v3948, %v5260
        %v5773 = vadd.f32 %v3949, %v5261
        %v5774 = vadd.f32 %v3950, %v5262
        %v5775 = vadd.f32 %v3951, %v5263
        %v5776 = vadd.f32 %v3952, %v5264
        %v5777 = vadd.f32 %v3953, %v5265
        %v5778 = vadd.f32 %v3954, %v5266
        %v5779 = vadd.f32 %v3955, %v5267
        %v5780 = vadd.f32 %v3956, %v5268
        %v5781 = vadd.f32 %v3957, %v5269
        %v5782 = vadd.f32 %v3958, %v5270
        %v5783 = vadd.f32 %v3959, %v5271
        %v5784 = vadd.f32 %v3960, %v5272
        %v5785 = vadd.f32 %v3961, %v5273
        %v5786 = vadd.f32 %v3962, %v5274
        %v5787 = vadd.f32 %v3963, %v5275
        %v5788 = vadd.f32 %v3964, %v5276
        %v5789 = vadd.f32 %v3965, %v5277
        %v5790 = vadd.f32 %v3966, %v5278
        %v5791 = vadd.f32 %v3967, %v5279
        %v5792 = vadd.f32 %v3968, %v5280
        %v5793 = vadd.f32 %v3969, %v5281
        %v5794 = vadd.f32 %v3970, %v5282
        %v5795 = vadd.f32 %v3971, %v5283
        %v5796 = vadd.f32 %v3972, %v5284
        %v5797 = vadd.f32 %v3973, %v5285
        %v5798 = vadd.f32 %v3974, %v5286
        %v5799 = vadd.f32 %v3975, %v5287
        %v5800 = vadd.f32 %v3976, %v5288
        %v5801 = vadd.f32 %v3977, %v5289
        %v5802 = vadd.f32 %v3978, %v5290
        %v5803 = vadd.f32 %v3979, %v5291
        %v5804 = vadd.f32 %v3980, %v5292
        %v5805 = vadd.f32 %v3981, %v5293
        %v5806 = vadd.f32 %v3982, %v5294
        %v5807 = vadd.f32 %v3983, %v5295
        %v5808 = vadd.f32 %v3984, %v5296
        %v5809 = vadd.f32 %v3985, %v5297
        %v5810 = vadd.f32 %v3986, %v5298
        %v5811 = vadd.f32 %v3987, %v5299
        %v5812 = vadd.f32 %v3988, %v5300
        %v5813 = vadd.f32 %v3989, %v5301
        %v5814 = vadd.f32 %v3990, %v5302
        %v5815 = vadd.f32 %v3991, %v5303
        %v5816 = vadd.f32 %v3992, %v5304
        %v5817 = vadd.f32 %v3993, %v5305
        %v5818 = vadd.f32 %v3994, %v5306
        %v5819 = vadd.f32 %v3995, %v5307
        %v5820 = vadd.f32 %v3996, %v5308
        %v5821 = vadd.f32 %v3997, %v5309
        %v5822 = vadd.f32 %v3998, %v5310
        %v5823 = vadd.f32 %v3999, %v5311
        %v5824 = vadd.f32 %v4000, %v5312
        %v5825 = vadd.f32 %v4001, %v5313
        %v5826 = vadd.f32 %v4002, %v5314
        %v5827 = vadd.f32 %v4003, %v5315
        %v5828 = vadd.f32 %v4004, %v5316
        %v5829 = vadd.f32 %v4005, %v5317
        %5830 = vset.pattern.permute.xlu0 3
        %5831 = vperm.xlu0 %5830, %v230
        %v5832 = vpop.permute.xlu0 %5831
        %5834 = vset.pattern.permute.xlu0 3
        %5835 = vperm.xlu0 %5834, %v231
        %v5836 = vpop.permute.xlu0 %5835
        %5838 = vset.pattern.permute.xlu0 3
        %5839 = vperm.xlu0 %5838, %v232
        %v5840 = vpop.permute.xlu0 %5839
        %5842 = vset.pattern.permute.xlu0 3
        %5843 = vperm.xlu0 %5842, %v233
        %v5844 = vpop.permute.xlu0 %5843
        %5846 = vset.pattern.permute.xlu0 3
        %5847 = vperm.xlu0 %5846, %v234
        %v5848 = vpop.permute.xlu0 %5847
        %5850 = vset.pattern.permute.xlu0 3
        %5851 = vperm.xlu0 %5850, %v235
        %v5852 = vpop.permute.xlu0 %5851
        %5854 = vset.pattern.permute.xlu0 3
        %5855 = vperm.xlu0 %5854, %v236
        %v5856 = vpop.permute.xlu0 %5855
        %5858 = vset.pattern.permute.xlu0 3
        %5859 = vperm.xlu0 %5858, %v237
        %v5860 = vpop.permute.xlu0 %5859
        %5862 = vset.pattern.permute.xlu0 3
        %5863 = vperm.xlu0 %5862, %v238
        %v5864 = vpop.permute.xlu0 %5863
        %5866 = vset.pattern.permute.xlu0 3
        %5867 = vperm.xlu0 %5866, %v239
        %v5868 = vpop.permute.xlu0 %5867
        %5870 = vset.pattern.permute.xlu0 3
        %5871 = vperm.xlu0 %5870, %v240
        %v5872 = vpop.permute.xlu0 %5871
        %5874 = vset.pattern.permute.xlu0 3
        %5875 = vperm.xlu0 %5874, %v241
        %v5876 = vpop.permute.xlu0 %5875
        %5878 = vset.pattern.permute.xlu0 3
        %5879 = vperm.xlu0 %5878, %v242
        %v5880 = vpop.permute.xlu0 %5879
        %5882 = vset.pattern.permute.xlu0 3
        %5883 = vperm.xlu0 %5882, %v243
        %v5884 = vpop.permute.xlu0 %5883
        %5886 = vset.pattern.permute.xlu0 3
        %5887 = vperm.xlu0 %5886, %v244
        %v5888 = vpop.permute.xlu0 %5887
        %5890 = vset.pattern.permute.xlu0 3
        %5891 = vperm.xlu0 %5890, %v245
        %v5892 = vpop.permute.xlu0 %5891
        %5894 = vset.pattern.permute.xlu0 3
        %5895 = vperm.xlu0 %5894, %v246
        %v5896 = vpop.permute.xlu0 %5895
        %5898 = vset.pattern.permute.xlu0 3
        %5899 = vperm.xlu0 %5898, %v247
        %v5900 = vpop.permute.xlu0 %5899
        %5902 = vset.pattern.permute.xlu0 3
        %5903 = vperm.xlu0 %5902, %v248
        %v5904 = vpop.permute.xlu0 %5903
        %5906 = vset.pattern.permute.xlu0 3
        %5907 = vperm.xlu0 %5906, %v249
        %v5908 = vpop.permute.xlu0 %5907
        %5910 = vset.pattern.permute.xlu0 3
        %5911 = vperm.xlu0 %5910, %v250
        %v5912 = vpop.permute.xlu0 %5911
        %5914 = vset.pattern.permute.xlu0 3
        %5915 = vperm.xlu0 %5914, %v251
        %v5916 = vpop.permute.xlu0 %5915
        %5918 = vset.pattern.permute.xlu0 3
        %5919 = vperm.xlu0 %5918, %v252
        %v5920 = vpop.permute.xlu0 %5919
        %5922 = vset.pattern.permute.xlu0 3
        %5923 = vperm.xlu0 %5922, %v253
        %v5924 = vpop.permute.xlu0 %5923
        %5926 = vset.pattern.permute.xlu0 3
        %5927 = vperm.xlu0 %5926, %v254
        %v5928 = vpop.permute.xlu0 %5927
        %5930 = vset.pattern.permute.xlu0 3
        %5931 = vperm.xlu0 %5930, %v255
        %v5932 = vpop.permute.xlu0 %5931
        %5934 = vset.pattern.permute.xlu0 3
        %5935 = vperm.xlu0 %5934, %v256
        %v5936 = vpop.permute.xlu0 %5935
        %5938 = vset.pattern.permute.xlu0 3
        %5939 = vperm.xlu0 %5938, %v257
        %v5940 = vpop.permute.xlu0 %5939
        %5942 = vset.pattern.permute.xlu0 3
        %5943 = vperm.xlu0 %5942, %v258
        %v5944 = vpop.permute.xlu0 %5943
        %5946 = vset.pattern.permute.xlu0 3
        %5947 = vperm.xlu0 %5946, %v259
        %v5948 = vpop.permute.xlu0 %5947
        %5950 = vset.pattern.permute.xlu0 3
        %5951 = vperm.xlu0 %5950, %v260
        %v5952 = vpop.permute.xlu0 %5951
        %5954 = vset.pattern.permute.xlu0 3
        %5955 = vperm.xlu0 %5954, %v261
        %v5956 = vpop.permute.xlu0 %5955
        %5958 = vset.pattern.permute.xlu0 3
        %5959 = vperm.xlu0 %5958, %v262
        %v5960 = vpop.permute.xlu0 %5959
        %5962 = vset.pattern.permute.xlu0 3
        %5963 = vperm.xlu0 %5962, %v263
        %v5964 = vpop.permute.xlu0 %5963
        %5966 = vset.pattern.permute.xlu0 3
        %5967 = vperm.xlu0 %5966, %v264
        %v5968 = vpop.permute.xlu0 %5967
        %5970 = vset.pattern.permute.xlu0 3
        %5971 = vperm.xlu0 %5970, %v265
        %v5972 = vpop.permute.xlu0 %5971
        %5974 = vset.pattern.permute.xlu0 3
        %5975 = vperm.xlu0 %5974, %v266
        %v5976 = vpop.permute.xlu0 %5975
        %5978 = vset.pattern.permute.xlu0 3
        %5979 = vperm.xlu0 %5978, %v267
        %v5980 = vpop.permute.xlu0 %5979
        %5982 = vset.pattern.permute.xlu0 3
        %5983 = vperm.xlu0 %5982, %v268
        %v5984 = vpop.permute.xlu0 %5983
        %5986 = vset.pattern.permute.xlu0 3
        %5987 = vperm.xlu0 %5986, %v269
        %v5988 = vpop.permute.xlu0 %5987
        %5990 = vset.pattern.permute.xlu0 3
        %5991 = vperm.xlu0 %5990, %v270
        %v5992 = vpop.permute.xlu0 %5991
        %5994 = vset.pattern.permute.xlu0 3
        %5995 = vperm.xlu0 %5994, %v271
        %v5996 = vpop.permute.xlu0 %5995
        %5998 = vset.pattern.permute.xlu0 3
        %5999 = vperm.xlu0 %5998, %v272
        %v6000 = vpop.permute.xlu0 %5999
        %6002 = vset.pattern.permute.xlu0 3
        %6003 = vperm.xlu0 %6002, %v273
        %v6004 = vpop.permute.xlu0 %6003
        %6006 = vset.pattern.permute.xlu0 3
        %6007 = vperm.xlu0 %6006, %v274
        %v6008 = vpop.permute.xlu0 %6007
        %6010 = vset.pattern.permute.xlu0 3
        %6011 = vperm.xlu0 %6010, %v275
        %v6012 = vpop.permute.xlu0 %6011
        %6014 = vset.pattern.permute.xlu0 3
        %6015 = vperm.xlu0 %6014, %v276
        %v6016 = vpop.permute.xlu0 %6015
        %6018 = vset.pattern.permute.xlu0 3
        %6019 = vperm.xlu0 %6018, %v277
        %v6020 = vpop.permute.xlu0 %6019
        %6022 = vset.pattern.permute.xlu0 3
        %6023 = vperm.xlu0 %6022, %v278
        %v6024 = vpop.permute.xlu0 %6023
        %6026 = vset.pattern.permute.xlu0 3
        %6027 = vperm.xlu0 %6026, %v279
        %v6028 = vpop.permute.xlu0 %6027
        %6030 = vset.pattern.permute.xlu0 3
        %6031 = vperm.xlu0 %6030, %v280
        %v6032 = vpop.permute.xlu0 %6031
        %6034 = vset.pattern.permute.xlu0 3
        %6035 = vperm.xlu0 %6034, %v281
        %v6036 = vpop.permute.xlu0 %6035
        %6038 = vset.pattern.permute.xlu0 3
        %6039 = vperm.xlu0 %6038, %v282
        %v6040 = vpop.permute.xlu0 %6039
        %6042 = vset.pattern.permute.xlu0 3
        %6043 = vperm.xlu0 %6042, %v283
        %v6044 = vpop.permute.xlu0 %6043
        %6046 = vset.pattern.permute.xlu0 3
        %6047 = vperm.xlu0 %6046, %v284
        %v6048 = vpop.permute.xlu0 %6047
        %6050 = vset.pattern.permute.xlu0 3
        %6051 = vperm.xlu0 %6050, %v285
        %v6052 = vpop.permute.xlu0 %6051
        %6054 = vset.pattern.permute.xlu0 3
        %6055 = vperm.xlu0 %6054, %v286
        %v6056 = vpop.permute.xlu0 %6055
        %6058 = vset.pattern.permute.xlu0 3
        %6059 = vperm.xlu0 %6058, %v287
        %v6060 = vpop.permute.xlu0 %6059
        %6062 = vset.pattern.permute.xlu0 3
        %6063 = vperm.xlu0 %6062, %v288
        %v6064 = vpop.permute.xlu0 %6063
        %6066 = vset.pattern.permute.xlu0 3
        %6067 = vperm.xlu0 %6066, %v289
        %v6068 = vpop.permute.xlu0 %6067
        %6070 = vset.pattern.permute.xlu0 3
        %6071 = vperm.xlu0 %6070, %v290
        %v6072 = vpop.permute.xlu0 %6071
        %6074 = vset.pattern.permute.xlu0 3
        %6075 = vperm.xlu0 %6074, %v291
        %v6076 = vpop.permute.xlu0 %6075
        %6078 = vset.pattern.permute.xlu0 3
        %6079 = vperm.xlu0 %6078, %v292
        %v6080 = vpop.permute.xlu0 %6079
        %6082 = vset.pattern.permute.xlu0 3
        %6083 = vperm.xlu0 %6082, %v293
        %v6084 = vpop.permute.xlu0 %6083
        %v6086 = vlaneseq
        %v6087 = vshrl.u32 %v6086, 7
        %v6088 = vsub.s32 3, %v6087
        %v6089 = vrot.slane %v222, %v6088
        %v6090 = vlaneseq
        %v6091 = vshrl.u32 %v6090, 7
        %v6092 = vsub.s32 3, %v6091
        %v6093 = vrot.slane %v223, %v6092
        %v6094 = vlaneseq
        %v6095 = vshrl.u32 %v6094, 7
        %v6096 = vsub.s32 3, %v6095
        %v6097 = vrot.slane %v224, %v6096
        %v6098 = vlaneseq
        %v6099 = vshrl.u32 %v6098, 7
        %v6100 = vsub.s32 3, %v6099
        %v6101 = vrot.slane %v225, %v6100
        %v6102 = vlaneseq
        %v6103 = vshrl.u32 %v6102, 7
        %v6104 = vsub.s32 3, %v6103
        %v6105 = vrot.slane %v226, %v6104
        %v6106 = vlaneseq
        %v6107 = vshrl.u32 %v6106, 7
        %v6108 = vsub.s32 3, %v6107
        %v6109 = vrot.slane %v227, %v6108
        %v6110 = vlaneseq
        %v6111 = vshrl.u32 %v6110, 7
        %v6112 = vsub.s32 3, %v6111
        %v6113 = vrot.slane %v228, %v6112
        %v6114 = vlaneseq
        %v6115 = vshrl.u32 %v6114, 7
        %v6116 = vsub.s32 3, %v6115
        %v6117 = vrot.slane %v229, %v6116
        %v6118 = vadd.f32 %v5832, %v6089
        %v6119 = vadd.f32 %v5832, %v6093
        %v6120 = vadd.f32 %v5832, %v6097
        %v6121 = vadd.f32 %v5832, %v6101
        %v6122 = vadd.f32 %v5832, %v6105
        %v6123 = vadd.f32 %v5832, %v6109
        %v6124 = vadd.f32 %v5832, %v6113
        %v6125 = vadd.f32 %v5832, %v6117
        %v6126 = vadd.f32 %v5836, %v6089
        %v6127 = vadd.f32 %v5836, %v6093
        %v6128 = vadd.f32 %v5836, %v6097
        %v6129 = vadd.f32 %v5836, %v6101
        %v6130 = vadd.f32 %v5836, %v6105
        %v6131 = vadd.f32 %v5836, %v6109
        %v6132 = vadd.f32 %v5836, %v6113
        %v6133 = vadd.f32 %v5836, %v6117
        %v6134 = vadd.f32 %v5840, %v6089
        %v6135 = vadd.f32 %v5840, %v6093
        %v6136 = vadd.f32 %v5840, %v6097
        %v6137 = vadd.f32 %v5840, %v6101
        %v6138 = vadd.f32 %v5840, %v6105
        %v6139 = vadd.f32 %v5840, %v6109
        %v6140 = vadd.f32 %v5840, %v6113
        %v6141 = vadd.f32 %v5840, %v6117
        %v6142 = vadd.f32 %v5844, %v6089
        %v6143 = vadd.f32 %v5844, %v6093
        %v6144 = vadd.f32 %v5844, %v6097
        %v6145 = vadd.f32 %v5844, %v6101
        %v6146 = vadd.f32 %v5844, %v6105
        %v6147 = vadd.f32 %v5844, %v6109
        %v6148 = vadd.f32 %v5844, %v6113
        %v6149 = vadd.f32 %v5844, %v6117
        %v6150 = vadd.f32 %v5848, %v6089
        %v6151 = vadd.f32 %v5848, %v6093
        %v6152 = vadd.f32 %v5848, %v6097
        %v6153 = vadd.f32 %v5848, %v6101
        %v6154 = vadd.f32 %v5848, %v6105
        %v6155 = vadd.f32 %v5848, %v6109
        %v6156 = vadd.f32 %v5848, %v6113
        %v6157 = vadd.f32 %v5848, %v6117
        %v6158 = vadd.f32 %v5852, %v6089
        %v6159 = vadd.f32 %v5852, %v6093
        %v6160 = vadd.f32 %v5852, %v6097
        %v6161 = vadd.f32 %v5852, %v6101
        %v6162 = vadd.f32 %v5852, %v6105
        %v6163 = vadd.f32 %v5852, %v6109
        %v6164 = vadd.f32 %v5852, %v6113
        %v6165 = vadd.f32 %v5852, %v6117
        %v6166 = vadd.f32 %v5856, %v6089
        %v6167 = vadd.f32 %v5856, %v6093
        %v6168 = vadd.f32 %v5856, %v6097
        %v6169 = vadd.f32 %v5856, %v6101
        %v6170 = vadd.f32 %v5856, %v6105
        %v6171 = vadd.f32 %v5856, %v6109
        %v6172 = vadd.f32 %v5856, %v6113
        %v6173 = vadd.f32 %v5856, %v6117
        %v6174 = vadd.f32 %v5860, %v6089
        %v6175 = vadd.f32 %v5860, %v6093
        %v6176 = vadd.f32 %v5860, %v6097
        %v6177 = vadd.f32 %v5860, %v6101
        %v6178 = vadd.f32 %v5860, %v6105
        %v6179 = vadd.f32 %v5860, %v6109
        %v6180 = vadd.f32 %v5860, %v6113
        %v6181 = vadd.f32 %v5860, %v6117
        %v6182 = vadd.f32 %v5864, %v6089
        %v6183 = vadd.f32 %v5864, %v6093
        %v6184 = vadd.f32 %v5864, %v6097
        %v6185 = vadd.f32 %v5864, %v6101
        %v6186 = vadd.f32 %v5864, %v6105
        %v6187 = vadd.f32 %v5864, %v6109
        %v6188 = vadd.f32 %v5864, %v6113
        %v6189 = vadd.f32 %v5864, %v6117
        %v6190 = vadd.f32 %v5868, %v6089
        %v6191 = vadd.f32 %v5868, %v6093
        %v6192 = vadd.f32 %v5868, %v6097
        %v6193 = vadd.f32 %v5868, %v6101
        %v6194 = vadd.f32 %v5868, %v6105
        %v6195 = vadd.f32 %v5868, %v6109
        %v6196 = vadd.f32 %v5868, %v6113
        %v6197 = vadd.f32 %v5868, %v6117
        %v6198 = vadd.f32 %v5872, %v6089
        %v6199 = vadd.f32 %v5872, %v6093
        %v6200 = vadd.f32 %v5872, %v6097
        %v6201 = vadd.f32 %v5872, %v6101
        %v6202 = vadd.f32 %v5872, %v6105
        %v6203 = vadd.f32 %v5872, %v6109
        %v6204 = vadd.f32 %v5872, %v6113
        %v6205 = vadd.f32 %v5872, %v6117
        %v6206 = vadd.f32 %v5876, %v6089
        %v6207 = vadd.f32 %v5876, %v6093
        %v6208 = vadd.f32 %v5876, %v6097
        %v6209 = vadd.f32 %v5876, %v6101
        %v6210 = vadd.f32 %v5876, %v6105
        %v6211 = vadd.f32 %v5876, %v6109
        %v6212 = vadd.f32 %v5876, %v6113
        %v6213 = vadd.f32 %v5876, %v6117
        %v6214 = vadd.f32 %v5880, %v6089
        %v6215 = vadd.f32 %v5880, %v6093
        %v6216 = vadd.f32 %v5880, %v6097
        %v6217 = vadd.f32 %v5880, %v6101
        %v6218 = vadd.f32 %v5880, %v6105
        %v6219 = vadd.f32 %v5880, %v6109
        %v6220 = vadd.f32 %v5880, %v6113
        %v6221 = vadd.f32 %v5880, %v6117
        %v6222 = vadd.f32 %v5884, %v6089
        %v6223 = vadd.f32 %v5884, %v6093
        %v6224 = vadd.f32 %v5884, %v6097
        %v6225 = vadd.f32 %v5884, %v6101
        %v6226 = vadd.f32 %v5884, %v6105
        %v6227 = vadd.f32 %v5884, %v6109
        %v6228 = vadd.f32 %v5884, %v6113
        %v6229 = vadd.f32 %v5884, %v6117
        %v6230 = vadd.f32 %v5888, %v6089
        %v6231 = vadd.f32 %v5888, %v6093
        %v6232 = vadd.f32 %v5888, %v6097
        %v6233 = vadd.f32 %v5888, %v6101
        %v6234 = vadd.f32 %v5888, %v6105
        %v6235 = vadd.f32 %v5888, %v6109
        %v6236 = vadd.f32 %v5888, %v6113
        %v6237 = vadd.f32 %v5888, %v6117
        %v6238 = vadd.f32 %v5892, %v6089
        %v6239 = vadd.f32 %v5892, %v6093
        %v6240 = vadd.f32 %v5892, %v6097
        %v6241 = vadd.f32 %v5892, %v6101
        %v6242 = vadd.f32 %v5892, %v6105
        %v6243 = vadd.f32 %v5892, %v6109
        %v6244 = vadd.f32 %v5892, %v6113
        %v6245 = vadd.f32 %v5892, %v6117
        %v6246 = vadd.f32 %v5896, %v6089
        %v6247 = vadd.f32 %v5896, %v6093
        %v6248 = vadd.f32 %v5896, %v6097
        %v6249 = vadd.f32 %v5896, %v6101
        %v6250 = vadd.f32 %v5896, %v6105
        %v6251 = vadd.f32 %v5896, %v6109
        %v6252 = vadd.f32 %v5896, %v6113
        %v6253 = vadd.f32 %v5896, %v6117
        %v6254 = vadd.f32 %v5900, %v6089
        %v6255 = vadd.f32 %v5900, %v6093
        %v6256 = vadd.f32 %v5900, %v6097
        %v6257 = vadd.f32 %v5900, %v6101
        %v6258 = vadd.f32 %v5900, %v6105
        %v6259 = vadd.f32 %v5900, %v6109
        %v6260 = vadd.f32 %v5900, %v6113
        %v6261 = vadd.f32 %v5900, %v6117
        %v6262 = vadd.f32 %v5904, %v6089
        %v6263 = vadd.f32 %v5904, %v6093
        %v6264 = vadd.f32 %v5904, %v6097
        %v6265 = vadd.f32 %v5904, %v6101
        %v6266 = vadd.f32 %v5904, %v6105
        %v6267 = vadd.f32 %v5904, %v6109
        %v6268 = vadd.f32 %v5904, %v6113
        %v6269 = vadd.f32 %v5904, %v6117
        %v6270 = vadd.f32 %v5908, %v6089
        %v6271 = vadd.f32 %v5908, %v6093
        %v6272 = vadd.f32 %v5908, %v6097
        %v6273 = vadd.f32 %v5908, %v6101
        %v6274 = vadd.f32 %v5908, %v6105
        %v6275 = vadd.f32 %v5908, %v6109
        %v6276 = vadd.f32 %v5908, %v6113
        %v6277 = vadd.f32 %v5908, %v6117
        %v6278 = vadd.f32 %v5912, %v6089
        %v6279 = vadd.f32 %v5912, %v6093
        %v6280 = vadd.f32 %v5912, %v6097
        %v6281 = vadd.f32 %v5912, %v6101
        %v6282 = vadd.f32 %v5912, %v6105
        %v6283 = vadd.f32 %v5912, %v6109
        %v6284 = vadd.f32 %v5912, %v6113
        %v6285 = vadd.f32 %v5912, %v6117
        %v6286 = vadd.f32 %v5916, %v6089
        %v6287 = vadd.f32 %v5916, %v6093
        %v6288 = vadd.f32 %v5916, %v6097
        %v6289 = vadd.f32 %v5916, %v6101
        %v6290 = vadd.f32 %v5916, %v6105
        %v6291 = vadd.f32 %v5916, %v6109
        %v6292 = vadd.f32 %v5916, %v6113
        %v6293 = vadd.f32 %v5916, %v6117
        %v6294 = vadd.f32 %v5920, %v6089
        %v6295 = vadd.f32 %v5920, %v6093
        %v6296 = vadd.f32 %v5920, %v6097
        %v6297 = vadd.f32 %v5920, %v6101
        %v6298 = vadd.f32 %v5920, %v6105
        %v6299 = vadd.f32 %v5920, %v6109
        %v6300 = vadd.f32 %v5920, %v6113
        %v6301 = vadd.f32 %v5920, %v6117
        %v6302 = vadd.f32 %v5924, %v6089
        %v6303 = vadd.f32 %v5924, %v6093
        %v6304 = vadd.f32 %v5924, %v6097
        %v6305 = vadd.f32 %v5924, %v6101
        %v6306 = vadd.f32 %v5924, %v6105
        %v6307 = vadd.f32 %v5924, %v6109
        %v6308 = vadd.f32 %v5924, %v6113
        %v6309 = vadd.f32 %v5924, %v6117
        %v6310 = vadd.f32 %v5928, %v6089
        %v6311 = vadd.f32 %v5928, %v6093
        %v6312 = vadd.f32 %v5928, %v6097
        %v6313 = vadd.f32 %v5928, %v6101
        %v6314 = vadd.f32 %v5928, %v6105
        %v6315 = vadd.f32 %v5928, %v6109
        %v6316 = vadd.f32 %v5928, %v6113
        %v6317 = vadd.f32 %v5928, %v6117
        %v6318 = vadd.f32 %v5932, %v6089
        %v6319 = vadd.f32 %v5932, %v6093
        %v6320 = vadd.f32 %v5932, %v6097
        %v6321 = vadd.f32 %v5932, %v6101
        %v6322 = vadd.f32 %v5932, %v6105
        %v6323 = vadd.f32 %v5932, %v6109
        %v6324 = vadd.f32 %v5932, %v6113
        %v6325 = vadd.f32 %v5932, %v6117
        %v6326 = vadd.f32 %v5936, %v6089
        %v6327 = vadd.f32 %v5936, %v6093
        %v6328 = vadd.f32 %v5936, %v6097
        %v6329 = vadd.f32 %v5936, %v6101
        %v6330 = vadd.f32 %v5936, %v6105
        %v6331 = vadd.f32 %v5936, %v6109
        %v6332 = vadd.f32 %v5936, %v6113
        %v6333 = vadd.f32 %v5936, %v6117
        %v6334 = vadd.f32 %v5940, %v6089
        %v6335 = vadd.f32 %v5940, %v6093
        %v6336 = vadd.f32 %v5940, %v6097
        %v6337 = vadd.f32 %v5940, %v6101
        %v6338 = vadd.f32 %v5940, %v6105
        %v6339 = vadd.f32 %v5940, %v6109
        %v6340 = vadd.f32 %v5940, %v6113
        %v6341 = vadd.f32 %v5940, %v6117
        %v6342 = vadd.f32 %v5944, %v6089
        %v6343 = vadd.f32 %v5944, %v6093
        %v6344 = vadd.f32 %v5944, %v6097
        %v6345 = vadd.f32 %v5944, %v6101
        %v6346 = vadd.f32 %v5944, %v6105
        %v6347 = vadd.f32 %v5944, %v6109
        %v6348 = vadd.f32 %v5944, %v6113
        %v6349 = vadd.f32 %v5944, %v6117
        %v6350 = vadd.f32 %v5948, %v6089
        %v6351 = vadd.f32 %v5948, %v6093
        %v6352 = vadd.f32 %v5948, %v6097
        %v6353 = vadd.f32 %v5948, %v6101
        %v6354 = vadd.f32 %v5948, %v6105
        %v6355 = vadd.f32 %v5948, %v6109
        %v6356 = vadd.f32 %v5948, %v6113
        %v6357 = vadd.f32 %v5948, %v6117
        %v6358 = vadd.f32 %v5952, %v6089
        %v6359 = vadd.f32 %v5952, %v6093
        %v6360 = vadd.f32 %v5952, %v6097
        %v6361 = vadd.f32 %v5952, %v6101
        %v6362 = vadd.f32 %v5952, %v6105
        %v6363 = vadd.f32 %v5952, %v6109
        %v6364 = vadd.f32 %v5952, %v6113
        %v6365 = vadd.f32 %v5952, %v6117
        %v6366 = vadd.f32 %v5956, %v6089
        %v6367 = vadd.f32 %v5956, %v6093
        %v6368 = vadd.f32 %v5956, %v6097
        %v6369 = vadd.f32 %v5956, %v6101
        %v6370 = vadd.f32 %v5956, %v6105
        %v6371 = vadd.f32 %v5956, %v6109
        %v6372 = vadd.f32 %v5956, %v6113
        %v6373 = vadd.f32 %v5956, %v6117
        %v6374 = vadd.f32 %v5960, %v6089
        %v6375 = vadd.f32 %v5960, %v6093
        %v6376 = vadd.f32 %v5960, %v6097
        %v6377 = vadd.f32 %v5960, %v6101
        %v6378 = vadd.f32 %v5960, %v6105
        %v6379 = vadd.f32 %v5960, %v6109
        %v6380 = vadd.f32 %v5960, %v6113
        %v6381 = vadd.f32 %v5960, %v6117
        %v6382 = vadd.f32 %v5964, %v6089
        %v6383 = vadd.f32 %v5964, %v6093
        %v6384 = vadd.f32 %v5964, %v6097
        %v6385 = vadd.f32 %v5964, %v6101
        %v6386 = vadd.f32 %v5964, %v6105
        %v6387 = vadd.f32 %v5964, %v6109
        %v6388 = vadd.f32 %v5964, %v6113
        %v6389 = vadd.f32 %v5964, %v6117
        %v6390 = vadd.f32 %v5968, %v6089
        %v6391 = vadd.f32 %v5968, %v6093
        %v6392 = vadd.f32 %v5968, %v6097
        %v6393 = vadd.f32 %v5968, %v6101
        %v6394 = vadd.f32 %v5968, %v6105
        %v6395 = vadd.f32 %v5968, %v6109
        %v6396 = vadd.f32 %v5968, %v6113
        %v6397 = vadd.f32 %v5968, %v6117
        %v6398 = vadd.f32 %v5972, %v6089
        %v6399 = vadd.f32 %v5972, %v6093
        %v6400 = vadd.f32 %v5972, %v6097
        %v6401 = vadd.f32 %v5972, %v6101
        %v6402 = vadd.f32 %v5972, %v6105
        %v6403 = vadd.f32 %v5972, %v6109
        %v6404 = vadd.f32 %v5972, %v6113
        %v6405 = vadd.f32 %v5972, %v6117
        %v6406 = vadd.f32 %v5976, %v6089
        %v6407 = vadd.f32 %v5976, %v6093
        %v6408 = vadd.f32 %v5976, %v6097
        %v6409 = vadd.f32 %v5976, %v6101
        %v6410 = vadd.f32 %v5976, %v6105
        %v6411 = vadd.f32 %v5976, %v6109
        %v6412 = vadd.f32 %v5976, %v6113
        %v6413 = vadd.f32 %v5976, %v6117
        %v6414 = vadd.f32 %v5980, %v6089
        %v6415 = vadd.f32 %v5980, %v6093
        %v6416 = vadd.f32 %v5980, %v6097
        %v6417 = vadd.f32 %v5980, %v6101
        %v6418 = vadd.f32 %v5980, %v6105
        %v6419 = vadd.f32 %v5980, %v6109
        %v6420 = vadd.f32 %v5980, %v6113
        %v6421 = vadd.f32 %v5980, %v6117
        %v6422 = vadd.f32 %v5984, %v6089
        %v6423 = vadd.f32 %v5984, %v6093
        %v6424 = vadd.f32 %v5984, %v6097
        %v6425 = vadd.f32 %v5984, %v6101
        %v6426 = vadd.f32 %v5984, %v6105
        %v6427 = vadd.f32 %v5984, %v6109
        %v6428 = vadd.f32 %v5984, %v6113
        %v6429 = vadd.f32 %v5984, %v6117
        %v6430 = vadd.f32 %v5988, %v6089
        %v6431 = vadd.f32 %v5988, %v6093
        %v6432 = vadd.f32 %v5988, %v6097
        %v6433 = vadd.f32 %v5988, %v6101
        %v6434 = vadd.f32 %v5988, %v6105
        %v6435 = vadd.f32 %v5988, %v6109
        %v6436 = vadd.f32 %v5988, %v6113
        %v6437 = vadd.f32 %v5988, %v6117
        %v6438 = vadd.f32 %v5992, %v6089
        %v6439 = vadd.f32 %v5992, %v6093
        %v6440 = vadd.f32 %v5992, %v6097
        %v6441 = vadd.f32 %v5992, %v6101
        %v6442 = vadd.f32 %v5992, %v6105
        %v6443 = vadd.f32 %v5992, %v6109
        %v6444 = vadd.f32 %v5992, %v6113
        %v6445 = vadd.f32 %v5992, %v6117
        %v6446 = vadd.f32 %v5996, %v6089
        %v6447 = vadd.f32 %v5996, %v6093
        %v6448 = vadd.f32 %v5996, %v6097
        %v6449 = vadd.f32 %v5996, %v6101
        %v6450 = vadd.f32 %v5996, %v6105
        %v6451 = vadd.f32 %v5996, %v6109
        %v6452 = vadd.f32 %v5996, %v6113
        %v6453 = vadd.f32 %v5996, %v6117
        %v6454 = vadd.f32 %v6000, %v6089
        %v6455 = vadd.f32 %v6000, %v6093
        %v6456 = vadd.f32 %v6000, %v6097
        %v6457 = vadd.f32 %v6000, %v6101
        %v6458 = vadd.f32 %v6000, %v6105
        %v6459 = vadd.f32 %v6000, %v6109
        %v6460 = vadd.f32 %v6000, %v6113
        %v6461 = vadd.f32 %v6000, %v6117
        %v6462 = vadd.f32 %v6004, %v6089
        %v6463 = vadd.f32 %v6004, %v6093
        %v6464 = vadd.f32 %v6004, %v6097
        %v6465 = vadd.f32 %v6004, %v6101
        %v6466 = vadd.f32 %v6004, %v6105
        %v6467 = vadd.f32 %v6004, %v6109
        %v6468 = vadd.f32 %v6004, %v6113
        %v6469 = vadd.f32 %v6004, %v6117
        %v6470 = vadd.f32 %v6008, %v6089
        %v6471 = vadd.f32 %v6008, %v6093
        %v6472 = vadd.f32 %v6008, %v6097
        %v6473 = vadd.f32 %v6008, %v6101
        %v6474 = vadd.f32 %v6008, %v6105
        %v6475 = vadd.f32 %v6008, %v6109
        %v6476 = vadd.f32 %v6008, %v6113
        %v6477 = vadd.f32 %v6008, %v6117
        %v6478 = vadd.f32 %v6012, %v6089
        %v6479 = vadd.f32 %v6012, %v6093
        %v6480 = vadd.f32 %v6012, %v6097
        %v6481 = vadd.f32 %v6012, %v6101
        %v6482 = vadd.f32 %v6012, %v6105
        %v6483 = vadd.f32 %v6012, %v6109
        %v6484 = vadd.f32 %v6012, %v6113
        %v6485 = vadd.f32 %v6012, %v6117
        %v6486 = vadd.f32 %v6016, %v6089
        %v6487 = vadd.f32 %v6016, %v6093
        %v6488 = vadd.f32 %v6016, %v6097
        %v6489 = vadd.f32 %v6016, %v6101
        %v6490 = vadd.f32 %v6016, %v6105
        %v6491 = vadd.f32 %v6016, %v6109
        %v6492 = vadd.f32 %v6016, %v6113
        %v6493 = vadd.f32 %v6016, %v6117
        %v6494 = vadd.f32 %v6020, %v6089
        %v6495 = vadd.f32 %v6020, %v6093
        %v6496 = vadd.f32 %v6020, %v6097
        %v6497 = vadd.f32 %v6020, %v6101
        %v6498 = vadd.f32 %v6020, %v6105
        %v6499 = vadd.f32 %v6020, %v6109
        %v6500 = vadd.f32 %v6020, %v6113
        %v6501 = vadd.f32 %v6020, %v6117
        %v6502 = vadd.f32 %v6024, %v6089
        %v6503 = vadd.f32 %v6024, %v6093
        %v6504 = vadd.f32 %v6024, %v6097
        %v6505 = vadd.f32 %v6024, %v6101
        %v6506 = vadd.f32 %v6024, %v6105
        %v6507 = vadd.f32 %v6024, %v6109
        %v6508 = vadd.f32 %v6024, %v6113
        %v6509 = vadd.f32 %v6024, %v6117
        %v6510 = vadd.f32 %v6028, %v6089
        %v6511 = vadd.f32 %v6028, %v6093
        %v6512 = vadd.f32 %v6028, %v6097
        %v6513 = vadd.f32 %v6028, %v6101
        %v6514 = vadd.f32 %v6028, %v6105
        %v6515 = vadd.f32 %v6028, %v6109
        %v6516 = vadd.f32 %v6028, %v6113
        %v6517 = vadd.f32 %v6028, %v6117
        %v6518 = vadd.f32 %v6032, %v6089
        %v6519 = vadd.f32 %v6032, %v6093
        %v6520 = vadd.f32 %v6032, %v6097
        %v6521 = vadd.f32 %v6032, %v6101
        %v6522 = vadd.f32 %v6032, %v6105
        %v6523 = vadd.f32 %v6032, %v6109
        %v6524 = vadd.f32 %v6032, %v6113
        %v6525 = vadd.f32 %v6032, %v6117
        %v6526 = vadd.f32 %v6036, %v6089
        %v6527 = vadd.f32 %v6036, %v6093
        %v6528 = vadd.f32 %v6036, %v6097
        %v6529 = vadd.f32 %v6036, %v6101
        %v6530 = vadd.f32 %v6036, %v6105
        %v6531 = vadd.f32 %v6036, %v6109
        %v6532 = vadd.f32 %v6036, %v6113
        %v6533 = vadd.f32 %v6036, %v6117
        %v6534 = vadd.f32 %v6040, %v6089
        %v6535 = vadd.f32 %v6040, %v6093
        %v6536 = vadd.f32 %v6040, %v6097
        %v6537 = vadd.f32 %v6040, %v6101
        %v6538 = vadd.f32 %v6040, %v6105
        %v6539 = vadd.f32 %v6040, %v6109
        %v6540 = vadd.f32 %v6040, %v6113
        %v6541 = vadd.f32 %v6040, %v6117
        %v6542 = vadd.f32 %v6044, %v6089
        %v6543 = vadd.f32 %v6044, %v6093
        %v6544 = vadd.f32 %v6044, %v6097
        %v6545 = vadd.f32 %v6044, %v6101
        %v6546 = vadd.f32 %v6044, %v6105
        %v6547 = vadd.f32 %v6044, %v6109
        %v6548 = vadd.f32 %v6044, %v6113
        %v6549 = vadd.f32 %v6044, %v6117
        %v6550 = vadd.f32 %v6048, %v6089
        %v6551 = vadd.f32 %v6048, %v6093
        %v6552 = vadd.f32 %v6048, %v6097
        %v6553 = vadd.f32 %v6048, %v6101
        %v6554 = vadd.f32 %v6048, %v6105
        %v6555 = vadd.f32 %v6048, %v6109
        %v6556 = vadd.f32 %v6048, %v6113
        %v6557 = vadd.f32 %v6048, %v6117
        %v6558 = vadd.f32 %v6052, %v6089
        %v6559 = vadd.f32 %v6052, %v6093
        %v6560 = vadd.f32 %v6052, %v6097
        %v6561 = vadd.f32 %v6052, %v6101
        %v6562 = vadd.f32 %v6052, %v6105
        %v6563 = vadd.f32 %v6052, %v6109
        %v6564 = vadd.f32 %v6052, %v6113
        %v6565 = vadd.f32 %v6052, %v6117
        %v6566 = vadd.f32 %v6056, %v6089
        %v6567 = vadd.f32 %v6056, %v6093
        %v6568 = vadd.f32 %v6056, %v6097
        %v6569 = vadd.f32 %v6056, %v6101
        %v6570 = vadd.f32 %v6056, %v6105
        %v6571 = vadd.f32 %v6056, %v6109
        %v6572 = vadd.f32 %v6056, %v6113
        %v6573 = vadd.f32 %v6056, %v6117
        %v6574 = vadd.f32 %v6060, %v6089
        %v6575 = vadd.f32 %v6060, %v6093
        %v6576 = vadd.f32 %v6060, %v6097
        %v6577 = vadd.f32 %v6060, %v6101
        %v6578 = vadd.f32 %v6060, %v6105
        %v6579 = vadd.f32 %v6060, %v6109
        %v6580 = vadd.f32 %v6060, %v6113
        %v6581 = vadd.f32 %v6060, %v6117
        %v6582 = vadd.f32 %v6064, %v6089
        %v6583 = vadd.f32 %v6064, %v6093
        %v6584 = vadd.f32 %v6064, %v6097
        %v6585 = vadd.f32 %v6064, %v6101
        %v6586 = vadd.f32 %v6064, %v6105
        %v6587 = vadd.f32 %v6064, %v6109
        %v6588 = vadd.f32 %v6064, %v6113
        %v6589 = vadd.f32 %v6064, %v6117
        %v6590 = vadd.f32 %v6068, %v6089
        %v6591 = vadd.f32 %v6068, %v6093
        %v6592 = vadd.f32 %v6068, %v6097
        %v6593 = vadd.f32 %v6068, %v6101
        %v6594 = vadd.f32 %v6068, %v6105
        %v6595 = vadd.f32 %v6068, %v6109
        %v6596 = vadd.f32 %v6068, %v6113
        %v6597 = vadd.f32 %v6068, %v6117
        %v6598 = vadd.f32 %v6072, %v6089
        %v6599 = vadd.f32 %v6072, %v6093
        %v6600 = vadd.f32 %v6072, %v6097
        %v6601 = vadd.f32 %v6072, %v6101
        %v6602 = vadd.f32 %v6072, %v6105
        %v6603 = vadd.f32 %v6072, %v6109
        %v6604 = vadd.f32 %v6072, %v6113
        %v6605 = vadd.f32 %v6072, %v6117
        %v6606 = vadd.f32 %v6076, %v6089
        %v6607 = vadd.f32 %v6076, %v6093
        %v6608 = vadd.f32 %v6076, %v6097
        %v6609 = vadd.f32 %v6076, %v6101
        %v6610 = vadd.f32 %v6076, %v6105
        %v6611 = vadd.f32 %v6076, %v6109
        %v6612 = vadd.f32 %v6076, %v6113
        %v6613 = vadd.f32 %v6076, %v6117
        %v6614 = vadd.f32 %v6080, %v6089
        %v6615 = vadd.f32 %v6080, %v6093
        %v6616 = vadd.f32 %v6080, %v6097
        %v6617 = vadd.f32 %v6080, %v6101
        %v6618 = vadd.f32 %v6080, %v6105
        %v6619 = vadd.f32 %v6080, %v6109
        %v6620 = vadd.f32 %v6080, %v6113
        %v6621 = vadd.f32 %v6080, %v6117
        %v6622 = vadd.f32 %v6084, %v6089
        %v6623 = vadd.f32 %v6084, %v6093
        %v6624 = vadd.f32 %v6084, %v6097
        %v6625 = vadd.f32 %v6084, %v6101
        %v6626 = vadd.f32 %v6084, %v6105
        %v6627 = vadd.f32 %v6084, %v6109
        %v6628 = vadd.f32 %v6084, %v6113
        %v6629 = vadd.f32 %v6084, %v6117
        %vm6630 = vcmp.eq.f32.partialorder %v6118, 1.0
        %vm6631 = vcmp.eq.f32.partialorder %v6119, 1.0
        %vm6632 = vcmp.eq.f32.partialorder %v6120, 1.0
        %vm6633 = vcmp.eq.f32.partialorder %v6121, 1.0
        %vm6634 = vcmp.eq.f32.partialorder %v6122, 1.0
        %vm6635 = vcmp.eq.f32.partialorder %v6123, 1.0
        %vm6636 = vcmp.eq.f32.partialorder %v6124, 1.0
        %vm6637 = vcmp.eq.f32.partialorder %v6125, 1.0
        %vm6638 = vcmp.eq.f32.partialorder %v6126, 1.0
        %vm6639 = vcmp.eq.f32.partialorder %v6127, 1.0
        %vm6640 = vcmp.eq.f32.partialorder %v6128, 1.0
        %vm6641 = vcmp.eq.f32.partialorder %v6129, 1.0
        %vm6642 = vcmp.eq.f32.partialorder %v6130, 1.0
        %vm6643 = vcmp.eq.f32.partialorder %v6131, 1.0
        %vm6644 = vcmp.eq.f32.partialorder %v6132, 1.0
        %vm6645 = vcmp.eq.f32.partialorder %v6133, 1.0
        %vm6646 = vcmp.eq.f32.partialorder %v6134, 1.0
        %vm6647 = vcmp.eq.f32.partialorder %v6135, 1.0
        %vm6648 = vcmp.eq.f32.partialorder %v6136, 1.0
        %vm6649 = vcmp.eq.f32.partialorder %v6137, 1.0
        %vm6650 = vcmp.eq.f32.partialorder %v6138, 1.0
        %vm6651 = vcmp.eq.f32.partialorder %v6139, 1.0
        %vm6652 = vcmp.eq.f32.partialorder %v6140, 1.0
        %vm6653 = vcmp.eq.f32.partialorder %v6141, 1.0
        %vm6654 = vcmp.eq.f32.partialorder %v6142, 1.0
        %vm6655 = vcmp.eq.f32.partialorder %v6143, 1.0
        %vm6656 = vcmp.eq.f32.partialorder %v6144, 1.0
        %vm6657 = vcmp.eq.f32.partialorder %v6145, 1.0
        %vm6658 = vcmp.eq.f32.partialorder %v6146, 1.0
        %vm6659 = vcmp.eq.f32.partialorder %v6147, 1.0
        %vm6660 = vcmp.eq.f32.partialorder %v6148, 1.0
        %vm6661 = vcmp.eq.f32.partialorder %v6149, 1.0
        %vm6662 = vcmp.eq.f32.partialorder %v6150, 1.0
        %vm6663 = vcmp.eq.f32.partialorder %v6151, 1.0
        %vm6664 = vcmp.eq.f32.partialorder %v6152, 1.0
        %vm6665 = vcmp.eq.f32.partialorder %v6153, 1.0
        %vm6666 = vcmp.eq.f32.partialorder %v6154, 1.0
        %vm6667 = vcmp.eq.f32.partialorder %v6155, 1.0
        %vm6668 = vcmp.eq.f32.partialorder %v6156, 1.0
        %vm6669 = vcmp.eq.f32.partialorder %v6157, 1.0
        %vm6670 = vcmp.eq.f32.partialorder %v6158, 1.0
        %vm6671 = vcmp.eq.f32.partialorder %v6159, 1.0
        %vm6672 = vcmp.eq.f32.partialorder %v6160, 1.0
        %vm6673 = vcmp.eq.f32.partialorder %v6161, 1.0
        %vm6674 = vcmp.eq.f32.partialorder %v6162, 1.0
        %vm6675 = vcmp.eq.f32.partialorder %v6163, 1.0
        %vm6676 = vcmp.eq.f32.partialorder %v6164, 1.0
        %vm6677 = vcmp.eq.f32.partialorder %v6165, 1.0
        %vm6678 = vcmp.eq.f32.partialorder %v6166, 1.0
        %vm6679 = vcmp.eq.f32.partialorder %v6167, 1.0
        %vm6680 = vcmp.eq.f32.partialorder %v6168, 1.0
        %vm6681 = vcmp.eq.f32.partialorder %v6169, 1.0
        %vm6682 = vcmp.eq.f32.partialorder %v6170, 1.0
        %vm6683 = vcmp.eq.f32.partialorder %v6171, 1.0
        %vm6684 = vcmp.eq.f32.partialorder %v6172, 1.0
        %vm6685 = vcmp.eq.f32.partialorder %v6173, 1.0
        %vm6686 = vcmp.eq.f32.partialorder %v6174, 1.0
        %vm6687 = vcmp.eq.f32.partialorder %v6175, 1.0
        %vm6688 = vcmp.eq.f32.partialorder %v6176, 1.0
        %vm6689 = vcmp.eq.f32.partialorder %v6177, 1.0
        %vm6690 = vcmp.eq.f32.partialorder %v6178, 1.0
        %vm6691 = vcmp.eq.f32.partialorder %v6179, 1.0
        %vm6692 = vcmp.eq.f32.partialorder %v6180, 1.0
        %vm6693 = vcmp.eq.f32.partialorder %v6181, 1.0
        %vm6694 = vcmp.eq.f32.partialorder %v6182, 1.0
        %vm6695 = vcmp.eq.f32.partialorder %v6183, 1.0
        %vm6696 = vcmp.eq.f32.partialorder %v6184, 1.0
        %vm6697 = vcmp.eq.f32.partialorder %v6185, 1.0
        %vm6698 = vcmp.eq.f32.partialorder %v6186, 1.0
        %vm6699 = vcmp.eq.f32.partialorder %v6187, 1.0
        %vm6700 = vcmp.eq.f32.partialorder %v6188, 1.0
        %vm6701 = vcmp.eq.f32.partialorder %v6189, 1.0
        %vm6702 = vcmp.eq.f32.partialorder %v6190, 1.0
        %vm6703 = vcmp.eq.f32.partialorder %v6191, 1.0
        %vm6704 = vcmp.eq.f32.partialorder %v6192, 1.0
        %vm6705 = vcmp.eq.f32.partialorder %v6193, 1.0
        %vm6706 = vcmp.eq.f32.partialorder %v6194, 1.0
        %vm6707 = vcmp.eq.f32.partialorder %v6195, 1.0
        %vm6708 = vcmp.eq.f32.partialorder %v6196, 1.0
        %vm6709 = vcmp.eq.f32.partialorder %v6197, 1.0
        %vm6710 = vcmp.eq.f32.partialorder %v6198, 1.0
        %vm6711 = vcmp.eq.f32.partialorder %v6199, 1.0
        %vm6712 = vcmp.eq.f32.partialorder %v6200, 1.0
        %vm6713 = vcmp.eq.f32.partialorder %v6201, 1.0
        %vm6714 = vcmp.eq.f32.partialorder %v6202, 1.0
        %vm6715 = vcmp.eq.f32.partialorder %v6203, 1.0
        %vm6716 = vcmp.eq.f32.partialorder %v6204, 1.0
        %vm6717 = vcmp.eq.f32.partialorder %v6205, 1.0
        %vm6718 = vcmp.eq.f32.partialorder %v6206, 1.0
        %vm6719 = vcmp.eq.f32.partialorder %v6207, 1.0
        %vm6720 = vcmp.eq.f32.partialorder %v6208, 1.0
        %vm6721 = vcmp.eq.f32.partialorder %v6209, 1.0
        %vm6722 = vcmp.eq.f32.partialorder %v6210, 1.0
        %vm6723 = vcmp.eq.f32.partialorder %v6211, 1.0
        %vm6724 = vcmp.eq.f32.partialorder %v6212, 1.0
        %vm6725 = vcmp.eq.f32.partialorder %v6213, 1.0
        %vm6726 = vcmp.eq.f32.partialorder %v6214, 1.0
        %vm6727 = vcmp.eq.f32.partialorder %v6215, 1.0
        %vm6728 = vcmp.eq.f32.partialorder %v6216, 1.0
        %vm6729 = vcmp.eq.f32.partialorder %v6217, 1.0
        %vm6730 = vcmp.eq.f32.partialorder %v6218, 1.0
        %vm6731 = vcmp.eq.f32.partialorder %v6219, 1.0
        %vm6732 = vcmp.eq.f32.partialorder %v6220, 1.0
        %vm6733 = vcmp.eq.f32.partialorder %v6221, 1.0
        %vm6734 = vcmp.eq.f32.partialorder %v6222, 1.0
        %vm6735 = vcmp.eq.f32.partialorder %v6223, 1.0
        %vm6736 = vcmp.eq.f32.partialorder %v6224, 1.0
        %vm6737 = vcmp.eq.f32.partialorder %v6225, 1.0
        %vm6738 = vcmp.eq.f32.partialorder %v6226, 1.0
        %vm6739 = vcmp.eq.f32.partialorder %v6227, 1.0
        %vm6740 = vcmp.eq.f32.partialorder %v6228, 1.0
        %vm6741 = vcmp.eq.f32.partialorder %v6229, 1.0
        %vm6742 = vcmp.eq.f32.partialorder %v6230, 1.0
        %vm6743 = vcmp.eq.f32.partialorder %v6231, 1.0
        %vm6744 = vcmp.eq.f32.partialorder %v6232, 1.0
        %vm6745 = vcmp.eq.f32.partialorder %v6233, 1.0
        %vm6746 = vcmp.eq.f32.partialorder %v6234, 1.0
        %vm6747 = vcmp.eq.f32.partialorder %v6235, 1.0
        %vm6748 = vcmp.eq.f32.partialorder %v6236, 1.0
        %vm6749 = vcmp.eq.f32.partialorder %v6237, 1.0
        %vm6750 = vcmp.eq.f32.partialorder %v6238, 1.0
        %vm6751 = vcmp.eq.f32.partialorder %v6239, 1.0
        %vm6752 = vcmp.eq.f32.partialorder %v6240, 1.0
        %vm6753 = vcmp.eq.f32.partialorder %v6241, 1.0
        %vm6754 = vcmp.eq.f32.partialorder %v6242, 1.0
        %vm6755 = vcmp.eq.f32.partialorder %v6243, 1.0
        %vm6756 = vcmp.eq.f32.partialorder %v6244, 1.0
        %vm6757 = vcmp.eq.f32.partialorder %v6245, 1.0
        %vm6758 = vcmp.eq.f32.partialorder %v6246, 1.0
        %vm6759 = vcmp.eq.f32.partialorder %v6247, 1.0
        %vm6760 = vcmp.eq.f32.partialorder %v6248, 1.0
        %vm6761 = vcmp.eq.f32.partialorder %v6249, 1.0
        %vm6762 = vcmp.eq.f32.partialorder %v6250, 1.0
        %vm6763 = vcmp.eq.f32.partialorder %v6251, 1.0
        %vm6764 = vcmp.eq.f32.partialorder %v6252, 1.0
        %vm6765 = vcmp.eq.f32.partialorder %v6253, 1.0
        %vm6766 = vcmp.eq.f32.partialorder %v6254, 1.0
        %vm6767 = vcmp.eq.f32.partialorder %v6255, 1.0
        %vm6768 = vcmp.eq.f32.partialorder %v6256, 1.0
        %vm6769 = vcmp.eq.f32.partialorder %v6257, 1.0
        %vm6770 = vcmp.eq.f32.partialorder %v6258, 1.0
        %vm6771 = vcmp.eq.f32.partialorder %v6259, 1.0
        %vm6772 = vcmp.eq.f32.partialorder %v6260, 1.0
        %vm6773 = vcmp.eq.f32.partialorder %v6261, 1.0
        %vm6774 = vcmp.eq.f32.partialorder %v6262, 1.0
        %vm6775 = vcmp.eq.f32.partialorder %v6263, 1.0
        %vm6776 = vcmp.eq.f32.partialorder %v6264, 1.0
        %vm6777 = vcmp.eq.f32.partialorder %v6265, 1.0
        %vm6778 = vcmp.eq.f32.partialorder %v6266, 1.0
        %vm6779 = vcmp.eq.f32.partialorder %v6267, 1.0
        %vm6780 = vcmp.eq.f32.partialorder %v6268, 1.0
        %vm6781 = vcmp.eq.f32.partialorder %v6269, 1.0
        %vm6782 = vcmp.eq.f32.partialorder %v6270, 1.0
        %vm6783 = vcmp.eq.f32.partialorder %v6271, 1.0
        %vm6784 = vcmp.eq.f32.partialorder %v6272, 1.0
        %vm6785 = vcmp.eq.f32.partialorder %v6273, 1.0
        %vm6786 = vcmp.eq.f32.partialorder %v6274, 1.0
        %vm6787 = vcmp.eq.f32.partialorder %v6275, 1.0
        %vm6788 = vcmp.eq.f32.partialorder %v6276, 1.0
        %vm6789 = vcmp.eq.f32.partialorder %v6277, 1.0
        %vm6790 = vcmp.eq.f32.partialorder %v6278, 1.0
        %vm6791 = vcmp.eq.f32.partialorder %v6279, 1.0
        %vm6792 = vcmp.eq.f32.partialorder %v6280, 1.0
        %vm6793 = vcmp.eq.f32.partialorder %v6281, 1.0
        %vm6794 = vcmp.eq.f32.partialorder %v6282, 1.0
        %vm6795 = vcmp.eq.f32.partialorder %v6283, 1.0
        %vm6796 = vcmp.eq.f32.partialorder %v6284, 1.0
        %vm6797 = vcmp.eq.f32.partialorder %v6285, 1.0
        %vm6798 = vcmp.eq.f32.partialorder %v6286, 1.0
        %vm6799 = vcmp.eq.f32.partialorder %v6287, 1.0
        %vm6800 = vcmp.eq.f32.partialorder %v6288, 1.0
        %vm6801 = vcmp.eq.f32.partialorder %v6289, 1.0
        %vm6802 = vcmp.eq.f32.partialorder %v6290, 1.0
        %vm6803 = vcmp.eq.f32.partialorder %v6291, 1.0
        %vm6804 = vcmp.eq.f32.partialorder %v6292, 1.0
        %vm6805 = vcmp.eq.f32.partialorder %v6293, 1.0
        %vm6806 = vcmp.eq.f32.partialorder %v6294, 1.0
        %vm6807 = vcmp.eq.f32.partialorder %v6295, 1.0
        %vm6808 = vcmp.eq.f32.partialorder %v6296, 1.0
        %vm6809 = vcmp.eq.f32.partialorder %v6297, 1.0
        %vm6810 = vcmp.eq.f32.partialorder %v6298, 1.0
        %vm6811 = vcmp.eq.f32.partialorder %v6299, 1.0
        %vm6812 = vcmp.eq.f32.partialorder %v6300, 1.0
        %vm6813 = vcmp.eq.f32.partialorder %v6301, 1.0
        %vm6814 = vcmp.eq.f32.partialorder %v6302, 1.0
        %vm6815 = vcmp.eq.f32.partialorder %v6303, 1.0
        %vm6816 = vcmp.eq.f32.partialorder %v6304, 1.0
        %vm6817 = vcmp.eq.f32.partialorder %v6305, 1.0
        %vm6818 = vcmp.eq.f32.partialorder %v6306, 1.0
        %vm6819 = vcmp.eq.f32.partialorder %v6307, 1.0
        %vm6820 = vcmp.eq.f32.partialorder %v6308, 1.0
        %vm6821 = vcmp.eq.f32.partialorder %v6309, 1.0
        %vm6822 = vcmp.eq.f32.partialorder %v6310, 1.0
        %vm6823 = vcmp.eq.f32.partialorder %v6311, 1.0
        %vm6824 = vcmp.eq.f32.partialorder %v6312, 1.0
        %vm6825 = vcmp.eq.f32.partialorder %v6313, 1.0
        %vm6826 = vcmp.eq.f32.partialorder %v6314, 1.0
        %vm6827 = vcmp.eq.f32.partialorder %v6315, 1.0
        %vm6828 = vcmp.eq.f32.partialorder %v6316, 1.0
        %vm6829 = vcmp.eq.f32.partialorder %v6317, 1.0
        %vm6830 = vcmp.eq.f32.partialorder %v6318, 1.0
        %vm6831 = vcmp.eq.f32.partialorder %v6319, 1.0
        %vm6832 = vcmp.eq.f32.partialorder %v6320, 1.0
        %vm6833 = vcmp.eq.f32.partialorder %v6321, 1.0
        %vm6834 = vcmp.eq.f32.partialorder %v6322, 1.0
        %vm6835 = vcmp.eq.f32.partialorder %v6323, 1.0
        %vm6836 = vcmp.eq.f32.partialorder %v6324, 1.0
        %vm6837 = vcmp.eq.f32.partialorder %v6325, 1.0
        %vm6838 = vcmp.eq.f32.partialorder %v6326, 1.0
        %vm6839 = vcmp.eq.f32.partialorder %v6327, 1.0
        %vm6840 = vcmp.eq.f32.partialorder %v6328, 1.0
        %vm6841 = vcmp.eq.f32.partialorder %v6329, 1.0
        %vm6842 = vcmp.eq.f32.partialorder %v6330, 1.0
        %vm6843 = vcmp.eq.f32.partialorder %v6331, 1.0
        %vm6844 = vcmp.eq.f32.partialorder %v6332, 1.0
        %vm6845 = vcmp.eq.f32.partialorder %v6333, 1.0
        %vm6846 = vcmp.eq.f32.partialorder %v6334, 1.0
        %vm6847 = vcmp.eq.f32.partialorder %v6335, 1.0
        %vm6848 = vcmp.eq.f32.partialorder %v6336, 1.0
        %vm6849 = vcmp.eq.f32.partialorder %v6337, 1.0
        %vm6850 = vcmp.eq.f32.partialorder %v6338, 1.0
        %vm6851 = vcmp.eq.f32.partialorder %v6339, 1.0
        %vm6852 = vcmp.eq.f32.partialorder %v6340, 1.0
        %vm6853 = vcmp.eq.f32.partialorder %v6341, 1.0
        %vm6854 = vcmp.eq.f32.partialorder %v6342, 1.0
        %vm6855 = vcmp.eq.f32.partialorder %v6343, 1.0
        %vm6856 = vcmp.eq.f32.partialorder %v6344, 1.0
        %vm6857 = vcmp.eq.f32.partialorder %v6345, 1.0
        %vm6858 = vcmp.eq.f32.partialorder %v6346, 1.0
        %vm6859 = vcmp.eq.f32.partialorder %v6347, 1.0
        %vm6860 = vcmp.eq.f32.partialorder %v6348, 1.0
        %vm6861 = vcmp.eq.f32.partialorder %v6349, 1.0
        %vm6862 = vcmp.eq.f32.partialorder %v6350, 1.0
        %vm6863 = vcmp.eq.f32.partialorder %v6351, 1.0
        %vm6864 = vcmp.eq.f32.partialorder %v6352, 1.0
        %vm6865 = vcmp.eq.f32.partialorder %v6353, 1.0
        %vm6866 = vcmp.eq.f32.partialorder %v6354, 1.0
        %vm6867 = vcmp.eq.f32.partialorder %v6355, 1.0
        %vm6868 = vcmp.eq.f32.partialorder %v6356, 1.0
        %vm6869 = vcmp.eq.f32.partialorder %v6357, 1.0
        %vm6870 = vcmp.eq.f32.partialorder %v6358, 1.0
        %vm6871 = vcmp.eq.f32.partialorder %v6359, 1.0
        %vm6872 = vcmp.eq.f32.partialorder %v6360, 1.0
        %vm6873 = vcmp.eq.f32.partialorder %v6361, 1.0
        %vm6874 = vcmp.eq.f32.partialorder %v6362, 1.0
        %vm6875 = vcmp.eq.f32.partialorder %v6363, 1.0
        %vm6876 = vcmp.eq.f32.partialorder %v6364, 1.0
        %vm6877 = vcmp.eq.f32.partialorder %v6365, 1.0
        %vm6878 = vcmp.eq.f32.partialorder %v6366, 1.0
        %vm6879 = vcmp.eq.f32.partialorder %v6367, 1.0
        %vm6880 = vcmp.eq.f32.partialorder %v6368, 1.0
        %vm6881 = vcmp.eq.f32.partialorder %v6369, 1.0
        %vm6882 = vcmp.eq.f32.partialorder %v6370, 1.0
        %vm6883 = vcmp.eq.f32.partialorder %v6371, 1.0
        %vm6884 = vcmp.eq.f32.partialorder %v6372, 1.0
        %vm6885 = vcmp.eq.f32.partialorder %v6373, 1.0
        %vm6886 = vcmp.eq.f32.partialorder %v6374, 1.0
        %vm6887 = vcmp.eq.f32.partialorder %v6375, 1.0
        %vm6888 = vcmp.eq.f32.partialorder %v6376, 1.0
        %vm6889 = vcmp.eq.f32.partialorder %v6377, 1.0
        %vm6890 = vcmp.eq.f32.partialorder %v6378, 1.0
        %vm6891 = vcmp.eq.f32.partialorder %v6379, 1.0
        %vm6892 = vcmp.eq.f32.partialorder %v6380, 1.0
        %vm6893 = vcmp.eq.f32.partialorder %v6381, 1.0
        %vm6894 = vcmp.eq.f32.partialorder %v6382, 1.0
        %vm6895 = vcmp.eq.f32.partialorder %v6383, 1.0
        %vm6896 = vcmp.eq.f32.partialorder %v6384, 1.0
        %vm6897 = vcmp.eq.f32.partialorder %v6385, 1.0
        %vm6898 = vcmp.eq.f32.partialorder %v6386, 1.0
        %vm6899 = vcmp.eq.f32.partialorder %v6387, 1.0
        %vm6900 = vcmp.eq.f32.partialorder %v6388, 1.0
        %vm6901 = vcmp.eq.f32.partialorder %v6389, 1.0
        %vm6902 = vcmp.eq.f32.partialorder %v6390, 1.0
        %vm6903 = vcmp.eq.f32.partialorder %v6391, 1.0
        %vm6904 = vcmp.eq.f32.partialorder %v6392, 1.0
        %vm6905 = vcmp.eq.f32.partialorder %v6393, 1.0
        %vm6906 = vcmp.eq.f32.partialorder %v6394, 1.0
        %vm6907 = vcmp.eq.f32.partialorder %v6395, 1.0
        %vm6908 = vcmp.eq.f32.partialorder %v6396, 1.0
        %vm6909 = vcmp.eq.f32.partialorder %v6397, 1.0
        %vm6910 = vcmp.eq.f32.partialorder %v6398, 1.0
        %vm6911 = vcmp.eq.f32.partialorder %v6399, 1.0
        %vm6912 = vcmp.eq.f32.partialorder %v6400, 1.0
        %vm6913 = vcmp.eq.f32.partialorder %v6401, 1.0
        %vm6914 = vcmp.eq.f32.partialorder %v6402, 1.0
        %vm6915 = vcmp.eq.f32.partialorder %v6403, 1.0
        %vm6916 = vcmp.eq.f32.partialorder %v6404, 1.0
        %vm6917 = vcmp.eq.f32.partialorder %v6405, 1.0
        %vm6918 = vcmp.eq.f32.partialorder %v6406, 1.0
        %vm6919 = vcmp.eq.f32.partialorder %v6407, 1.0
        %vm6920 = vcmp.eq.f32.partialorder %v6408, 1.0
        %vm6921 = vcmp.eq.f32.partialorder %v6409, 1.0
        %vm6922 = vcmp.eq.f32.partialorder %v6410, 1.0
        %vm6923 = vcmp.eq.f32.partialorder %v6411, 1.0
        %vm6924 = vcmp.eq.f32.partialorder %v6412, 1.0
        %vm6925 = vcmp.eq.f32.partialorder %v6413, 1.0
        %vm6926 = vcmp.eq.f32.partialorder %v6414, 1.0
        %vm6927 = vcmp.eq.f32.partialorder %v6415, 1.0
        %vm6928 = vcmp.eq.f32.partialorder %v6416, 1.0
        %vm6929 = vcmp.eq.f32.partialorder %v6417, 1.0
        %vm6930 = vcmp.eq.f32.partialorder %v6418, 1.0
        %vm6931 = vcmp.eq.f32.partialorder %v6419, 1.0
        %vm6932 = vcmp.eq.f32.partialorder %v6420, 1.0
        %vm6933 = vcmp.eq.f32.partialorder %v6421, 1.0
        %vm6934 = vcmp.eq.f32.partialorder %v6422, 1.0
        %vm6935 = vcmp.eq.f32.partialorder %v6423, 1.0
        %vm6936 = vcmp.eq.f32.partialorder %v6424, 1.0
        %vm6937 = vcmp.eq.f32.partialorder %v6425, 1.0
        %vm6938 = vcmp.eq.f32.partialorder %v6426, 1.0
        %vm6939 = vcmp.eq.f32.partialorder %v6427, 1.0
        %vm6940 = vcmp.eq.f32.partialorder %v6428, 1.0
        %vm6941 = vcmp.eq.f32.partialorder %v6429, 1.0
        %vm6942 = vcmp.eq.f32.partialorder %v6430, 1.0
        %vm6943 = vcmp.eq.f32.partialorder %v6431, 1.0
        %vm6944 = vcmp.eq.f32.partialorder %v6432, 1.0
        %vm6945 = vcmp.eq.f32.partialorder %v6433, 1.0
        %vm6946 = vcmp.eq.f32.partialorder %v6434, 1.0
        %vm6947 = vcmp.eq.f32.partialorder %v6435, 1.0
        %vm6948 = vcmp.eq.f32.partialorder %v6436, 1.0
        %vm6949 = vcmp.eq.f32.partialorder %v6437, 1.0
        %vm6950 = vcmp.eq.f32.partialorder %v6438, 1.0
        %vm6951 = vcmp.eq.f32.partialorder %v6439, 1.0
        %vm6952 = vcmp.eq.f32.partialorder %v6440, 1.0
        %vm6953 = vcmp.eq.f32.partialorder %v6441, 1.0
        %vm6954 = vcmp.eq.f32.partialorder %v6442, 1.0
        %vm6955 = vcmp.eq.f32.partialorder %v6443, 1.0
        %vm6956 = vcmp.eq.f32.partialorder %v6444, 1.0
        %vm6957 = vcmp.eq.f32.partialorder %v6445, 1.0
        %vm6958 = vcmp.eq.f32.partialorder %v6446, 1.0
        %vm6959 = vcmp.eq.f32.partialorder %v6447, 1.0
        %vm6960 = vcmp.eq.f32.partialorder %v6448, 1.0
        %vm6961 = vcmp.eq.f32.partialorder %v6449, 1.0
        %vm6962 = vcmp.eq.f32.partialorder %v6450, 1.0
        %vm6963 = vcmp.eq.f32.partialorder %v6451, 1.0
        %vm6964 = vcmp.eq.f32.partialorder %v6452, 1.0
        %vm6965 = vcmp.eq.f32.partialorder %v6453, 1.0
        %vm6966 = vcmp.eq.f32.partialorder %v6454, 1.0
        %vm6967 = vcmp.eq.f32.partialorder %v6455, 1.0
        %vm6968 = vcmp.eq.f32.partialorder %v6456, 1.0
        %vm6969 = vcmp.eq.f32.partialorder %v6457, 1.0
        %vm6970 = vcmp.eq.f32.partialorder %v6458, 1.0
        %vm6971 = vcmp.eq.f32.partialorder %v6459, 1.0
        %vm6972 = vcmp.eq.f32.partialorder %v6460, 1.0
        %vm6973 = vcmp.eq.f32.partialorder %v6461, 1.0
        %vm6974 = vcmp.eq.f32.partialorder %v6462, 1.0
        %vm6975 = vcmp.eq.f32.partialorder %v6463, 1.0
        %vm6976 = vcmp.eq.f32.partialorder %v6464, 1.0
        %vm6977 = vcmp.eq.f32.partialorder %v6465, 1.0
        %vm6978 = vcmp.eq.f32.partialorder %v6466, 1.0
        %vm6979 = vcmp.eq.f32.partialorder %v6467, 1.0
        %vm6980 = vcmp.eq.f32.partialorder %v6468, 1.0
        %vm6981 = vcmp.eq.f32.partialorder %v6469, 1.0
        %vm6982 = vcmp.eq.f32.partialorder %v6470, 1.0
        %vm6983 = vcmp.eq.f32.partialorder %v6471, 1.0
        %vm6984 = vcmp.eq.f32.partialorder %v6472, 1.0
        %vm6985 = vcmp.eq.f32.partialorder %v6473, 1.0
        %vm6986 = vcmp.eq.f32.partialorder %v6474, 1.0
        %vm6987 = vcmp.eq.f32.partialorder %v6475, 1.0
        %vm6988 = vcmp.eq.f32.partialorder %v6476, 1.0
        %vm6989 = vcmp.eq.f32.partialorder %v6477, 1.0
        %vm6990 = vcmp.eq.f32.partialorder %v6478, 1.0
        %vm6991 = vcmp.eq.f32.partialorder %v6479, 1.0
        %vm6992 = vcmp.eq.f32.partialorder %v6480, 1.0
        %vm6993 = vcmp.eq.f32.partialorder %v6481, 1.0
        %vm6994 = vcmp.eq.f32.partialorder %v6482, 1.0
        %vm6995 = vcmp.eq.f32.partialorder %v6483, 1.0
        %vm6996 = vcmp.eq.f32.partialorder %v6484, 1.0
        %vm6997 = vcmp.eq.f32.partialorder %v6485, 1.0
        %vm6998 = vcmp.eq.f32.partialorder %v6486, 1.0
        %vm6999 = vcmp.eq.f32.partialorder %v6487, 1.0
        %vm7000 = vcmp.eq.f32.partialorder %v6488, 1.0
        %vm7001 = vcmp.eq.f32.partialorder %v6489, 1.0
        %vm7002 = vcmp.eq.f32.partialorder %v6490, 1.0
        %vm7003 = vcmp.eq.f32.partialorder %v6491, 1.0
        %vm7004 = vcmp.eq.f32.partialorder %v6492, 1.0
        %vm7005 = vcmp.eq.f32.partialorder %v6493, 1.0
        %vm7006 = vcmp.eq.f32.partialorder %v6494, 1.0
        %vm7007 = vcmp.eq.f32.partialorder %v6495, 1.0
        %vm7008 = vcmp.eq.f32.partialorder %v6496, 1.0
        %vm7009 = vcmp.eq.f32.partialorder %v6497, 1.0
        %vm7010 = vcmp.eq.f32.partialorder %v6498, 1.0
        %vm7011 = vcmp.eq.f32.partialorder %v6499, 1.0
        %vm7012 = vcmp.eq.f32.partialorder %v6500, 1.0
        %vm7013 = vcmp.eq.f32.partialorder %v6501, 1.0
        %vm7014 = vcmp.eq.f32.partialorder %v6502, 1.0
        %vm7015 = vcmp.eq.f32.partialorder %v6503, 1.0
        %vm7016 = vcmp.eq.f32.partialorder %v6504, 1.0
        %vm7017 = vcmp.eq.f32.partialorder %v6505, 1.0
        %vm7018 = vcmp.eq.f32.partialorder %v6506, 1.0
        %vm7019 = vcmp.eq.f32.partialorder %v6507, 1.0
        %vm7020 = vcmp.eq.f32.partialorder %v6508, 1.0
        %vm7021 = vcmp.eq.f32.partialorder %v6509, 1.0
        %vm7022 = vcmp.eq.f32.partialorder %v6510, 1.0
        %vm7023 = vcmp.eq.f32.partialorder %v6511, 1.0
        %vm7024 = vcmp.eq.f32.partialorder %v6512, 1.0
        %vm7025 = vcmp.eq.f32.partialorder %v6513, 1.0
        %vm7026 = vcmp.eq.f32.partialorder %v6514, 1.0
        %vm7027 = vcmp.eq.f32.partialorder %v6515, 1.0
        %vm7028 = vcmp.eq.f32.partialorder %v6516, 1.0
        %vm7029 = vcmp.eq.f32.partialorder %v6517, 1.0
        %vm7030 = vcmp.eq.f32.partialorder %v6518, 1.0
        %vm7031 = vcmp.eq.f32.partialorder %v6519, 1.0
        %vm7032 = vcmp.eq.f32.partialorder %v6520, 1.0
        %vm7033 = vcmp.eq.f32.partialorder %v6521, 1.0
        %vm7034 = vcmp.eq.f32.partialorder %v6522, 1.0
        %vm7035 = vcmp.eq.f32.partialorder %v6523, 1.0
        %vm7036 = vcmp.eq.f32.partialorder %v6524, 1.0
        %vm7037 = vcmp.eq.f32.partialorder %v6525, 1.0
        %vm7038 = vcmp.eq.f32.partialorder %v6526, 1.0
        %vm7039 = vcmp.eq.f32.partialorder %v6527, 1.0
        %vm7040 = vcmp.eq.f32.partialorder %v6528, 1.0
        %vm7041 = vcmp.eq.f32.partialorder %v6529, 1.0
        %vm7042 = vcmp.eq.f32.partialorder %v6530, 1.0
        %vm7043 = vcmp.eq.f32.partialorder %v6531, 1.0
        %vm7044 = vcmp.eq.f32.partialorder %v6532, 1.0
        %vm7045 = vcmp.eq.f32.partialorder %v6533, 1.0
        %vm7046 = vcmp.eq.f32.partialorder %v6534, 1.0
        %vm7047 = vcmp.eq.f32.partialorder %v6535, 1.0
        %vm7048 = vcmp.eq.f32.partialorder %v6536, 1.0
        %vm7049 = vcmp.eq.f32.partialorder %v6537, 1.0
        %vm7050 = vcmp.eq.f32.partialorder %v6538, 1.0
        %vm7051 = vcmp.eq.f32.partialorder %v6539, 1.0
        %vm7052 = vcmp.eq.f32.partialorder %v6540, 1.0
        %vm7053 = vcmp.eq.f32.partialorder %v6541, 1.0
        %vm7054 = vcmp.eq.f32.partialorder %v6542, 1.0
        %vm7055 = vcmp.eq.f32.partialorder %v6543, 1.0
        %vm7056 = vcmp.eq.f32.partialorder %v6544, 1.0
        %vm7057 = vcmp.eq.f32.partialorder %v6545, 1.0
        %vm7058 = vcmp.eq.f32.partialorder %v6546, 1.0
        %vm7059 = vcmp.eq.f32.partialorder %v6547, 1.0
        %vm7060 = vcmp.eq.f32.partialorder %v6548, 1.0
        %vm7061 = vcmp.eq.f32.partialorder %v6549, 1.0
        %vm7062 = vcmp.eq.f32.partialorder %v6550, 1.0
        %vm7063 = vcmp.eq.f32.partialorder %v6551, 1.0
        %vm7064 = vcmp.eq.f32.partialorder %v6552, 1.0
        %vm7065 = vcmp.eq.f32.partialorder %v6553, 1.0
        %vm7066 = vcmp.eq.f32.partialorder %v6554, 1.0
        %vm7067 = vcmp.eq.f32.partialorder %v6555, 1.0
        %vm7068 = vcmp.eq.f32.partialorder %v6556, 1.0
        %vm7069 = vcmp.eq.f32.partialorder %v6557, 1.0
        %vm7070 = vcmp.eq.f32.partialorder %v6558, 1.0
        %vm7071 = vcmp.eq.f32.partialorder %v6559, 1.0
        %vm7072 = vcmp.eq.f32.partialorder %v6560, 1.0
        %vm7073 = vcmp.eq.f32.partialorder %v6561, 1.0
        %vm7074 = vcmp.eq.f32.partialorder %v6562, 1.0
        %vm7075 = vcmp.eq.f32.partialorder %v6563, 1.0
        %vm7076 = vcmp.eq.f32.partialorder %v6564, 1.0
        %vm7077 = vcmp.eq.f32.partialorder %v6565, 1.0
        %vm7078 = vcmp.eq.f32.partialorder %v6566, 1.0
        %vm7079 = vcmp.eq.f32.partialorder %v6567, 1.0
        %vm7080 = vcmp.eq.f32.partialorder %v6568, 1.0
        %vm7081 = vcmp.eq.f32.partialorder %v6569, 1.0
        %vm7082 = vcmp.eq.f32.partialorder %v6570, 1.0
        %vm7083 = vcmp.eq.f32.partialorder %v6571, 1.0
        %vm7084 = vcmp.eq.f32.partialorder %v6572, 1.0
        %vm7085 = vcmp.eq.f32.partialorder %v6573, 1.0
        %vm7086 = vcmp.eq.f32.partialorder %v6574, 1.0
        %vm7087 = vcmp.eq.f32.partialorder %v6575, 1.0
        %vm7088 = vcmp.eq.f32.partialorder %v6576, 1.0
        %vm7089 = vcmp.eq.f32.partialorder %v6577, 1.0
        %vm7090 = vcmp.eq.f32.partialorder %v6578, 1.0
        %vm7091 = vcmp.eq.f32.partialorder %v6579, 1.0
        %vm7092 = vcmp.eq.f32.partialorder %v6580, 1.0
        %vm7093 = vcmp.eq.f32.partialorder %v6581, 1.0
        %vm7094 = vcmp.eq.f32.partialorder %v6582, 1.0
        %vm7095 = vcmp.eq.f32.partialorder %v6583, 1.0
        %vm7096 = vcmp.eq.f32.partialorder %v6584, 1.0
        %vm7097 = vcmp.eq.f32.partialorder %v6585, 1.0
        %vm7098 = vcmp.eq.f32.partialorder %v6586, 1.0
        %vm7099 = vcmp.eq.f32.partialorder %v6587, 1.0
        %vm7100 = vcmp.eq.f32.partialorder %v6588, 1.0
        %vm7101 = vcmp.eq.f32.partialorder %v6589, 1.0
        %vm7102 = vcmp.eq.f32.partialorder %v6590, 1.0
        %vm7103 = vcmp.eq.f32.partialorder %v6591, 1.0
        %vm7104 = vcmp.eq.f32.partialorder %v6592, 1.0
        %vm7105 = vcmp.eq.f32.partialorder %v6593, 1.0
        %vm7106 = vcmp.eq.f32.partialorder %v6594, 1.0
        %vm7107 = vcmp.eq.f32.partialorder %v6595, 1.0
        %vm7108 = vcmp.eq.f32.partialorder %v6596, 1.0
        %vm7109 = vcmp.eq.f32.partialorder %v6597, 1.0
        %vm7110 = vcmp.eq.f32.partialorder %v6598, 1.0
        %vm7111 = vcmp.eq.f32.partialorder %v6599, 1.0
        %vm7112 = vcmp.eq.f32.partialorder %v6600, 1.0
        %vm7113 = vcmp.eq.f32.partialorder %v6601, 1.0
        %vm7114 = vcmp.eq.f32.partialorder %v6602, 1.0
        %vm7115 = vcmp.eq.f32.partialorder %v6603, 1.0
        %vm7116 = vcmp.eq.f32.partialorder %v6604, 1.0
        %vm7117 = vcmp.eq.f32.partialorder %v6605, 1.0
        %vm7118 = vcmp.eq.f32.partialorder %v6606, 1.0
        %vm7119 = vcmp.eq.f32.partialorder %v6607, 1.0
        %vm7120 = vcmp.eq.f32.partialorder %v6608, 1.0
        %vm7121 = vcmp.eq.f32.partialorder %v6609, 1.0
        %vm7122 = vcmp.eq.f32.partialorder %v6610, 1.0
        %vm7123 = vcmp.eq.f32.partialorder %v6611, 1.0
        %vm7124 = vcmp.eq.f32.partialorder %v6612, 1.0
        %vm7125 = vcmp.eq.f32.partialorder %v6613, 1.0
        %vm7126 = vcmp.eq.f32.partialorder %v6614, 1.0
        %vm7127 = vcmp.eq.f32.partialorder %v6615, 1.0
        %vm7128 = vcmp.eq.f32.partialorder %v6616, 1.0
        %vm7129 = vcmp.eq.f32.partialorder %v6617, 1.0
        %vm7130 = vcmp.eq.f32.partialorder %v6618, 1.0
        %vm7131 = vcmp.eq.f32.partialorder %v6619, 1.0
        %vm7132 = vcmp.eq.f32.partialorder %v6620, 1.0
        %vm7133 = vcmp.eq.f32.partialorder %v6621, 1.0
        %vm7134 = vcmp.eq.f32.partialorder %v6622, 1.0
        %vm7135 = vcmp.eq.f32.partialorder %v6623, 1.0
        %vm7136 = vcmp.eq.f32.partialorder %v6624, 1.0
        %vm7137 = vcmp.eq.f32.partialorder %v6625, 1.0
        %vm7138 = vcmp.eq.f32.partialorder %v6626, 1.0
        %vm7139 = vcmp.eq.f32.partialorder %v6627, 1.0
        %vm7140 = vcmp.eq.f32.partialorder %v6628, 1.0
        %vm7141 = vcmp.eq.f32.partialorder %v6629, 1.0
        %v7142 = vsel %vm6630, %v5318, inf
        %v7143 = vsel %vm6631, %v5319, inf
        %v7144 = vsel %vm6632, %v5320, inf
        %v7145 = vsel %vm6633, %v5321, inf
        %v7146 = vsel %vm6634, %v5322, inf
        %v7147 = vsel %vm6635, %v5323, inf
        %v7148 = vsel %vm6636, %v5324, inf
        %v7149 = vsel %vm6637, %v5325, inf
        %v7150 = vsel %vm6638, %v5326, inf
        %v7151 = vsel %vm6639, %v5327, inf
        %v7152 = vsel %vm6640, %v5328, inf
        %v7153 = vsel %vm6641, %v5329, inf
        %v7154 = vsel %vm6642, %v5330, inf
        %v7155 = vsel %vm6643, %v5331, inf
        %v7156 = vsel %vm6644, %v5332, inf
        %v7157 = vsel %vm6645, %v5333, inf
        %v7158 = vsel %vm6646, %v5334, inf
        %v7159 = vsel %vm6647, %v5335, inf
        %v7160 = vsel %vm6648, %v5336, inf
        %v7161 = vsel %vm6649, %v5337, inf
        %v7162 = vsel %vm6650, %v5338, inf
        %v7163 = vsel %vm6651, %v5339, inf
        %v7164 = vsel %vm6652, %v5340, inf
        %v7165 = vsel %vm6653, %v5341, inf
        %v7166 = vsel %vm6654, %v5342, inf
        %v7167 = vsel %vm6655, %v5343, inf
        %v7168 = vsel %vm6656, %v5344, inf
        %v7169 = vsel %vm6657, %v5345, inf
        %v7170 = vsel %vm6658, %v5346, inf
        %v7171 = vsel %vm6659, %v5347, inf
        %v7172 = vsel %vm6660, %v5348, inf
        %v7173 = vsel %vm6661, %v5349, inf
        %v7174 = vsel %vm6662, %v5350, inf
        %v7175 = vsel %vm6663, %v5351, inf
        %v7176 = vsel %vm6664, %v5352, inf
        %v7177 = vsel %vm6665, %v5353, inf
        %v7178 = vsel %vm6666, %v5354, inf
        %v7179 = vsel %vm6667, %v5355, inf
        %v7180 = vsel %vm6668, %v5356, inf
        %v7181 = vsel %vm6669, %v5357, inf
        %v7182 = vsel %vm6670, %v5358, inf
        %v7183 = vsel %vm6671, %v5359, inf
        %v7184 = vsel %vm6672, %v5360, inf
        %v7185 = vsel %vm6673, %v5361, inf
        %v7186 = vsel %vm6674, %v5362, inf
        %v7187 = vsel %vm6675, %v5363, inf
        %v7188 = vsel %vm6676, %v5364, inf
        %v7189 = vsel %vm6677, %v5365, inf
        %v7190 = vsel %vm6678, %v5366, inf
        %v7191 = vsel %vm6679, %v5367, inf
        %v7192 = vsel %vm6680, %v5368, inf
        %v7193 = vsel %vm6681, %v5369, inf
        %v7194 = vsel %vm6682, %v5370, inf
        %v7195 = vsel %vm6683, %v5371, inf
        %v7196 = vsel %vm6684, %v5372, inf
        %v7197 = vsel %vm6685, %v5373, inf
        %v7198 = vsel %vm6686, %v5374, inf
        %v7199 = vsel %vm6687, %v5375, inf
        %v7200 = vsel %vm6688, %v5376, inf
        %v7201 = vsel %vm6689, %v5377, inf
        %v7202 = vsel %vm6690, %v5378, inf
        %v7203 = vsel %vm6691, %v5379, inf
        %v7204 = vsel %vm6692, %v5380, inf
        %v7205 = vsel %vm6693, %v5381, inf
        %v7206 = vsel %vm6694, %v5382, inf
        %v7207 = vsel %vm6695, %v5383, inf
        %v7208 = vsel %vm6696, %v5384, inf
        %v7209 = vsel %vm6697, %v5385, inf
        %v7210 = vsel %vm6698, %v5386, inf
        %v7211 = vsel %vm6699, %v5387, inf
        %v7212 = vsel %vm6700, %v5388, inf
        %v7213 = vsel %vm6701, %v5389, inf
        %v7214 = vsel %vm6702, %v5390, inf
        %v7215 = vsel %vm6703, %v5391, inf
        %v7216 = vsel %vm6704, %v5392, inf
        %v7217 = vsel %vm6705, %v5393, inf
        %v7218 = vsel %vm6706, %v5394, inf
        %v7219 = vsel %vm6707, %v5395, inf
        %v7220 = vsel %vm6708, %v5396, inf
        %v7221 = vsel %vm6709, %v5397, inf
        %v7222 = vsel %vm6710, %v5398, inf
        %v7223 = vsel %vm6711, %v5399, inf
        %v7224 = vsel %vm6712, %v5400, inf
        %v7225 = vsel %vm6713, %v5401, inf
        %v7226 = vsel %vm6714, %v5402, inf
        %v7227 = vsel %vm6715, %v5403, inf
        %v7228 = vsel %vm6716, %v5404, inf
        %v7229 = vsel %vm6717, %v5405, inf
        %v7230 = vsel %vm6718, %v5406, inf
        %v7231 = vsel %vm6719, %v5407, inf
        %v7232 = vsel %vm6720, %v5408, inf
        %v7233 = vsel %vm6721, %v5409, inf
        %v7234 = vsel %vm6722, %v5410, inf
        %v7235 = vsel %vm6723, %v5411, inf
        %v7236 = vsel %vm6724, %v5412, inf
        %v7237 = vsel %vm6725, %v5413, inf
        %v7238 = vsel %vm6726, %v5414, inf
        %v7239 = vsel %vm6727, %v5415, inf
        %v7240 = vsel %vm6728, %v5416, inf
        %v7241 = vsel %vm6729, %v5417, inf
        %v7242 = vsel %vm6730, %v5418, inf
        %v7243 = vsel %vm6731, %v5419, inf
        %v7244 = vsel %vm6732, %v5420, inf
        %v7245 = vsel %vm6733, %v5421, inf
        %v7246 = vsel %vm6734, %v5422, inf
        %v7247 = vsel %vm6735, %v5423, inf
        %v7248 = vsel %vm6736, %v5424, inf
        %v7249 = vsel %vm6737, %v5425, inf
        %v7250 = vsel %vm6738, %v5426, inf
        %v7251 = vsel %vm6739, %v5427, inf
        %v7252 = vsel %vm6740, %v5428, inf
        %v7253 = vsel %vm6741, %v5429, inf
        %v7254 = vsel %vm6742, %v5430, inf
        %v7255 = vsel %vm6743, %v5431, inf
        %v7256 = vsel %vm6744, %v5432, inf
        %v7257 = vsel %vm6745, %v5433, inf
        %v7258 = vsel %vm6746, %v5434, inf
        %v7259 = vsel %vm6747, %v5435, inf
        %v7260 = vsel %vm6748, %v5436, inf
        %v7261 = vsel %vm6749, %v5437, inf
        %v7262 = vsel %vm6750, %v5438, inf
        %v7263 = vsel %vm6751, %v5439, inf
        %v7264 = vsel %vm6752, %v5440, inf
        %v7265 = vsel %vm6753, %v5441, inf
        %v7266 = vsel %vm6754, %v5442, inf
        %v7267 = vsel %vm6755, %v5443, inf
        %v7268 = vsel %vm6756, %v5444, inf
        %v7269 = vsel %vm6757, %v5445, inf
        %v7270 = vsel %vm6758, %v5446, inf
        %v7271 = vsel %vm6759, %v5447, inf
        %v7272 = vsel %vm6760, %v5448, inf
        %v7273 = vsel %vm6761, %v5449, inf
        %v7274 = vsel %vm6762, %v5450, inf
        %v7275 = vsel %vm6763, %v5451, inf
        %v7276 = vsel %vm6764, %v5452, inf
        %v7277 = vsel %vm6765, %v5453, inf
        %v7278 = vsel %vm6766, %v5454, inf
        %v7279 = vsel %vm6767, %v5455, inf
        %v7280 = vsel %vm6768, %v5456, inf
        %v7281 = vsel %vm6769, %v5457, inf
        %v7282 = vsel %vm6770, %v5458, inf
        %v7283 = vsel %vm6771, %v5459, inf
        %v7284 = vsel %vm6772, %v5460, inf
        %v7285 = vsel %vm6773, %v5461, inf
        %v7286 = vsel %vm6774, %v5462, inf
        %v7287 = vsel %vm6775, %v5463, inf
        %v7288 = vsel %vm6776, %v5464, inf
        %v7289 = vsel %vm6777, %v5465, inf
        %v7290 = vsel %vm6778, %v5466, inf
        %v7291 = vsel %vm6779, %v5467, inf
        %v7292 = vsel %vm6780, %v5468, inf
        %v7293 = vsel %vm6781, %v5469, inf
        %v7294 = vsel %vm6782, %v5470, inf
        %v7295 = vsel %vm6783, %v5471, inf
        %v7296 = vsel %vm6784, %v5472, inf
        %v7297 = vsel %vm6785, %v5473, inf
        %v7298 = vsel %vm6786, %v5474, inf
        %v7299 = vsel %vm6787, %v5475, inf
        %v7300 = vsel %vm6788, %v5476, inf
        %v7301 = vsel %vm6789, %v5477, inf
        %v7302 = vsel %vm6790, %v5478, inf
        %v7303 = vsel %vm6791, %v5479, inf
        %v7304 = vsel %vm6792, %v5480, inf
        %v7305 = vsel %vm6793, %v5481, inf
        %v7306 = vsel %vm6794, %v5482, inf
        %v7307 = vsel %vm6795, %v5483, inf
        %v7308 = vsel %vm6796, %v5484, inf
        %v7309 = vsel %vm6797, %v5485, inf
        %v7310 = vsel %vm6798, %v5486, inf
        %v7311 = vsel %vm6799, %v5487, inf
        %v7312 = vsel %vm6800, %v5488, inf
        %v7313 = vsel %vm6801, %v5489, inf
        %v7314 = vsel %vm6802, %v5490, inf
        %v7315 = vsel %vm6803, %v5491, inf
        %v7316 = vsel %vm6804, %v5492, inf
        %v7317 = vsel %vm6805, %v5493, inf
        %v7318 = vsel %vm6806, %v5494, inf
        %v7319 = vsel %vm6807, %v5495, inf
        %v7320 = vsel %vm6808, %v5496, inf
        %v7321 = vsel %vm6809, %v5497, inf
        %v7322 = vsel %vm6810, %v5498, inf
        %v7323 = vsel %vm6811, %v5499, inf
        %v7324 = vsel %vm6812, %v5500, inf
        %v7325 = vsel %vm6813, %v5501, inf
        %v7326 = vsel %vm6814, %v5502, inf
        %v7327 = vsel %vm6815, %v5503, inf
        %v7328 = vsel %vm6816, %v5504, inf
        %v7329 = vsel %vm6817, %v5505, inf
        %v7330 = vsel %vm6818, %v5506, inf
        %v7331 = vsel %vm6819, %v5507, inf
        %v7332 = vsel %vm6820, %v5508, inf
        %v7333 = vsel %vm6821, %v5509, inf
        %v7334 = vsel %vm6822, %v5510, inf
        %v7335 = vsel %vm6823, %v5511, inf
        %v7336 = vsel %vm6824, %v5512, inf
        %v7337 = vsel %vm6825, %v5513, inf
        %v7338 = vsel %vm6826, %v5514, inf
        %v7339 = vsel %vm6827, %v5515, inf
        %v7340 = vsel %vm6828, %v5516, inf
        %v7341 = vsel %vm6829, %v5517, inf
        %v7342 = vsel %vm6830, %v5518, inf
        %v7343 = vsel %vm6831, %v5519, inf
        %v7344 = vsel %vm6832, %v5520, inf
        %v7345 = vsel %vm6833, %v5521, inf
        %v7346 = vsel %vm6834, %v5522, inf
        %v7347 = vsel %vm6835, %v5523, inf
        %v7348 = vsel %vm6836, %v5524, inf
        %v7349 = vsel %vm6837, %v5525, inf
        %v7350 = vsel %vm6838, %v5526, inf
        %v7351 = vsel %vm6839, %v5527, inf
        %v7352 = vsel %vm6840, %v5528, inf
        %v7353 = vsel %vm6841, %v5529, inf
        %v7354 = vsel %vm6842, %v5530, inf
        %v7355 = vsel %vm6843, %v5531, inf
        %v7356 = vsel %vm6844, %v5532, inf
        %v7357 = vsel %vm6845, %v5533, inf
        %v7358 = vsel %vm6846, %v5534, inf
        %v7359 = vsel %vm6847, %v5535, inf
        %v7360 = vsel %vm6848, %v5536, inf
        %v7361 = vsel %vm6849, %v5537, inf
        %v7362 = vsel %vm6850, %v5538, inf
        %v7363 = vsel %vm6851, %v5539, inf
        %v7364 = vsel %vm6852, %v5540, inf
        %v7365 = vsel %vm6853, %v5541, inf
        %v7366 = vsel %vm6854, %v5542, inf
        %v7367 = vsel %vm6855, %v5543, inf
        %v7368 = vsel %vm6856, %v5544, inf
        %v7369 = vsel %vm6857, %v5545, inf
        %v7370 = vsel %vm6858, %v5546, inf
        %v7371 = vsel %vm6859, %v5547, inf
        %v7372 = vsel %vm6860, %v5548, inf
        %v7373 = vsel %vm6861, %v5549, inf
        %v7374 = vsel %vm6862, %v5550, inf
        %v7375 = vsel %vm6863, %v5551, inf
        %v7376 = vsel %vm6864, %v5552, inf
        %v7377 = vsel %vm6865, %v5553, inf
        %v7378 = vsel %vm6866, %v5554, inf
        %v7379 = vsel %vm6867, %v5555, inf
        %v7380 = vsel %vm6868, %v5556, inf
        %v7381 = vsel %vm6869, %v5557, inf
        %v7382 = vsel %vm6870, %v5558, inf
        %v7383 = vsel %vm6871, %v5559, inf
        %v7384 = vsel %vm6872, %v5560, inf
        %v7385 = vsel %vm6873, %v5561, inf
        %v7386 = vsel %vm6874, %v5562, inf
        %v7387 = vsel %vm6875, %v5563, inf
        %v7388 = vsel %vm6876, %v5564, inf
        %v7389 = vsel %vm6877, %v5565, inf
        %v7390 = vsel %vm6878, %v5566, inf
        %v7391 = vsel %vm6879, %v5567, inf
        %v7392 = vsel %vm6880, %v5568, inf
        %v7393 = vsel %vm6881, %v5569, inf
        %v7394 = vsel %vm6882, %v5570, inf
        %v7395 = vsel %vm6883, %v5571, inf
        %v7396 = vsel %vm6884, %v5572, inf
        %v7397 = vsel %vm6885, %v5573, inf
        %v7398 = vsel %vm6886, %v5574, inf
        %v7399 = vsel %vm6887, %v5575, inf
        %v7400 = vsel %vm6888, %v5576, inf
        %v7401 = vsel %vm6889, %v5577, inf
        %v7402 = vsel %vm6890, %v5578, inf
        %v7403 = vsel %vm6891, %v5579, inf
        %v7404 = vsel %vm6892, %v5580, inf
        %v7405 = vsel %vm6893, %v5581, inf
        %v7406 = vsel %vm6894, %v5582, inf
        %v7407 = vsel %vm6895, %v5583, inf
        %v7408 = vsel %vm6896, %v5584, inf
        %v7409 = vsel %vm6897, %v5585, inf
        %v7410 = vsel %vm6898, %v5586, inf
        %v7411 = vsel %vm6899, %v5587, inf
        %v7412 = vsel %vm6900, %v5588, inf
        %v7413 = vsel %vm6901, %v5589, inf
        %v7414 = vsel %vm6902, %v5590, inf
        %v7415 = vsel %vm6903, %v5591, inf
        %v7416 = vsel %vm6904, %v5592, inf
        %v7417 = vsel %vm6905, %v5593, inf
        %v7418 = vsel %vm6906, %v5594, inf
        %v7419 = vsel %vm6907, %v5595, inf
        %v7420 = vsel %vm6908, %v5596, inf
        %v7421 = vsel %vm6909, %v5597, inf
        %v7422 = vsel %vm6910, %v5598, inf
        %v7423 = vsel %vm6911, %v5599, inf
        %v7424 = vsel %vm6912, %v5600, inf
        %v7425 = vsel %vm6913, %v5601, inf
        %v7426 = vsel %vm6914, %v5602, inf
        %v7427 = vsel %vm6915, %v5603, inf
        %v7428 = vsel %vm6916, %v5604, inf
        %v7429 = vsel %vm6917, %v5605, inf
        %v7430 = vsel %vm6918, %v5606, inf
        %v7431 = vsel %vm6919, %v5607, inf
        %v7432 = vsel %vm6920, %v5608, inf
        %v7433 = vsel %vm6921, %v5609, inf
        %v7434 = vsel %vm6922, %v5610, inf
        %v7435 = vsel %vm6923, %v5611, inf
        %v7436 = vsel %vm6924, %v5612, inf
        %v7437 = vsel %vm6925, %v5613, inf
        %v7438 = vsel %vm6926, %v5614, inf
        %v7439 = vsel %vm6927, %v5615, inf
        %v7440 = vsel %vm6928, %v5616, inf
        %v7441 = vsel %vm6929, %v5617, inf
        %v7442 = vsel %vm6930, %v5618, inf
        %v7443 = vsel %vm6931, %v5619, inf
        %v7444 = vsel %vm6932, %v5620, inf
        %v7445 = vsel %vm6933, %v5621, inf
        %v7446 = vsel %vm6934, %v5622, inf
        %v7447 = vsel %vm6935, %v5623, inf
        %v7448 = vsel %vm6936, %v5624, inf
        %v7449 = vsel %vm6937, %v5625, inf
        %v7450 = vsel %vm6938, %v5626, inf
        %v7451 = vsel %vm6939, %v5627, inf
        %v7452 = vsel %vm6940, %v5628, inf
        %v7453 = vsel %vm6941, %v5629, inf
        %v7454 = vsel %vm6942, %v5630, inf
        %v7455 = vsel %vm6943, %v5631, inf
        %v7456 = vsel %vm6944, %v5632, inf
        %v7457 = vsel %vm6945, %v5633, inf
        %v7458 = vsel %vm6946, %v5634, inf
        %v7459 = vsel %vm6947, %v5635, inf
        %v7460 = vsel %vm6948, %v5636, inf
        %v7461 = vsel %vm6949, %v5637, inf
        %v7462 = vsel %vm6950, %v5638, inf
        %v7463 = vsel %vm6951, %v5639, inf
        %v7464 = vsel %vm6952, %v5640, inf
        %v7465 = vsel %vm6953, %v5641, inf
        %v7466 = vsel %vm6954, %v5642, inf
        %v7467 = vsel %vm6955, %v5643, inf
        %v7468 = vsel %vm6956, %v5644, inf
        %v7469 = vsel %vm6957, %v5645, inf
        %v7470 = vsel %vm6958, %v5646, inf
        %v7471 = vsel %vm6959, %v5647, inf
        %v7472 = vsel %vm6960, %v5648, inf
        %v7473 = vsel %vm6961, %v5649, inf
        %v7474 = vsel %vm6962, %v5650, inf
        %v7475 = vsel %vm6963, %v5651, inf
        %v7476 = vsel %vm6964, %v5652, inf
        %v7477 = vsel %vm6965, %v5653, inf
        %v7478 = vsel %vm6966, %v5654, inf
        %v7479 = vsel %vm6967, %v5655, inf
        %v7480 = vsel %vm6968, %v5656, inf
        %v7481 = vsel %vm6969, %v5657, inf
        %v7482 = vsel %vm6970, %v5658, inf
        %v7483 = vsel %vm6971, %v5659, inf
        %v7484 = vsel %vm6972, %v5660, inf
        %v7485 = vsel %vm6973, %v5661, inf
        %v7486 = vsel %vm6974, %v5662, inf
        %v7487 = vsel %vm6975, %v5663, inf
        %v7488 = vsel %vm6976, %v5664, inf
        %v7489 = vsel %vm6977, %v5665, inf
        %v7490 = vsel %vm6978, %v5666, inf
        %v7491 = vsel %vm6979, %v5667, inf
        %v7492 = vsel %vm6980, %v5668, inf
        %v7493 = vsel %vm6981, %v5669, inf
        %v7494 = vsel %vm6982, %v5670, inf
        %v7495 = vsel %vm6983, %v5671, inf
        %v7496 = vsel %vm6984, %v5672, inf
        %v7497 = vsel %vm6985, %v5673, inf
        %v7498 = vsel %vm6986, %v5674, inf
        %v7499 = vsel %vm6987, %v5675, inf
        %v7500 = vsel %vm6988, %v5676, inf
        %v7501 = vsel %vm6989, %v5677, inf
        %v7502 = vsel %vm6990, %v5678, inf
        %v7503 = vsel %vm6991, %v5679, inf
        %v7504 = vsel %vm6992, %v5680, inf
        %v7505 = vsel %vm6993, %v5681, inf
        %v7506 = vsel %vm6994, %v5682, inf
        %v7507 = vsel %vm6995, %v5683, inf
        %v7508 = vsel %vm6996, %v5684, inf
        %v7509 = vsel %vm6997, %v5685, inf
        %v7510 = vsel %vm6998, %v5686, inf
        %v7511 = vsel %vm6999, %v5687, inf
        %v7512 = vsel %vm7000, %v5688, inf
        %v7513 = vsel %vm7001, %v5689, inf
        %v7514 = vsel %vm7002, %v5690, inf
        %v7515 = vsel %vm7003, %v5691, inf
        %v7516 = vsel %vm7004, %v5692, inf
        %v7517 = vsel %vm7005, %v5693, inf
        %v7518 = vsel %vm7006, %v5694, inf
        %v7519 = vsel %vm7007, %v5695, inf
        %v7520 = vsel %vm7008, %v5696, inf
        %v7521 = vsel %vm7009, %v5697, inf
        %v7522 = vsel %vm7010, %v5698, inf
        %v7523 = vsel %vm7011, %v5699, inf
        %v7524 = vsel %vm7012, %v5700, inf
        %v7525 = vsel %vm7013, %v5701, inf
        %v7526 = vsel %vm7014, %v5702, inf
        %v7527 = vsel %vm7015, %v5703, inf
        %v7528 = vsel %vm7016, %v5704, inf
        %v7529 = vsel %vm7017, %v5705, inf
        %v7530 = vsel %vm7018, %v5706, inf
        %v7531 = vsel %vm7019, %v5707, inf
        %v7532 = vsel %vm7020, %v5708, inf
        %v7533 = vsel %vm7021, %v5709, inf
        %v7534 = vsel %vm7022, %v5710, inf
        %v7535 = vsel %vm7023, %v5711, inf
        %v7536 = vsel %vm7024, %v5712, inf
        %v7537 = vsel %vm7025, %v5713, inf
        %v7538 = vsel %vm7026, %v5714, inf
        %v7539 = vsel %vm7027, %v5715, inf
        %v7540 = vsel %vm7028, %v5716, inf
        %v7541 = vsel %vm7029, %v5717, inf
        %v7542 = vsel %vm7030, %v5718, inf
        %v7543 = vsel %vm7031, %v5719, inf
        %v7544 = vsel %vm7032, %v5720, inf
        %v7545 = vsel %vm7033, %v5721, inf
        %v7546 = vsel %vm7034, %v5722, inf
        %v7547 = vsel %vm7035, %v5723, inf
        %v7548 = vsel %vm7036, %v5724, inf
        %v7549 = vsel %vm7037, %v5725, inf
        %v7550 = vsel %vm7038, %v5726, inf
        %v7551 = vsel %vm7039, %v5727, inf
        %v7552 = vsel %vm7040, %v5728, inf
        %v7553 = vsel %vm7041, %v5729, inf
        %v7554 = vsel %vm7042, %v5730, inf
        %v7555 = vsel %vm7043, %v5731, inf
        %v7556 = vsel %vm7044, %v5732, inf
        %v7557 = vsel %vm7045, %v5733, inf
        %v7558 = vsel %vm7046, %v5734, inf
        %v7559 = vsel %vm7047, %v5735, inf
        %v7560 = vsel %vm7048, %v5736, inf
        %v7561 = vsel %vm7049, %v5737, inf
        %v7562 = vsel %vm7050, %v5738, inf
        %v7563 = vsel %vm7051, %v5739, inf
        %v7564 = vsel %vm7052, %v5740, inf
        %v7565 = vsel %vm7053, %v5741, inf
        %v7566 = vsel %vm7054, %v5742, inf
        %v7567 = vsel %vm7055, %v5743, inf
        %v7568 = vsel %vm7056, %v5744, inf
        %v7569 = vsel %vm7057, %v5745, inf
        %v7570 = vsel %vm7058, %v5746, inf
        %v7571 = vsel %vm7059, %v5747, inf
        %v7572 = vsel %vm7060, %v5748, inf
        %v7573 = vsel %vm7061, %v5749, inf
        %v7574 = vsel %vm7062, %v5750, inf
        %v7575 = vsel %vm7063, %v5751, inf
        %v7576 = vsel %vm7064, %v5752, inf
        %v7577 = vsel %vm7065, %v5753, inf
        %v7578 = vsel %vm7066, %v5754, inf
        %v7579 = vsel %vm7067, %v5755, inf
        %v7580 = vsel %vm7068, %v5756, inf
        %v7581 = vsel %vm7069, %v5757, inf
        %v7582 = vsel %vm7070, %v5758, inf
        %v7583 = vsel %vm7071, %v5759, inf
        %v7584 = vsel %vm7072, %v5760, inf
        %v7585 = vsel %vm7073, %v5761, inf
        %v7586 = vsel %vm7074, %v5762, inf
        %v7587 = vsel %vm7075, %v5763, inf
        %v7588 = vsel %vm7076, %v5764, inf
        %v7589 = vsel %vm7077, %v5765, inf
        %v7590 = vsel %vm7078, %v5766, inf
        %v7591 = vsel %vm7079, %v5767, inf
        %v7592 = vsel %vm7080, %v5768, inf
        %v7593 = vsel %vm7081, %v5769, inf
        %v7594 = vsel %vm7082, %v5770, inf
        %v7595 = vsel %vm7083, %v5771, inf
        %v7596 = vsel %vm7084, %v5772, inf
        %v7597 = vsel %vm7085, %v5773, inf
        %v7598 = vsel %vm7086, %v5774, inf
        %v7599 = vsel %vm7087, %v5775, inf
        %v7600 = vsel %vm7088, %v5776, inf
        %v7601 = vsel %vm7089, %v5777, inf
        %v7602 = vsel %vm7090, %v5778, inf
        %v7603 = vsel %vm7091, %v5779, inf
        %v7604 = vsel %vm7092, %v5780, inf
        %v7605 = vsel %vm7093, %v5781, inf
        %v7606 = vsel %vm7094, %v5782, inf
        %v7607 = vsel %vm7095, %v5783, inf
        %v7608 = vsel %vm7096, %v5784, inf
        %v7609 = vsel %vm7097, %v5785, inf
        %v7610 = vsel %vm7098, %v5786, inf
        %v7611 = vsel %vm7099, %v5787, inf
        %v7612 = vsel %vm7100, %v5788, inf
        %v7613 = vsel %vm7101, %v5789, inf
        %v7614 = vsel %vm7102, %v5790, inf
        %v7615 = vsel %vm7103, %v5791, inf
        %v7616 = vsel %vm7104, %v5792, inf
        %v7617 = vsel %vm7105, %v5793, inf
        %v7618 = vsel %vm7106, %v5794, inf
        %v7619 = vsel %vm7107, %v5795, inf
        %v7620 = vsel %vm7108, %v5796, inf
        %v7621 = vsel %vm7109, %v5797, inf
        %v7622 = vsel %vm7110, %v5798, inf
        %v7623 = vsel %vm7111, %v5799, inf
        %v7624 = vsel %vm7112, %v5800, inf
        %v7625 = vsel %vm7113, %v5801, inf
        %v7626 = vsel %vm7114, %v5802, inf
        %v7627 = vsel %vm7115, %v5803, inf
        %v7628 = vsel %vm7116, %v5804, inf
        %v7629 = vsel %vm7117, %v5805, inf
        %v7630 = vsel %vm7118, %v5806, inf
        %v7631 = vsel %vm7119, %v5807, inf
        %v7632 = vsel %vm7120, %v5808, inf
        %v7633 = vsel %vm7121, %v5809, inf
        %v7634 = vsel %vm7122, %v5810, inf
        %v7635 = vsel %vm7123, %v5811, inf
        %v7636 = vsel %vm7124, %v5812, inf
        %v7637 = vsel %vm7125, %v5813, inf
        %v7638 = vsel %vm7126, %v5814, inf
        %v7639 = vsel %vm7127, %v5815, inf
        %v7640 = vsel %vm7128, %v5816, inf
        %v7641 = vsel %vm7129, %v5817, inf
        %v7642 = vsel %vm7130, %v5818, inf
        %v7643 = vsel %vm7131, %v5819, inf
        %v7644 = vsel %vm7132, %v5820, inf
        %v7645 = vsel %vm7133, %v5821, inf
        %v7646 = vsel %vm7134, %v5822, inf
        %v7647 = vsel %vm7135, %v5823, inf
        %v7648 = vsel %vm7136, %v5824, inf
        %v7649 = vsel %vm7137, %v5825, inf
        %v7650 = vsel %vm7138, %v5826, inf
        %v7651 = vsel %vm7139, %v5827, inf
        %v7652 = vsel %vm7140, %v5828, inf
        %v7653 = vsel %vm7141, %v5829, inf
        %7654 = vset.pattern.permute.xlu0 4
        %7655 = vperm.xlu0 %7654, %v230
        %v7656 = vpop.permute.xlu0 %7655
        %7658 = vset.pattern.permute.xlu0 4
        %7659 = vperm.xlu0 %7658, %v231
        %v7660 = vpop.permute.xlu0 %7659
        %7662 = vset.pattern.permute.xlu0 4
        %7663 = vperm.xlu0 %7662, %v232
        %v7664 = vpop.permute.xlu0 %7663
        %7666 = vset.pattern.permute.xlu0 4
        %7667 = vperm.xlu0 %7666, %v233
        %v7668 = vpop.permute.xlu0 %7667
        %7670 = vset.pattern.permute.xlu0 4
        %7671 = vperm.xlu0 %7670, %v234
        %v7672 = vpop.permute.xlu0 %7671
        %7674 = vset.pattern.permute.xlu0 4
        %7675 = vperm.xlu0 %7674, %v235
        %v7676 = vpop.permute.xlu0 %7675
        %7678 = vset.pattern.permute.xlu0 4
        %7679 = vperm.xlu0 %7678, %v236
        %v7680 = vpop.permute.xlu0 %7679
        %7682 = vset.pattern.permute.xlu0 4
        %7683 = vperm.xlu0 %7682, %v237
        %v7684 = vpop.permute.xlu0 %7683
        %7686 = vset.pattern.permute.xlu0 4
        %7687 = vperm.xlu0 %7686, %v238
        %v7688 = vpop.permute.xlu0 %7687
        %7690 = vset.pattern.permute.xlu0 4
        %7691 = vperm.xlu0 %7690, %v239
        %v7692 = vpop.permute.xlu0 %7691
        %7694 = vset.pattern.permute.xlu0 4
        %7695 = vperm.xlu0 %7694, %v240
        %v7696 = vpop.permute.xlu0 %7695
        %7698 = vset.pattern.permute.xlu0 4
        %7699 = vperm.xlu0 %7698, %v241
        %v7700 = vpop.permute.xlu0 %7699
        %7702 = vset.pattern.permute.xlu0 4
        %7703 = vperm.xlu0 %7702, %v242
        %v7704 = vpop.permute.xlu0 %7703
        %7706 = vset.pattern.permute.xlu0 4
        %7707 = vperm.xlu0 %7706, %v243
        %v7708 = vpop.permute.xlu0 %7707
        %7710 = vset.pattern.permute.xlu0 4
        %7711 = vperm.xlu0 %7710, %v244
        %v7712 = vpop.permute.xlu0 %7711
        %7714 = vset.pattern.permute.xlu0 4
        %7715 = vperm.xlu0 %7714, %v245
        %v7716 = vpop.permute.xlu0 %7715
        %7718 = vset.pattern.permute.xlu0 4
        %7719 = vperm.xlu0 %7718, %v246
        %v7720 = vpop.permute.xlu0 %7719
        %7722 = vset.pattern.permute.xlu0 4
        %7723 = vperm.xlu0 %7722, %v247
        %v7724 = vpop.permute.xlu0 %7723
        %7726 = vset.pattern.permute.xlu0 4
        %7727 = vperm.xlu0 %7726, %v248
        %v7728 = vpop.permute.xlu0 %7727
        %7730 = vset.pattern.permute.xlu0 4
        %7731 = vperm.xlu0 %7730, %v249
        %v7732 = vpop.permute.xlu0 %7731
        %7734 = vset.pattern.permute.xlu0 4
        %7735 = vperm.xlu0 %7734, %v250
        %v7736 = vpop.permute.xlu0 %7735
        %7738 = vset.pattern.permute.xlu0 4
        %7739 = vperm.xlu0 %7738, %v251
        %v7740 = vpop.permute.xlu0 %7739
        %7742 = vset.pattern.permute.xlu0 4
        %7743 = vperm.xlu0 %7742, %v252
        %v7744 = vpop.permute.xlu0 %7743
        %7746 = vset.pattern.permute.xlu0 4
        %7747 = vperm.xlu0 %7746, %v253
        %v7748 = vpop.permute.xlu0 %7747
        %7750 = vset.pattern.permute.xlu0 4
        %7751 = vperm.xlu0 %7750, %v254
        %v7752 = vpop.permute.xlu0 %7751
        %7754 = vset.pattern.permute.xlu0 4
        %7755 = vperm.xlu0 %7754, %v255
        %v7756 = vpop.permute.xlu0 %7755
        %7758 = vset.pattern.permute.xlu0 4
        %7759 = vperm.xlu0 %7758, %v256
        %v7760 = vpop.permute.xlu0 %7759
        %7762 = vset.pattern.permute.xlu0 4
        %7763 = vperm.xlu0 %7762, %v257
        %v7764 = vpop.permute.xlu0 %7763
        %7766 = vset.pattern.permute.xlu0 4
        %7767 = vperm.xlu0 %7766, %v258
        %v7768 = vpop.permute.xlu0 %7767
        %7770 = vset.pattern.permute.xlu0 4
        %7771 = vperm.xlu0 %7770, %v259
        %v7772 = vpop.permute.xlu0 %7771
        %7774 = vset.pattern.permute.xlu0 4
        %7775 = vperm.xlu0 %7774, %v260
        %v7776 = vpop.permute.xlu0 %7775
        %7778 = vset.pattern.permute.xlu0 4
        %7779 = vperm.xlu0 %7778, %v261
        %v7780 = vpop.permute.xlu0 %7779
        %7782 = vset.pattern.permute.xlu0 4
        %7783 = vperm.xlu0 %7782, %v262
        %v7784 = vpop.permute.xlu0 %7783
        %7786 = vset.pattern.permute.xlu0 4
        %7787 = vperm.xlu0 %7786, %v263
        %v7788 = vpop.permute.xlu0 %7787
        %7790 = vset.pattern.permute.xlu0 4
        %7791 = vperm.xlu0 %7790, %v264
        %v7792 = vpop.permute.xlu0 %7791
        %7794 = vset.pattern.permute.xlu0 4
        %7795 = vperm.xlu0 %7794, %v265
        %v7796 = vpop.permute.xlu0 %7795
        %7798 = vset.pattern.permute.xlu0 4
        %7799 = vperm.xlu0 %7798, %v266
        %v7800 = vpop.permute.xlu0 %7799
        %7802 = vset.pattern.permute.xlu0 4
        %7803 = vperm.xlu0 %7802, %v267
        %v7804 = vpop.permute.xlu0 %7803
        %7806 = vset.pattern.permute.xlu0 4
        %7807 = vperm.xlu0 %7806, %v268
        %v7808 = vpop.permute.xlu0 %7807
        %7810 = vset.pattern.permute.xlu0 4
        %7811 = vperm.xlu0 %7810, %v269
        %v7812 = vpop.permute.xlu0 %7811
        %7814 = vset.pattern.permute.xlu0 4
        %7815 = vperm.xlu0 %7814, %v270
        %v7816 = vpop.permute.xlu0 %7815
        %7818 = vset.pattern.permute.xlu0 4
        %7819 = vperm.xlu0 %7818, %v271
        %v7820 = vpop.permute.xlu0 %7819
        %7822 = vset.pattern.permute.xlu0 4
        %7823 = vperm.xlu0 %7822, %v272
        %v7824 = vpop.permute.xlu0 %7823
        %7826 = vset.pattern.permute.xlu0 4
        %7827 = vperm.xlu0 %7826, %v273
        %v7828 = vpop.permute.xlu0 %7827
        %7830 = vset.pattern.permute.xlu0 4
        %7831 = vperm.xlu0 %7830, %v274
        %v7832 = vpop.permute.xlu0 %7831
        %7834 = vset.pattern.permute.xlu0 4
        %7835 = vperm.xlu0 %7834, %v275
        %v7836 = vpop.permute.xlu0 %7835
        %7838 = vset.pattern.permute.xlu0 4
        %7839 = vperm.xlu0 %7838, %v276
        %v7840 = vpop.permute.xlu0 %7839
        %7842 = vset.pattern.permute.xlu0 4
        %7843 = vperm.xlu0 %7842, %v277
        %v7844 = vpop.permute.xlu0 %7843
        %7846 = vset.pattern.permute.xlu0 4
        %7847 = vperm.xlu0 %7846, %v278
        %v7848 = vpop.permute.xlu0 %7847
        %7850 = vset.pattern.permute.xlu0 4
        %7851 = vperm.xlu0 %7850, %v279
        %v7852 = vpop.permute.xlu0 %7851
        %7854 = vset.pattern.permute.xlu0 4
        %7855 = vperm.xlu0 %7854, %v280
        %v7856 = vpop.permute.xlu0 %7855
        %7858 = vset.pattern.permute.xlu0 4
        %7859 = vperm.xlu0 %7858, %v281
        %v7860 = vpop.permute.xlu0 %7859
        %7862 = vset.pattern.permute.xlu0 4
        %7863 = vperm.xlu0 %7862, %v282
        %v7864 = vpop.permute.xlu0 %7863
        %7866 = vset.pattern.permute.xlu0 4
        %7867 = vperm.xlu0 %7866, %v283
        %v7868 = vpop.permute.xlu0 %7867
        %7870 = vset.pattern.permute.xlu0 4
        %7871 = vperm.xlu0 %7870, %v284
        %v7872 = vpop.permute.xlu0 %7871
        %7874 = vset.pattern.permute.xlu0 4
        %7875 = vperm.xlu0 %7874, %v285
        %v7876 = vpop.permute.xlu0 %7875
        %7878 = vset.pattern.permute.xlu0 4
        %7879 = vperm.xlu0 %7878, %v286
        %v7880 = vpop.permute.xlu0 %7879
        %7882 = vset.pattern.permute.xlu0 4
        %7883 = vperm.xlu0 %7882, %v287
        %v7884 = vpop.permute.xlu0 %7883
        %7886 = vset.pattern.permute.xlu0 4
        %7887 = vperm.xlu0 %7886, %v288
        %v7888 = vpop.permute.xlu0 %7887
        %7890 = vset.pattern.permute.xlu0 4
        %7891 = vperm.xlu0 %7890, %v289
        %v7892 = vpop.permute.xlu0 %7891
        %7894 = vset.pattern.permute.xlu0 4
        %7895 = vperm.xlu0 %7894, %v290
        %v7896 = vpop.permute.xlu0 %7895
        %7898 = vset.pattern.permute.xlu0 4
        %7899 = vperm.xlu0 %7898, %v291
        %v7900 = vpop.permute.xlu0 %7899
        %7902 = vset.pattern.permute.xlu0 4
        %7903 = vperm.xlu0 %7902, %v292
        %v7904 = vpop.permute.xlu0 %7903
        %7906 = vset.pattern.permute.xlu0 4
        %7907 = vperm.xlu0 %7906, %v293
        %v7908 = vpop.permute.xlu0 %7907
        %v7910 = vlaneseq
        %v7911 = vshrl.u32 %v7910, 7
        %v7912 = vsub.s32 4, %v7911
        %v7913 = vrot.slane %v222, %v7912
        %v7914 = vlaneseq
        %v7915 = vshrl.u32 %v7914, 7
        %v7916 = vsub.s32 4, %v7915
        %v7917 = vrot.slane %v223, %v7916
        %v7918 = vlaneseq
        %v7919 = vshrl.u32 %v7918, 7
        %v7920 = vsub.s32 4, %v7919
        %v7921 = vrot.slane %v224, %v7920
        %v7922 = vlaneseq
        %v7923 = vshrl.u32 %v7922, 7
        %v7924 = vsub.s32 4, %v7923
        %v7925 = vrot.slane %v225, %v7924
        %v7926 = vlaneseq
        %v7927 = vshrl.u32 %v7926, 7
        %v7928 = vsub.s32 4, %v7927
        %v7929 = vrot.slane %v226, %v7928
        %v7930 = vlaneseq
        %v7931 = vshrl.u32 %v7930, 7
        %v7932 = vsub.s32 4, %v7931
        %v7933 = vrot.slane %v227, %v7932
        %v7934 = vlaneseq
        %v7935 = vshrl.u32 %v7934, 7
        %v7936 = vsub.s32 4, %v7935
        %v7937 = vrot.slane %v228, %v7936
        %v7938 = vlaneseq
        %v7939 = vshrl.u32 %v7938, 7
        %v7940 = vsub.s32 4, %v7939
        %v7941 = vrot.slane %v229, %v7940
        %v7942 = vadd.f32 %v7656, %v7913
        %v7943 = vadd.f32 %v7656, %v7917
        %v7944 = vadd.f32 %v7656, %v7921
        %v7945 = vadd.f32 %v7656, %v7925
        %v7946 = vadd.f32 %v7656, %v7929
        %v7947 = vadd.f32 %v7656, %v7933
        %v7948 = vadd.f32 %v7656, %v7937
        %v7949 = vadd.f32 %v7656, %v7941
        %v7950 = vadd.f32 %v7660, %v7913
        %v7951 = vadd.f32 %v7660, %v7917
        %v7952 = vadd.f32 %v7660, %v7921
        %v7953 = vadd.f32 %v7660, %v7925
        %v7954 = vadd.f32 %v7660, %v7929
        %v7955 = vadd.f32 %v7660, %v7933
        %v7956 = vadd.f32 %v7660, %v7937
        %v7957 = vadd.f32 %v7660, %v7941
        %v7958 = vadd.f32 %v7664, %v7913
        %v7959 = vadd.f32 %v7664, %v7917
        %v7960 = vadd.f32 %v7664, %v7921
        %v7961 = vadd.f32 %v7664, %v7925
        %v7962 = vadd.f32 %v7664, %v7929
        %v7963 = vadd.f32 %v7664, %v7933
        %v7964 = vadd.f32 %v7664, %v7937
        %v7965 = vadd.f32 %v7664, %v7941
        %v7966 = vadd.f32 %v7668, %v7913
        %v7967 = vadd.f32 %v7668, %v7917
        %v7968 = vadd.f32 %v7668, %v7921
        %v7969 = vadd.f32 %v7668, %v7925
        %v7970 = vadd.f32 %v7668, %v7929
        %v7971 = vadd.f32 %v7668, %v7933
        %v7972 = vadd.f32 %v7668, %v7937
        %v7973 = vadd.f32 %v7668, %v7941
        %v7974 = vadd.f32 %v7672, %v7913
        %v7975 = vadd.f32 %v7672, %v7917
        %v7976 = vadd.f32 %v7672, %v7921
        %v7977 = vadd.f32 %v7672, %v7925
        %v7978 = vadd.f32 %v7672, %v7929
        %v7979 = vadd.f32 %v7672, %v7933
        %v7980 = vadd.f32 %v7672, %v7937
        %v7981 = vadd.f32 %v7672, %v7941
        %v7982 = vadd.f32 %v7676, %v7913
        %v7983 = vadd.f32 %v7676, %v7917
        %v7984 = vadd.f32 %v7676, %v7921
        %v7985 = vadd.f32 %v7676, %v7925
        %v7986 = vadd.f32 %v7676, %v7929
        %v7987 = vadd.f32 %v7676, %v7933
        %v7988 = vadd.f32 %v7676, %v7937
        %v7989 = vadd.f32 %v7676, %v7941
        %v7990 = vadd.f32 %v7680, %v7913
        %v7991 = vadd.f32 %v7680, %v7917
        %v7992 = vadd.f32 %v7680, %v7921
        %v7993 = vadd.f32 %v7680, %v7925
        %v7994 = vadd.f32 %v7680, %v7929
        %v7995 = vadd.f32 %v7680, %v7933
        %v7996 = vadd.f32 %v7680, %v7937
        %v7997 = vadd.f32 %v7680, %v7941
        %v7998 = vadd.f32 %v7684, %v7913
        %v7999 = vadd.f32 %v7684, %v7917
        %v8000 = vadd.f32 %v7684, %v7921
        %v8001 = vadd.f32 %v7684, %v7925
        %v8002 = vadd.f32 %v7684, %v7929
        %v8003 = vadd.f32 %v7684, %v7933
        %v8004 = vadd.f32 %v7684, %v7937
        %v8005 = vadd.f32 %v7684, %v7941
        %v8006 = vadd.f32 %v7688, %v7913
        %v8007 = vadd.f32 %v7688, %v7917
        %v8008 = vadd.f32 %v7688, %v7921
        %v8009 = vadd.f32 %v7688, %v7925
        %v8010 = vadd.f32 %v7688, %v7929
        %v8011 = vadd.f32 %v7688, %v7933
        %v8012 = vadd.f32 %v7688, %v7937
        %v8013 = vadd.f32 %v7688, %v7941
        %v8014 = vadd.f32 %v7692, %v7913
        %v8015 = vadd.f32 %v7692, %v7917
        %v8016 = vadd.f32 %v7692, %v7921
        %v8017 = vadd.f32 %v7692, %v7925
        %v8018 = vadd.f32 %v7692, %v7929
        %v8019 = vadd.f32 %v7692, %v7933
        %v8020 = vadd.f32 %v7692, %v7937
        %v8021 = vadd.f32 %v7692, %v7941
        %v8022 = vadd.f32 %v7696, %v7913
        %v8023 = vadd.f32 %v7696, %v7917
        %v8024 = vadd.f32 %v7696, %v7921
        %v8025 = vadd.f32 %v7696, %v7925
        %v8026 = vadd.f32 %v7696, %v7929
        %v8027 = vadd.f32 %v7696, %v7933
        %v8028 = vadd.f32 %v7696, %v7937
        %v8029 = vadd.f32 %v7696, %v7941
        %v8030 = vadd.f32 %v7700, %v7913
        %v8031 = vadd.f32 %v7700, %v7917
        %v8032 = vadd.f32 %v7700, %v7921
        %v8033 = vadd.f32 %v7700, %v7925
        %v8034 = vadd.f32 %v7700, %v7929
        %v8035 = vadd.f32 %v7700, %v7933
        %v8036 = vadd.f32 %v7700, %v7937
        %v8037 = vadd.f32 %v7700, %v7941
        %v8038 = vadd.f32 %v7704, %v7913
        %v8039 = vadd.f32 %v7704, %v7917
        %v8040 = vadd.f32 %v7704, %v7921
        %v8041 = vadd.f32 %v7704, %v7925
        %v8042 = vadd.f32 %v7704, %v7929
        %v8043 = vadd.f32 %v7704, %v7933
        %v8044 = vadd.f32 %v7704, %v7937
        %v8045 = vadd.f32 %v7704, %v7941
        %v8046 = vadd.f32 %v7708, %v7913
        %v8047 = vadd.f32 %v7708, %v7917
        %v8048 = vadd.f32 %v7708, %v7921
        %v8049 = vadd.f32 %v7708, %v7925
        %v8050 = vadd.f32 %v7708, %v7929
        %v8051 = vadd.f32 %v7708, %v7933
        %v8052 = vadd.f32 %v7708, %v7937
        %v8053 = vadd.f32 %v7708, %v7941
        %v8054 = vadd.f32 %v7712, %v7913
        %v8055 = vadd.f32 %v7712, %v7917
        %v8056 = vadd.f32 %v7712, %v7921
        %v8057 = vadd.f32 %v7712, %v7925
        %v8058 = vadd.f32 %v7712, %v7929
        %v8059 = vadd.f32 %v7712, %v7933
        %v8060 = vadd.f32 %v7712, %v7937
        %v8061 = vadd.f32 %v7712, %v7941
        %v8062 = vadd.f32 %v7716, %v7913
        %v8063 = vadd.f32 %v7716, %v7917
        %v8064 = vadd.f32 %v7716, %v7921
        %v8065 = vadd.f32 %v7716, %v7925
        %v8066 = vadd.f32 %v7716, %v7929
        %v8067 = vadd.f32 %v7716, %v7933
        %v8068 = vadd.f32 %v7716, %v7937
        %v8069 = vadd.f32 %v7716, %v7941
        %v8070 = vadd.f32 %v7720, %v7913
        %v8071 = vadd.f32 %v7720, %v7917
        %v8072 = vadd.f32 %v7720, %v7921
        %v8073 = vadd.f32 %v7720, %v7925
        %v8074 = vadd.f32 %v7720, %v7929
        %v8075 = vadd.f32 %v7720, %v7933
        %v8076 = vadd.f32 %v7720, %v7937
        %v8077 = vadd.f32 %v7720, %v7941
        %v8078 = vadd.f32 %v7724, %v7913
        %v8079 = vadd.f32 %v7724, %v7917
        %v8080 = vadd.f32 %v7724, %v7921
        %v8081 = vadd.f32 %v7724, %v7925
        %v8082 = vadd.f32 %v7724, %v7929
        %v8083 = vadd.f32 %v7724, %v7933
        %v8084 = vadd.f32 %v7724, %v7937
        %v8085 = vadd.f32 %v7724, %v7941
        %v8086 = vadd.f32 %v7728, %v7913
        %v8087 = vadd.f32 %v7728, %v7917
        %v8088 = vadd.f32 %v7728, %v7921
        %v8089 = vadd.f32 %v7728, %v7925
        %v8090 = vadd.f32 %v7728, %v7929
        %v8091 = vadd.f32 %v7728, %v7933
        %v8092 = vadd.f32 %v7728, %v7937
        %v8093 = vadd.f32 %v7728, %v7941
        %v8094 = vadd.f32 %v7732, %v7913
        %v8095 = vadd.f32 %v7732, %v7917
        %v8096 = vadd.f32 %v7732, %v7921
        %v8097 = vadd.f32 %v7732, %v7925
        %v8098 = vadd.f32 %v7732, %v7929
        %v8099 = vadd.f32 %v7732, %v7933
        %v8100 = vadd.f32 %v7732, %v7937
        %v8101 = vadd.f32 %v7732, %v7941
        %v8102 = vadd.f32 %v7736, %v7913
        %v8103 = vadd.f32 %v7736, %v7917
        %v8104 = vadd.f32 %v7736, %v7921
        %v8105 = vadd.f32 %v7736, %v7925
        %v8106 = vadd.f32 %v7736, %v7929
        %v8107 = vadd.f32 %v7736, %v7933
        %v8108 = vadd.f32 %v7736, %v7937
        %v8109 = vadd.f32 %v7736, %v7941
        %v8110 = vadd.f32 %v7740, %v7913
        %v8111 = vadd.f32 %v7740, %v7917
        %v8112 = vadd.f32 %v7740, %v7921
        %v8113 = vadd.f32 %v7740, %v7925
        %v8114 = vadd.f32 %v7740, %v7929
        %v8115 = vadd.f32 %v7740, %v7933
        %v8116 = vadd.f32 %v7740, %v7937
        %v8117 = vadd.f32 %v7740, %v7941
        %v8118 = vadd.f32 %v7744, %v7913
        %v8119 = vadd.f32 %v7744, %v7917
        %v8120 = vadd.f32 %v7744, %v7921
        %v8121 = vadd.f32 %v7744, %v7925
        %v8122 = vadd.f32 %v7744, %v7929
        %v8123 = vadd.f32 %v7744, %v7933
        %v8124 = vadd.f32 %v7744, %v7937
        %v8125 = vadd.f32 %v7744, %v7941
        %v8126 = vadd.f32 %v7748, %v7913
        %v8127 = vadd.f32 %v7748, %v7917
        %v8128 = vadd.f32 %v7748, %v7921
        %v8129 = vadd.f32 %v7748, %v7925
        %v8130 = vadd.f32 %v7748, %v7929
        %v8131 = vadd.f32 %v7748, %v7933
        %v8132 = vadd.f32 %v7748, %v7937
        %v8133 = vadd.f32 %v7748, %v7941
        %v8134 = vadd.f32 %v7752, %v7913
        %v8135 = vadd.f32 %v7752, %v7917
        %v8136 = vadd.f32 %v7752, %v7921
        %v8137 = vadd.f32 %v7752, %v7925
        %v8138 = vadd.f32 %v7752, %v7929
        %v8139 = vadd.f32 %v7752, %v7933
        %v8140 = vadd.f32 %v7752, %v7937
        %v8141 = vadd.f32 %v7752, %v7941
        %v8142 = vadd.f32 %v7756, %v7913
        %v8143 = vadd.f32 %v7756, %v7917
        %v8144 = vadd.f32 %v7756, %v7921
        %v8145 = vadd.f32 %v7756, %v7925
        %v8146 = vadd.f32 %v7756, %v7929
        %v8147 = vadd.f32 %v7756, %v7933
        %v8148 = vadd.f32 %v7756, %v7937
        %v8149 = vadd.f32 %v7756, %v7941
        %v8150 = vadd.f32 %v7760, %v7913
        %v8151 = vadd.f32 %v7760, %v7917
        %v8152 = vadd.f32 %v7760, %v7921
        %v8153 = vadd.f32 %v7760, %v7925
        %v8154 = vadd.f32 %v7760, %v7929
        %v8155 = vadd.f32 %v7760, %v7933
        %v8156 = vadd.f32 %v7760, %v7937
        %v8157 = vadd.f32 %v7760, %v7941
        %v8158 = vadd.f32 %v7764, %v7913
        %v8159 = vadd.f32 %v7764, %v7917
        %v8160 = vadd.f32 %v7764, %v7921
        %v8161 = vadd.f32 %v7764, %v7925
        %v8162 = vadd.f32 %v7764, %v7929
        %v8163 = vadd.f32 %v7764, %v7933
        %v8164 = vadd.f32 %v7764, %v7937
        %v8165 = vadd.f32 %v7764, %v7941
        %v8166 = vadd.f32 %v7768, %v7913
        %v8167 = vadd.f32 %v7768, %v7917
        %v8168 = vadd.f32 %v7768, %v7921
        %v8169 = vadd.f32 %v7768, %v7925
        %v8170 = vadd.f32 %v7768, %v7929
        %v8171 = vadd.f32 %v7768, %v7933
        %v8172 = vadd.f32 %v7768, %v7937
        %v8173 = vadd.f32 %v7768, %v7941
        %v8174 = vadd.f32 %v7772, %v7913
        %v8175 = vadd.f32 %v7772, %v7917
        %v8176 = vadd.f32 %v7772, %v7921
        %v8177 = vadd.f32 %v7772, %v7925
        %v8178 = vadd.f32 %v7772, %v7929
        %v8179 = vadd.f32 %v7772, %v7933
        %v8180 = vadd.f32 %v7772, %v7937
        %v8181 = vadd.f32 %v7772, %v7941
        %v8182 = vadd.f32 %v7776, %v7913
        %v8183 = vadd.f32 %v7776, %v7917
        %v8184 = vadd.f32 %v7776, %v7921
        %v8185 = vadd.f32 %v7776, %v7925
        %v8186 = vadd.f32 %v7776, %v7929
        %v8187 = vadd.f32 %v7776, %v7933
        %v8188 = vadd.f32 %v7776, %v7937
        %v8189 = vadd.f32 %v7776, %v7941
        %v8190 = vadd.f32 %v7780, %v7913
        %v8191 = vadd.f32 %v7780, %v7917
        %v8192 = vadd.f32 %v7780, %v7921
        %v8193 = vadd.f32 %v7780, %v7925
        %v8194 = vadd.f32 %v7780, %v7929
        %v8195 = vadd.f32 %v7780, %v7933
        %v8196 = vadd.f32 %v7780, %v7937
        %v8197 = vadd.f32 %v7780, %v7941
        %v8198 = vadd.f32 %v7784, %v7913
        %v8199 = vadd.f32 %v7784, %v7917
        %v8200 = vadd.f32 %v7784, %v7921
        %v8201 = vadd.f32 %v7784, %v7925
        %v8202 = vadd.f32 %v7784, %v7929
        %v8203 = vadd.f32 %v7784, %v7933
        %v8204 = vadd.f32 %v7784, %v7937
        %v8205 = vadd.f32 %v7784, %v7941
        %v8206 = vadd.f32 %v7788, %v7913
        %v8207 = vadd.f32 %v7788, %v7917
        %v8208 = vadd.f32 %v7788, %v7921
        %v8209 = vadd.f32 %v7788, %v7925
        %v8210 = vadd.f32 %v7788, %v7929
        %v8211 = vadd.f32 %v7788, %v7933
        %v8212 = vadd.f32 %v7788, %v7937
        %v8213 = vadd.f32 %v7788, %v7941
        %v8214 = vadd.f32 %v7792, %v7913
        %v8215 = vadd.f32 %v7792, %v7917
        %v8216 = vadd.f32 %v7792, %v7921
        %v8217 = vadd.f32 %v7792, %v7925
        %v8218 = vadd.f32 %v7792, %v7929
        %v8219 = vadd.f32 %v7792, %v7933
        %v8220 = vadd.f32 %v7792, %v7937
        %v8221 = vadd.f32 %v7792, %v7941
        %v8222 = vadd.f32 %v7796, %v7913
        %v8223 = vadd.f32 %v7796, %v7917
        %v8224 = vadd.f32 %v7796, %v7921
        %v8225 = vadd.f32 %v7796, %v7925
        %v8226 = vadd.f32 %v7796, %v7929
        %v8227 = vadd.f32 %v7796, %v7933
        %v8228 = vadd.f32 %v7796, %v7937
        %v8229 = vadd.f32 %v7796, %v7941
        %v8230 = vadd.f32 %v7800, %v7913
        %v8231 = vadd.f32 %v7800, %v7917
        %v8232 = vadd.f32 %v7800, %v7921
        %v8233 = vadd.f32 %v7800, %v7925
        %v8234 = vadd.f32 %v7800, %v7929
        %v8235 = vadd.f32 %v7800, %v7933
        %v8236 = vadd.f32 %v7800, %v7937
        %v8237 = vadd.f32 %v7800, %v7941
        %v8238 = vadd.f32 %v7804, %v7913
        %v8239 = vadd.f32 %v7804, %v7917
        %v8240 = vadd.f32 %v7804, %v7921
        %v8241 = vadd.f32 %v7804, %v7925
        %v8242 = vadd.f32 %v7804, %v7929
        %v8243 = vadd.f32 %v7804, %v7933
        %v8244 = vadd.f32 %v7804, %v7937
        %v8245 = vadd.f32 %v7804, %v7941
        %v8246 = vadd.f32 %v7808, %v7913
        %v8247 = vadd.f32 %v7808, %v7917
        %v8248 = vadd.f32 %v7808, %v7921
        %v8249 = vadd.f32 %v7808, %v7925
        %v8250 = vadd.f32 %v7808, %v7929
        %v8251 = vadd.f32 %v7808, %v7933
        %v8252 = vadd.f32 %v7808, %v7937
        %v8253 = vadd.f32 %v7808, %v7941
        %v8254 = vadd.f32 %v7812, %v7913
        %v8255 = vadd.f32 %v7812, %v7917
        %v8256 = vadd.f32 %v7812, %v7921
        %v8257 = vadd.f32 %v7812, %v7925
        %v8258 = vadd.f32 %v7812, %v7929
        %v8259 = vadd.f32 %v7812, %v7933
        %v8260 = vadd.f32 %v7812, %v7937
        %v8261 = vadd.f32 %v7812, %v7941
        %v8262 = vadd.f32 %v7816, %v7913
        %v8263 = vadd.f32 %v7816, %v7917
        %v8264 = vadd.f32 %v7816, %v7921
        %v8265 = vadd.f32 %v7816, %v7925
        %v8266 = vadd.f32 %v7816, %v7929
        %v8267 = vadd.f32 %v7816, %v7933
        %v8268 = vadd.f32 %v7816, %v7937
        %v8269 = vadd.f32 %v7816, %v7941
        %v8270 = vadd.f32 %v7820, %v7913
        %v8271 = vadd.f32 %v7820, %v7917
        %v8272 = vadd.f32 %v7820, %v7921
        %v8273 = vadd.f32 %v7820, %v7925
        %v8274 = vadd.f32 %v7820, %v7929
        %v8275 = vadd.f32 %v7820, %v7933
        %v8276 = vadd.f32 %v7820, %v7937
        %v8277 = vadd.f32 %v7820, %v7941
        %v8278 = vadd.f32 %v7824, %v7913
        %v8279 = vadd.f32 %v7824, %v7917
        %v8280 = vadd.f32 %v7824, %v7921
        %v8281 = vadd.f32 %v7824, %v7925
        %v8282 = vadd.f32 %v7824, %v7929
        %v8283 = vadd.f32 %v7824, %v7933
        %v8284 = vadd.f32 %v7824, %v7937
        %v8285 = vadd.f32 %v7824, %v7941
        %v8286 = vadd.f32 %v7828, %v7913
        %v8287 = vadd.f32 %v7828, %v7917
        %v8288 = vadd.f32 %v7828, %v7921
        %v8289 = vadd.f32 %v7828, %v7925
        %v8290 = vadd.f32 %v7828, %v7929
        %v8291 = vadd.f32 %v7828, %v7933
        %v8292 = vadd.f32 %v7828, %v7937
        %v8293 = vadd.f32 %v7828, %v7941
        %v8294 = vadd.f32 %v7832, %v7913
        %v8295 = vadd.f32 %v7832, %v7917
        %v8296 = vadd.f32 %v7832, %v7921
        %v8297 = vadd.f32 %v7832, %v7925
        %v8298 = vadd.f32 %v7832, %v7929
        %v8299 = vadd.f32 %v7832, %v7933
        %v8300 = vadd.f32 %v7832, %v7937
        %v8301 = vadd.f32 %v7832, %v7941
        %v8302 = vadd.f32 %v7836, %v7913
        %v8303 = vadd.f32 %v7836, %v7917
        %v8304 = vadd.f32 %v7836, %v7921
        %v8305 = vadd.f32 %v7836, %v7925
        %v8306 = vadd.f32 %v7836, %v7929
        %v8307 = vadd.f32 %v7836, %v7933
        %v8308 = vadd.f32 %v7836, %v7937
        %v8309 = vadd.f32 %v7836, %v7941
        %v8310 = vadd.f32 %v7840, %v7913
        %v8311 = vadd.f32 %v7840, %v7917
        %v8312 = vadd.f32 %v7840, %v7921
        %v8313 = vadd.f32 %v7840, %v7925
        %v8314 = vadd.f32 %v7840, %v7929
        %v8315 = vadd.f32 %v7840, %v7933
        %v8316 = vadd.f32 %v7840, %v7937
        %v8317 = vadd.f32 %v7840, %v7941
        %v8318 = vadd.f32 %v7844, %v7913
        %v8319 = vadd.f32 %v7844, %v7917
        %v8320 = vadd.f32 %v7844, %v7921
        %v8321 = vadd.f32 %v7844, %v7925
        %v8322 = vadd.f32 %v7844, %v7929
        %v8323 = vadd.f32 %v7844, %v7933
        %v8324 = vadd.f32 %v7844, %v7937
        %v8325 = vadd.f32 %v7844, %v7941
        %v8326 = vadd.f32 %v7848, %v7913
        %v8327 = vadd.f32 %v7848, %v7917
        %v8328 = vadd.f32 %v7848, %v7921
        %v8329 = vadd.f32 %v7848, %v7925
        %v8330 = vadd.f32 %v7848, %v7929
        %v8331 = vadd.f32 %v7848, %v7933
        %v8332 = vadd.f32 %v7848, %v7937
        %v8333 = vadd.f32 %v7848, %v7941
        %v8334 = vadd.f32 %v7852, %v7913
        %v8335 = vadd.f32 %v7852, %v7917
        %v8336 = vadd.f32 %v7852, %v7921
        %v8337 = vadd.f32 %v7852, %v7925
        %v8338 = vadd.f32 %v7852, %v7929
        %v8339 = vadd.f32 %v7852, %v7933
        %v8340 = vadd.f32 %v7852, %v7937
        %v8341 = vadd.f32 %v7852, %v7941
        %v8342 = vadd.f32 %v7856, %v7913
        %v8343 = vadd.f32 %v7856, %v7917
        %v8344 = vadd.f32 %v7856, %v7921
        %v8345 = vadd.f32 %v7856, %v7925
        %v8346 = vadd.f32 %v7856, %v7929
        %v8347 = vadd.f32 %v7856, %v7933
        %v8348 = vadd.f32 %v7856, %v7937
        %v8349 = vadd.f32 %v7856, %v7941
        %v8350 = vadd.f32 %v7860, %v7913
        %v8351 = vadd.f32 %v7860, %v7917
        %v8352 = vadd.f32 %v7860, %v7921
        %v8353 = vadd.f32 %v7860, %v7925
        %v8354 = vadd.f32 %v7860, %v7929
        %v8355 = vadd.f32 %v7860, %v7933
        %v8356 = vadd.f32 %v7860, %v7937
        %v8357 = vadd.f32 %v7860, %v7941
        %v8358 = vadd.f32 %v7864, %v7913
        %v8359 = vadd.f32 %v7864, %v7917
        %v8360 = vadd.f32 %v7864, %v7921
        %v8361 = vadd.f32 %v7864, %v7925
        %v8362 = vadd.f32 %v7864, %v7929
        %v8363 = vadd.f32 %v7864, %v7933
        %v8364 = vadd.f32 %v7864, %v7937
        %v8365 = vadd.f32 %v7864, %v7941
        %v8366 = vadd.f32 %v7868, %v7913
        %v8367 = vadd.f32 %v7868, %v7917
        %v8368 = vadd.f32 %v7868, %v7921
        %v8369 = vadd.f32 %v7868, %v7925
        %v8370 = vadd.f32 %v7868, %v7929
        %v8371 = vadd.f32 %v7868, %v7933
        %v8372 = vadd.f32 %v7868, %v7937
        %v8373 = vadd.f32 %v7868, %v7941
        %v8374 = vadd.f32 %v7872, %v7913
        %v8375 = vadd.f32 %v7872, %v7917
        %v8376 = vadd.f32 %v7872, %v7921
        %v8377 = vadd.f32 %v7872, %v7925
        %v8378 = vadd.f32 %v7872, %v7929
        %v8379 = vadd.f32 %v7872, %v7933
        %v8380 = vadd.f32 %v7872, %v7937
        %v8381 = vadd.f32 %v7872, %v7941
        %v8382 = vadd.f32 %v7876, %v7913
        %v8383 = vadd.f32 %v7876, %v7917
        %v8384 = vadd.f32 %v7876, %v7921
        %v8385 = vadd.f32 %v7876, %v7925
        %v8386 = vadd.f32 %v7876, %v7929
        %v8387 = vadd.f32 %v7876, %v7933
        %v8388 = vadd.f32 %v7876, %v7937
        %v8389 = vadd.f32 %v7876, %v7941
        %v8390 = vadd.f32 %v7880, %v7913
        %v8391 = vadd.f32 %v7880, %v7917
        %v8392 = vadd.f32 %v7880, %v7921
        %v8393 = vadd.f32 %v7880, %v7925
        %v8394 = vadd.f32 %v7880, %v7929
        %v8395 = vadd.f32 %v7880, %v7933
        %v8396 = vadd.f32 %v7880, %v7937
        %v8397 = vadd.f32 %v7880, %v7941
        %v8398 = vadd.f32 %v7884, %v7913
        %v8399 = vadd.f32 %v7884, %v7917
        %v8400 = vadd.f32 %v7884, %v7921
        %v8401 = vadd.f32 %v7884, %v7925
        %v8402 = vadd.f32 %v7884, %v7929
        %v8403 = vadd.f32 %v7884, %v7933
        %v8404 = vadd.f32 %v7884, %v7937
        %v8405 = vadd.f32 %v7884, %v7941
        %v8406 = vadd.f32 %v7888, %v7913
        %v8407 = vadd.f32 %v7888, %v7917
        %v8408 = vadd.f32 %v7888, %v7921
        %v8409 = vadd.f32 %v7888, %v7925
        %v8410 = vadd.f32 %v7888, %v7929
        %v8411 = vadd.f32 %v7888, %v7933
        %v8412 = vadd.f32 %v7888, %v7937
        %v8413 = vadd.f32 %v7888, %v7941
        %v8414 = vadd.f32 %v7892, %v7913
        %v8415 = vadd.f32 %v7892, %v7917
        %v8416 = vadd.f32 %v7892, %v7921
        %v8417 = vadd.f32 %v7892, %v7925
        %v8418 = vadd.f32 %v7892, %v7929
        %v8419 = vadd.f32 %v7892, %v7933
        %v8420 = vadd.f32 %v7892, %v7937
        %v8421 = vadd.f32 %v7892, %v7941
        %v8422 = vadd.f32 %v7896, %v7913
        %v8423 = vadd.f32 %v7896, %v7917
        %v8424 = vadd.f32 %v7896, %v7921
        %v8425 = vadd.f32 %v7896, %v7925
        %v8426 = vadd.f32 %v7896, %v7929
        %v8427 = vadd.f32 %v7896, %v7933
        %v8428 = vadd.f32 %v7896, %v7937
        %v8429 = vadd.f32 %v7896, %v7941
        %v8430 = vadd.f32 %v7900, %v7913
        %v8431 = vadd.f32 %v7900, %v7917
        %v8432 = vadd.f32 %v7900, %v7921
        %v8433 = vadd.f32 %v7900, %v7925
        %v8434 = vadd.f32 %v7900, %v7929
        %v8435 = vadd.f32 %v7900, %v7933
        %v8436 = vadd.f32 %v7900, %v7937
        %v8437 = vadd.f32 %v7900, %v7941
        %v8438 = vadd.f32 %v7904, %v7913
        %v8439 = vadd.f32 %v7904, %v7917
        %v8440 = vadd.f32 %v7904, %v7921
        %v8441 = vadd.f32 %v7904, %v7925
        %v8442 = vadd.f32 %v7904, %v7929
        %v8443 = vadd.f32 %v7904, %v7933
        %v8444 = vadd.f32 %v7904, %v7937
        %v8445 = vadd.f32 %v7904, %v7941
        %v8446 = vadd.f32 %v7908, %v7913
        %v8447 = vadd.f32 %v7908, %v7917
        %v8448 = vadd.f32 %v7908, %v7921
        %v8449 = vadd.f32 %v7908, %v7925
        %v8450 = vadd.f32 %v7908, %v7929
        %v8451 = vadd.f32 %v7908, %v7933
        %v8452 = vadd.f32 %v7908, %v7937
        %v8453 = vadd.f32 %v7908, %v7941
        %vm8454 = vcmp.eq.f32.partialorder %v7942, 1.0
        %vm8455 = vcmp.eq.f32.partialorder %v7943, 1.0
        %vm8456 = vcmp.eq.f32.partialorder %v7944, 1.0
        %vm8457 = vcmp.eq.f32.partialorder %v7945, 1.0
        %vm8458 = vcmp.eq.f32.partialorder %v7946, 1.0
        %vm8459 = vcmp.eq.f32.partialorder %v7947, 1.0
        %vm8460 = vcmp.eq.f32.partialorder %v7948, 1.0
        %vm8461 = vcmp.eq.f32.partialorder %v7949, 1.0
        %vm8462 = vcmp.eq.f32.partialorder %v7950, 1.0
        %vm8463 = vcmp.eq.f32.partialorder %v7951, 1.0
        %vm8464 = vcmp.eq.f32.partialorder %v7952, 1.0
        %vm8465 = vcmp.eq.f32.partialorder %v7953, 1.0
        %vm8466 = vcmp.eq.f32.partialorder %v7954, 1.0
        %vm8467 = vcmp.eq.f32.partialorder %v7955, 1.0
        %vm8468 = vcmp.eq.f32.partialorder %v7956, 1.0
        %vm8469 = vcmp.eq.f32.partialorder %v7957, 1.0
        %vm8470 = vcmp.eq.f32.partialorder %v7958, 1.0
        %vm8471 = vcmp.eq.f32.partialorder %v7959, 1.0
        %vm8472 = vcmp.eq.f32.partialorder %v7960, 1.0
        %vm8473 = vcmp.eq.f32.partialorder %v7961, 1.0
        %vm8474 = vcmp.eq.f32.partialorder %v7962, 1.0
        %vm8475 = vcmp.eq.f32.partialorder %v7963, 1.0
        %vm8476 = vcmp.eq.f32.partialorder %v7964, 1.0
        %vm8477 = vcmp.eq.f32.partialorder %v7965, 1.0
        %vm8478 = vcmp.eq.f32.partialorder %v7966, 1.0
        %vm8479 = vcmp.eq.f32.partialorder %v7967, 1.0
        %vm8480 = vcmp.eq.f32.partialorder %v7968, 1.0
        %vm8481 = vcmp.eq.f32.partialorder %v7969, 1.0
        %vm8482 = vcmp.eq.f32.partialorder %v7970, 1.0
        %vm8483 = vcmp.eq.f32.partialorder %v7971, 1.0
        %vm8484 = vcmp.eq.f32.partialorder %v7972, 1.0
        %vm8485 = vcmp.eq.f32.partialorder %v7973, 1.0
        %vm8486 = vcmp.eq.f32.partialorder %v7974, 1.0
        %vm8487 = vcmp.eq.f32.partialorder %v7975, 1.0
        %vm8488 = vcmp.eq.f32.partialorder %v7976, 1.0
        %vm8489 = vcmp.eq.f32.partialorder %v7977, 1.0
        %vm8490 = vcmp.eq.f32.partialorder %v7978, 1.0
        %vm8491 = vcmp.eq.f32.partialorder %v7979, 1.0
        %vm8492 = vcmp.eq.f32.partialorder %v7980, 1.0
        %vm8493 = vcmp.eq.f32.partialorder %v7981, 1.0
        %vm8494 = vcmp.eq.f32.partialorder %v7982, 1.0
        %vm8495 = vcmp.eq.f32.partialorder %v7983, 1.0
        %vm8496 = vcmp.eq.f32.partialorder %v7984, 1.0
        %vm8497 = vcmp.eq.f32.partialorder %v7985, 1.0
        %vm8498 = vcmp.eq.f32.partialorder %v7986, 1.0
        %vm8499 = vcmp.eq.f32.partialorder %v7987, 1.0
        %vm8500 = vcmp.eq.f32.partialorder %v7988, 1.0
        %vm8501 = vcmp.eq.f32.partialorder %v7989, 1.0
        %vm8502 = vcmp.eq.f32.partialorder %v7990, 1.0
        %vm8503 = vcmp.eq.f32.partialorder %v7991, 1.0
        %vm8504 = vcmp.eq.f32.partialorder %v7992, 1.0
        %vm8505 = vcmp.eq.f32.partialorder %v7993, 1.0
        %vm8506 = vcmp.eq.f32.partialorder %v7994, 1.0
        %vm8507 = vcmp.eq.f32.partialorder %v7995, 1.0
        %vm8508 = vcmp.eq.f32.partialorder %v7996, 1.0
        %vm8509 = vcmp.eq.f32.partialorder %v7997, 1.0
        %vm8510 = vcmp.eq.f32.partialorder %v7998, 1.0
        %vm8511 = vcmp.eq.f32.partialorder %v7999, 1.0
        %vm8512 = vcmp.eq.f32.partialorder %v8000, 1.0
        %vm8513 = vcmp.eq.f32.partialorder %v8001, 1.0
        %vm8514 = vcmp.eq.f32.partialorder %v8002, 1.0
        %vm8515 = vcmp.eq.f32.partialorder %v8003, 1.0
        %vm8516 = vcmp.eq.f32.partialorder %v8004, 1.0
        %vm8517 = vcmp.eq.f32.partialorder %v8005, 1.0
        %vm8518 = vcmp.eq.f32.partialorder %v8006, 1.0
        %vm8519 = vcmp.eq.f32.partialorder %v8007, 1.0
        %vm8520 = vcmp.eq.f32.partialorder %v8008, 1.0
        %vm8521 = vcmp.eq.f32.partialorder %v8009, 1.0
        %vm8522 = vcmp.eq.f32.partialorder %v8010, 1.0
        %vm8523 = vcmp.eq.f32.partialorder %v8011, 1.0
        %vm8524 = vcmp.eq.f32.partialorder %v8012, 1.0
        %vm8525 = vcmp.eq.f32.partialorder %v8013, 1.0
        %vm8526 = vcmp.eq.f32.partialorder %v8014, 1.0
        %vm8527 = vcmp.eq.f32.partialorder %v8015, 1.0
        %vm8528 = vcmp.eq.f32.partialorder %v8016, 1.0
        %vm8529 = vcmp.eq.f32.partialorder %v8017, 1.0
        %vm8530 = vcmp.eq.f32.partialorder %v8018, 1.0
        %vm8531 = vcmp.eq.f32.partialorder %v8019, 1.0
        %vm8532 = vcmp.eq.f32.partialorder %v8020, 1.0
        %vm8533 = vcmp.eq.f32.partialorder %v8021, 1.0
        %vm8534 = vcmp.eq.f32.partialorder %v8022, 1.0
        %vm8535 = vcmp.eq.f32.partialorder %v8023, 1.0
        %vm8536 = vcmp.eq.f32.partialorder %v8024, 1.0
        %vm8537 = vcmp.eq.f32.partialorder %v8025, 1.0
        %vm8538 = vcmp.eq.f32.partialorder %v8026, 1.0
        %vm8539 = vcmp.eq.f32.partialorder %v8027, 1.0
        %vm8540 = vcmp.eq.f32.partialorder %v8028, 1.0
        %vm8541 = vcmp.eq.f32.partialorder %v8029, 1.0
        %vm8542 = vcmp.eq.f32.partialorder %v8030, 1.0
        %vm8543 = vcmp.eq.f32.partialorder %v8031, 1.0
        %vm8544 = vcmp.eq.f32.partialorder %v8032, 1.0
        %vm8545 = vcmp.eq.f32.partialorder %v8033, 1.0
        %vm8546 = vcmp.eq.f32.partialorder %v8034, 1.0
        %vm8547 = vcmp.eq.f32.partialorder %v8035, 1.0
        %vm8548 = vcmp.eq.f32.partialorder %v8036, 1.0
        %vm8549 = vcmp.eq.f32.partialorder %v8037, 1.0
        %vm8550 = vcmp.eq.f32.partialorder %v8038, 1.0
        %vm8551 = vcmp.eq.f32.partialorder %v8039, 1.0
        %vm8552 = vcmp.eq.f32.partialorder %v8040, 1.0
        %vm8553 = vcmp.eq.f32.partialorder %v8041, 1.0
        %vm8554 = vcmp.eq.f32.partialorder %v8042, 1.0
        %vm8555 = vcmp.eq.f32.partialorder %v8043, 1.0
        %vm8556 = vcmp.eq.f32.partialorder %v8044, 1.0
        %vm8557 = vcmp.eq.f32.partialorder %v8045, 1.0
        %vm8558 = vcmp.eq.f32.partialorder %v8046, 1.0
        %vm8559 = vcmp.eq.f32.partialorder %v8047, 1.0
        %vm8560 = vcmp.eq.f32.partialorder %v8048, 1.0
        %vm8561 = vcmp.eq.f32.partialorder %v8049, 1.0
        %vm8562 = vcmp.eq.f32.partialorder %v8050, 1.0
        %vm8563 = vcmp.eq.f32.partialorder %v8051, 1.0
        %vm8564 = vcmp.eq.f32.partialorder %v8052, 1.0
        %vm8565 = vcmp.eq.f32.partialorder %v8053, 1.0
        %vm8566 = vcmp.eq.f32.partialorder %v8054, 1.0
        %vm8567 = vcmp.eq.f32.partialorder %v8055, 1.0
        %vm8568 = vcmp.eq.f32.partialorder %v8056, 1.0
        %vm8569 = vcmp.eq.f32.partialorder %v8057, 1.0
        %vm8570 = vcmp.eq.f32.partialorder %v8058, 1.0
        %vm8571 = vcmp.eq.f32.partialorder %v8059, 1.0
        %vm8572 = vcmp.eq.f32.partialorder %v8060, 1.0
        %vm8573 = vcmp.eq.f32.partialorder %v8061, 1.0
        %vm8574 = vcmp.eq.f32.partialorder %v8062, 1.0
        %vm8575 = vcmp.eq.f32.partialorder %v8063, 1.0
        %vm8576 = vcmp.eq.f32.partialorder %v8064, 1.0
        %vm8577 = vcmp.eq.f32.partialorder %v8065, 1.0
        %vm8578 = vcmp.eq.f32.partialorder %v8066, 1.0
        %vm8579 = vcmp.eq.f32.partialorder %v8067, 1.0
        %vm8580 = vcmp.eq.f32.partialorder %v8068, 1.0
        %vm8581 = vcmp.eq.f32.partialorder %v8069, 1.0
        %vm8582 = vcmp.eq.f32.partialorder %v8070, 1.0
        %vm8583 = vcmp.eq.f32.partialorder %v8071, 1.0
        %vm8584 = vcmp.eq.f32.partialorder %v8072, 1.0
        %vm8585 = vcmp.eq.f32.partialorder %v8073, 1.0
        %vm8586 = vcmp.eq.f32.partialorder %v8074, 1.0
        %vm8587 = vcmp.eq.f32.partialorder %v8075, 1.0
        %vm8588 = vcmp.eq.f32.partialorder %v8076, 1.0
        %vm8589 = vcmp.eq.f32.partialorder %v8077, 1.0
        %vm8590 = vcmp.eq.f32.partialorder %v8078, 1.0
        %vm8591 = vcmp.eq.f32.partialorder %v8079, 1.0
        %vm8592 = vcmp.eq.f32.partialorder %v8080, 1.0
        %vm8593 = vcmp.eq.f32.partialorder %v8081, 1.0
        %vm8594 = vcmp.eq.f32.partialorder %v8082, 1.0
        %vm8595 = vcmp.eq.f32.partialorder %v8083, 1.0
        %vm8596 = vcmp.eq.f32.partialorder %v8084, 1.0
        %vm8597 = vcmp.eq.f32.partialorder %v8085, 1.0
        %vm8598 = vcmp.eq.f32.partialorder %v8086, 1.0
        %vm8599 = vcmp.eq.f32.partialorder %v8087, 1.0
        %vm8600 = vcmp.eq.f32.partialorder %v8088, 1.0
        %vm8601 = vcmp.eq.f32.partialorder %v8089, 1.0
        %vm8602 = vcmp.eq.f32.partialorder %v8090, 1.0
        %vm8603 = vcmp.eq.f32.partialorder %v8091, 1.0
        %vm8604 = vcmp.eq.f32.partialorder %v8092, 1.0
        %vm8605 = vcmp.eq.f32.partialorder %v8093, 1.0
        %vm8606 = vcmp.eq.f32.partialorder %v8094, 1.0
        %vm8607 = vcmp.eq.f32.partialorder %v8095, 1.0
        %vm8608 = vcmp.eq.f32.partialorder %v8096, 1.0
        %vm8609 = vcmp.eq.f32.partialorder %v8097, 1.0
        %vm8610 = vcmp.eq.f32.partialorder %v8098, 1.0
        %vm8611 = vcmp.eq.f32.partialorder %v8099, 1.0
        %vm8612 = vcmp.eq.f32.partialorder %v8100, 1.0
        %vm8613 = vcmp.eq.f32.partialorder %v8101, 1.0
        %vm8614 = vcmp.eq.f32.partialorder %v8102, 1.0
        %vm8615 = vcmp.eq.f32.partialorder %v8103, 1.0
        %vm8616 = vcmp.eq.f32.partialorder %v8104, 1.0
        %vm8617 = vcmp.eq.f32.partialorder %v8105, 1.0
        %vm8618 = vcmp.eq.f32.partialorder %v8106, 1.0
        %vm8619 = vcmp.eq.f32.partialorder %v8107, 1.0
        %vm8620 = vcmp.eq.f32.partialorder %v8108, 1.0
        %vm8621 = vcmp.eq.f32.partialorder %v8109, 1.0
        %vm8622 = vcmp.eq.f32.partialorder %v8110, 1.0
        %vm8623 = vcmp.eq.f32.partialorder %v8111, 1.0
        %vm8624 = vcmp.eq.f32.partialorder %v8112, 1.0
        %vm8625 = vcmp.eq.f32.partialorder %v8113, 1.0
        %vm8626 = vcmp.eq.f32.partialorder %v8114, 1.0
        %vm8627 = vcmp.eq.f32.partialorder %v8115, 1.0
        %vm8628 = vcmp.eq.f32.partialorder %v8116, 1.0
        %vm8629 = vcmp.eq.f32.partialorder %v8117, 1.0
        %vm8630 = vcmp.eq.f32.partialorder %v8118, 1.0
        %vm8631 = vcmp.eq.f32.partialorder %v8119, 1.0
        %vm8632 = vcmp.eq.f32.partialorder %v8120, 1.0
        %vm8633 = vcmp.eq.f32.partialorder %v8121, 1.0
        %vm8634 = vcmp.eq.f32.partialorder %v8122, 1.0
        %vm8635 = vcmp.eq.f32.partialorder %v8123, 1.0
        %vm8636 = vcmp.eq.f32.partialorder %v8124, 1.0
        %vm8637 = vcmp.eq.f32.partialorder %v8125, 1.0
        %vm8638 = vcmp.eq.f32.partialorder %v8126, 1.0
        %vm8639 = vcmp.eq.f32.partialorder %v8127, 1.0
        %vm8640 = vcmp.eq.f32.partialorder %v8128, 1.0
        %vm8641 = vcmp.eq.f32.partialorder %v8129, 1.0
        %vm8642 = vcmp.eq.f32.partialorder %v8130, 1.0
        %vm8643 = vcmp.eq.f32.partialorder %v8131, 1.0
        %vm8644 = vcmp.eq.f32.partialorder %v8132, 1.0
        %vm8645 = vcmp.eq.f32.partialorder %v8133, 1.0
        %vm8646 = vcmp.eq.f32.partialorder %v8134, 1.0
        %vm8647 = vcmp.eq.f32.partialorder %v8135, 1.0
        %vm8648 = vcmp.eq.f32.partialorder %v8136, 1.0
        %vm8649 = vcmp.eq.f32.partialorder %v8137, 1.0
        %vm8650 = vcmp.eq.f32.partialorder %v8138, 1.0
        %vm8651 = vcmp.eq.f32.partialorder %v8139, 1.0
        %vm8652 = vcmp.eq.f32.partialorder %v8140, 1.0
        %vm8653 = vcmp.eq.f32.partialorder %v8141, 1.0
        %vm8654 = vcmp.eq.f32.partialorder %v8142, 1.0
        %vm8655 = vcmp.eq.f32.partialorder %v8143, 1.0
        %vm8656 = vcmp.eq.f32.partialorder %v8144, 1.0
        %vm8657 = vcmp.eq.f32.partialorder %v8145, 1.0
        %vm8658 = vcmp.eq.f32.partialorder %v8146, 1.0
        %vm8659 = vcmp.eq.f32.partialorder %v8147, 1.0
        %vm8660 = vcmp.eq.f32.partialorder %v8148, 1.0
        %vm8661 = vcmp.eq.f32.partialorder %v8149, 1.0
        %vm8662 = vcmp.eq.f32.partialorder %v8150, 1.0
        %vm8663 = vcmp.eq.f32.partialorder %v8151, 1.0
        %vm8664 = vcmp.eq.f32.partialorder %v8152, 1.0
        %vm8665 = vcmp.eq.f32.partialorder %v8153, 1.0
        %vm8666 = vcmp.eq.f32.partialorder %v8154, 1.0
        %vm8667 = vcmp.eq.f32.partialorder %v8155, 1.0
        %vm8668 = vcmp.eq.f32.partialorder %v8156, 1.0
        %vm8669 = vcmp.eq.f32.partialorder %v8157, 1.0
        %vm8670 = vcmp.eq.f32.partialorder %v8158, 1.0
        %vm8671 = vcmp.eq.f32.partialorder %v8159, 1.0
        %vm8672 = vcmp.eq.f32.partialorder %v8160, 1.0
        %vm8673 = vcmp.eq.f32.partialorder %v8161, 1.0
        %vm8674 = vcmp.eq.f32.partialorder %v8162, 1.0
        %vm8675 = vcmp.eq.f32.partialorder %v8163, 1.0
        %vm8676 = vcmp.eq.f32.partialorder %v8164, 1.0
        %vm8677 = vcmp.eq.f32.partialorder %v8165, 1.0
        %vm8678 = vcmp.eq.f32.partialorder %v8166, 1.0
        %vm8679 = vcmp.eq.f32.partialorder %v8167, 1.0
        %vm8680 = vcmp.eq.f32.partialorder %v8168, 1.0
        %vm8681 = vcmp.eq.f32.partialorder %v8169, 1.0
        %vm8682 = vcmp.eq.f32.partialorder %v8170, 1.0
        %vm8683 = vcmp.eq.f32.partialorder %v8171, 1.0
        %vm8684 = vcmp.eq.f32.partialorder %v8172, 1.0
        %vm8685 = vcmp.eq.f32.partialorder %v8173, 1.0
        %vm8686 = vcmp.eq.f32.partialorder %v8174, 1.0
        %vm8687 = vcmp.eq.f32.partialorder %v8175, 1.0
        %vm8688 = vcmp.eq.f32.partialorder %v8176, 1.0
        %vm8689 = vcmp.eq.f32.partialorder %v8177, 1.0
        %vm8690 = vcmp.eq.f32.partialorder %v8178, 1.0
        %vm8691 = vcmp.eq.f32.partialorder %v8179, 1.0
        %vm8692 = vcmp.eq.f32.partialorder %v8180, 1.0
        %vm8693 = vcmp.eq.f32.partialorder %v8181, 1.0
        %vm8694 = vcmp.eq.f32.partialorder %v8182, 1.0
        %vm8695 = vcmp.eq.f32.partialorder %v8183, 1.0
        %vm8696 = vcmp.eq.f32.partialorder %v8184, 1.0
        %vm8697 = vcmp.eq.f32.partialorder %v8185, 1.0
        %vm8698 = vcmp.eq.f32.partialorder %v8186, 1.0
        %vm8699 = vcmp.eq.f32.partialorder %v8187, 1.0
        %vm8700 = vcmp.eq.f32.partialorder %v8188, 1.0
        %vm8701 = vcmp.eq.f32.partialorder %v8189, 1.0
        %vm8702 = vcmp.eq.f32.partialorder %v8190, 1.0
        %vm8703 = vcmp.eq.f32.partialorder %v8191, 1.0
        %vm8704 = vcmp.eq.f32.partialorder %v8192, 1.0
        %vm8705 = vcmp.eq.f32.partialorder %v8193, 1.0
        %vm8706 = vcmp.eq.f32.partialorder %v8194, 1.0
        %vm8707 = vcmp.eq.f32.partialorder %v8195, 1.0
        %vm8708 = vcmp.eq.f32.partialorder %v8196, 1.0
        %vm8709 = vcmp.eq.f32.partialorder %v8197, 1.0
        %vm8710 = vcmp.eq.f32.partialorder %v8198, 1.0
        %vm8711 = vcmp.eq.f32.partialorder %v8199, 1.0
        %vm8712 = vcmp.eq.f32.partialorder %v8200, 1.0
        %vm8713 = vcmp.eq.f32.partialorder %v8201, 1.0
        %vm8714 = vcmp.eq.f32.partialorder %v8202, 1.0
        %vm8715 = vcmp.eq.f32.partialorder %v8203, 1.0
        %vm8716 = vcmp.eq.f32.partialorder %v8204, 1.0
        %vm8717 = vcmp.eq.f32.partialorder %v8205, 1.0
        %vm8718 = vcmp.eq.f32.partialorder %v8206, 1.0
        %vm8719 = vcmp.eq.f32.partialorder %v8207, 1.0
        %vm8720 = vcmp.eq.f32.partialorder %v8208, 1.0
        %vm8721 = vcmp.eq.f32.partialorder %v8209, 1.0
        %vm8722 = vcmp.eq.f32.partialorder %v8210, 1.0
        %vm8723 = vcmp.eq.f32.partialorder %v8211, 1.0
        %vm8724 = vcmp.eq.f32.partialorder %v8212, 1.0
        %vm8725 = vcmp.eq.f32.partialorder %v8213, 1.0
        %vm8726 = vcmp.eq.f32.partialorder %v8214, 1.0
        %vm8727 = vcmp.eq.f32.partialorder %v8215, 1.0
        %vm8728 = vcmp.eq.f32.partialorder %v8216, 1.0
        %vm8729 = vcmp.eq.f32.partialorder %v8217, 1.0
        %vm8730 = vcmp.eq.f32.partialorder %v8218, 1.0
        %vm8731 = vcmp.eq.f32.partialorder %v8219, 1.0
        %vm8732 = vcmp.eq.f32.partialorder %v8220, 1.0
        %vm8733 = vcmp.eq.f32.partialorder %v8221, 1.0
        %vm8734 = vcmp.eq.f32.partialorder %v8222, 1.0
        %vm8735 = vcmp.eq.f32.partialorder %v8223, 1.0
        %vm8736 = vcmp.eq.f32.partialorder %v8224, 1.0
        %vm8737 = vcmp.eq.f32.partialorder %v8225, 1.0
        %vm8738 = vcmp.eq.f32.partialorder %v8226, 1.0
        %vm8739 = vcmp.eq.f32.partialorder %v8227, 1.0
        %vm8740 = vcmp.eq.f32.partialorder %v8228, 1.0
        %vm8741 = vcmp.eq.f32.partialorder %v8229, 1.0
        %vm8742 = vcmp.eq.f32.partialorder %v8230, 1.0
        %vm8743 = vcmp.eq.f32.partialorder %v8231, 1.0
        %vm8744 = vcmp.eq.f32.partialorder %v8232, 1.0
        %vm8745 = vcmp.eq.f32.partialorder %v8233, 1.0
        %vm8746 = vcmp.eq.f32.partialorder %v8234, 1.0
        %vm8747 = vcmp.eq.f32.partialorder %v8235, 1.0
        %vm8748 = vcmp.eq.f32.partialorder %v8236, 1.0
        %vm8749 = vcmp.eq.f32.partialorder %v8237, 1.0
        %vm8750 = vcmp.eq.f32.partialorder %v8238, 1.0
        %vm8751 = vcmp.eq.f32.partialorder %v8239, 1.0
        %vm8752 = vcmp.eq.f32.partialorder %v8240, 1.0
        %vm8753 = vcmp.eq.f32.partialorder %v8241, 1.0
        %vm8754 = vcmp.eq.f32.partialorder %v8242, 1.0
        %vm8755 = vcmp.eq.f32.partialorder %v8243, 1.0
        %vm8756 = vcmp.eq.f32.partialorder %v8244, 1.0
        %vm8757 = vcmp.eq.f32.partialorder %v8245, 1.0
        %vm8758 = vcmp.eq.f32.partialorder %v8246, 1.0
        %vm8759 = vcmp.eq.f32.partialorder %v8247, 1.0
        %vm8760 = vcmp.eq.f32.partialorder %v8248, 1.0
        %vm8761 = vcmp.eq.f32.partialorder %v8249, 1.0
        %vm8762 = vcmp.eq.f32.partialorder %v8250, 1.0
        %vm8763 = vcmp.eq.f32.partialorder %v8251, 1.0
        %vm8764 = vcmp.eq.f32.partialorder %v8252, 1.0
        %vm8765 = vcmp.eq.f32.partialorder %v8253, 1.0
        %vm8766 = vcmp.eq.f32.partialorder %v8254, 1.0
        %vm8767 = vcmp.eq.f32.partialorder %v8255, 1.0
        %vm8768 = vcmp.eq.f32.partialorder %v8256, 1.0
        %vm8769 = vcmp.eq.f32.partialorder %v8257, 1.0
        %vm8770 = vcmp.eq.f32.partialorder %v8258, 1.0
        %vm8771 = vcmp.eq.f32.partialorder %v8259, 1.0
        %vm8772 = vcmp.eq.f32.partialorder %v8260, 1.0
        %vm8773 = vcmp.eq.f32.partialorder %v8261, 1.0
        %vm8774 = vcmp.eq.f32.partialorder %v8262, 1.0
        %vm8775 = vcmp.eq.f32.partialorder %v8263, 1.0
        %vm8776 = vcmp.eq.f32.partialorder %v8264, 1.0
        %vm8777 = vcmp.eq.f32.partialorder %v8265, 1.0
        %vm8778 = vcmp.eq.f32.partialorder %v8266, 1.0
        %vm8779 = vcmp.eq.f32.partialorder %v8267, 1.0
        %vm8780 = vcmp.eq.f32.partialorder %v8268, 1.0
        %vm8781 = vcmp.eq.f32.partialorder %v8269, 1.0
        %vm8782 = vcmp.eq.f32.partialorder %v8270, 1.0
        %vm8783 = vcmp.eq.f32.partialorder %v8271, 1.0
        %vm8784 = vcmp.eq.f32.partialorder %v8272, 1.0
        %vm8785 = vcmp.eq.f32.partialorder %v8273, 1.0
        %vm8786 = vcmp.eq.f32.partialorder %v8274, 1.0
        %vm8787 = vcmp.eq.f32.partialorder %v8275, 1.0
        %vm8788 = vcmp.eq.f32.partialorder %v8276, 1.0
        %vm8789 = vcmp.eq.f32.partialorder %v8277, 1.0
        %vm8790 = vcmp.eq.f32.partialorder %v8278, 1.0
        %vm8791 = vcmp.eq.f32.partialorder %v8279, 1.0
        %vm8792 = vcmp.eq.f32.partialorder %v8280, 1.0
        %vm8793 = vcmp.eq.f32.partialorder %v8281, 1.0
        %vm8794 = vcmp.eq.f32.partialorder %v8282, 1.0
        %vm8795 = vcmp.eq.f32.partialorder %v8283, 1.0
        %vm8796 = vcmp.eq.f32.partialorder %v8284, 1.0
        %vm8797 = vcmp.eq.f32.partialorder %v8285, 1.0
        %vm8798 = vcmp.eq.f32.partialorder %v8286, 1.0
        %vm8799 = vcmp.eq.f32.partialorder %v8287, 1.0
        %vm8800 = vcmp.eq.f32.partialorder %v8288, 1.0
        %vm8801 = vcmp.eq.f32.partialorder %v8289, 1.0
        %vm8802 = vcmp.eq.f32.partialorder %v8290, 1.0
        %vm8803 = vcmp.eq.f32.partialorder %v8291, 1.0
        %vm8804 = vcmp.eq.f32.partialorder %v8292, 1.0
        %vm8805 = vcmp.eq.f32.partialorder %v8293, 1.0
        %vm8806 = vcmp.eq.f32.partialorder %v8294, 1.0
        %vm8807 = vcmp.eq.f32.partialorder %v8295, 1.0
        %vm8808 = vcmp.eq.f32.partialorder %v8296, 1.0
        %vm8809 = vcmp.eq.f32.partialorder %v8297, 1.0
        %vm8810 = vcmp.eq.f32.partialorder %v8298, 1.0
        %vm8811 = vcmp.eq.f32.partialorder %v8299, 1.0
        %vm8812 = vcmp.eq.f32.partialorder %v8300, 1.0
        %vm8813 = vcmp.eq.f32.partialorder %v8301, 1.0
        %vm8814 = vcmp.eq.f32.partialorder %v8302, 1.0
        %vm8815 = vcmp.eq.f32.partialorder %v8303, 1.0
        %vm8816 = vcmp.eq.f32.partialorder %v8304, 1.0
        %vm8817 = vcmp.eq.f32.partialorder %v8305, 1.0
        %vm8818 = vcmp.eq.f32.partialorder %v8306, 1.0
        %vm8819 = vcmp.eq.f32.partialorder %v8307, 1.0
        %vm8820 = vcmp.eq.f32.partialorder %v8308, 1.0
        %vm8821 = vcmp.eq.f32.partialorder %v8309, 1.0
        %vm8822 = vcmp.eq.f32.partialorder %v8310, 1.0
        %vm8823 = vcmp.eq.f32.partialorder %v8311, 1.0
        %vm8824 = vcmp.eq.f32.partialorder %v8312, 1.0
        %vm8825 = vcmp.eq.f32.partialorder %v8313, 1.0
        %vm8826 = vcmp.eq.f32.partialorder %v8314, 1.0
        %vm8827 = vcmp.eq.f32.partialorder %v8315, 1.0
        %vm8828 = vcmp.eq.f32.partialorder %v8316, 1.0
        %vm8829 = vcmp.eq.f32.partialorder %v8317, 1.0
        %vm8830 = vcmp.eq.f32.partialorder %v8318, 1.0
        %vm8831 = vcmp.eq.f32.partialorder %v8319, 1.0
        %vm8832 = vcmp.eq.f32.partialorder %v8320, 1.0
        %vm8833 = vcmp.eq.f32.partialorder %v8321, 1.0
        %vm8834 = vcmp.eq.f32.partialorder %v8322, 1.0
        %vm8835 = vcmp.eq.f32.partialorder %v8323, 1.0
        %vm8836 = vcmp.eq.f32.partialorder %v8324, 1.0
        %vm8837 = vcmp.eq.f32.partialorder %v8325, 1.0
        %vm8838 = vcmp.eq.f32.partialorder %v8326, 1.0
        %vm8839 = vcmp.eq.f32.partialorder %v8327, 1.0
        %vm8840 = vcmp.eq.f32.partialorder %v8328, 1.0
        %vm8841 = vcmp.eq.f32.partialorder %v8329, 1.0
        %vm8842 = vcmp.eq.f32.partialorder %v8330, 1.0
        %vm8843 = vcmp.eq.f32.partialorder %v8331, 1.0
        %vm8844 = vcmp.eq.f32.partialorder %v8332, 1.0
        %vm8845 = vcmp.eq.f32.partialorder %v8333, 1.0
        %vm8846 = vcmp.eq.f32.partialorder %v8334, 1.0
        %vm8847 = vcmp.eq.f32.partialorder %v8335, 1.0
        %vm8848 = vcmp.eq.f32.partialorder %v8336, 1.0
        %vm8849 = vcmp.eq.f32.partialorder %v8337, 1.0
        %vm8850 = vcmp.eq.f32.partialorder %v8338, 1.0
        %vm8851 = vcmp.eq.f32.partialorder %v8339, 1.0
        %vm8852 = vcmp.eq.f32.partialorder %v8340, 1.0
        %vm8853 = vcmp.eq.f32.partialorder %v8341, 1.0
        %vm8854 = vcmp.eq.f32.partialorder %v8342, 1.0
        %vm8855 = vcmp.eq.f32.partialorder %v8343, 1.0
        %vm8856 = vcmp.eq.f32.partialorder %v8344, 1.0
        %vm8857 = vcmp.eq.f32.partialorder %v8345, 1.0
        %vm8858 = vcmp.eq.f32.partialorder %v8346, 1.0
        %vm8859 = vcmp.eq.f32.partialorder %v8347, 1.0
        %vm8860 = vcmp.eq.f32.partialorder %v8348, 1.0
        %vm8861 = vcmp.eq.f32.partialorder %v8349, 1.0
        %vm8862 = vcmp.eq.f32.partialorder %v8350, 1.0
        %vm8863 = vcmp.eq.f32.partialorder %v8351, 1.0
        %vm8864 = vcmp.eq.f32.partialorder %v8352, 1.0
        %vm8865 = vcmp.eq.f32.partialorder %v8353, 1.0
        %vm8866 = vcmp.eq.f32.partialorder %v8354, 1.0
        %vm8867 = vcmp.eq.f32.partialorder %v8355, 1.0
        %vm8868 = vcmp.eq.f32.partialorder %v8356, 1.0
        %vm8869 = vcmp.eq.f32.partialorder %v8357, 1.0
        %vm8870 = vcmp.eq.f32.partialorder %v8358, 1.0
        %vm8871 = vcmp.eq.f32.partialorder %v8359, 1.0
        %vm8872 = vcmp.eq.f32.partialorder %v8360, 1.0
        %vm8873 = vcmp.eq.f32.partialorder %v8361, 1.0
        %vm8874 = vcmp.eq.f32.partialorder %v8362, 1.0
        %vm8875 = vcmp.eq.f32.partialorder %v8363, 1.0
        %vm8876 = vcmp.eq.f32.partialorder %v8364, 1.0
        %vm8877 = vcmp.eq.f32.partialorder %v8365, 1.0
        %vm8878 = vcmp.eq.f32.partialorder %v8366, 1.0
        %vm8879 = vcmp.eq.f32.partialorder %v8367, 1.0
        %vm8880 = vcmp.eq.f32.partialorder %v8368, 1.0
        %vm8881 = vcmp.eq.f32.partialorder %v8369, 1.0
        %vm8882 = vcmp.eq.f32.partialorder %v8370, 1.0
        %vm8883 = vcmp.eq.f32.partialorder %v8371, 1.0
        %vm8884 = vcmp.eq.f32.partialorder %v8372, 1.0
        %vm8885 = vcmp.eq.f32.partialorder %v8373, 1.0
        %vm8886 = vcmp.eq.f32.partialorder %v8374, 1.0
        %vm8887 = vcmp.eq.f32.partialorder %v8375, 1.0
        %vm8888 = vcmp.eq.f32.partialorder %v8376, 1.0
        %vm8889 = vcmp.eq.f32.partialorder %v8377, 1.0
        %vm8890 = vcmp.eq.f32.partialorder %v8378, 1.0
        %vm8891 = vcmp.eq.f32.partialorder %v8379, 1.0
        %vm8892 = vcmp.eq.f32.partialorder %v8380, 1.0
        %vm8893 = vcmp.eq.f32.partialorder %v8381, 1.0
        %vm8894 = vcmp.eq.f32.partialorder %v8382, 1.0
        %vm8895 = vcmp.eq.f32.partialorder %v8383, 1.0
        %vm8896 = vcmp.eq.f32.partialorder %v8384, 1.0
        %vm8897 = vcmp.eq.f32.partialorder %v8385, 1.0
        %vm8898 = vcmp.eq.f32.partialorder %v8386, 1.0
        %vm8899 = vcmp.eq.f32.partialorder %v8387, 1.0
        %vm8900 = vcmp.eq.f32.partialorder %v8388, 1.0
        %vm8901 = vcmp.eq.f32.partialorder %v8389, 1.0
        %vm8902 = vcmp.eq.f32.partialorder %v8390, 1.0
        %vm8903 = vcmp.eq.f32.partialorder %v8391, 1.0
        %vm8904 = vcmp.eq.f32.partialorder %v8392, 1.0
        %vm8905 = vcmp.eq.f32.partialorder %v8393, 1.0
        %vm8906 = vcmp.eq.f32.partialorder %v8394, 1.0
        %vm8907 = vcmp.eq.f32.partialorder %v8395, 1.0
        %vm8908 = vcmp.eq.f32.partialorder %v8396, 1.0
        %vm8909 = vcmp.eq.f32.partialorder %v8397, 1.0
        %vm8910 = vcmp.eq.f32.partialorder %v8398, 1.0
        %vm8911 = vcmp.eq.f32.partialorder %v8399, 1.0
        %vm8912 = vcmp.eq.f32.partialorder %v8400, 1.0
        %vm8913 = vcmp.eq.f32.partialorder %v8401, 1.0
        %vm8914 = vcmp.eq.f32.partialorder %v8402, 1.0
        %vm8915 = vcmp.eq.f32.partialorder %v8403, 1.0
        %vm8916 = vcmp.eq.f32.partialorder %v8404, 1.0
        %vm8917 = vcmp.eq.f32.partialorder %v8405, 1.0
        %vm8918 = vcmp.eq.f32.partialorder %v8406, 1.0
        %vm8919 = vcmp.eq.f32.partialorder %v8407, 1.0
        %vm8920 = vcmp.eq.f32.partialorder %v8408, 1.0
        %vm8921 = vcmp.eq.f32.partialorder %v8409, 1.0
        %vm8922 = vcmp.eq.f32.partialorder %v8410, 1.0
        %vm8923 = vcmp.eq.f32.partialorder %v8411, 1.0
        %vm8924 = vcmp.eq.f32.partialorder %v8412, 1.0
        %vm8925 = vcmp.eq.f32.partialorder %v8413, 1.0
        %vm8926 = vcmp.eq.f32.partialorder %v8414, 1.0
        %vm8927 = vcmp.eq.f32.partialorder %v8415, 1.0
        %vm8928 = vcmp.eq.f32.partialorder %v8416, 1.0
        %vm8929 = vcmp.eq.f32.partialorder %v8417, 1.0
        %vm8930 = vcmp.eq.f32.partialorder %v8418, 1.0
        %vm8931 = vcmp.eq.f32.partialorder %v8419, 1.0
        %vm8932 = vcmp.eq.f32.partialorder %v8420, 1.0
        %vm8933 = vcmp.eq.f32.partialorder %v8421, 1.0
        %vm8934 = vcmp.eq.f32.partialorder %v8422, 1.0
        %vm8935 = vcmp.eq.f32.partialorder %v8423, 1.0
        %vm8936 = vcmp.eq.f32.partialorder %v8424, 1.0
        %vm8937 = vcmp.eq.f32.partialorder %v8425, 1.0
        %vm8938 = vcmp.eq.f32.partialorder %v8426, 1.0
        %vm8939 = vcmp.eq.f32.partialorder %v8427, 1.0
        %vm8940 = vcmp.eq.f32.partialorder %v8428, 1.0
        %vm8941 = vcmp.eq.f32.partialorder %v8429, 1.0
        %vm8942 = vcmp.eq.f32.partialorder %v8430, 1.0
        %vm8943 = vcmp.eq.f32.partialorder %v8431, 1.0
        %vm8944 = vcmp.eq.f32.partialorder %v8432, 1.0
        %vm8945 = vcmp.eq.f32.partialorder %v8433, 1.0
        %vm8946 = vcmp.eq.f32.partialorder %v8434, 1.0
        %vm8947 = vcmp.eq.f32.partialorder %v8435, 1.0
        %vm8948 = vcmp.eq.f32.partialorder %v8436, 1.0
        %vm8949 = vcmp.eq.f32.partialorder %v8437, 1.0
        %vm8950 = vcmp.eq.f32.partialorder %v8438, 1.0
        %vm8951 = vcmp.eq.f32.partialorder %v8439, 1.0
        %vm8952 = vcmp.eq.f32.partialorder %v8440, 1.0
        %vm8953 = vcmp.eq.f32.partialorder %v8441, 1.0
        %vm8954 = vcmp.eq.f32.partialorder %v8442, 1.0
        %vm8955 = vcmp.eq.f32.partialorder %v8443, 1.0
        %vm8956 = vcmp.eq.f32.partialorder %v8444, 1.0
        %vm8957 = vcmp.eq.f32.partialorder %v8445, 1.0
        %vm8958 = vcmp.eq.f32.partialorder %v8446, 1.0
        %vm8959 = vcmp.eq.f32.partialorder %v8447, 1.0
        %vm8960 = vcmp.eq.f32.partialorder %v8448, 1.0
        %vm8961 = vcmp.eq.f32.partialorder %v8449, 1.0
        %vm8962 = vcmp.eq.f32.partialorder %v8450, 1.0
        %vm8963 = vcmp.eq.f32.partialorder %v8451, 1.0
        %vm8964 = vcmp.eq.f32.partialorder %v8452, 1.0
        %vm8965 = vcmp.eq.f32.partialorder %v8453, 1.0
        %v8966 = vsel %vm8454, %v5318, inf
        %v8967 = vsel %vm8455, %v5319, inf
        %v8968 = vsel %vm8456, %v5320, inf
        %v8969 = vsel %vm8457, %v5321, inf
        %v8970 = vsel %vm8458, %v5322, inf
        %v8971 = vsel %vm8459, %v5323, inf
        %v8972 = vsel %vm8460, %v5324, inf
        %v8973 = vsel %vm8461, %v5325, inf
        %v8974 = vsel %vm8462, %v5326, inf
        %v8975 = vsel %vm8463, %v5327, inf
        %v8976 = vsel %vm8464, %v5328, inf
        %v8977 = vsel %vm8465, %v5329, inf
        %v8978 = vsel %vm8466, %v5330, inf
        %v8979 = vsel %vm8467, %v5331, inf
        %v8980 = vsel %vm8468, %v5332, inf
        %v8981 = vsel %vm8469, %v5333, inf
        %v8982 = vsel %vm8470, %v5334, inf
        %v8983 = vsel %vm8471, %v5335, inf
        %v8984 = vsel %vm8472, %v5336, inf
        %v8985 = vsel %vm8473, %v5337, inf
        %v8986 = vsel %vm8474, %v5338, inf
        %v8987 = vsel %vm8475, %v5339, inf
        %v8988 = vsel %vm8476, %v5340, inf
        %v8989 = vsel %vm8477, %v5341, inf
        %v8990 = vsel %vm8478, %v5342, inf
        %v8991 = vsel %vm8479, %v5343, inf
        %v8992 = vsel %vm8480, %v5344, inf
        %v8993 = vsel %vm8481, %v5345, inf
        %v8994 = vsel %vm8482, %v5346, inf
        %v8995 = vsel %vm8483, %v5347, inf
        %v8996 = vsel %vm8484, %v5348, inf
        %v8997 = vsel %vm8485, %v5349, inf
        %v8998 = vsel %vm8486, %v5350, inf
        %v8999 = vsel %vm8487, %v5351, inf
        %v9000 = vsel %vm8488, %v5352, inf
        %v9001 = vsel %vm8489, %v5353, inf
        %v9002 = vsel %vm8490, %v5354, inf
        %v9003 = vsel %vm8491, %v5355, inf
        %v9004 = vsel %vm8492, %v5356, inf
        %v9005 = vsel %vm8493, %v5357, inf
        %v9006 = vsel %vm8494, %v5358, inf
        %v9007 = vsel %vm8495, %v5359, inf
        %v9008 = vsel %vm8496, %v5360, inf
        %v9009 = vsel %vm8497, %v5361, inf
        %v9010 = vsel %vm8498, %v5362, inf
        %v9011 = vsel %vm8499, %v5363, inf
        %v9012 = vsel %vm8500, %v5364, inf
        %v9013 = vsel %vm8501, %v5365, inf
        %v9014 = vsel %vm8502, %v5366, inf
        %v9015 = vsel %vm8503, %v5367, inf
        %v9016 = vsel %vm8504, %v5368, inf
        %v9017 = vsel %vm8505, %v5369, inf
        %v9018 = vsel %vm8506, %v5370, inf
        %v9019 = vsel %vm8507, %v5371, inf
        %v9020 = vsel %vm8508, %v5372, inf
        %v9021 = vsel %vm8509, %v5373, inf
        %v9022 = vsel %vm8510, %v5374, inf
        %v9023 = vsel %vm8511, %v5375, inf
        %v9024 = vsel %vm8512, %v5376, inf
        %v9025 = vsel %vm8513, %v5377, inf
        %v9026 = vsel %vm8514, %v5378, inf
        %v9027 = vsel %vm8515, %v5379, inf
        %v9028 = vsel %vm8516, %v5380, inf
        %v9029 = vsel %vm8517, %v5381, inf
        %v9030 = vsel %vm8518, %v5382, inf
        %v9031 = vsel %vm8519, %v5383, inf
        %v9032 = vsel %vm8520, %v5384, inf
        %v9033 = vsel %vm8521, %v5385, inf
        %v9034 = vsel %vm8522, %v5386, inf
        %v9035 = vsel %vm8523, %v5387, inf
        %v9036 = vsel %vm8524, %v5388, inf
        %v9037 = vsel %vm8525, %v5389, inf
        %v9038 = vsel %vm8526, %v5390, inf
        %v9039 = vsel %vm8527, %v5391, inf
        %v9040 = vsel %vm8528, %v5392, inf
        %v9041 = vsel %vm8529, %v5393, inf
        %v9042 = vsel %vm8530, %v5394, inf
        %v9043 = vsel %vm8531, %v5395, inf
        %v9044 = vsel %vm8532, %v5396, inf
        %v9045 = vsel %vm8533, %v5397, inf
        %v9046 = vsel %vm8534, %v5398, inf
        %v9047 = vsel %vm8535, %v5399, inf
        %v9048 = vsel %vm8536, %v5400, inf
        %v9049 = vsel %vm8537, %v5401, inf
        %v9050 = vsel %vm8538, %v5402, inf
        %v9051 = vsel %vm8539, %v5403, inf
        %v9052 = vsel %vm8540, %v5404, inf
        %v9053 = vsel %vm8541, %v5405, inf
        %v9054 = vsel %vm8542, %v5406, inf
        %v9055 = vsel %vm8543, %v5407, inf
        %v9056 = vsel %vm8544, %v5408, inf
        %v9057 = vsel %vm8545, %v5409, inf
        %v9058 = vsel %vm8546, %v5410, inf
        %v9059 = vsel %vm8547, %v5411, inf
        %v9060 = vsel %vm8548, %v5412, inf
        %v9061 = vsel %vm8549, %v5413, inf
        %v9062 = vsel %vm8550, %v5414, inf
        %v9063 = vsel %vm8551, %v5415, inf
        %v9064 = vsel %vm8552, %v5416, inf
        %v9065 = vsel %vm8553, %v5417, inf
        %v9066 = vsel %vm8554, %v5418, inf
        %v9067 = vsel %vm8555, %v5419, inf
        %v9068 = vsel %vm8556, %v5420, inf
        %v9069 = vsel %vm8557, %v5421, inf
        %v9070 = vsel %vm8558, %v5422, inf
        %v9071 = vsel %vm8559, %v5423, inf
        %v9072 = vsel %vm8560, %v5424, inf
        %v9073 = vsel %vm8561, %v5425, inf
        %v9074 = vsel %vm8562, %v5426, inf
        %v9075 = vsel %vm8563, %v5427, inf
        %v9076 = vsel %vm8564, %v5428, inf
        %v9077 = vsel %vm8565, %v5429, inf
        %v9078 = vsel %vm8566, %v5430, inf
        %v9079 = vsel %vm8567, %v5431, inf
        %v9080 = vsel %vm8568, %v5432, inf
        %v9081 = vsel %vm8569, %v5433, inf
        %v9082 = vsel %vm8570, %v5434, inf
        %v9083 = vsel %vm8571, %v5435, inf
        %v9084 = vsel %vm8572, %v5436, inf
        %v9085 = vsel %vm8573, %v5437, inf
        %v9086 = vsel %vm8574, %v5438, inf
        %v9087 = vsel %vm8575, %v5439, inf
        %v9088 = vsel %vm8576, %v5440, inf
        %v9089 = vsel %vm8577, %v5441, inf
        %v9090 = vsel %vm8578, %v5442, inf
        %v9091 = vsel %vm8579, %v5443, inf
        %v9092 = vsel %vm8580, %v5444, inf
        %v9093 = vsel %vm8581, %v5445, inf
        %v9094 = vsel %vm8582, %v5446, inf
        %v9095 = vsel %vm8583, %v5447, inf
        %v9096 = vsel %vm8584, %v5448, inf
        %v9097 = vsel %vm8585, %v5449, inf
        %v9098 = vsel %vm8586, %v5450, inf
        %v9099 = vsel %vm8587, %v5451, inf
        %v9100 = vsel %vm8588, %v5452, inf
        %v9101 = vsel %vm8589, %v5453, inf
        %v9102 = vsel %vm8590, %v5454, inf
        %v9103 = vsel %vm8591, %v5455, inf
        %v9104 = vsel %vm8592, %v5456, inf
        %v9105 = vsel %vm8593, %v5457, inf
        %v9106 = vsel %vm8594, %v5458, inf
        %v9107 = vsel %vm8595, %v5459, inf
        %v9108 = vsel %vm8596, %v5460, inf
        %v9109 = vsel %vm8597, %v5461, inf
        %v9110 = vsel %vm8598, %v5462, inf
        %v9111 = vsel %vm8599, %v5463, inf
        %v9112 = vsel %vm8600, %v5464, inf
        %v9113 = vsel %vm8601, %v5465, inf
        %v9114 = vsel %vm8602, %v5466, inf
        %v9115 = vsel %vm8603, %v5467, inf
        %v9116 = vsel %vm8604, %v5468, inf
        %v9117 = vsel %vm8605, %v5469, inf
        %v9118 = vsel %vm8606, %v5470, inf
        %v9119 = vsel %vm8607, %v5471, inf
        %v9120 = vsel %vm8608, %v5472, inf
        %v9121 = vsel %vm8609, %v5473, inf
        %v9122 = vsel %vm8610, %v5474, inf
        %v9123 = vsel %vm8611, %v5475, inf
        %v9124 = vsel %vm8612, %v5476, inf
        %v9125 = vsel %vm8613, %v5477, inf
        %v9126 = vsel %vm8614, %v5478, inf
        %v9127 = vsel %vm8615, %v5479, inf
        %v9128 = vsel %vm8616, %v5480, inf
        %v9129 = vsel %vm8617, %v5481, inf
        %v9130 = vsel %vm8618, %v5482, inf
        %v9131 = vsel %vm8619, %v5483, inf
        %v9132 = vsel %vm8620, %v5484, inf
        %v9133 = vsel %vm8621, %v5485, inf
        %v9134 = vsel %vm8622, %v5486, inf
        %v9135 = vsel %vm8623, %v5487, inf
        %v9136 = vsel %vm8624, %v5488, inf
        %v9137 = vsel %vm8625, %v5489, inf
        %v9138 = vsel %vm8626, %v5490, inf
        %v9139 = vsel %vm8627, %v5491, inf
        %v9140 = vsel %vm8628, %v5492, inf
        %v9141 = vsel %vm8629, %v5493, inf
        %v9142 = vsel %vm8630, %v5494, inf
        %v9143 = vsel %vm8631, %v5495, inf
        %v9144 = vsel %vm8632, %v5496, inf
        %v9145 = vsel %vm8633, %v5497, inf
        %v9146 = vsel %vm8634, %v5498, inf
        %v9147 = vsel %vm8635, %v5499, inf
        %v9148 = vsel %vm8636, %v5500, inf
        %v9149 = vsel %vm8637, %v5501, inf
        %v9150 = vsel %vm8638, %v5502, inf
        %v9151 = vsel %vm8639, %v5503, inf
        %v9152 = vsel %vm8640, %v5504, inf
        %v9153 = vsel %vm8641, %v5505, inf
        %v9154 = vsel %vm8642, %v5506, inf
        %v9155 = vsel %vm8643, %v5507, inf
        %v9156 = vsel %vm8644, %v5508, inf
        %v9157 = vsel %vm8645, %v5509, inf
        %v9158 = vsel %vm8646, %v5510, inf
        %v9159 = vsel %vm8647, %v5511, inf
        %v9160 = vsel %vm8648, %v5512, inf
        %v9161 = vsel %vm8649, %v5513, inf
        %v9162 = vsel %vm8650, %v5514, inf
        %v9163 = vsel %vm8651, %v5515, inf
        %v9164 = vsel %vm8652, %v5516, inf
        %v9165 = vsel %vm8653, %v5517, inf
        %v9166 = vsel %vm8654, %v5518, inf
        %v9167 = vsel %vm8655, %v5519, inf
        %v9168 = vsel %vm8656, %v5520, inf
        %v9169 = vsel %vm8657, %v5521, inf
        %v9170 = vsel %vm8658, %v5522, inf
        %v9171 = vsel %vm8659, %v5523, inf
        %v9172 = vsel %vm8660, %v5524, inf
        %v9173 = vsel %vm8661, %v5525, inf
        %v9174 = vsel %vm8662, %v5526, inf
        %v9175 = vsel %vm8663, %v5527, inf
        %v9176 = vsel %vm8664, %v5528, inf
        %v9177 = vsel %vm8665, %v5529, inf
        %v9178 = vsel %vm8666, %v5530, inf
        %v9179 = vsel %vm8667, %v5531, inf
        %v9180 = vsel %vm8668, %v5532, inf
        %v9181 = vsel %vm8669, %v5533, inf
        %v9182 = vsel %vm8670, %v5534, inf
        %v9183 = vsel %vm8671, %v5535, inf
        %v9184 = vsel %vm8672, %v5536, inf
        %v9185 = vsel %vm8673, %v5537, inf
        %v9186 = vsel %vm8674, %v5538, inf
        %v9187 = vsel %vm8675, %v5539, inf
        %v9188 = vsel %vm8676, %v5540, inf
        %v9189 = vsel %vm8677, %v5541, inf
        %v9190 = vsel %vm8678, %v5542, inf
        %v9191 = vsel %vm8679, %v5543, inf
        %v9192 = vsel %vm8680, %v5544, inf
        %v9193 = vsel %vm8681, %v5545, inf
        %v9194 = vsel %vm8682, %v5546, inf
        %v9195 = vsel %vm8683, %v5547, inf
        %v9196 = vsel %vm8684, %v5548, inf
        %v9197 = vsel %vm8685, %v5549, inf
        %v9198 = vsel %vm8686, %v5550, inf
        %v9199 = vsel %vm8687, %v5551, inf
        %v9200 = vsel %vm8688, %v5552, inf
        %v9201 = vsel %vm8689, %v5553, inf
        %v9202 = vsel %vm8690, %v5554, inf
        %v9203 = vsel %vm8691, %v5555, inf
        %v9204 = vsel %vm8692, %v5556, inf
        %v9205 = vsel %vm8693, %v5557, inf
        %v9206 = vsel %vm8694, %v5558, inf
        %v9207 = vsel %vm8695, %v5559, inf
        %v9208 = vsel %vm8696, %v5560, inf
        %v9209 = vsel %vm8697, %v5561, inf
        %v9210 = vsel %vm8698, %v5562, inf
        %v9211 = vsel %vm8699, %v5563, inf
        %v9212 = vsel %vm8700, %v5564, inf
        %v9213 = vsel %vm8701, %v5565, inf
        %v9214 = vsel %vm8702, %v5566, inf
        %v9215 = vsel %vm8703, %v5567, inf
        %v9216 = vsel %vm8704, %v5568, inf
        %v9217 = vsel %vm8705, %v5569, inf
        %v9218 = vsel %vm8706, %v5570, inf
        %v9219 = vsel %vm8707, %v5571, inf
        %v9220 = vsel %vm8708, %v5572, inf
        %v9221 = vsel %vm8709, %v5573, inf
        %v9222 = vsel %vm8710, %v5574, inf
        %v9223 = vsel %vm8711, %v5575, inf
        %v9224 = vsel %vm8712, %v5576, inf
        %v9225 = vsel %vm8713, %v5577, inf
        %v9226 = vsel %vm8714, %v5578, inf
        %v9227 = vsel %vm8715, %v5579, inf
        %v9228 = vsel %vm8716, %v5580, inf
        %v9229 = vsel %vm8717, %v5581, inf
        %v9230 = vsel %vm8718, %v5582, inf
        %v9231 = vsel %vm8719, %v5583, inf
        %v9232 = vsel %vm8720, %v5584, inf
        %v9233 = vsel %vm8721, %v5585, inf
        %v9234 = vsel %vm8722, %v5586, inf
        %v9235 = vsel %vm8723, %v5587, inf
        %v9236 = vsel %vm8724, %v5588, inf
        %v9237 = vsel %vm8725, %v5589, inf
        %v9238 = vsel %vm8726, %v5590, inf
        %v9239 = vsel %vm8727, %v5591, inf
        %v9240 = vsel %vm8728, %v5592, inf
        %v9241 = vsel %vm8729, %v5593, inf
        %v9242 = vsel %vm8730, %v5594, inf
        %v9243 = vsel %vm8731, %v5595, inf
        %v9244 = vsel %vm8732, %v5596, inf
        %v9245 = vsel %vm8733, %v5597, inf
        %v9246 = vsel %vm8734, %v5598, inf
        %v9247 = vsel %vm8735, %v5599, inf
        %v9248 = vsel %vm8736, %v5600, inf
        %v9249 = vsel %vm8737, %v5601, inf
        %v9250 = vsel %vm8738, %v5602, inf
        %v9251 = vsel %vm8739, %v5603, inf
        %v9252 = vsel %vm8740, %v5604, inf
        %v9253 = vsel %vm8741, %v5605, inf
        %v9254 = vsel %vm8742, %v5606, inf
        %v9255 = vsel %vm8743, %v5607, inf
        %v9256 = vsel %vm8744, %v5608, inf
        %v9257 = vsel %vm8745, %v5609, inf
        %v9258 = vsel %vm8746, %v5610, inf
        %v9259 = vsel %vm8747, %v5611, inf
        %v9260 = vsel %vm8748, %v5612, inf
        %v9261 = vsel %vm8749, %v5613, inf
        %v9262 = vsel %vm8750, %v5614, inf
        %v9263 = vsel %vm8751, %v5615, inf
        %v9264 = vsel %vm8752, %v5616, inf
        %v9265 = vsel %vm8753, %v5617, inf
        %v9266 = vsel %vm8754, %v5618, inf
        %v9267 = vsel %vm8755, %v5619, inf
        %v9268 = vsel %vm8756, %v5620, inf
        %v9269 = vsel %vm8757, %v5621, inf
        %v9270 = vsel %vm8758, %v5622, inf
        %v9271 = vsel %vm8759, %v5623, inf
        %v9272 = vsel %vm8760, %v5624, inf
        %v9273 = vsel %vm8761, %v5625, inf
        %v9274 = vsel %vm8762, %v5626, inf
        %v9275 = vsel %vm8763, %v5627, inf
        %v9276 = vsel %vm8764, %v5628, inf
        %v9277 = vsel %vm8765, %v5629, inf
        %v9278 = vsel %vm8766, %v5630, inf
        %v9279 = vsel %vm8767, %v5631, inf
        %v9280 = vsel %vm8768, %v5632, inf
        %v9281 = vsel %vm8769, %v5633, inf
        %v9282 = vsel %vm8770, %v5634, inf
        %v9283 = vsel %vm8771, %v5635, inf
        %v9284 = vsel %vm8772, %v5636, inf
        %v9285 = vsel %vm8773, %v5637, inf
        %v9286 = vsel %vm8774, %v5638, inf
        %v9287 = vsel %vm8775, %v5639, inf
        %v9288 = vsel %vm8776, %v5640, inf
        %v9289 = vsel %vm8777, %v5641, inf
        %v9290 = vsel %vm8778, %v5642, inf
        %v9291 = vsel %vm8779, %v5643, inf
        %v9292 = vsel %vm8780, %v5644, inf
        %v9293 = vsel %vm8781, %v5645, inf
        %v9294 = vsel %vm8782, %v5646, inf
        %v9295 = vsel %vm8783, %v5647, inf
        %v9296 = vsel %vm8784, %v5648, inf
        %v9297 = vsel %vm8785, %v5649, inf
        %v9298 = vsel %vm8786, %v5650, inf
        %v9299 = vsel %vm8787, %v5651, inf
        %v9300 = vsel %vm8788, %v5652, inf
        %v9301 = vsel %vm8789, %v5653, inf
        %v9302 = vsel %vm8790, %v5654, inf
        %v9303 = vsel %vm8791, %v5655, inf
        %v9304 = vsel %vm8792, %v5656, inf
        %v9305 = vsel %vm8793, %v5657, inf
        %v9306 = vsel %vm8794, %v5658, inf
        %v9307 = vsel %vm8795, %v5659, inf
        %v9308 = vsel %vm8796, %v5660, inf
        %v9309 = vsel %vm8797, %v5661, inf
        %v9310 = vsel %vm8798, %v5662, inf
        %v9311 = vsel %vm8799, %v5663, inf
        %v9312 = vsel %vm8800, %v5664, inf
        %v9313 = vsel %vm8801, %v5665, inf
        %v9314 = vsel %vm8802, %v5666, inf
        %v9315 = vsel %vm8803, %v5667, inf
        %v9316 = vsel %vm8804, %v5668, inf
        %v9317 = vsel %vm8805, %v5669, inf
        %v9318 = vsel %vm8806, %v5670, inf
        %v9319 = vsel %vm8807, %v5671, inf
        %v9320 = vsel %vm8808, %v5672, inf
        %v9321 = vsel %vm8809, %v5673, inf
        %v9322 = vsel %vm8810, %v5674, inf
        %v9323 = vsel %vm8811, %v5675, inf
        %v9324 = vsel %vm8812, %v5676, inf
        %v9325 = vsel %vm8813, %v5677, inf
        %v9326 = vsel %vm8814, %v5678, inf
        %v9327 = vsel %vm8815, %v5679, inf
        %v9328 = vsel %vm8816, %v5680, inf
        %v9329 = vsel %vm8817, %v5681, inf
        %v9330 = vsel %vm8818, %v5682, inf
        %v9331 = vsel %vm8819, %v5683, inf
        %v9332 = vsel %vm8820, %v5684, inf
        %v9333 = vsel %vm8821, %v5685, inf
        %v9334 = vsel %vm8822, %v5686, inf
        %v9335 = vsel %vm8823, %v5687, inf
        %v9336 = vsel %vm8824, %v5688, inf
        %v9337 = vsel %vm8825, %v5689, inf
        %v9338 = vsel %vm8826, %v5690, inf
        %v9339 = vsel %vm8827, %v5691, inf
        %v9340 = vsel %vm8828, %v5692, inf
        %v9341 = vsel %vm8829, %v5693, inf
        %v9342 = vsel %vm8830, %v5694, inf
        %v9343 = vsel %vm8831, %v5695, inf
        %v9344 = vsel %vm8832, %v5696, inf
        %v9345 = vsel %vm8833, %v5697, inf
        %v9346 = vsel %vm8834, %v5698, inf
        %v9347 = vsel %vm8835, %v5699, inf
        %v9348 = vsel %vm8836, %v5700, inf
        %v9349 = vsel %vm8837, %v5701, inf
        %v9350 = vsel %vm8838, %v5702, inf
        %v9351 = vsel %vm8839, %v5703, inf
        %v9352 = vsel %vm8840, %v5704, inf
        %v9353 = vsel %vm8841, %v5705, inf
        %v9354 = vsel %vm8842, %v5706, inf
        %v9355 = vsel %vm8843, %v5707, inf
        %v9356 = vsel %vm8844, %v5708, inf
        %v9357 = vsel %vm8845, %v5709, inf
        %v9358 = vsel %vm8846, %v5710, inf
        %v9359 = vsel %vm8847, %v5711, inf
        %v9360 = vsel %vm8848, %v5712, inf
        %v9361 = vsel %vm8849, %v5713, inf
        %v9362 = vsel %vm8850, %v5714, inf
        %v9363 = vsel %vm8851, %v5715, inf
        %v9364 = vsel %vm8852, %v5716, inf
        %v9365 = vsel %vm8853, %v5717, inf
        %v9366 = vsel %vm8854, %v5718, inf
        %v9367 = vsel %vm8855, %v5719, inf
        %v9368 = vsel %vm8856, %v5720, inf
        %v9369 = vsel %vm8857, %v5721, inf
        %v9370 = vsel %vm8858, %v5722, inf
        %v9371 = vsel %vm8859, %v5723, inf
        %v9372 = vsel %vm8860, %v5724, inf
        %v9373 = vsel %vm8861, %v5725, inf
        %v9374 = vsel %vm8862, %v5726, inf
        %v9375 = vsel %vm8863, %v5727, inf
        %v9376 = vsel %vm8864, %v5728, inf
        %v9377 = vsel %vm8865, %v5729, inf
        %v9378 = vsel %vm8866, %v5730, inf
        %v9379 = vsel %vm8867, %v5731, inf
        %v9380 = vsel %vm8868, %v5732, inf
        %v9381 = vsel %vm8869, %v5733, inf
        %v9382 = vsel %vm8870, %v5734, inf
        %v9383 = vsel %vm8871, %v5735, inf
        %v9384 = vsel %vm8872, %v5736, inf
        %v9385 = vsel %vm8873, %v5737, inf
        %v9386 = vsel %vm8874, %v5738, inf
        %v9387 = vsel %vm8875, %v5739, inf
        %v9388 = vsel %vm8876, %v5740, inf
        %v9389 = vsel %vm8877, %v5741, inf
        %v9390 = vsel %vm8878, %v5742, inf
        %v9391 = vsel %vm8879, %v5743, inf
        %v9392 = vsel %vm8880, %v5744, inf
        %v9393 = vsel %vm8881, %v5745, inf
        %v9394 = vsel %vm8882, %v5746, inf
        %v9395 = vsel %vm8883, %v5747, inf
        %v9396 = vsel %vm8884, %v5748, inf
        %v9397 = vsel %vm8885, %v5749, inf
        %v9398 = vsel %vm8886, %v5750, inf
        %v9399 = vsel %vm8887, %v5751, inf
        %v9400 = vsel %vm8888, %v5752, inf
        %v9401 = vsel %vm8889, %v5753, inf
        %v9402 = vsel %vm8890, %v5754, inf
        %v9403 = vsel %vm8891, %v5755, inf
        %v9404 = vsel %vm8892, %v5756, inf
        %v9405 = vsel %vm8893, %v5757, inf
        %v9406 = vsel %vm8894, %v5758, inf
        %v9407 = vsel %vm8895, %v5759, inf
        %v9408 = vsel %vm8896, %v5760, inf
        %v9409 = vsel %vm8897, %v5761, inf
        %v9410 = vsel %vm8898, %v5762, inf
        %v9411 = vsel %vm8899, %v5763, inf
        %v9412 = vsel %vm8900, %v5764, inf
        %v9413 = vsel %vm8901, %v5765, inf
        %v9414 = vsel %vm8902, %v5766, inf
        %v9415 = vsel %vm8903, %v5767, inf
        %v9416 = vsel %vm8904, %v5768, inf
        %v9417 = vsel %vm8905, %v5769, inf
        %v9418 = vsel %vm8906, %v5770, inf
        %v9419 = vsel %vm8907, %v5771, inf
        %v9420 = vsel %vm8908, %v5772, inf
        %v9421 = vsel %vm8909, %v5773, inf
        %v9422 = vsel %vm8910, %v5774, inf
        %v9423 = vsel %vm8911, %v5775, inf
        %v9424 = vsel %vm8912, %v5776, inf
        %v9425 = vsel %vm8913, %v5777, inf
        %v9426 = vsel %vm8914, %v5778, inf
        %v9427 = vsel %vm8915, %v5779, inf
        %v9428 = vsel %vm8916, %v5780, inf
        %v9429 = vsel %vm8917, %v5781, inf
        %v9430 = vsel %vm8918, %v5782, inf
        %v9431 = vsel %vm8919, %v5783, inf
        %v9432 = vsel %vm8920, %v5784, inf
        %v9433 = vsel %vm8921, %v5785, inf
        %v9434 = vsel %vm8922, %v5786, inf
        %v9435 = vsel %vm8923, %v5787, inf
        %v9436 = vsel %vm8924, %v5788, inf
        %v9437 = vsel %vm8925, %v5789, inf
        %v9438 = vsel %vm8926, %v5790, inf
        %v9439 = vsel %vm8927, %v5791, inf
        %v9440 = vsel %vm8928, %v5792, inf
        %v9441 = vsel %vm8929, %v5793, inf
        %v9442 = vsel %vm8930, %v5794, inf
        %v9443 = vsel %vm8931, %v5795, inf
        %v9444 = vsel %vm8932, %v5796, inf
        %v9445 = vsel %vm8933, %v5797, inf
        %v9446 = vsel %vm8934, %v5798, inf
        %v9447 = vsel %vm8935, %v5799, inf
        %v9448 = vsel %vm8936, %v5800, inf
        %v9449 = vsel %vm8937, %v5801, inf
        %v9450 = vsel %vm8938, %v5802, inf
        %v9451 = vsel %vm8939, %v5803, inf
        %v9452 = vsel %vm8940, %v5804, inf
        %v9453 = vsel %vm8941, %v5805, inf
        %v9454 = vsel %vm8942, %v5806, inf
        %v9455 = vsel %vm8943, %v5807, inf
        %v9456 = vsel %vm8944, %v5808, inf
        %v9457 = vsel %vm8945, %v5809, inf
        %v9458 = vsel %vm8946, %v5810, inf
        %v9459 = vsel %vm8947, %v5811, inf
        %v9460 = vsel %vm8948, %v5812, inf
        %v9461 = vsel %vm8949, %v5813, inf
        %v9462 = vsel %vm8950, %v5814, inf
        %v9463 = vsel %vm8951, %v5815, inf
        %v9464 = vsel %vm8952, %v5816, inf
        %v9465 = vsel %vm8953, %v5817, inf
        %v9466 = vsel %vm8954, %v5818, inf
        %v9467 = vsel %vm8955, %v5819, inf
        %v9468 = vsel %vm8956, %v5820, inf
        %v9469 = vsel %vm8957, %v5821, inf
        %v9470 = vsel %vm8958, %v5822, inf
        %v9471 = vsel %vm8959, %v5823, inf
        %v9472 = vsel %vm8960, %v5824, inf
        %v9473 = vsel %vm8961, %v5825, inf
        %v9474 = vsel %vm8962, %v5826, inf
        %v9475 = vsel %vm8963, %v5827, inf
        %v9476 = vsel %vm8964, %v5828, inf
        %v9477 = vsel %vm8965, %v5829, inf
        %v9478 = vld [vmem:[#allocation2] sm:$0xff]
        %v9479 = vmin.f32 %v7142, %v7150
        %v9480 = vmin.f32 %v9479, %v7158
        %v9481 = vmin.f32 %v9480, %v7166
        %v9482 = vmin.f32 %v9481, %v7174
        %v9483 = vmin.f32 %v9482, %v7182
        %v9484 = vmin.f32 %v9483, %v7190
        %v9485 = vmin.f32 %v9484, %v7198
        %v9486 = vmin.f32 %v9485, %v7206
        %v9487 = vmin.f32 %v9486, %v7214
        %v9488 = vmin.f32 %v9487, %v7222
        %v9489 = vmin.f32 %v9488, %v7230
        %v9490 = vmin.f32 %v9489, %v7238
        %v9491 = vmin.f32 %v9490, %v7246
        %v9492 = vmin.f32 %v9491, %v7254
        %v9493 = vmin.f32 %v9492, %v7262
        %v9494 = vmin.f32 %v9493, %v7270
        %v9495 = vmin.f32 %v9494, %v7278
        %v9496 = vmin.f32 %v9495, %v7286
        %v9497 = vmin.f32 %v9496, %v7294
        %v9498 = vmin.f32 %v9497, %v7302
        %v9499 = vmin.f32 %v9498, %v7310
        %v9500 = vmin.f32 %v9499, %v7318
        %v9501 = vmin.f32 %v9500, %v7326
        %v9502 = vmin.f32 %v9501, %v7334
        %v9503 = vmin.f32 %v9502, %v7342
        %v9504 = vmin.f32 %v9503, %v7350
        %v9505 = vmin.f32 %v9504, %v7358
        %v9506 = vmin.f32 %v9505, %v7366
        %v9507 = vmin.f32 %v9506, %v7374
        %v9508 = vmin.f32 %v9507, %v7382
        %v9509 = vmin.f32 %v9508, %v7390
        %v9510 = vmin.f32 %v9509, %v7398
        %v9511 = vmin.f32 %v9510, %v7406
        %v9512 = vmin.f32 %v9511, %v7414
        %v9513 = vmin.f32 %v9512, %v7422
        %v9514 = vmin.f32 %v9513, %v7430
        %v9515 = vmin.f32 %v9514, %v7438
        %v9516 = vmin.f32 %v9515, %v7446
        %v9517 = vmin.f32 %v9516, %v7454
        %v9518 = vmin.f32 %v9517, %v7462
        %v9519 = vmin.f32 %v9518, %v7470
        %v9520 = vmin.f32 %v9519, %v7478
        %v9521 = vmin.f32 %v9520, %v7486
        %v9522 = vmin.f32 %v9521, %v7494
        %v9523 = vmin.f32 %v9522, %v7502
        %v9524 = vmin.f32 %v9523, %v7510
        %v9525 = vmin.f32 %v9524, %v7518
        %v9526 = vmin.f32 %v9525, %v7526
        %v9527 = vmin.f32 %v9526, %v7534
        %v9528 = vmin.f32 %v9527, %v7542
        %v9529 = vmin.f32 %v9528, %v7550
        %v9530 = vmin.f32 %v9529, %v7558
        %v9531 = vmin.f32 %v9530, %v7566
        %v9532 = vmin.f32 %v9531, %v7574
        %v9533 = vmin.f32 %v9532, %v7582
        %v9534 = vmin.f32 %v9533, %v7590
        %v9535 = vmin.f32 %v9534, %v7598
        %v9536 = vmin.f32 %v9535, %v7606
        %v9537 = vmin.f32 %v9536, %v7614
        %v9538 = vmin.f32 %v9537, %v7622
        %v9539 = vmin.f32 %v9538, %v7630
        %v9540 = vmin.f32 %v9539, %v7638
        %v9541 = vmin.f32 %v9540, %v7646
        %v9542 = vrot.slane %v9541, 4
        %v9543 = vmin.f32 %v9541, %v9542
        %v9544 = vrot.slane %v9543, 2
        %v9545 = vmin.f32 %v9543, %v9544
        %v9546 = vrot.slane %v9545, 1
        %v9547 = vmin.f32 %v9545, %v9546
        %v9548 = vmin.f32 %v7143, %v7151
        %v9549 = vmin.f32 %v9548, %v7159
        %v9550 = vmin.f32 %v9549, %v7167
        %v9551 = vmin.f32 %v9550, %v7175
        %v9552 = vmin.f32 %v9551, %v7183
        %v9553 = vmin.f32 %v9552, %v7191
        %v9554 = vmin.f32 %v9553, %v7199
        %v9555 = vmin.f32 %v9554, %v7207
        %v9556 = vmin.f32 %v9555, %v7215
        %v9557 = vmin.f32 %v9556, %v7223
        %v9558 = vmin.f32 %v9557, %v7231
        %v9559 = vmin.f32 %v9558, %v7239
        %v9560 = vmin.f32 %v9559, %v7247
        %v9561 = vmin.f32 %v9560, %v7255
        %v9562 = vmin.f32 %v9561, %v7263
        %v9563 = vmin.f32 %v9562, %v7271
        %v9564 = vmin.f32 %v9563, %v7279
        %v9565 = vmin.f32 %v9564, %v7287
        %v9566 = vmin.f32 %v9565, %v7295
        %v9567 = vmin.f32 %v9566, %v7303
        %v9568 = vmin.f32 %v9567, %v7311
        %v9569 = vmin.f32 %v9568, %v7319
        %v9570 = vmin.f32 %v9569, %v7327
        %v9571 = vmin.f32 %v9570, %v7335
        %v9572 = vmin.f32 %v9571, %v7343
        %v9573 = vmin.f32 %v9572, %v7351
        %v9574 = vmin.f32 %v9573, %v7359
        %v9575 = vmin.f32 %v9574, %v7367
        %v9576 = vmin.f32 %v9575, %v7375
        %v9577 = vmin.f32 %v9576, %v7383
        %v9578 = vmin.f32 %v9577, %v7391
        %v9579 = vmin.f32 %v9578, %v7399
        %v9580 = vmin.f32 %v9579, %v7407
        %v9581 = vmin.f32 %v9580, %v7415
        %v9582 = vmin.f32 %v9581, %v7423
        %v9583 = vmin.f32 %v9582, %v7431
        %v9584 = vmin.f32 %v9583, %v7439
        %v9585 = vmin.f32 %v9584, %v7447
        %v9586 = vmin.f32 %v9585, %v7455
        %v9587 = vmin.f32 %v9586, %v7463
        %v9588 = vmin.f32 %v9587, %v7471
        %v9589 = vmin.f32 %v9588, %v7479
        %v9590 = vmin.f32 %v9589, %v7487
        %v9591 = vmin.f32 %v9590, %v7495
        %v9592 = vmin.f32 %v9591, %v7503
        %v9593 = vmin.f32 %v9592, %v7511
        %v9594 = vmin.f32 %v9593, %v7519
        %v9595 = vmin.f32 %v9594, %v7527
        %v9596 = vmin.f32 %v9595, %v7535
        %v9597 = vmin.f32 %v9596, %v7543
        %v9598 = vmin.f32 %v9597, %v7551
        %v9599 = vmin.f32 %v9598, %v7559
        %v9600 = vmin.f32 %v9599, %v7567
        %v9601 = vmin.f32 %v9600, %v7575
        %v9602 = vmin.f32 %v9601, %v7583
        %v9603 = vmin.f32 %v9602, %v7591
        %v9604 = vmin.f32 %v9603, %v7599
        %v9605 = vmin.f32 %v9604, %v7607
        %v9606 = vmin.f32 %v9605, %v7615
        %v9607 = vmin.f32 %v9606, %v7623
        %v9608 = vmin.f32 %v9607, %v7631
        %v9609 = vmin.f32 %v9608, %v7639
        %v9610 = vmin.f32 %v9609, %v7647
        %v9611 = vrot.slane %v9610, 4
        %v9612 = vmin.f32 %v9610, %v9611
        %v9613 = vrot.slane %v9612, 2
        %v9614 = vmin.f32 %v9612, %v9613
        %v9615 = vrot.slane %v9614, 1
        %v9616 = vmin.f32 %v9614, %v9615
        %v9617 = vmin.f32 %v7144, %v7152
        %v9618 = vmin.f32 %v9617, %v7160
        %v9619 = vmin.f32 %v9618, %v7168
        %v9620 = vmin.f32 %v9619, %v7176
        %v9621 = vmin.f32 %v9620, %v7184
        %v9622 = vmin.f32 %v9621, %v7192
        %v9623 = vmin.f32 %v9622, %v7200
        %v9624 = vmin.f32 %v9623, %v7208
        %v9625 = vmin.f32 %v9624, %v7216
        %v9626 = vmin.f32 %v9625, %v7224
        %v9627 = vmin.f32 %v9626, %v7232
        %v9628 = vmin.f32 %v9627, %v7240
        %v9629 = vmin.f32 %v9628, %v7248
        %v9630 = vmin.f32 %v9629, %v7256
        %v9631 = vmin.f32 %v9630, %v7264
        %v9632 = vmin.f32 %v9631, %v7272
        %v9633 = vmin.f32 %v9632, %v7280
        %v9634 = vmin.f32 %v9633, %v7288
        %v9635 = vmin.f32 %v9634, %v7296
        %v9636 = vmin.f32 %v9635, %v7304
        %v9637 = vmin.f32 %v9636, %v7312
        %v9638 = vmin.f32 %v9637, %v7320
        %v9639 = vmin.f32 %v9638, %v7328
        %v9640 = vmin.f32 %v9639, %v7336
        %v9641 = vmin.f32 %v9640, %v7344
        %v9642 = vmin.f32 %v9641, %v7352
        %v9643 = vmin.f32 %v9642, %v7360
        %v9644 = vmin.f32 %v9643, %v7368
        %v9645 = vmin.f32 %v9644, %v7376
        %v9646 = vmin.f32 %v9645, %v7384
        %v9647 = vmin.f32 %v9646, %v7392
        %v9648 = vmin.f32 %v9647, %v7400
        %v9649 = vmin.f32 %v9648, %v7408
        %v9650 = vmin.f32 %v9649, %v7416
        %v9651 = vmin.f32 %v9650, %v7424
        %v9652 = vmin.f32 %v9651, %v7432
        %v9653 = vmin.f32 %v9652, %v7440
        %v9654 = vmin.f32 %v9653, %v7448
        %v9655 = vmin.f32 %v9654, %v7456
        %v9656 = vmin.f32 %v9655, %v7464
        %v9657 = vmin.f32 %v9656, %v7472
        %v9658 = vmin.f32 %v9657, %v7480
        %v9659 = vmin.f32 %v9658, %v7488
        %v9660 = vmin.f32 %v9659, %v7496
        %v9661 = vmin.f32 %v9660, %v7504
        %v9662 = vmin.f32 %v9661, %v7512
        %v9663 = vmin.f32 %v9662, %v7520
        %v9664 = vmin.f32 %v9663, %v7528
        %v9665 = vmin.f32 %v9664, %v7536
        %v9666 = vmin.f32 %v9665, %v7544
        %v9667 = vmin.f32 %v9666, %v7552
        %v9668 = vmin.f32 %v9667, %v7560
        %v9669 = vmin.f32 %v9668, %v7568
        %v9670 = vmin.f32 %v9669, %v7576
        %v9671 = vmin.f32 %v9670, %v7584
        %v9672 = vmin.f32 %v9671, %v7592
        %v9673 = vmin.f32 %v9672, %v7600
        %v9674 = vmin.f32 %v9673, %v7608
        %v9675 = vmin.f32 %v9674, %v7616
        %v9676 = vmin.f32 %v9675, %v7624
        %v9677 = vmin.f32 %v9676, %v7632
        %v9678 = vmin.f32 %v9677, %v7640
        %v9679 = vmin.f32 %v9678, %v7648
        %v9680 = vrot.slane %v9679, 4
        %v9681 = vmin.f32 %v9679, %v9680
        %v9682 = vrot.slane %v9681, 2
        %v9683 = vmin.f32 %v9681, %v9682
        %v9684 = vrot.slane %v9683, 1
        %v9685 = vmin.f32 %v9683, %v9684
        %v9686 = vmin.f32 %v7145, %v7153
        %v9687 = vmin.f32 %v9686, %v7161
        %v9688 = vmin.f32 %v9687, %v7169
        %v9689 = vmin.f32 %v9688, %v7177
        %v9690 = vmin.f32 %v9689, %v7185
        %v9691 = vmin.f32 %v9690, %v7193
        %v9692 = vmin.f32 %v9691, %v7201
        %v9693 = vmin.f32 %v9692, %v7209
        %v9694 = vmin.f32 %v9693, %v7217
        %v9695 = vmin.f32 %v9694, %v7225
        %v9696 = vmin.f32 %v9695, %v7233
        %v9697 = vmin.f32 %v9696, %v7241
        %v9698 = vmin.f32 %v9697, %v7249
        %v9699 = vmin.f32 %v9698, %v7257
        %v9700 = vmin.f32 %v9699, %v7265
        %v9701 = vmin.f32 %v9700, %v7273
        %v9702 = vmin.f32 %v9701, %v7281
        %v9703 = vmin.f32 %v9702, %v7289
        %v9704 = vmin.f32 %v9703, %v7297
        %v9705 = vmin.f32 %v9704, %v7305
        %v9706 = vmin.f32 %v9705, %v7313
        %v9707 = vmin.f32 %v9706, %v7321
        %v9708 = vmin.f32 %v9707, %v7329
        %v9709 = vmin.f32 %v9708, %v7337
        %v9710 = vmin.f32 %v9709, %v7345
        %v9711 = vmin.f32 %v9710, %v7353
        %v9712 = vmin.f32 %v9711, %v7361
        %v9713 = vmin.f32 %v9712, %v7369
        %v9714 = vmin.f32 %v9713, %v7377
        %v9715 = vmin.f32 %v9714, %v7385
        %v9716 = vmin.f32 %v9715, %v7393
        %v9717 = vmin.f32 %v9716, %v7401
        %v9718 = vmin.f32 %v9717, %v7409
        %v9719 = vmin.f32 %v9718, %v7417
        %v9720 = vmin.f32 %v9719, %v7425
        %v9721 = vmin.f32 %v9720, %v7433
        %v9722 = vmin.f32 %v9721, %v7441
        %v9723 = vmin.f32 %v9722, %v7449
        %v9724 = vmin.f32 %v9723, %v7457
        %v9725 = vmin.f32 %v9724, %v7465
        %v9726 = vmin.f32 %v9725, %v7473
        %v9727 = vmin.f32 %v9726, %v7481
        %v9728 = vmin.f32 %v9727, %v7489
        %v9729 = vmin.f32 %v9728, %v7497
        %v9730 = vmin.f32 %v9729, %v7505
        %v9731 = vmin.f32 %v9730, %v7513
        %v9732 = vmin.f32 %v9731, %v7521
        %v9733 = vmin.f32 %v9732, %v7529
        %v9734 = vmin.f32 %v9733, %v7537
        %v9735 = vmin.f32 %v9734, %v7545
        %v9736 = vmin.f32 %v9735, %v7553
        %v9737 = vmin.f32 %v9736, %v7561
        %v9738 = vmin.f32 %v9737, %v7569
        %v9739 = vmin.f32 %v9738, %v7577
        %v9740 = vmin.f32 %v9739, %v7585
        %v9741 = vmin.f32 %v9740, %v7593
        %v9742 = vmin.f32 %v9741, %v7601
        %v9743 = vmin.f32 %v9742, %v7609
        %v9744 = vmin.f32 %v9743, %v7617
        %v9745 = vmin.f32 %v9744, %v7625
        %v9746 = vmin.f32 %v9745, %v7633
        %v9747 = vmin.f32 %v9746, %v7641
        %v9748 = vmin.f32 %v9747, %v7649
        %v9749 = vrot.slane %v9748, 4
        %v9750 = vmin.f32 %v9748, %v9749
        %v9751 = vrot.slane %v9750, 2
        %v9752 = vmin.f32 %v9750, %v9751
        %v9753 = vrot.slane %v9752, 1
        %v9754 = vmin.f32 %v9752, %v9753
        %v9755 = vmin.f32 %v7146, %v7154
        %v9756 = vmin.f32 %v9755, %v7162
        %v9757 = vmin.f32 %v9756, %v7170
        %v9758 = vmin.f32 %v9757, %v7178
        %v9759 = vmin.f32 %v9758, %v7186
        %v9760 = vmin.f32 %v9759, %v7194
        %v9761 = vmin.f32 %v9760, %v7202
        %v9762 = vmin.f32 %v9761, %v7210
        %v9763 = vmin.f32 %v9762, %v7218
        %v9764 = vmin.f32 %v9763, %v7226
        %v9765 = vmin.f32 %v9764, %v7234
        %v9766 = vmin.f32 %v9765, %v7242
        %v9767 = vmin.f32 %v9766, %v7250
        %v9768 = vmin.f32 %v9767, %v7258
        %v9769 = vmin.f32 %v9768, %v7266
        %v9770 = vmin.f32 %v9769, %v7274
        %v9771 = vmin.f32 %v9770, %v7282
        %v9772 = vmin.f32 %v9771, %v7290
        %v9773 = vmin.f32 %v9772, %v7298
        %v9774 = vmin.f32 %v9773, %v7306
        %v9775 = vmin.f32 %v9774, %v7314
        %v9776 = vmin.f32 %v9775, %v7322
        %v9777 = vmin.f32 %v9776, %v7330
        %v9778 = vmin.f32 %v9777, %v7338
        %v9779 = vmin.f32 %v9778, %v7346
        %v9780 = vmin.f32 %v9779, %v7354
        %v9781 = vmin.f32 %v9780, %v7362
        %v9782 = vmin.f32 %v9781, %v7370
        %v9783 = vmin.f32 %v9782, %v7378
        %v9784 = vmin.f32 %v9783, %v7386
        %v9785 = vmin.f32 %v9784, %v7394
        %v9786 = vmin.f32 %v9785, %v7402
        %v9787 = vmin.f32 %v9786, %v7410
        %v9788 = vmin.f32 %v9787, %v7418
        %v9789 = vmin.f32 %v9788, %v7426
        %v9790 = vmin.f32 %v9789, %v7434
        %v9791 = vmin.f32 %v9790, %v7442
        %v9792 = vmin.f32 %v9791, %v7450
        %v9793 = vmin.f32 %v9792, %v7458
        %v9794 = vmin.f32 %v9793, %v7466
        %v9795 = vmin.f32 %v9794, %v7474
        %v9796 = vmin.f32 %v9795, %v7482
        %v9797 = vmin.f32 %v9796, %v7490
        %v9798 = vmin.f32 %v9797, %v7498
        %v9799 = vmin.f32 %v9798, %v7506
        %v9800 = vmin.f32 %v9799, %v7514
        %v9801 = vmin.f32 %v9800, %v7522
        %v9802 = vmin.f32 %v9801, %v7530
        %v9803 = vmin.f32 %v9802, %v7538
        %v9804 = vmin.f32 %v9803, %v7546
        %v9805 = vmin.f32 %v9804, %v7554
        %v9806 = vmin.f32 %v9805, %v7562
        %v9807 = vmin.f32 %v9806, %v7570
        %v9808 = vmin.f32 %v9807, %v7578
        %v9809 = vmin.f32 %v9808, %v7586
        %v9810 = vmin.f32 %v9809, %v7594
        %v9811 = vmin.f32 %v9810, %v7602
        %v9812 = vmin.f32 %v9811, %v7610
        %v9813 = vmin.f32 %v9812, %v7618
        %v9814 = vmin.f32 %v9813, %v7626
        %v9815 = vmin.f32 %v9814, %v7634
        %v9816 = vmin.f32 %v9815, %v7642
        %v9817 = vmin.f32 %v9816, %v7650
        %v9818 = vrot.slane %v9817, 4
        %v9819 = vmin.f32 %v9817, %v9818
        %v9820 = vrot.slane %v9819, 2
        %v9821 = vmin.f32 %v9819, %v9820
        %v9822 = vrot.slane %v9821, 1
        %v9823 = vmin.f32 %v9821, %v9822
        %v9824 = vmin.f32 %v7147, %v7155
        %v9825 = vmin.f32 %v9824, %v7163
        %v9826 = vmin.f32 %v9825, %v7171
        %v9827 = vmin.f32 %v9826, %v7179
        %v9828 = vmin.f32 %v9827, %v7187
        %v9829 = vmin.f32 %v9828, %v7195
        %v9830 = vmin.f32 %v9829, %v7203
        %v9831 = vmin.f32 %v9830, %v7211
        %v9832 = vmin.f32 %v9831, %v7219
        %v9833 = vmin.f32 %v9832, %v7227
        %v9834 = vmin.f32 %v9833, %v7235
        %v9835 = vmin.f32 %v9834, %v7243
        %v9836 = vmin.f32 %v9835, %v7251
        %v9837 = vmin.f32 %v9836, %v7259
        %v9838 = vmin.f32 %v9837, %v7267
        %v9839 = vmin.f32 %v9838, %v7275
        %v9840 = vmin.f32 %v9839, %v7283
        %v9841 = vmin.f32 %v9840, %v7291
        %v9842 = vmin.f32 %v9841, %v7299
        %v9843 = vmin.f32 %v9842, %v7307
        %v9844 = vmin.f32 %v9843, %v7315
        %v9845 = vmin.f32 %v9844, %v7323
        %v9846 = vmin.f32 %v9845, %v7331
        %v9847 = vmin.f32 %v9846, %v7339
        %v9848 = vmin.f32 %v9847, %v7347
        %v9849 = vmin.f32 %v9848, %v7355
        %v9850 = vmin.f32 %v9849, %v7363
        %v9851 = vmin.f32 %v9850, %v7371
        %v9852 = vmin.f32 %v9851, %v7379
        %v9853 = vmin.f32 %v9852, %v7387
        %v9854 = vmin.f32 %v9853, %v7395
        %v9855 = vmin.f32 %v9854, %v7403
        %v9856 = vmin.f32 %v9855, %v7411
        %v9857 = vmin.f32 %v9856, %v7419
        %v9858 = vmin.f32 %v9857, %v7427
        %v9859 = vmin.f32 %v9858, %v7435
        %v9860 = vmin.f32 %v9859, %v7443
        %v9861 = vmin.f32 %v9860, %v7451
        %v9862 = vmin.f32 %v9861, %v7459
        %v9863 = vmin.f32 %v9862, %v7467
        %v9864 = vmin.f32 %v9863, %v7475
        %v9865 = vmin.f32 %v9864, %v7483
        %v9866 = vmin.f32 %v9865, %v7491
        %v9867 = vmin.f32 %v9866, %v7499
        %v9868 = vmin.f32 %v9867, %v7507
        %v9869 = vmin.f32 %v9868, %v7515
        %v9870 = vmin.f32 %v9869, %v7523
        %v9871 = vmin.f32 %v9870, %v7531
        %v9872 = vmin.f32 %v9871, %v7539
        %v9873 = vmin.f32 %v9872, %v7547
        %v9874 = vmin.f32 %v9873, %v7555
        %v9875 = vmin.f32 %v9874, %v7563
        %v9876 = vmin.f32 %v9875, %v7571
        %v9877 = vmin.f32 %v9876, %v7579
        %v9878 = vmin.f32 %v9877, %v7587
        %v9879 = vmin.f32 %v9878, %v7595
        %v9880 = vmin.f32 %v9879, %v7603
        %v9881 = vmin.f32 %v9880, %v7611
        %v9882 = vmin.f32 %v9881, %v7619
        %v9883 = vmin.f32 %v9882, %v7627
        %v9884 = vmin.f32 %v9883, %v7635
        %v9885 = vmin.f32 %v9884, %v7643
        %v9886 = vmin.f32 %v9885, %v7651
        %v9887 = vrot.slane %v9886, 4
        %v9888 = vmin.f32 %v9886, %v9887
        %v9889 = vrot.slane %v9888, 2
        %v9890 = vmin.f32 %v9888, %v9889
        %v9891 = vrot.slane %v9890, 1
        %v9892 = vmin.f32 %v9890, %v9891
        %v9893 = vmin.f32 %v7148, %v7156
        %v9894 = vmin.f32 %v9893, %v7164
        %v9895 = vmin.f32 %v9894, %v7172
        %v9896 = vmin.f32 %v9895, %v7180
        %v9897 = vmin.f32 %v9896, %v7188
        %v9898 = vmin.f32 %v9897, %v7196
        %v9899 = vmin.f32 %v9898, %v7204
        %v9900 = vmin.f32 %v9899, %v7212
        %v9901 = vmin.f32 %v9900, %v7220
        %v9902 = vmin.f32 %v9901, %v7228
        %v9903 = vmin.f32 %v9902, %v7236
        %v9904 = vmin.f32 %v9903, %v7244
        %v9905 = vmin.f32 %v9904, %v7252
        %v9906 = vmin.f32 %v9905, %v7260
        %v9907 = vmin.f32 %v9906, %v7268
        %v9908 = vmin.f32 %v9907, %v7276
        %v9909 = vmin.f32 %v9908, %v7284
        %v9910 = vmin.f32 %v9909, %v7292
        %v9911 = vmin.f32 %v9910, %v7300
        %v9912 = vmin.f32 %v9911, %v7308
        %v9913 = vmin.f32 %v9912, %v7316
        %v9914 = vmin.f32 %v9913, %v7324
        %v9915 = vmin.f32 %v9914, %v7332
        %v9916 = vmin.f32 %v9915, %v7340
        %v9917 = vmin.f32 %v9916, %v7348
        %v9918 = vmin.f32 %v9917, %v7356
        %v9919 = vmin.f32 %v9918, %v7364
        %v9920 = vmin.f32 %v9919, %v7372
        %v9921 = vmin.f32 %v9920, %v7380
        %v9922 = vmin.f32 %v9921, %v7388
        %v9923 = vmin.f32 %v9922, %v7396
        %v9924 = vmin.f32 %v9923, %v7404
        %v9925 = vmin.f32 %v9924, %v7412
        %v9926 = vmin.f32 %v9925, %v7420
        %v9927 = vmin.f32 %v9926, %v7428
        %v9928 = vmin.f32 %v9927, %v7436
        %v9929 = vmin.f32 %v9928, %v7444
        %v9930 = vmin.f32 %v9929, %v7452
        %v9931 = vmin.f32 %v9930, %v7460
        %v9932 = vmin.f32 %v9931, %v7468
        %v9933 = vmin.f32 %v9932, %v7476
        %v9934 = vmin.f32 %v9933, %v7484
        %v9935 = vmin.f32 %v9934, %v7492
        %v9936 = vmin.f32 %v9935, %v7500
        %v9937 = vmin.f32 %v9936, %v7508
        %v9938 = vmin.f32 %v9937, %v7516
        %v9939 = vmin.f32 %v9938, %v7524
        %v9940 = vmin.f32 %v9939, %v7532
        %v9941 = vmin.f32 %v9940, %v7540
        %v9942 = vmin.f32 %v9941, %v7548
        %v9943 = vmin.f32 %v9942, %v7556
        %v9944 = vmin.f32 %v9943, %v7564
        %v9945 = vmin.f32 %v9944, %v7572
        %v9946 = vmin.f32 %v9945, %v7580
        %v9947 = vmin.f32 %v9946, %v7588
        %v9948 = vmin.f32 %v9947, %v7596
        %v9949 = vmin.f32 %v9948, %v7604
        %v9950 = vmin.f32 %v9949, %v7612
        %v9951 = vmin.f32 %v9950, %v7620
        %v9952 = vmin.f32 %v9951, %v7628
        %v9953 = vmin.f32 %v9952, %v7636
        %v9954 = vmin.f32 %v9953, %v7644
        %v9955 = vmin.f32 %v9954, %v7652
        %v9956 = vrot.slane %v9955, 4
        %v9957 = vmin.f32 %v9955, %v9956
        %v9958 = vrot.slane %v9957, 2
        %v9959 = vmin.f32 %v9957, %v9958
        %v9960 = vrot.slane %v9959, 1
        %v9961 = vmin.f32 %v9959, %v9960
        %v9962 = vmin.f32 %v7149, %v7157
        %v9963 = vmin.f32 %v9962, %v7165
        %v9964 = vmin.f32 %v9963, %v7173
        %v9965 = vmin.f32 %v9964, %v7181
        %v9966 = vmin.f32 %v9965, %v7189
        %v9967 = vmin.f32 %v9966, %v7197
        %v9968 = vmin.f32 %v9967, %v7205
        %v9969 = vmin.f32 %v9968, %v7213
        %v9970 = vmin.f32 %v9969, %v7221
        %v9971 = vmin.f32 %v9970, %v7229
        %v9972 = vmin.f32 %v9971, %v7237
        %v9973 = vmin.f32 %v9972, %v7245
        %v9974 = vmin.f32 %v9973, %v7253
        %v9975 = vmin.f32 %v9974, %v7261
        %v9976 = vmin.f32 %v9975, %v7269
        %v9977 = vmin.f32 %v9976, %v7277
        %v9978 = vmin.f32 %v9977, %v7285
        %v9979 = vmin.f32 %v9978, %v7293
        %v9980 = vmin.f32 %v9979, %v7301
        %v9981 = vmin.f32 %v9980, %v7309
        %v9982 = vmin.f32 %v9981, %v7317
        %v9983 = vmin.f32 %v9982, %v7325
        %v9984 = vmin.f32 %v9983, %v7333
        %v9985 = vmin.f32 %v9984, %v7341
        %v9986 = vmin.f32 %v9985, %v7349
        %v9987 = vmin.f32 %v9986, %v7357
        %v9988 = vmin.f32 %v9987, %v7365
        %v9989 = vmin.f32 %v9988, %v7373
        %v9990 = vmin.f32 %v9989, %v7381
        %v9991 = vmin.f32 %v9990, %v7389
        %v9992 = vmin.f32 %v9991, %v7397
        %v9993 = vmin.f32 %v9992, %v7405
        %v9994 = vmin.f32 %v9993, %v7413
        %v9995 = vmin.f32 %v9994, %v7421
        %v9996 = vmin.f32 %v9995, %v7429
        %v9997 = vmin.f32 %v9996, %v7437
        %v9998 = vmin.f32 %v9997, %v7445
        %v9999 = vmin.f32 %v9998, %v7453
        %v10000 = vmin.f32 %v9999, %v7461
        %v10001 = vmin.f32 %v10000, %v7469
        %v10002 = vmin.f32 %v10001, %v7477
        %v10003 = vmin.f32 %v10002, %v7485
        %v10004 = vmin.f32 %v10003, %v7493
        %v10005 = vmin.f32 %v10004, %v7501
        %v10006 = vmin.f32 %v10005, %v7509
        %v10007 = vmin.f32 %v10006, %v7517
        %v10008 = vmin.f32 %v10007, %v7525
        %v10009 = vmin.f32 %v10008, %v7533
        %v10010 = vmin.f32 %v10009, %v7541
        %v10011 = vmin.f32 %v10010, %v7549
        %v10012 = vmin.f32 %v10011, %v7557
        %v10013 = vmin.f32 %v10012, %v7565
        %v10014 = vmin.f32 %v10013, %v7573
        %v10015 = vmin.f32 %v10014, %v7581
        %v10016 = vmin.f32 %v10015, %v7589
        %v10017 = vmin.f32 %v10016, %v7597
        %v10018 = vmin.f32 %v10017, %v7605
        %v10019 = vmin.f32 %v10018, %v7613
        %v10020 = vmin.f32 %v10019, %v7621
        %v10021 = vmin.f32 %v10020, %v7629
        %v10022 = vmin.f32 %v10021, %v7637
        %v10023 = vmin.f32 %v10022, %v7645
        %v10024 = vmin.f32 %v10023, %v7653
        %v10025 = vrot.slane %v10024, 4
        %v10026 = vmin.f32 %v10024, %v10025
        %v10027 = vrot.slane %v10026, 2
        %v10028 = vmin.f32 %v10026, %v10027
        %v10029 = vrot.slane %v10028, 1
        %v10030 = vmin.f32 %v10028, %v10029
        %v10039 = vcombine.low %v9547, %v9616
        %v10040 = vcombine.low %v9685, %v9754
        %v10041 = vcombine.low %v9823, %v9892
        %v10042 = vcombine.low %v9961, %v10030
        %v10044 = vunpack.c.l.s4 1966171168
        %v10045 = vunpack.c.0.s8 %v10044
        %v10046 = vlaneseq
        %v10047 = vshrl.u32 %v10046, 7
        %v10048 = vsub.s32 %v10045, %v10047
        %v10049 = vrot.slane %v10039, %v10048
        %v10051 = vunpack.c.l.s4 1966171168
        %v10052 = vunpack.c.0.s8 %v10051
        %v10053 = vlaneseq
        %v10054 = vshrl.u32 %v10053, 7
        %v10055 = vsub.s32 %v10052, %v10054
        %v10056 = vrot.slane %v10040, %v10055
        %v10058 = vunpack.c.l.s4 1966171168
        %v10059 = vunpack.c.0.s8 %v10058
        %v10060 = vlaneseq
        %v10061 = vshrl.u32 %v10060, 7
        %v10062 = vsub.s32 %v10059, %v10061
        %v10063 = vrot.slane %v10041, %v10062
        %v10065 = vunpack.c.l.s4 1966171168
        %v10066 = vunpack.c.0.s8 %v10065
        %v10067 = vlaneseq
        %v10068 = vshrl.u32 %v10067, 7
        %v10069 = vsub.s32 %v10066, %v10068
        %v10070 = vrot.slane %v10042, %v10069
        %v10071 = vcombine.low %v10049, %v10056
        %v10072 = vcombine.low %v10063, %v10070
        %v10074 = vunpack.c.l.s4 1966171168
        %v10075 = vunpack.c.0.s8 %v10074
        %v10076 = vlaneseq
        %v10077 = vshrl.u32 %v10076, 7
        %v10078 = vsub.s32 %v10075, %v10077
        %v10079 = vrot.slane %v10071, %v10078
        %v10081 = vunpack.c.l.s4 1966171168
        %v10082 = vunpack.c.0.s8 %v10081
        %v10083 = vlaneseq
        %v10084 = vshrl.u32 %v10083, 7
        %v10085 = vsub.s32 %v10082, %v10084
        %v10086 = vrot.slane %v10072, %v10085
        %v10087 = vcombine.low %v10079, %v10086
        %v10089 = vmin.f32 %v9478, %v10087
        %10090 = vst [vmem:[#allocation2] sm:$0xff] %v10089
        %v10091 = vld [vmem:[#allocation3] sm:$0xff]
        %v10092 = vmin.f32 %v8966, %v8974
        %v10093 = vmin.f32 %v10092, %v8982
        %v10094 = vmin.f32 %v10093, %v8990
        %v10095 = vmin.f32 %v10094, %v8998
        %v10096 = vmin.f32 %v10095, %v9006
        %v10097 = vmin.f32 %v10096, %v9014
        %v10098 = vmin.f32 %v10097, %v9022
        %v10099 = vmin.f32 %v10098, %v9030
        %v10100 = vmin.f32 %v10099, %v9038
        %v10101 = vmin.f32 %v10100, %v9046
        %v10102 = vmin.f32 %v10101, %v9054
        %v10103 = vmin.f32 %v10102, %v9062
        %v10104 = vmin.f32 %v10103, %v9070
        %v10105 = vmin.f32 %v10104, %v9078
        %v10106 = vmin.f32 %v10105, %v9086
        %v10107 = vmin.f32 %v10106, %v9094
        %v10108 = vmin.f32 %v10107, %v9102
        %v10109 = vmin.f32 %v10108, %v9110
        %v10110 = vmin.f32 %v10109, %v9118
        %v10111 = vmin.f32 %v10110, %v9126
        %v10112 = vmin.f32 %v10111, %v9134
        %v10113 = vmin.f32 %v10112, %v9142
        %v10114 = vmin.f32 %v10113, %v9150
        %v10115 = vmin.f32 %v10114, %v9158
        %v10116 = vmin.f32 %v10115, %v9166
        %v10117 = vmin.f32 %v10116, %v9174
        %v10118 = vmin.f32 %v10117, %v9182
        %v10119 = vmin.f32 %v10118, %v9190
        %v10120 = vmin.f32 %v10119, %v9198
        %v10121 = vmin.f32 %v10120, %v9206
        %v10122 = vmin.f32 %v10121, %v9214
        %v10123 = vmin.f32 %v10122, %v9222
        %v10124 = vmin.f32 %v10123, %v9230
        %v10125 = vmin.f32 %v10124, %v9238
        %v10126 = vmin.f32 %v10125, %v9246
        %v10127 = vmin.f32 %v10126, %v9254
        %v10128 = vmin.f32 %v10127, %v9262
        %v10129 = vmin.f32 %v10128, %v9270
        %v10130 = vmin.f32 %v10129, %v9278
        %v10131 = vmin.f32 %v10130, %v9286
        %v10132 = vmin.f32 %v10131, %v9294
        %v10133 = vmin.f32 %v10132, %v9302
        %v10134 = vmin.f32 %v10133, %v9310
        %v10135 = vmin.f32 %v10134, %v9318
        %v10136 = vmin.f32 %v10135, %v9326
        %v10137 = vmin.f32 %v10136, %v9334
        %v10138 = vmin.f32 %v10137, %v9342
        %v10139 = vmin.f32 %v10138, %v9350
        %v10140 = vmin.f32 %v10139, %v9358
        %v10141 = vmin.f32 %v10140, %v9366
        %v10142 = vmin.f32 %v10141, %v9374
        %v10143 = vmin.f32 %v10142, %v9382
        %v10144 = vmin.f32 %v10143, %v9390
        %v10145 = vmin.f32 %v10144, %v9398
        %v10146 = vmin.f32 %v10145, %v9406
        %v10147 = vmin.f32 %v10146, %v9414
        %v10148 = vmin.f32 %v10147, %v9422
        %v10149 = vmin.f32 %v10148, %v9430
        %v10150 = vmin.f32 %v10149, %v9438
        %v10151 = vmin.f32 %v10150, %v9446
        %v10152 = vmin.f32 %v10151, %v9454
        %v10153 = vmin.f32 %v10152, %v9462
        %v10154 = vmin.f32 %v10153, %v9470
        %v10155 = vrot.slane %v10154, 4
        %v10156 = vmin.f32 %v10154, %v10155
        %v10157 = vrot.slane %v10156, 2
        %v10158 = vmin.f32 %v10156, %v10157
        %v10159 = vrot.slane %v10158, 1
        %v10160 = vmin.f32 %v10158, %v10159
        %v10161 = vmin.f32 %v8967, %v8975
        %v10162 = vmin.f32 %v10161, %v8983
        %v10163 = vmin.f32 %v10162, %v8991
        %v10164 = vmin.f32 %v10163, %v8999
        %v10165 = vmin.f32 %v10164, %v9007
        %v10166 = vmin.f32 %v10165, %v9015
        %v10167 = vmin.f32 %v10166, %v9023
        %v10168 = vmin.f32 %v10167, %v9031
        %v10169 = vmin.f32 %v10168, %v9039
        %v10170 = vmin.f32 %v10169, %v9047
        %v10171 = vmin.f32 %v10170, %v9055
        %v10172 = vmin.f32 %v10171, %v9063
        %v10173 = vmin.f32 %v10172, %v9071
        %v10174 = vmin.f32 %v10173, %v9079
        %v10175 = vmin.f32 %v10174, %v9087
        %v10176 = vmin.f32 %v10175, %v9095
        %v10177 = vmin.f32 %v10176, %v9103
        %v10178 = vmin.f32 %v10177, %v9111
        %v10179 = vmin.f32 %v10178, %v9119
        %v10180 = vmin.f32 %v10179, %v9127
        %v10181 = vmin.f32 %v10180, %v9135
        %v10182 = vmin.f32 %v10181, %v9143
        %v10183 = vmin.f32 %v10182, %v9151
        %v10184 = vmin.f32 %v10183, %v9159
        %v10185 = vmin.f32 %v10184, %v9167
        %v10186 = vmin.f32 %v10185, %v9175
        %v10187 = vmin.f32 %v10186, %v9183
        %v10188 = vmin.f32 %v10187, %v9191
        %v10189 = vmin.f32 %v10188, %v9199
        %v10190 = vmin.f32 %v10189, %v9207
        %v10191 = vmin.f32 %v10190, %v9215
        %v10192 = vmin.f32 %v10191, %v9223
        %v10193 = vmin.f32 %v10192, %v9231
        %v10194 = vmin.f32 %v10193, %v9239
        %v10195 = vmin.f32 %v10194, %v9247
        %v10196 = vmin.f32 %v10195, %v9255
        %v10197 = vmin.f32 %v10196, %v9263
        %v10198 = vmin.f32 %v10197, %v9271
        %v10199 = vmin.f32 %v10198, %v9279
        %v10200 = vmin.f32 %v10199, %v9287
        %v10201 = vmin.f32 %v10200, %v9295
        %v10202 = vmin.f32 %v10201, %v9303
        %v10203 = vmin.f32 %v10202, %v9311
        %v10204 = vmin.f32 %v10203, %v9319
        %v10205 = vmin.f32 %v10204, %v9327
        %v10206 = vmin.f32 %v10205, %v9335
        %v10207 = vmin.f32 %v10206, %v9343
        %v10208 = vmin.f32 %v10207, %v9351
        %v10209 = vmin.f32 %v10208, %v9359
        %v10210 = vmin.f32 %v10209, %v9367
        %v10211 = vmin.f32 %v10210, %v9375
        %v10212 = vmin.f32 %v10211, %v9383
        %v10213 = vmin.f32 %v10212, %v9391
        %v10214 = vmin.f32 %v10213, %v9399
        %v10215 = vmin.f32 %v10214, %v9407
        %v10216 = vmin.f32 %v10215, %v9415
        %v10217 = vmin.f32 %v10216, %v9423
        %v10218 = vmin.f32 %v10217, %v9431
        %v10219 = vmin.f32 %v10218, %v9439
        %v10220 = vmin.f32 %v10219, %v9447
        %v10221 = vmin.f32 %v10220, %v9455
        %v10222 = vmin.f32 %v10221, %v9463
        %v10223 = vmin.f32 %v10222, %v9471
        %v10224 = vrot.slane %v10223, 4
        %v10225 = vmin.f32 %v10223, %v10224
        %v10226 = vrot.slane %v10225, 2
        %v10227 = vmin.f32 %v10225, %v10226
        %v10228 = vrot.slane %v10227, 1
        %v10229 = vmin.f32 %v10227, %v10228
        %v10230 = vmin.f32 %v8968, %v8976
        %v10231 = vmin.f32 %v10230, %v8984
        %v10232 = vmin.f32 %v10231, %v8992
        %v10233 = vmin.f32 %v10232, %v9000
        %v10234 = vmin.f32 %v10233, %v9008
        %v10235 = vmin.f32 %v10234, %v9016
        %v10236 = vmin.f32 %v10235, %v9024
        %v10237 = vmin.f32 %v10236, %v9032
        %v10238 = vmin.f32 %v10237, %v9040
        %v10239 = vmin.f32 %v10238, %v9048
        %v10240 = vmin.f32 %v10239, %v9056
        %v10241 = vmin.f32 %v10240, %v9064
        %v10242 = vmin.f32 %v10241, %v9072
        %v10243 = vmin.f32 %v10242, %v9080
        %v10244 = vmin.f32 %v10243, %v9088
        %v10245 = vmin.f32 %v10244, %v9096
        %v10246 = vmin.f32 %v10245, %v9104
        %v10247 = vmin.f32 %v10246, %v9112
        %v10248 = vmin.f32 %v10247, %v9120
        %v10249 = vmin.f32 %v10248, %v9128
        %v10250 = vmin.f32 %v10249, %v9136
        %v10251 = vmin.f32 %v10250, %v9144
        %v10252 = vmin.f32 %v10251, %v9152
        %v10253 = vmin.f32 %v10252, %v9160
        %v10254 = vmin.f32 %v10253, %v9168
        %v10255 = vmin.f32 %v10254, %v9176
        %v10256 = vmin.f32 %v10255, %v9184
        %v10257 = vmin.f32 %v10256, %v9192
        %v10258 = vmin.f32 %v10257, %v9200
        %v10259 = vmin.f32 %v10258, %v9208
        %v10260 = vmin.f32 %v10259, %v9216
        %v10261 = vmin.f32 %v10260, %v9224
        %v10262 = vmin.f32 %v10261, %v9232
        %v10263 = vmin.f32 %v10262, %v9240
        %v10264 = vmin.f32 %v10263, %v9248
        %v10265 = vmin.f32 %v10264, %v9256
        %v10266 = vmin.f32 %v10265, %v9264
        %v10267 = vmin.f32 %v10266, %v9272
        %v10268 = vmin.f32 %v10267, %v9280
        %v10269 = vmin.f32 %v10268, %v9288
        %v10270 = vmin.f32 %v10269, %v9296
        %v10271 = vmin.f32 %v10270, %v9304
        %v10272 = vmin.f32 %v10271, %v9312
        %v10273 = vmin.f32 %v10272, %v9320
        %v10274 = vmin.f32 %v10273, %v9328
        %v10275 = vmin.f32 %v10274, %v9336
        %v10276 = vmin.f32 %v10275, %v9344
        %v10277 = vmin.f32 %v10276, %v9352
        %v10278 = vmin.f32 %v10277, %v9360
        %v10279 = vmin.f32 %v10278, %v9368
        %v10280 = vmin.f32 %v10279, %v9376
        %v10281 = vmin.f32 %v10280, %v9384
        %v10282 = vmin.f32 %v10281, %v9392
        %v10283 = vmin.f32 %v10282, %v9400
        %v10284 = vmin.f32 %v10283, %v9408
        %v10285 = vmin.f32 %v10284, %v9416
        %v10286 = vmin.f32 %v10285, %v9424
        %v10287 = vmin.f32 %v10286, %v9432
        %v10288 = vmin.f32 %v10287, %v9440
        %v10289 = vmin.f32 %v10288, %v9448
        %v10290 = vmin.f32 %v10289, %v9456
        %v10291 = vmin.f32 %v10290, %v9464
        %v10292 = vmin.f32 %v10291, %v9472
        %v10293 = vrot.slane %v10292, 4
        %v10294 = vmin.f32 %v10292, %v10293
        %v10295 = vrot.slane %v10294, 2
        %v10296 = vmin.f32 %v10294, %v10295
        %v10297 = vrot.slane %v10296, 1
        %v10298 = vmin.f32 %v10296, %v10297
        %v10299 = vmin.f32 %v8969, %v8977
        %v10300 = vmin.f32 %v10299, %v8985
        %v10301 = vmin.f32 %v10300, %v8993
        %v10302 = vmin.f32 %v10301, %v9001
        %v10303 = vmin.f32 %v10302, %v9009
        %v10304 = vmin.f32 %v10303, %v9017
        %v10305 = vmin.f32 %v10304, %v9025
        %v10306 = vmin.f32 %v10305, %v9033
        %v10307 = vmin.f32 %v10306, %v9041
        %v10308 = vmin.f32 %v10307, %v9049
        %v10309 = vmin.f32 %v10308, %v9057
        %v10310 = vmin.f32 %v10309, %v9065
        %v10311 = vmin.f32 %v10310, %v9073
        %v10312 = vmin.f32 %v10311, %v9081
        %v10313 = vmin.f32 %v10312, %v9089
        %v10314 = vmin.f32 %v10313, %v9097
        %v10315 = vmin.f32 %v10314, %v9105
        %v10316 = vmin.f32 %v10315, %v9113
        %v10317 = vmin.f32 %v10316, %v9121
        %v10318 = vmin.f32 %v10317, %v9129
        %v10319 = vmin.f32 %v10318, %v9137
        %v10320 = vmin.f32 %v10319, %v9145
        %v10321 = vmin.f32 %v10320, %v9153
        %v10322 = vmin.f32 %v10321, %v9161
        %v10323 = vmin.f32 %v10322, %v9169
        %v10324 = vmin.f32 %v10323, %v9177
        %v10325 = vmin.f32 %v10324, %v9185
        %v10326 = vmin.f32 %v10325, %v9193
        %v10327 = vmin.f32 %v10326, %v9201
        %v10328 = vmin.f32 %v10327, %v9209
        %v10329 = vmin.f32 %v10328, %v9217
        %v10330 = vmin.f32 %v10329, %v9225
        %v10331 = vmin.f32 %v10330, %v9233
        %v10332 = vmin.f32 %v10331, %v9241
        %v10333 = vmin.f32 %v10332, %v9249
        %v10334 = vmin.f32 %v10333, %v9257
        %v10335 = vmin.f32 %v10334, %v9265
        %v10336 = vmin.f32 %v10335, %v9273
        %v10337 = vmin.f32 %v10336, %v9281
        %v10338 = vmin.f32 %v10337, %v9289
        %v10339 = vmin.f32 %v10338, %v9297
        %v10340 = vmin.f32 %v10339, %v9305
        %v10341 = vmin.f32 %v10340, %v9313
        %v10342 = vmin.f32 %v10341, %v9321
        %v10343 = vmin.f32 %v10342, %v9329
        %v10344 = vmin.f32 %v10343, %v9337
        %v10345 = vmin.f32 %v10344, %v9345
        %v10346 = vmin.f32 %v10345, %v9353
        %v10347 = vmin.f32 %v10346, %v9361
        %v10348 = vmin.f32 %v10347, %v9369
        %v10349 = vmin.f32 %v10348, %v9377
        %v10350 = vmin.f32 %v10349, %v9385
        %v10351 = vmin.f32 %v10350, %v9393
        %v10352 = vmin.f32 %v10351, %v9401
        %v10353 = vmin.f32 %v10352, %v9409
        %v10354 = vmin.f32 %v10353, %v9417
        %v10355 = vmin.f32 %v10354, %v9425
        %v10356 = vmin.f32 %v10355, %v9433
        %v10357 = vmin.f32 %v10356, %v9441
        %v10358 = vmin.f32 %v10357, %v9449
        %v10359 = vmin.f32 %v10358, %v9457
        %v10360 = vmin.f32 %v10359, %v9465
        %v10361 = vmin.f32 %v10360, %v9473
        %v10362 = vrot.slane %v10361, 4
        %v10363 = vmin.f32 %v10361, %v10362
        %v10364 = vrot.slane %v10363, 2
        %v10365 = vmin.f32 %v10363, %v10364
        %v10366 = vrot.slane %v10365, 1
        %v10367 = vmin.f32 %v10365, %v10366
        %v10368 = vmin.f32 %v8970, %v8978
        %v10369 = vmin.f32 %v10368, %v8986
        %v10370 = vmin.f32 %v10369, %v8994
        %v10371 = vmin.f32 %v10370, %v9002
        %v10372 = vmin.f32 %v10371, %v9010
        %v10373 = vmin.f32 %v10372, %v9018
        %v10374 = vmin.f32 %v10373, %v9026
        %v10375 = vmin.f32 %v10374, %v9034
        %v10376 = vmin.f32 %v10375, %v9042
        %v10377 = vmin.f32 %v10376, %v9050
        %v10378 = vmin.f32 %v10377, %v9058
        %v10379 = vmin.f32 %v10378, %v9066
        %v10380 = vmin.f32 %v10379, %v9074
        %v10381 = vmin.f32 %v10380, %v9082
        %v10382 = vmin.f32 %v10381, %v9090
        %v10383 = vmin.f32 %v10382, %v9098
        %v10384 = vmin.f32 %v10383, %v9106
        %v10385 = vmin.f32 %v10384, %v9114
        %v10386 = vmin.f32 %v10385, %v9122
        %v10387 = vmin.f32 %v10386, %v9130
        %v10388 = vmin.f32 %v10387, %v9138
        %v10389 = vmin.f32 %v10388, %v9146
        %v10390 = vmin.f32 %v10389, %v9154
        %v10391 = vmin.f32 %v10390, %v9162
        %v10392 = vmin.f32 %v10391, %v9170
        %v10393 = vmin.f32 %v10392, %v9178
        %v10394 = vmin.f32 %v10393, %v9186
        %v10395 = vmin.f32 %v10394, %v9194
        %v10396 = vmin.f32 %v10395, %v9202
        %v10397 = vmin.f32 %v10396, %v9210
        %v10398 = vmin.f32 %v10397, %v9218
        %v10399 = vmin.f32 %v10398, %v9226
        %v10400 = vmin.f32 %v10399, %v9234
        %v10401 = vmin.f32 %v10400, %v9242
        %v10402 = vmin.f32 %v10401, %v9250
        %v10403 = vmin.f32 %v10402, %v9258
        %v10404 = vmin.f32 %v10403, %v9266
        %v10405 = vmin.f32 %v10404, %v9274
        %v10406 = vmin.f32 %v10405, %v9282
        %v10407 = vmin.f32 %v10406, %v9290
        %v10408 = vmin.f32 %v10407, %v9298
        %v10409 = vmin.f32 %v10408, %v9306
        %v10410 = vmin.f32 %v10409, %v9314
        %v10411 = vmin.f32 %v10410, %v9322
        %v10412 = vmin.f32 %v10411, %v9330
        %v10413 = vmin.f32 %v10412, %v9338
        %v10414 = vmin.f32 %v10413, %v9346
        %v10415 = vmin.f32 %v10414, %v9354
        %v10416 = vmin.f32 %v10415, %v9362
        %v10417 = vmin.f32 %v10416, %v9370
        %v10418 = vmin.f32 %v10417, %v9378
        %v10419 = vmin.f32 %v10418, %v9386
        %v10420 = vmin.f32 %v10419, %v9394
        %v10421 = vmin.f32 %v10420, %v9402
        %v10422 = vmin.f32 %v10421, %v9410
        %v10423 = vmin.f32 %v10422, %v9418
        %v10424 = vmin.f32 %v10423, %v9426
        %v10425 = vmin.f32 %v10424, %v9434
        %v10426 = vmin.f32 %v10425, %v9442
        %v10427 = vmin.f32 %v10426, %v9450
        %v10428 = vmin.f32 %v10427, %v9458
        %v10429 = vmin.f32 %v10428, %v9466
        %v10430 = vmin.f32 %v10429, %v9474
        %v10431 = vrot.slane %v10430, 4
        %v10432 = vmin.f32 %v10430, %v10431
        %v10433 = vrot.slane %v10432, 2
        %v10434 = vmin.f32 %v10432, %v10433
        %v10435 = vrot.slane %v10434, 1
        %v10436 = vmin.f32 %v10434, %v10435
        %v10437 = vmin.f32 %v8971, %v8979
        %v10438 = vmin.f32 %v10437, %v8987
        %v10439 = vmin.f32 %v10438, %v8995
        %v10440 = vmin.f32 %v10439, %v9003
        %v10441 = vmin.f32 %v10440, %v9011
        %v10442 = vmin.f32 %v10441, %v9019
        %v10443 = vmin.f32 %v10442, %v9027
        %v10444 = vmin.f32 %v10443, %v9035
        %v10445 = vmin.f32 %v10444, %v9043
        %v10446 = vmin.f32 %v10445, %v9051
        %v10447 = vmin.f32 %v10446, %v9059
        %v10448 = vmin.f32 %v10447, %v9067
        %v10449 = vmin.f32 %v10448, %v9075
        %v10450 = vmin.f32 %v10449, %v9083
        %v10451 = vmin.f32 %v10450, %v9091
        %v10452 = vmin.f32 %v10451, %v9099
        %v10453 = vmin.f32 %v10452, %v9107
        %v10454 = vmin.f32 %v10453, %v9115
        %v10455 = vmin.f32 %v10454, %v9123
        %v10456 = vmin.f32 %v10455, %v9131
        %v10457 = vmin.f32 %v10456, %v9139
        %v10458 = vmin.f32 %v10457, %v9147
        %v10459 = vmin.f32 %v10458, %v9155
        %v10460 = vmin.f32 %v10459, %v9163
        %v10461 = vmin.f32 %v10460, %v9171
        %v10462 = vmin.f32 %v10461, %v9179
        %v10463 = vmin.f32 %v10462, %v9187
        %v10464 = vmin.f32 %v10463, %v9195
        %v10465 = vmin.f32 %v10464, %v9203
        %v10466 = vmin.f32 %v10465, %v9211
        %v10467 = vmin.f32 %v10466, %v9219
        %v10468 = vmin.f32 %v10467, %v9227
        %v10469 = vmin.f32 %v10468, %v9235
        %v10470 = vmin.f32 %v10469, %v9243
        %v10471 = vmin.f32 %v10470, %v9251
        %v10472 = vmin.f32 %v10471, %v9259
        %v10473 = vmin.f32 %v10472, %v9267
        %v10474 = vmin.f32 %v10473, %v9275
        %v10475 = vmin.f32 %v10474, %v9283
        %v10476 = vmin.f32 %v10475, %v9291
        %v10477 = vmin.f32 %v10476, %v9299
        %v10478 = vmin.f32 %v10477, %v9307
        %v10479 = vmin.f32 %v10478, %v9315
        %v10480 = vmin.f32 %v10479, %v9323
        %v10481 = vmin.f32 %v10480, %v9331
        %v10482 = vmin.f32 %v10481, %v9339
        %v10483 = vmin.f32 %v10482, %v9347
        %v10484 = vmin.f32 %v10483, %v9355
        %v10485 = vmin.f32 %v10484, %v9363
        %v10486 = vmin.f32 %v10485, %v9371
        %v10487 = vmin.f32 %v10486, %v9379
        %v10488 = vmin.f32 %v10487, %v9387
        %v10489 = vmin.f32 %v10488, %v9395
        %v10490 = vmin.f32 %v10489, %v9403
        %v10491 = vmin.f32 %v10490, %v9411
        %v10492 = vmin.f32 %v10491, %v9419
        %v10493 = vmin.f32 %v10492, %v9427
        %v10494 = vmin.f32 %v10493, %v9435
        %v10495 = vmin.f32 %v10494, %v9443
        %v10496 = vmin.f32 %v10495, %v9451
        %v10497 = vmin.f32 %v10496, %v9459
        %v10498 = vmin.f32 %v10497, %v9467
        %v10499 = vmin.f32 %v10498, %v9475
        %v10500 = vrot.slane %v10499, 4
        %v10501 = vmin.f32 %v10499, %v10500
        %v10502 = vrot.slane %v10501, 2
        %v10503 = vmin.f32 %v10501, %v10502
        %v10504 = vrot.slane %v10503, 1
        %v10505 = vmin.f32 %v10503, %v10504
        %v10506 = vmin.f32 %v8972, %v8980
        %v10507 = vmin.f32 %v10506, %v8988
        %v10508 = vmin.f32 %v10507, %v8996
        %v10509 = vmin.f32 %v10508, %v9004
        %v10510 = vmin.f32 %v10509, %v9012
        %v10511 = vmin.f32 %v10510, %v9020
        %v10512 = vmin.f32 %v10511, %v9028
        %v10513 = vmin.f32 %v10512, %v9036
        %v10514 = vmin.f32 %v10513, %v9044
        %v10515 = vmin.f32 %v10514, %v9052
        %v10516 = vmin.f32 %v10515, %v9060
        %v10517 = vmin.f32 %v10516, %v9068
        %v10518 = vmin.f32 %v10517, %v9076
        %v10519 = vmin.f32 %v10518, %v9084
        %v10520 = vmin.f32 %v10519, %v9092
        %v10521 = vmin.f32 %v10520, %v9100
        %v10522 = vmin.f32 %v10521, %v9108
        %v10523 = vmin.f32 %v10522, %v9116
        %v10524 = vmin.f32 %v10523, %v9124
        %v10525 = vmin.f32 %v10524, %v9132
        %v10526 = vmin.f32 %v10525, %v9140
        %v10527 = vmin.f32 %v10526, %v9148
        %v10528 = vmin.f32 %v10527, %v9156
        %v10529 = vmin.f32 %v10528, %v9164
        %v10530 = vmin.f32 %v10529, %v9172
        %v10531 = vmin.f32 %v10530, %v9180
        %v10532 = vmin.f32 %v10531, %v9188
        %v10533 = vmin.f32 %v10532, %v9196
        %v10534 = vmin.f32 %v10533, %v9204
        %v10535 = vmin.f32 %v10534, %v9212
        %v10536 = vmin.f32 %v10535, %v9220
        %v10537 = vmin.f32 %v10536, %v9228
        %v10538 = vmin.f32 %v10537, %v9236
        %v10539 = vmin.f32 %v10538, %v9244
        %v10540 = vmin.f32 %v10539, %v9252
        %v10541 = vmin.f32 %v10540, %v9260
        %v10542 = vmin.f32 %v10541, %v9268
        %v10543 = vmin.f32 %v10542, %v9276
        %v10544 = vmin.f32 %v10543, %v9284
        %v10545 = vmin.f32 %v10544, %v9292
        %v10546 = vmin.f32 %v10545, %v9300
        %v10547 = vmin.f32 %v10546, %v9308
        %v10548 = vmin.f32 %v10547, %v9316
        %v10549 = vmin.f32 %v10548, %v9324
        %v10550 = vmin.f32 %v10549, %v9332
        %v10551 = vmin.f32 %v10550, %v9340
        %v10552 = vmin.f32 %v10551, %v9348
        %v10553 = vmin.f32 %v10552, %v9356
        %v10554 = vmin.f32 %v10553, %v9364
        %v10555 = vmin.f32 %v10554, %v9372
        %v10556 = vmin.f32 %v10555, %v9380
        %v10557 = vmin.f32 %v10556, %v9388
        %v10558 = vmin.f32 %v10557, %v9396
        %v10559 = vmin.f32 %v10558, %v9404
        %v10560 = vmin.f32 %v10559, %v9412
        %v10561 = vmin.f32 %v10560, %v9420
        %v10562 = vmin.f32 %v10561, %v9428
        %v10563 = vmin.f32 %v10562, %v9436
        %v10564 = vmin.f32 %v10563, %v9444
        %v10565 = vmin.f32 %v10564, %v9452
        %v10566 = vmin.f32 %v10565, %v9460
        %v10567 = vmin.f32 %v10566, %v9468
        %v10568 = vmin.f32 %v10567, %v9476
        %v10569 = vrot.slane %v10568, 4
        %v10570 = vmin.f32 %v10568, %v10569
        %v10571 = vrot.slane %v10570, 2
        %v10572 = vmin.f32 %v10570, %v10571
        %v10573 = vrot.slane %v10572, 1
        %v10574 = vmin.f32 %v10572, %v10573
        %v10575 = vmin.f32 %v8973, %v8981
        %v10576 = vmin.f32 %v10575, %v8989
        %v10577 = vmin.f32 %v10576, %v8997
        %v10578 = vmin.f32 %v10577, %v9005
        %v10579 = vmin.f32 %v10578, %v9013
        %v10580 = vmin.f32 %v10579, %v9021
        %v10581 = vmin.f32 %v10580, %v9029
        %v10582 = vmin.f32 %v10581, %v9037
        %v10583 = vmin.f32 %v10582, %v9045
        %v10584 = vmin.f32 %v10583, %v9053
        %v10585 = vmin.f32 %v10584, %v9061
        %v10586 = vmin.f32 %v10585, %v9069
        %v10587 = vmin.f32 %v10586, %v9077
        %v10588 = vmin.f32 %v10587, %v9085
        %v10589 = vmin.f32 %v10588, %v9093
        %v10590 = vmin.f32 %v10589, %v9101
        %v10591 = vmin.f32 %v10590, %v9109
        %v10592 = vmin.f32 %v10591, %v9117
        %v10593 = vmin.f32 %v10592, %v9125
        %v10594 = vmin.f32 %v10593, %v9133
        %v10595 = vmin.f32 %v10594, %v9141
        %v10596 = vmin.f32 %v10595, %v9149
        %v10597 = vmin.f32 %v10596, %v9157
        %v10598 = vmin.f32 %v10597, %v9165
        %v10599 = vmin.f32 %v10598, %v9173
        %v10600 = vmin.f32 %v10599, %v9181
        %v10601 = vmin.f32 %v10600, %v9189
        %v10602 = vmin.f32 %v10601, %v9197
        %v10603 = vmin.f32 %v10602, %v9205
        %v10604 = vmin.f32 %v10603, %v9213
        %v10605 = vmin.f32 %v10604, %v9221
        %v10606 = vmin.f32 %v10605, %v9229
        %v10607 = vmin.f32 %v10606, %v9237
        %v10608 = vmin.f32 %v10607, %v9245
        %v10609 = vmin.f32 %v10608, %v9253
        %v10610 = vmin.f32 %v10609, %v9261
        %v10611 = vmin.f32 %v10610, %v9269
        %v10612 = vmin.f32 %v10611, %v9277
        %v10613 = vmin.f32 %v10612, %v9285
        %v10614 = vmin.f32 %v10613, %v9293
        %v10615 = vmin.f32 %v10614, %v9301
        %v10616 = vmin.f32 %v10615, %v9309
        %v10617 = vmin.f32 %v10616, %v9317
        %v10618 = vmin.f32 %v10617, %v9325
        %v10619 = vmin.f32 %v10618, %v9333
        %v10620 = vmin.f32 %v10619, %v9341
        %v10621 = vmin.f32 %v10620, %v9349
        %v10622 = vmin.f32 %v10621, %v9357
        %v10623 = vmin.f32 %v10622, %v9365
        %v10624 = vmin.f32 %v10623, %v9373
        %v10625 = vmin.f32 %v10624, %v9381
        %v10626 = vmin.f32 %v10625, %v9389
        %v10627 = vmin.f32 %v10626, %v9397
        %v10628 = vmin.f32 %v10627, %v9405
        %v10629 = vmin.f32 %v10628, %v9413
        %v10630 = vmin.f32 %v10629, %v9421
        %v10631 = vmin.f32 %v10630, %v9429
        %v10632 = vmin.f32 %v10631, %v9437
        %v10633 = vmin.f32 %v10632, %v9445
        %v10634 = vmin.f32 %v10633, %v9453
        %v10635 = vmin.f32 %v10634, %v9461
        %v10636 = vmin.f32 %v10635, %v9469
        %v10637 = vmin.f32 %v10636, %v9477
        %v10638 = vrot.slane %v10637, 4
        %v10639 = vmin.f32 %v10637, %v10638
        %v10640 = vrot.slane %v10639, 2
        %v10641 = vmin.f32 %v10639, %v10640
        %v10642 = vrot.slane %v10641, 1
        %v10643 = vmin.f32 %v10641, %v10642
        %v10652 = vcombine.low %v10160, %v10229
        %v10653 = vcombine.low %v10298, %v10367
        %v10654 = vcombine.low %v10436, %v10505
        %v10655 = vcombine.low %v10574, %v10643
        %v10657 = vunpack.c.l.s4 1966171168
        %v10658 = vunpack.c.0.s8 %v10657
        %v10659 = vlaneseq
        %v10660 = vshrl.u32 %v10659, 7
        %v10661 = vsub.s32 %v10658, %v10660
        %v10662 = vrot.slane %v10652, %v10661
        %v10664 = vunpack.c.l.s4 1966171168
        %v10665 = vunpack.c.0.s8 %v10664
        %v10666 = vlaneseq
        %v10667 = vshrl.u32 %v10666, 7
        %v10668 = vsub.s32 %v10665, %v10667
        %v10669 = vrot.slane %v10653, %v10668
        %v10671 = vunpack.c.l.s4 1966171168
        %v10672 = vunpack.c.0.s8 %v10671
        %v10673 = vlaneseq
        %v10674 = vshrl.u32 %v10673, 7
        %v10675 = vsub.s32 %v10672, %v10674
        %v10676 = vrot.slane %v10654, %v10675
        %v10678 = vunpack.c.l.s4 1966171168
        %v10679 = vunpack.c.0.s8 %v10678
        %v10680 = vlaneseq
        %v10681 = vshrl.u32 %v10680, 7
        %v10682 = vsub.s32 %v10679, %v10681
        %v10683 = vrot.slane %v10655, %v10682
        %v10684 = vcombine.low %v10662, %v10669
        %v10685 = vcombine.low %v10676, %v10683
        %v10687 = vunpack.c.l.s4 1966171168
        %v10688 = vunpack.c.0.s8 %v10687
        %v10689 = vlaneseq
        %v10690 = vshrl.u32 %v10689, 7
        %v10691 = vsub.s32 %v10688, %v10690
        %v10692 = vrot.slane %v10684, %v10691
        %v10694 = vunpack.c.l.s4 1966171168
        %v10695 = vunpack.c.0.s8 %v10694
        %v10696 = vlaneseq
        %v10697 = vshrl.u32 %v10696, 7
        %v10698 = vsub.s32 %v10695, %v10697
        %v10699 = vrot.slane %v10685, %v10698
        %v10700 = vcombine.low %v10692, %v10699
        %v10702 = vmin.f32 %v10091, %v10700
        %10703 = vst [vmem:[#allocation3] sm:$0xff] %v10702
        %p10704 = scmp.eq.s32.totalorder %s23, 1
        // Predicated region
        $region33: #{tpu_custom_call.1} parent=27 // pred_check
          %p10705 = pneg %p10704
        $region34: #{tpu_custom_call.1} parent=27 // pred_check_branch
          %10707 = sbr.rel (%p10705) target = $region36
        $region35: #{tpu_custom_call.1} parent=27 // pred_region
          %v10708 = vld [vmem:[#allocation2] sm:$0xff]
          %vm10709 = vcmp.lt.f32.partialorder %v10708, inf
          %v10710 = vsel %vm10709, %v10708, 0.0
          %v10711 = vld [vmem:[#allocation3] sm:$0xff]
          %vm10712 = vcmp.lt.f32.partialorder %v10711, inf
          %v10713 = vsel %vm10712, %v10711, 0.0
          %v10714 = vadd.f32 %v10710, %v10713
          %v10716 = vlaneseq
          %v10717 = vshrl.u32 %v10716, 7
          %v10718 = vsub.s32 0, %v10717
          %v10719 = vrot.slane %v10714, %v10718
          %v10720 = vlaneseq
          %v10721 = vshrl.u32 %v10720, 7
          %v10722 = vsub.s32 1, %v10721
          %v10723 = vrot.slane %v10714, %v10722
          %v10724 = vlaneseq
          %v10725 = vshrl.u32 %v10724, 7
          %v10726 = vsub.s32 2, %v10725
          %v10727 = vrot.slane %v10714, %v10726
          %v10728 = vlaneseq
          %v10729 = vshrl.u32 %v10728, 7
          %v10730 = vsub.s32 3, %v10729
          %v10731 = vrot.slane %v10714, %v10730
          %v10732 = vlaneseq
          %v10733 = vshrl.u32 %v10732, 7
          %v10734 = vsub.s32 4, %v10733
          %v10735 = vrot.slane %v10714, %v10734
          %v10736 = vlaneseq
          %v10737 = vshrl.u32 %v10736, 7
          %v10738 = vsub.s32 5, %v10737
          %v10739 = vrot.slane %v10714, %v10738
          %v10740 = vlaneseq
          %v10741 = vshrl.u32 %v10740, 7
          %v10742 = vsub.s32 6, %v10741
          %v10743 = vrot.slane %v10714, %v10742
          %v10744 = vlaneseq
          %v10745 = vshrl.u32 %v10744, 7
          %v10746 = vsub.s32 7, %v10745
          %v10747 = vrot.slane %v10714, %v10746
          %v10756 = vmul.f32 %v222, %v10719
          %v10757 = vmul.f32 %v223, %v10723
          %v10758 = vmul.f32 %v224, %v10727
          %v10759 = vmul.f32 %v225, %v10731
          %v10760 = vmul.f32 %v226, %v10735
          %v10761 = vmul.f32 %v227, %v10739
          %v10762 = vmul.f32 %v228, %v10743
          %v10763 = vmul.f32 %v229, %v10747
          %v10772 = vcombine.high %v10756, %v10757
          %v10773 = vcombine.high %v10758, %v10759
          %v10774 = vcombine.high %v10760, %v10761
          %v10775 = vcombine.high %v10762, %v10763
          %v10777 = vunpack.c.l.s4 1966171168
          %v10778 = vunpack.c.0.s8 %v10777
          %v10779 = vlaneseq
          %v10780 = vshrl.u32 %v10779, 7
          %v10781 = vsub.s32 %v10778, %v10780
          %v10782 = vrot.slane %v10772, %v10781
          %v10784 = vunpack.c.l.s4 1966171168
          %v10785 = vunpack.c.0.s8 %v10784
          %v10786 = vlaneseq
          %v10787 = vshrl.u32 %v10786, 7
          %v10788 = vsub.s32 %v10785, %v10787
          %v10789 = vrot.slane %v10773, %v10788
          %v10791 = vunpack.c.l.s4 1966171168
          %v10792 = vunpack.c.0.s8 %v10791
          %v10793 = vlaneseq
          %v10794 = vshrl.u32 %v10793, 7
          %v10795 = vsub.s32 %v10792, %v10794
          %v10796 = vrot.slane %v10774, %v10795
          %v10798 = vunpack.c.l.s4 1966171168
          %v10799 = vunpack.c.0.s8 %v10798
          %v10800 = vlaneseq
          %v10801 = vshrl.u32 %v10800, 7
          %v10802 = vsub.s32 %v10799, %v10801
          %v10803 = vrot.slane %v10775, %v10802
          %v10804 = vcombine.high %v10782, %v10789
          %v10805 = vcombine.high %v10796, %v10803
          %v10807 = vunpack.c.l.s4 1966171168
          %v10808 = vunpack.c.0.s8 %v10807
          %v10809 = vlaneseq
          %v10810 = vshrl.u32 %v10809, 7
          %v10811 = vsub.s32 %v10808, %v10810
          %v10812 = vrot.slane %v10804, %v10811
          %v10814 = vunpack.c.l.s4 1966171168
          %v10815 = vunpack.c.0.s8 %v10814
          %v10816 = vlaneseq
          %v10817 = vshrl.u32 %v10816, 7
          %v10818 = vsub.s32 %v10815, %v10817
          %v10819 = vrot.slane %v10805, %v10818
          %v10820 = vcombine.low %v10812, %v10819
          %10822 = vst [vmem:[%s194] sm:$0xff] %v10820
        $region36: #{tpu_custom_call.1} parent=27 // pred_fallthru
          _
        %s10823 = sand.u32 %s101, 1
        %s10824 = scalar_lea.sflag [#allocation5], %s10823
        %s10825 = sand.u32 %s101, 1
        %s10826 = smul.addr %s10825, 8
        %s10827 = scalar_lea.vmem [#allocation4], %s10826
        // Predicated region
        $region37: #{tpu_custom_call.1} parent=27 // pred_check
          %p10828 = pneg %p111
        $region38: #{tpu_custom_call.1} parent=27 // pred_check_branch
          %10830 = sbr.rel (%p10828) target = $region40
        $region39: #{tpu_custom_call.1} parent=27 // pred_region
          %s10831 = smul.u32 8, %s22
          %s10833 = ssub.s32 128, 128
          %10834 = vsyncadd %s10824, %s10833
          %s10835 = smul.addr %s21, 8
          %s10836 = sadd.s32 %s10831, %s10835
          %s10837 = smul.addr %s10836, 16
          %s10838 = scalar_lea.hbm %s2, %s10837
          %s10840 = sshll.u32 %s10827, 4
          %s10841 = int_to_ptr.vmem [resolvable:$true] %s10840
          %10843 = dma.vmem_to_hbm [thread:$0]  %s10841, 128, %s10838, %s10824
        $region40: #{tpu_custom_call.1} parent=27 // pred_fallthru
          _
      $region28: #{tpu_custom_call.1} parent=5 // pred_fallthru
        _
      %p10844 = scmp.le.s32.totalorder 2, %s11
      // Predicated region
      $region41: #{tpu_custom_call.1} parent=5 // pred_check
        %p10845 = pneg %p10844
      $region42: #{tpu_custom_call.1} parent=5 // pred_check_branch
        %10847 = sbr.rel (%p10845) target = $region44
      $region43: #{tpu_custom_call.1} parent=5 // pred_region
        %s10848 = ssub.s32 %s11, 2
        // Predicated region
        $region45: #{tpu_custom_call.1} parent=43 // pred_check
          %p10849 = pneg %p117
        $region46: #{tpu_custom_call.1} parent=43 // pred_check_branch
          %10851 = sbr.rel (%p10849) target = $region48
        $region47: #{tpu_custom_call.1} parent=43 // pred_region
          %s10852 = sand.u32 %s102, 1
          %s10853 = scalar_lea.sflag [#allocation5], %s10852
          %s10854 = sand.u32 %s102, 1
          %s10855 = smul.addr %s10854, 8
          %s10856 = scalar_lea.vmem [#allocation4], %s10855
          %10857 = dma.done %s10853, 128
        $region48: #{tpu_custom_call.1} parent=43 // pred_fallthru
          _
      $region44: #{tpu_custom_call.1} parent=5 // pred_fallthru
        _
    $region6: #{tpu_custom_call.1} parent=1 // loop_footer
      %s15 = sadd.s32 1, %s11
    $region7: #{tpu_custom_call.1} parent=1 // loop_footer_branch
      %10 = sbr.rel target = $region3
    $region8: #{tpu_custom_call.1} parent=1 // loop_exit
      _
    %10858 = vsyncpa [#allocation5], 1
    %s10859 = scalar_lea.sflag [#allocation5], 1
    %10860 = vsyncpa %s10859, 1

</llo_original>
